<compile_context>
chip_gen: v6e
topology: v6e:2x2x1
jax: 0.10.0
libtpu: 0.0.40
codegen_flags: <defaults>
</compile_context>

<pallas_src>
import functools

import jax
import jax.numpy as jnp
from jax.experimental import pallas as pl
from jax.experimental.pallas import tpu as pltpu

NEG_SLOPE = 0.01   # PyTorch nn.LeakyReLU default
BN_EPS = 1e-5
CONV_CH = 128      # channel count of every conv layer


# ----------------------------------------------------------------------------
# Fused forward kernel: conv0 + conv1 + conv2 + flatten + 4 FC layers
# ----------------------------------------------------------------------------
def _fused_kernel(cols0_ref, w0_ref, b0_ref, w1_ref, b1_ref, w2_ref, b2_ref,
                  wf0_ref, bf0_ref, wf1_ref, bf1_ref, wf2_ref, bf2_ref,
                  wf3_ref, bf3_ref,
                  o_ref,
                  s0, s1, s2, sflat,
                  *, batch, hw, rows_c, taps):
    f32 = jnp.float32
    bf16 = jnp.bfloat16

    def lrelu(v):
        return jnp.maximum(v, NEG_SLOPE * v)

    # Padding rows beyond the written frame are read by later conv taps (they
    # only feed discarded frame positions) -- make sure they are defined.
    s1[...] = jnp.zeros_like(s1)
    s2[...] = jnp.zeros_like(s2)

    # --- conv0 + BN + LeakyReLU: pre-built im2col columns, K = Cin*2*2 = 8 ---
    a0 = jnp.dot(cols0_ref[...].astype(bf16), w0_ref[...],
                 preferred_element_type=f32)
    s0[...] = lrelu(a0 + b0_ref[...])

    # --- conv1 / conv2 + BN + LeakyReLU ------------------------------------
    # 2x2 conv on the (b,h,w)-flattened frame = sum of 4 row-shifted matmuls.
    def conv_block(src, dst, w_ref, b_ref):
        acc = jnp.zeros((rows_c, CONV_CH), f32)
        for t, off in enumerate(taps):
            lhs = src[pl.ds(off, rows_c), :].astype(bf16)
            acc = acc + jnp.dot(lhs, w_ref[t], preferred_element_type=f32)
        dst[pl.ds(0, rows_c), :] = lrelu(acc + b_ref[...])

    conv_block(s0, s1, w1_ref, b1_ref)
    conv_block(s1, s2, w2_ref, b2_ref)

    # --- flatten: gather the valid 4x4 spatial block per sample -------------
    # Rows are written in (h, w, c) order; fc0's weight rows were permuted at
    # prep time to match PyTorch's (c, h, w) flatten.
    out_hw = hw - 3  # 7 -> 4 after three k=2 convs
    for b in range(batch):
        for h in range(out_hw):
            for w in range(out_hw):
                r = b * hw * hw + h * hw + w
                p = h * out_hw + w
                sflat[pl.ds(b, 1), pl.ds(p * CONV_CH, CONV_CH)] = s2[pl.ds(r, 1), :]

    # --- FC head (Dropout = identity, eval semantics) ------------------------
    x = sflat[...]
    x = lrelu(jnp.dot(x.astype(bf16), wf0_ref[...], preferred_element_type=f32)
              + bf0_ref[...])
    x = lrelu(jnp.dot(x.astype(bf16), wf1_ref[...], preferred_element_type=f32)
              + bf1_ref[...])
    x = lrelu(jnp.dot(x.astype(bf16), wf2_ref[...], preferred_element_type=f32)
              + bf2_ref[...])
    x = jnp.dot(x.astype(bf16), wf3_ref[...], preferred_element_type=f32) + bf3_ref[...]
    o_ref[...] = x.astype(o_ref.dtype)


# ----------------------------------------------------------------------------
# One-time parameter preparation (BN folding, layout permutations, bf16 cast)
# ----------------------------------------------------------------------------
def prepare_params(p):
    def fold(i):
        w, b = p[f"conv{i}_w"], p[f"conv{i}_b"]
        scale = p[f"bn{i}_gamma"] / jnp.sqrt(p[f"bn{i}_var"] + BN_EPS)
        w_fold = w * scale[:, None, None, None]
        b_fold = scale * (b - p[f"bn{i}_mean"]) + p[f"bn{i}_beta"]
        return w_fold, b_fold

    ops = {}
    w0f, b0f = fold(0)
    # conv0: (O, C, 2, 2) -> (kh, kw, c, o) -> (8, 128), matching the wrapper's
    # im2col column order (kh, kw, c).
    ops["w0"] = w0f.transpose(2, 3, 1, 0).reshape(8, CONV_CH).astype(jnp.bfloat16)
    ops["b0"] = b0f.reshape(1, CONV_CH).astype(jnp.float32)
    for i in (1, 2):
        wif, bif = fold(i)
        # (O, C, 2, 2) -> per-tap (Cin, Cout) matrices, tap order (kh, kw).
        ops[f"w{i}"] = wif.transpose(2, 3, 1, 0).reshape(4, CONV_CH, CONV_CH) \
                          .astype(jnp.bfloat16)
        ops[f"b{i}"] = bif.reshape(1, CONV_CH).astype(jnp.float32)

    # fc0: permute input columns from PyTorch (c, h, w) flatten order to the
    # kernel's (h, w, c) gather order, then lay out as [in, out].
    wf0 = p["fc0_w"].reshape(512, CONV_CH, 4, 4).transpose(2, 3, 1, 0) \
                    .reshape(4 * 4 * CONV_CH, 512)
    ops["wf0"] = wf0.astype(jnp.bfloat16)
    ops["bf0"] = p["fc0_b"].reshape(1, -1).astype(jnp.float32)
    for i in (1, 2, 3):
        ops[f"wf{i}"] = p[f"fc{i}_w"].T.astype(jnp.bfloat16)   # [in, out]
        ops[f"bf{i}"] = p[f"fc{i}_b"].reshape(1, -1).astype(jnp.float32)
    return ops


# ----------------------------------------------------------------------------
# Forward wrapper: tiny im2col of the 2-channel input, then one pallas_call
# ----------------------------------------------------------------------------
@jax.jit
def network_forward(ops, x):
    B, c_in, H, W = x.shape                 # (2, 2, 7, 7)
    n_frame = B * H * W                     # 98 flattened (b, h, w) rows
    rows_c = ((n_frame + 7) // 8) * 8       # 104 (rows computed by conv1/conv2)
    pad_rows = rows_c + 8                   # 112 (frame + shift slack)
    taps = (0, 1, W, W + 1)                 # 2x2 taps as flat row offsets

    # im2col for conv0 only (Cin=2 -> K=8); columns ordered (kh, kw, c).
    xf = jnp.transpose(x, (0, 2, 3, 1)).reshape(n_frame, c_in).astype(jnp.float32)
    xp = jnp.pad(xf, ((0, pad_rows - n_frame), (0, 0)))
    cols = jnp.concatenate([xp[off:off + n_frame] for off in taps], axis=1)
    cols0 = jnp.pad(cols, ((0, pad_rows - n_frame), (0, 0)))        # (112, 8)

    operands = [cols0,
                ops["w0"], ops["b0"], ops["w1"], ops["b1"], ops["w2"], ops["b2"],
                ops["wf0"], ops["bf0"], ops["wf1"], ops["bf1"],
                ops["wf2"], ops["bf2"], ops["wf3"], ops["bf3"]]
    in_specs = [pl.BlockSpec(op.shape, lambda i, n=op.ndim: (0,) * n)
                for op in operands]

    kernel = functools.partial(_fused_kernel, batch=B, hw=H,
                               rows_c=rows_c, taps=taps)
    return pl.pallas_call(
        kernel,
        out_shape=jax.ShapeDtypeStruct((B, 32), jnp.float32),
        grid=(1,),
        in_specs=in_specs,
        out_specs=pl.BlockSpec((B, 32), lambda i: (0, 0)),
        scratch_shapes=[
            pltpu.VMEM((pad_rows, CONV_CH), jnp.float32),   # conv0 activations
            pltpu.VMEM((pad_rows, CONV_CH), jnp.float32),   # conv1 activations
            pltpu.VMEM((pad_rows, CONV_CH), jnp.float32),   # conv2 activations
            pltpu.VMEM((B, 4 * 4 * CONV_CH), jnp.float32),  # flattened FC input
        ],
        compiler_params=pltpu.CompilerParams(
            dimension_semantics=("arbitrary",),
            vmem_limit_bytes=32 * 1024 * 1024,
        ),
    )(*operands)


# ----------------------------------------------------------------------------
# Parameter construction (deterministic, synthetic)
# ----------------------------------------------------------------------------
def init_params(key):
    def nrm(k, shape, s=0.05):
        return s * jax.random.normal(k, shape, dtype=jnp.float32)

    ks = jax.random.split(key, 20)
    p = {}
    conv_dims = [(2, 128), (128, 128), (128, 128)]
    for i, (cin, cout) in enumerate(conv_dims):
        p[f"conv{i}_w"] = nrm(ks[4 * i + 0], (cout, cin, 2, 2))
        p[f"conv{i}_b"] = nrm(ks[4 * i + 1], (cout,))
        p[f"bn{i}_gamma"] = 1.0 + nrm(ks[4 * i + 2], (cout,), 0.02)
        p[f"bn{i}_beta"] = nrm(ks[4 * i + 3], (cout,), 0.02)
        p[f"bn{i}_mean"] = nrm(ks[4 * i + 2], (cout,), 0.01)
        p[f"bn{i}_var"] = 1.0 + jnp.abs(nrm(ks[4 * i + 3], (cout,), 0.02))
    fc_dims = [(128 * 4 * 4, 512), (512, 256), (256, 128), (128, 32)]
    for i, (fin, fout) in enumerate(fc_dims):
        p[f"fc{i}_w"] = nrm(ks[12 + 2 * i], (fout, fin))   # PyTorch [out, in]
        p[f"fc{i}_b"] = nrm(ks[13 + 2 * i], (fout,))
    return p


# ----------------------------------------------------------------------------
# Pure-JAX f32 reference (PyTorch eval semantics) for the correctness check
# ----------------------------------------------------------------------------
def reference_forward(params, x):
    p = params

    def lrelu(v):
        return jnp.where(v >= 0, v, NEG_SLOPE * v)

    for i in range(3):
        w, b = p[f"conv{i}_w"], p[f"conv{i}_b"]
        y = jax.lax.conv_general_dilated(
            x, w, window_strides=(1, 1), padding="VALID",
            dimension_numbers=("NCHW", "OIHW", "NCHW"),
        ) + b[None, :, None, None]
        scale = p[f"bn{i}_gamma"] / jnp.sqrt(p[f"bn{i}_var"] + BN_EPS)
        y = (y - p[f"bn{i}_mean"][None, :, None, None]) * scale[None, :, None, None] \
            + p[f"bn{i}_beta"][None, :, None, None]
        x = lrelu(y)
    x = x.reshape(x.shape[0], -1)
    x = lrelu(x @ p["fc0_w"].T + p["fc0_b"])
    x = lrelu(x @ p["fc1_w"].T + p["fc1_b"])
    x = lrelu(x @ p["fc2_w"].T + p["fc2_b"])
    x = x @ p["fc3_w"].T + p["fc3_b"]
    return x


if __name__ == "__main__":
    key = jax.random.PRNGKey(0)
    k_params, k_x = jax.random.split(key)
    params = init_params(k_params)
    ops = prepare_params(params)   # one-time: BN fold, transposes, flatten perm, bf16
    # 128*4*4 flatten implies 7x7 spatial input (7 -> 6 -> 5 -> 4 after 3 k=2 convs).
    x = jax.random.normal(k_x, (2, 2, 7, 7), dtype=jnp.float32)

    out = jax.block_until_ready(network_forward(ops, x))
    ref = jax.block_until_ready(reference_forward(params, x))

    assert out.shape == (2, 32), out.shape
    max_err = float(jnp.max(jnp.abs(out - ref)))
    # bf16 matmul inputs / f32 accumulation vs pure-f32 reference.
    assert jnp.allclose(out, ref, atol=2e-2, rtol=2e-2), max_err
    # TODO(synk): Dropout is stochastic in train mode; implemented as identity (eval).
    print("KERNEL_OK")
</pallas_src>

<mosaic_0001>
module attributes {stable_mosaic.version = 11 : i64} {
  func.func @_fused_kernel(%arg0: i32, %arg1: memref<112x8xf32, #tpu.memory_space<vmem>>, %arg2: memref<8x128xbf16, #tpu.memory_space<vmem>>, %arg3: memref<1x128xf32, #tpu.memory_space<vmem>>, %arg4: memref<4x128x128xbf16, #tpu.memory_space<vmem>>, %arg5: memref<1x128xf32, #tpu.memory_space<vmem>>, %arg6: memref<4x128x128xbf16, #tpu.memory_space<vmem>>, %arg7: memref<1x128xf32, #tpu.memory_space<vmem>>, %arg8: memref<2048x512xbf16, #tpu.memory_space<vmem>>, %arg9: memref<1x512xf32, #tpu.memory_space<vmem>>, %arg10: memref<512x256xbf16, #tpu.memory_space<vmem>>, %arg11: memref<1x256xf32, #tpu.memory_space<vmem>>, %arg12: memref<256x128xbf16, #tpu.memory_space<vmem>>, %arg13: memref<1x128xf32, #tpu.memory_space<vmem>>, %arg14: memref<128x32xbf16, #tpu.memory_space<vmem>>, %arg15: memref<1x32xf32, #tpu.memory_space<vmem>>, %arg16: memref<2x32xf32, #tpu.memory_space<vmem>>, %arg17: memref<112x128xf32, #tpu.memory_space<vmem>>, %arg18: memref<112x128xf32, #tpu.memory_space<vmem>>, %arg19: memref<112x128xf32, #tpu.memory_space<vmem>>, %arg20: memref<2x2048xf32, #tpu.memory_space<vmem>>) attributes {dimension_semantics = [#tpu.dimension_semantics<arbitrary>], iteration_bounds = array<i64: 1>, scalar_prefetch = 0 : i64, scratch_operands = 4 : i64, tpu.core_type = #tpu.core_type<tc>, window_params = [{pipeline_mode = #tpu.pipeline_mode<synchronous>, transform_indices = @transform_0, window_bounds = array<i64: 112, 8>}, {pipeline_mode = #tpu.pipeline_mode<synchronous>, transform_indices = @transform_1, window_bounds = array<i64: 8, 128>}, {pipeline_mode = #tpu.pipeline_mode<synchronous>, transform_indices = @transform_2, window_bounds = array<i64: 1, 128>}, {pipeline_mode = #tpu.pipeline_mode<synchronous>, transform_indices = @transform_3, window_bounds = array<i64: 4, 128, 128>}, {pipeline_mode = #tpu.pipeline_mode<synchronous>, transform_indices = @transform_4, window_bounds = array<i64: 1, 128>}, {pipeline_mode = #tpu.pipeline_mode<synchronous>, transform_indices = @transform_5, window_bounds = array<i64: 4, 128, 128>}, {pipeline_mode = #tpu.pipeline_mode<synchronous>, transform_indices = @transform_6, window_bounds = array<i64: 1, 128>}, {pipeline_mode = #tpu.pipeline_mode<synchronous>, transform_indices = @transform_7, window_bounds = array<i64: 2048, 512>}, {pipeline_mode = #tpu.pipeline_mode<synchronous>, transform_indices = @transform_8, window_bounds = array<i64: 1, 512>}, {pipeline_mode = #tpu.pipeline_mode<synchronous>, transform_indices = @transform_9, window_bounds = array<i64: 512, 256>}, {pipeline_mode = #tpu.pipeline_mode<synchronous>, transform_indices = @transform_10, window_bounds = array<i64: 1, 256>}, {pipeline_mode = #tpu.pipeline_mode<synchronous>, transform_indices = @transform_11, window_bounds = array<i64: 256, 128>}, {pipeline_mode = #tpu.pipeline_mode<synchronous>, transform_indices = @transform_12, window_bounds = array<i64: 1, 128>}, {pipeline_mode = #tpu.pipeline_mode<synchronous>, transform_indices = @transform_13, window_bounds = array<i64: 128, 32>}, {pipeline_mode = #tpu.pipeline_mode<synchronous>, transform_indices = @transform_14, window_bounds = array<i64: 1, 32>}, {pipeline_mode = #tpu.pipeline_mode<synchronous>, transform_indices = @transform_15, window_bounds = array<i64: 2, 32>}]} {
    %cst = arith.constant 0.000000e+00 : f32
    %0 = vector.broadcast %cst : f32 to vector<112x128xf32>
    %c0 = arith.constant 0 : index
    %c0_0 = arith.constant 0 : index
    %1 = vector.load %arg18[%c0, %c0_0] : memref<112x128xf32, #tpu.memory_space<vmem>>, vector<112x128xf32>
    tpu.vector_store %arg18[%c0, %c0_0], %0 {strides = array<i32>} : memref<112x128xf32, #tpu.memory_space<vmem>>, vector<112x128xf32>,
    %cst_1 = arith.constant 0.000000e+00 : f32
    %2 = vector.broadcast %cst_1 : f32 to vector<112x128xf32>
    %c0_2 = arith.constant 0 : index
    %c0_3 = arith.constant 0 : index
    %3 = vector.load %arg19[%c0_2, %c0_3] : memref<112x128xf32, #tpu.memory_space<vmem>>, vector<112x128xf32>
    tpu.vector_store %arg19[%c0_2, %c0_3], %2 {strides = array<i32>} : memref<112x128xf32, #tpu.memory_space<vmem>>, vector<112x128xf32>,
    %c0_4 = arith.constant 0 : index
    %c0_5 = arith.constant 0 : index
    %4 = vector.load %arg1[%c0_4, %c0_5] : memref<112x8xf32, #tpu.memory_space<vmem>>, vector<112x8xf32>
    %5 = arith.truncf %4 : vector<112x8xf32> to vector<112x8xbf16>
    %c0_6 = arith.constant 0 : index
    %c0_7 = arith.constant 0 : index
    %6 = vector.load %arg2[%c0_6, %c0_7] : memref<8x128xbf16, #tpu.memory_space<vmem>>, vector<8x128xbf16>
    %cst_8 = arith.constant dense<0.000000e+00> : vector<112x128xf32>
    %7 = tpu.matmul %5, %6, %cst_8 {dimension_numbers = #tpu.dot_dimension_numbers<[1], [0], [0], [1], [0, 0, 1, 1], [], []>} : vector<112x8xbf16>, vector<8x128xbf16>, vector<112x128xf32> -> vector<112x128xf32>
    %c0_9 = arith.constant 0 : index
    %c0_10 = arith.constant 0 : index
    %8 = vector.load %arg3[%c0_9, %c0_10] : memref<1x128xf32, #tpu.memory_space<vmem>>, vector<1x128xf32>
    %9 = vector.broadcast %8 : vector<1x128xf32> to vector<112x128xf32>
    %10 = arith.addf %7, %9 : vector<112x128xf32>
    %cst_11 = arith.constant 0.00999999977 : f32
    %11 = vector.broadcast %cst_11 : f32 to vector<112x128xf32>
    %12 = arith.mulf %11, %10 : vector<112x128xf32>
    %13 = arith.maximumf %10, %12 : vector<112x128xf32>
    %c0_12 = arith.constant 0 : index
    %c0_13 = arith.constant 0 : index
    %14 = vector.load %arg17[%c0_12, %c0_13] : memref<112x128xf32, #tpu.memory_space<vmem>>, vector<112x128xf32>
    tpu.vector_store %arg17[%c0_12, %c0_13], %13 {strides = array<i32>} : memref<112x128xf32, #tpu.memory_space<vmem>>, vector<112x128xf32>,
    %cst_14 = arith.constant 0.000000e+00 : f32
    %15 = vector.broadcast %cst_14 : f32 to vector<104x128xf32>
    %c0_15 = arith.constant 0 : index
    %c0_16 = arith.constant 0 : index
    %16 = vector.load %arg17[%c0_15, %c0_16] : memref<112x128xf32, #tpu.memory_space<vmem>>, vector<104x128xf32>
    %17 = arith.truncf %16 : vector<104x128xf32> to vector<104x128xbf16>
    %c0_17 = arith.constant 0 : index
    %c0_18 = arith.constant 0 : index
    %c0_19 = arith.constant 0 : index
    %18 = vector.load %arg4[%c0_17, %c0_18, %c0_19] : memref<4x128x128xbf16, #tpu.memory_space<vmem>>, vector<1x128x128xbf16>
    %19 = vector.shape_cast %18 : vector<1x128x128xbf16> to vector<128x128xbf16>
    %cst_20 = arith.constant dense<0.000000e+00> : vector<104x128xf32>
    %20 = tpu.matmul %17, %19, %cst_20 {dimension_numbers = #tpu.dot_dimension_numbers<[1], [0], [0], [1], [0, 0, 1, 1], [], []>} : vector<104x128xbf16>, vector<128x128xbf16>, vector<104x128xf32> -> vector<104x128xf32>
    %21 = arith.addf %15, %20 : vector<104x128xf32>
    %c1 = arith.constant 1 : index
    %c0_21 = arith.constant 0 : index
    %22 = vector.load %arg17[%c1, %c0_21] : memref<112x128xf32, #tpu.memory_space<vmem>>, vector<104x128xf32>
    %23 = arith.truncf %22 : vector<104x128xf32> to vector<104x128xbf16>
    %c1_22 = arith.constant 1 : index
    %c0_23 = arith.constant 0 : index
    %c0_24 = arith.constant 0 : index
    %24 = vector.load %arg4[%c1_22, %c0_23, %c0_24] : memref<4x128x128xbf16, #tpu.memory_space<vmem>>, vector<1x128x128xbf16>
    %25 = vector.shape_cast %24 : vector<1x128x128xbf16> to vector<128x128xbf16>
    %cst_25 = arith.constant dense<0.000000e+00> : vector<104x128xf32>
    %26 = tpu.matmul %23, %25, %cst_25 {dimension_numbers = #tpu.dot_dimension_numbers<[1], [0], [0], [1], [0, 0, 1, 1], [], []>} : vector<104x128xbf16>, vector<128x128xbf16>, vector<104x128xf32> -> vector<104x128xf32>
    %27 = arith.addf %21, %26 : vector<104x128xf32>
    %c7 = arith.constant 7 : index
    %c0_26 = arith.constant 0 : index
    %28 = vector.load %arg17[%c7, %c0_26] : memref<112x128xf32, #tpu.memory_space<vmem>>, vector<104x128xf32>
    %29 = arith.truncf %28 : vector<104x128xf32> to vector<104x128xbf16>
    %c2 = arith.constant 2 : index
    %c0_27 = arith.constant 0 : index
    %c0_28 = arith.constant 0 : index
    %30 = vector.load %arg4[%c2, %c0_27, %c0_28] : memref<4x128x128xbf16, #tpu.memory_space<vmem>>, vector<1x128x128xbf16>
    %31 = vector.shape_cast %30 : vector<1x128x128xbf16> to vector<128x128xbf16>
    %cst_29 = arith.constant dense<0.000000e+00> : vector<104x128xf32>
    %32 = tpu.matmul %29, %31, %cst_29 {dimension_numbers = #tpu.dot_dimension_numbers<[1], [0], [0], [1], [0, 0, 1, 1], [], []>} : vector<104x128xbf16>, vector<128x128xbf16>, vector<104x128xf32> -> vector<104x128xf32>
    %33 = arith.addf %27, %32 : vector<104x128xf32>
    %c8 = arith.constant 8 : index
    %c0_30 = arith.constant 0 : index
    %34 = vector.load %arg17[%c8, %c0_30] : memref<112x128xf32, #tpu.memory_space<vmem>>, vector<104x128xf32>
    %35 = arith.truncf %34 : vector<104x128xf32> to vector<104x128xbf16>
    %c3 = arith.constant 3 : index
    %c0_31 = arith.constant 0 : index
    %c0_32 = arith.constant 0 : index
    %36 = vector.load %arg4[%c3, %c0_31, %c0_32] : memref<4x128x128xbf16, #tpu.memory_space<vmem>>, vector<1x128x128xbf16>
    %37 = vector.shape_cast %36 : vector<1x128x128xbf16> to vector<128x128xbf16>
    %cst_33 = arith.constant dense<0.000000e+00> : vector<104x128xf32>
    %38 = tpu.matmul %35, %37, %cst_33 {dimension_numbers = #tpu.dot_dimension_numbers<[1], [0], [0], [1], [0, 0, 1, 1], [], []>} : vector<104x128xbf16>, vector<128x128xbf16>, vector<104x128xf32> -> vector<104x128xf32>
    %39 = arith.addf %33, %38 : vector<104x128xf32>
    %c0_34 = arith.constant 0 : index
    %c0_35 = arith.constant 0 : index
    %40 = vector.load %arg5[%c0_34, %c0_35] : memref<1x128xf32, #tpu.memory_space<vmem>>, vector<1x128xf32>
    %41 = vector.broadcast %40 : vector<1x128xf32> to vector<104x128xf32>
    %42 = arith.addf %39, %41 : vector<104x128xf32>
    %cst_36 = arith.constant 0.00999999977 : f32
    %43 = vector.broadcast %cst_36 : f32 to vector<104x128xf32>
    %44 = arith.mulf %43, %42 : vector<104x128xf32>
    %45 = arith.maximumf %42, %44 : vector<104x128xf32>
    %c0_37 = arith.constant 0 : index
    %c0_38 = arith.constant 0 : index
    %46 = vector.load %arg18[%c0_37, %c0_38] : memref<112x128xf32, #tpu.memory_space<vmem>>, vector<104x128xf32>
    tpu.vector_store %arg18[%c0_37, %c0_38], %45 {strides = array<i32>} : memref<112x128xf32, #tpu.memory_space<vmem>>, vector<104x128xf32>,
    %cst_39 = arith.constant 0.000000e+00 : f32
    %47 = vector.broadcast %cst_39 : f32 to vector<104x128xf32>
    %c0_40 = arith.constant 0 : index
    %c0_41 = arith.constant 0 : index
    %48 = vector.load %arg18[%c0_40, %c0_41] : memref<112x128xf32, #tpu.memory_space<vmem>>, vector<104x128xf32>
    %49 = arith.truncf %48 : vector<104x128xf32> to vector<104x128xbf16>
    %c0_42 = arith.constant 0 : index
    %c0_43 = arith.constant 0 : index
    %c0_44 = arith.constant 0 : index
    %50 = vector.load %arg6[%c0_42, %c0_43, %c0_44] : memref<4x128x128xbf16, #tpu.memory_space<vmem>>, vector<1x128x128xbf16>
    %51 = vector.shape_cast %50 : vector<1x128x128xbf16> to vector<128x128xbf16>
    %cst_45 = arith.constant dense<0.000000e+00> : vector<104x128xf32>
    %52 = tpu.matmul %49, %51, %cst_45 {dimension_numbers = #tpu.dot_dimension_numbers<[1], [0], [0], [1], [0, 0, 1, 1], [], []>} : vector<104x128xbf16>, vector<128x128xbf16>, vector<104x128xf32> -> vector<104x128xf32>
    %53 = arith.addf %47, %52 : vector<104x128xf32>
    %c1_46 = arith.constant 1 : index
    %c0_47 = arith.constant 0 : index
    %54 = vector.load %arg18[%c1_46, %c0_47] : memref<112x128xf32, #tpu.memory_space<vmem>>, vector<104x128xf32>
    %55 = arith.truncf %54 : vector<104x128xf32> to vector<104x128xbf16>
    %c1_48 = arith.constant 1 : index
    %c0_49 = arith.constant 0 : index
    %c0_50 = arith.constant 0 : index
    %56 = vector.load %arg6[%c1_48, %c0_49, %c0_50] : memref<4x128x128xbf16, #tpu.memory_space<vmem>>, vector<1x128x128xbf16>
    %57 = vector.shape_cast %56 : vector<1x128x128xbf16> to vector<128x128xbf16>
    %cst_51 = arith.constant dense<0.000000e+00> : vector<104x128xf32>
    %58 = tpu.matmul %55, %57, %cst_51 {dimension_numbers = #tpu.dot_dimension_numbers<[1], [0], [0], [1], [0, 0, 1, 1], [], []>} : vector<104x128xbf16>, vector<128x128xbf16>, vector<104x128xf32> -> vector<104x128xf32>
    %59 = arith.addf %53, %58 : vector<104x128xf32>
    %c7_52 = arith.constant 7 : index
    %c0_53 = arith.constant 0 : index
    %60 = vector.load %arg18[%c7_52, %c0_53] : memref<112x128xf32, #tpu.memory_space<vmem>>, vector<104x128xf32>
    %61 = arith.truncf %60 : vector<104x128xf32> to vector<104x128xbf16>
    %c2_54 = arith.constant 2 : index
    %c0_55 = arith.constant 0 : index
    %c0_56 = arith.constant 0 : index
    %62 = vector.load %arg6[%c2_54, %c0_55, %c0_56] : memref<4x128x128xbf16, #tpu.memory_space<vmem>>, vector<1x128x128xbf16>
    %63 = vector.shape_cast %62 : vector<1x128x128xbf16> to vector<128x128xbf16>
    %cst_57 = arith.constant dense<0.000000e+00> : vector<104x128xf32>
    %64 = tpu.matmul %61, %63, %cst_57 {dimension_numbers = #tpu.dot_dimension_numbers<[1], [0], [0], [1], [0, 0, 1, 1], [], []>} : vector<104x128xbf16>, vector<128x128xbf16>, vector<104x128xf32> -> vector<104x128xf32>
    %65 = arith.addf %59, %64 : vector<104x128xf32>
    %c8_58 = arith.constant 8 : index
    %c0_59 = arith.constant 0 : index
    %66 = vector.load %arg18[%c8_58, %c0_59] : memref<112x128xf32, #tpu.memory_space<vmem>>, vector<104x128xf32>
    %67 = arith.truncf %66 : vector<104x128xf32> to vector<104x128xbf16>
    %c3_60 = arith.constant 3 : index
    %c0_61 = arith.constant 0 : index
    %c0_62 = arith.constant 0 : index
    %68 = vector.load %arg6[%c3_60, %c0_61, %c0_62] : memref<4x128x128xbf16, #tpu.memory_space<vmem>>, vector<1x128x128xbf16>
    %69 = vector.shape_cast %68 : vector<1x128x128xbf16> to vector<128x128xbf16>
    %cst_63 = arith.constant dense<0.000000e+00> : vector<104x128xf32>
    %70 = tpu.matmul %67, %69, %cst_63 {dimension_numbers = #tpu.dot_dimension_numbers<[1], [0], [0], [1], [0, 0, 1, 1], [], []>} : vector<104x128xbf16>, vector<128x128xbf16>, vector<104x128xf32> -> vector<104x128xf32>
    %71 = arith.addf %65, %70 : vector<104x128xf32>
    %c0_64 = arith.constant 0 : index
    %c0_65 = arith.constant 0 : index
    %72 = vector.load %arg7[%c0_64, %c0_65] : memref<1x128xf32, #tpu.memory_space<vmem>>, vector<1x128xf32>
    %73 = vector.broadcast %72 : vector<1x128xf32> to vector<104x128xf32>
    %74 = arith.addf %71, %73 : vector<104x128xf32>
    %cst_66 = arith.constant 0.00999999977 : f32
    %75 = vector.broadcast %cst_66 : f32 to vector<104x128xf32>
    %76 = arith.mulf %75, %74 : vector<104x128xf32>
    %77 = arith.maximumf %74, %76 : vector<104x128xf32>
    %c0_67 = arith.constant 0 : index
    %c0_68 = arith.constant 0 : index
    %78 = vector.load %arg19[%c0_67, %c0_68] : memref<112x128xf32, #tpu.memory_space<vmem>>, vector<104x128xf32>
    tpu.vector_store %arg19[%c0_67, %c0_68], %77 {strides = array<i32>} : memref<112x128xf32, #tpu.memory_space<vmem>>, vector<104x128xf32>,
    %c0_69 = arith.constant 0 : index
    %c0_70 = arith.constant 0 : index
    %79 = vector.load %arg19[%c0_69, %c0_70] : memref<112x128xf32, #tpu.memory_space<vmem>>, vector<1x128xf32>
    %c0_71 = arith.constant 0 : index
    %c0_72 = arith.constant 0 : index
    %80 = vector.load %arg20[%c0_71, %c0_72] : memref<2x2048xf32, #tpu.memory_space<vmem>>, vector<1x128xf32>
    tpu.vector_store %arg20[%c0_71, %c0_72], %79 {strides = array<i32>} : memref<2x2048xf32, #tpu.memory_space<vmem>>, vector<1x128xf32>,
    %c1_73 = arith.constant 1 : index
    %c0_74 = arith.constant 0 : index
    %81 = vector.load %arg19[%c1_73, %c0_74] : memref<112x128xf32, #tpu.memory_space<vmem>>, vector<1x128xf32>
    %c0_75 = arith.constant 0 : index
    %c128 = arith.constant 128 : index
    %82 = vector.load %arg20[%c0_75, %c128] : memref<2x2048xf32, #tpu.memory_space<vmem>>, vector<1x128xf32>
    tpu.vector_store %arg20[%c0_75, %c128], %81 {strides = array<i32>} : memref<2x2048xf32, #tpu.memory_space<vmem>>, vector<1x128xf32>,
    %c2_76 = arith.constant 2 : index
    %c0_77 = arith.constant 0 : index
    %83 = vector.load %arg19[%c2_76, %c0_77] : memref<112x128xf32, #tpu.memory_space<vmem>>, vector<1x128xf32>
    %c0_78 = arith.constant 0 : index
    %c256 = arith.constant 256 : index
    %84 = vector.load %arg20[%c0_78, %c256] : memref<2x2048xf32, #tpu.memory_space<vmem>>, vector<1x128xf32>
    tpu.vector_store %arg20[%c0_78, %c256], %83 {strides = array<i32>} : memref<2x2048xf32, #tpu.memory_space<vmem>>, vector<1x128xf32>,
    %c3_79 = arith.constant 3 : index
    %c0_80 = arith.constant 0 : index
    %85 = vector.load %arg19[%c3_79, %c0_80] : memref<112x128xf32, #tpu.memory_space<vmem>>, vector<1x128xf32>
    %c0_81 = arith.constant 0 : index
    %c384 = arith.constant 384 : index
    %86 = vector.load %arg20[%c0_81, %c384] : memref<2x2048xf32, #tpu.memory_space<vmem>>, vector<1x128xf32>
    tpu.vector_store %arg20[%c0_81, %c384], %85 {strides = array<i32>} : memref<2x2048xf32, #tpu.memory_space<vmem>>, vector<1x128xf32>,
    %c7_82 = arith.constant 7 : index
    %c0_83 = arith.constant 0 : index
    %87 = vector.load %arg19[%c7_82, %c0_83] : memref<112x128xf32, #tpu.memory_space<vmem>>, vector<1x128xf32>
    %c0_84 = arith.constant 0 : index
    %c512 = arith.constant 512 : index
    %88 = vector.load %arg20[%c0_84, %c512] : memref<2x2048xf32, #tpu.memory_space<vmem>>, vector<1x128xf32>
    tpu.vector_store %arg20[%c0_84, %c512], %87 {strides = array<i32>} : memref<2x2048xf32, #tpu.memory_space<vmem>>, vector<1x128xf32>,
    %c8_85 = arith.constant 8 : index
    %c0_86 = arith.constant 0 : index
    %89 = vector.load %arg19[%c8_85, %c0_86] : memref<112x128xf32, #tpu.memory_space<vmem>>, vector<1x128xf32>
    %c0_87 = arith.constant 0 : index
    %c640 = arith.constant 640 : index
    %90 = vector.load %arg20[%c0_87, %c640] : memref<2x2048xf32, #tpu.memory_space<vmem>>, vector<1x128xf32>
    tpu.vector_store %arg20[%c0_87, %c640], %89 {strides = array<i32>} : memref<2x2048xf32, #tpu.memory_space<vmem>>, vector<1x128xf32>,
    %c9 = arith.constant 9 : index
    %c0_88 = arith.constant 0 : index
    %91 = vector.load %arg19[%c9, %c0_88] : memref<112x128xf32, #tpu.memory_space<vmem>>, vector<1x128xf32>
    %c0_89 = arith.constant 0 : index
    %c768 = arith.constant 768 : index
    %92 = vector.load %arg20[%c0_89, %c768] : memref<2x2048xf32, #tpu.memory_space<vmem>>, vector<1x128xf32>
    tpu.vector_store %arg20[%c0_89, %c768], %91 {strides = array<i32>} : memref<2x2048xf32, #tpu.memory_space<vmem>>, vector<1x128xf32>,
    %c10 = arith.constant 10 : index
    %c0_90 = arith.constant 0 : index
    %93 = vector.load %arg19[%c10, %c0_90] : memref<112x128xf32, #tpu.memory_space<vmem>>, vector<1x128xf32>
    %c0_91 = arith.constant 0 : index
    %c896 = arith.constant 896 : index
    %94 = vector.load %arg20[%c0_91, %c896] : memref<2x2048xf32, #tpu.memory_space<vmem>>, vector<1x128xf32>
    tpu.vector_store %arg20[%c0_91, %c896], %93 {strides = array<i32>} : memref<2x2048xf32, #tpu.memory_space<vmem>>, vector<1x128xf32>,
    %c14 = arith.constant 14 : index
    %c0_92 = arith.constant 0 : index
    %95 = vector.load %arg19[%c14, %c0_92] : memref<112x128xf32, #tpu.memory_space<vmem>>, vector<1x128xf32>
    %c0_93 = arith.constant 0 : index
    %c1024 = arith.constant 1024 : index
    %96 = vector.load %arg20[%c0_93, %c1024] : memref<2x2048xf32, #tpu.memory_space<vmem>>, vector<1x128xf32>
    tpu.vector_store %arg20[%c0_93, %c1024], %95 {strides = array<i32>} : memref<2x2048xf32, #tpu.memory_space<vmem>>, vector<1x128xf32>,
    %c15 = arith.constant 15 : index
    %c0_94 = arith.constant 0 : index
    %97 = vector.load %arg19[%c15, %c0_94] : memref<112x128xf32, #tpu.memory_space<vmem>>, vector<1x128xf32>
    %c0_95 = arith.constant 0 : index
    %c1152 = arith.constant 1152 : index
    %98 = vector.load %arg20[%c0_95, %c1152] : memref<2x2048xf32, #tpu.memory_space<vmem>>, vector<1x128xf32>
    tpu.vector_store %arg20[%c0_95, %c1152], %97 {strides = array<i32>} : memref<2x2048xf32, #tpu.memory_space<vmem>>, vector<1x128xf32>,
    %c16 = arith.constant 16 : index
    %c0_96 = arith.constant 0 : index
    %99 = vector.load %arg19[%c16, %c0_96] : memref<112x128xf32, #tpu.memory_space<vmem>>, vector<1x128xf32>
    %c0_97 = arith.constant 0 : index
    %c1280 = arith.constant 1280 : index
    %100 = vector.load %arg20[%c0_97, %c1280] : memref<2x2048xf32, #tpu.memory_space<vmem>>, vector<1x128xf32>
    tpu.vector_store %arg20[%c0_97, %c1280], %99 {strides = array<i32>} : memref<2x2048xf32, #tpu.memory_space<vmem>>, vector<1x128xf32>,
    %c17 = arith.constant 17 : index
    %c0_98 = arith.constant 0 : index
    %101 = vector.load %arg19[%c17, %c0_98] : memref<112x128xf32, #tpu.memory_space<vmem>>, vector<1x128xf32>
    %c0_99 = arith.constant 0 : index
    %c1408 = arith.constant 1408 : index
    %102 = vector.load %arg20[%c0_99, %c1408] : memref<2x2048xf32, #tpu.memory_space<vmem>>, vector<1x128xf32>
    tpu.vector_store %arg20[%c0_99, %c1408], %101 {strides = array<i32>} : memref<2x2048xf32, #tpu.memory_space<vmem>>, vector<1x128xf32>,
    %c21 = arith.constant 21 : index
    %c0_100 = arith.constant 0 : index
    %103 = vector.load %arg19[%c21, %c0_100] : memref<112x128xf32, #tpu.memory_space<vmem>>, vector<1x128xf32>
    %c0_101 = arith.constant 0 : index
    %c1536 = arith.constant 1536 : index
    %104 = vector.load %arg20[%c0_101, %c1536] : memref<2x2048xf32, #tpu.memory_space<vmem>>, vector<1x128xf32>
    tpu.vector_store %arg20[%c0_101, %c1536], %103 {strides = array<i32>} : memref<2x2048xf32, #tpu.memory_space<vmem>>, vector<1x128xf32>,
    %c22 = arith.constant 22 : index
    %c0_102 = arith.constant 0 : index
    %105 = vector.load %arg19[%c22, %c0_102] : memref<112x128xf32, #tpu.memory_space<vmem>>, vector<1x128xf32>
    %c0_103 = arith.constant 0 : index
    %c1664 = arith.constant 1664 : index
    %106 = vector.load %arg20[%c0_103, %c1664] : memref<2x2048xf32, #tpu.memory_space<vmem>>, vector<1x128xf32>
    tpu.vector_store %arg20[%c0_103, %c1664], %105 {strides = array<i32>} : memref<2x2048xf32, #tpu.memory_space<vmem>>, vector<1x128xf32>,
    %c23 = arith.constant 23 : index
    %c0_104 = arith.constant 0 : index
    %107 = vector.load %arg19[%c23, %c0_104] : memref<112x128xf32, #tpu.memory_space<vmem>>, vector<1x128xf32>
    %c0_105 = arith.constant 0 : index
    %c1792 = arith.constant 1792 : index
    %108 = vector.load %arg20[%c0_105, %c1792] : memref<2x2048xf32, #tpu.memory_space<vmem>>, vector<1x128xf32>
    tpu.vector_store %arg20[%c0_105, %c1792], %107 {strides = array<i32>} : memref<2x2048xf32, #tpu.memory_space<vmem>>, vector<1x128xf32>,
    %c24 = arith.constant 24 : index
    %c0_106 = arith.constant 0 : index
    %109 = vector.load %arg19[%c24, %c0_106] : memref<112x128xf32, #tpu.memory_space<vmem>>, vector<1x128xf32>
    %c0_107 = arith.constant 0 : index
    %c1920 = arith.constant 1920 : index
    %110 = vector.load %arg20[%c0_107, %c1920] : memref<2x2048xf32, #tpu.memory_space<vmem>>, vector<1x128xf32>
    tpu.vector_store %arg20[%c0_107, %c1920], %109 {strides = array<i32>} : memref<2x2048xf32, #tpu.memory_space<vmem>>, vector<1x128xf32>,
    %c49 = arith.constant 49 : index
    %c0_108 = arith.constant 0 : index
    %111 = vector.load %arg19[%c49, %c0_108] : memref<112x128xf32, #tpu.memory_space<vmem>>, vector<1x128xf32>
    %c1_109 = arith.constant 1 : index
    %c0_110 = arith.constant 0 : index
    %112 = vector.load %arg20[%c1_109, %c0_110] : memref<2x2048xf32, #tpu.memory_space<vmem>>, vector<1x128xf32>
    tpu.vector_store %arg20[%c1_109, %c0_110], %111 {strides = array<i32>} : memref<2x2048xf32, #tpu.memory_space<vmem>>, vector<1x128xf32>,
    %c50 = arith.constant 50 : index
    %c0_111 = arith.constant 0 : index
    %113 = vector.load %arg19[%c50, %c0_111] : memref<112x128xf32, #tpu.memory_space<vmem>>, vector<1x128xf32>
    %c1_112 = arith.constant 1 : index
    %c128_113 = arith.constant 128 : index
    %114 = vector.load %arg20[%c1_112, %c128_113] : memref<2x2048xf32, #tpu.memory_space<vmem>>, vector<1x128xf32>
    tpu.vector_store %arg20[%c1_112, %c128_113], %113 {strides = array<i32>} : memref<2x2048xf32, #tpu.memory_space<vmem>>, vector<1x128xf32>,
    %c51 = arith.constant 51 : index
    %c0_114 = arith.constant 0 : index
    %115 = vector.load %arg19[%c51, %c0_114] : memref<112x128xf32, #tpu.memory_space<vmem>>, vector<1x128xf32>
    %c1_115 = arith.constant 1 : index
    %c256_116 = arith.constant 256 : index
    %116 = vector.load %arg20[%c1_115, %c256_116] : memref<2x2048xf32, #tpu.memory_space<vmem>>, vector<1x128xf32>
    tpu.vector_store %arg20[%c1_115, %c256_116], %115 {strides = array<i32>} : memref<2x2048xf32, #tpu.memory_space<vmem>>, vector<1x128xf32>,
    %c52 = arith.constant 52 : index
    %c0_117 = arith.constant 0 : index
    %117 = vector.load %arg19[%c52, %c0_117] : memref<112x128xf32, #tpu.memory_space<vmem>>, vector<1x128xf32>
    %c1_118 = arith.constant 1 : index
    %c384_119 = arith.constant 384 : index
    %118 = vector.load %arg20[%c1_118, %c384_119] : memref<2x2048xf32, #tpu.memory_space<vmem>>, vector<1x128xf32>
    tpu.vector_store %arg20[%c1_118, %c384_119], %117 {strides = array<i32>} : memref<2x2048xf32, #tpu.memory_space<vmem>>, vector<1x128xf32>,
    %c56 = arith.constant 56 : index
    %c0_120 = arith.constant 0 : index
    %119 = vector.load %arg19[%c56, %c0_120] : memref<112x128xf32, #tpu.memory_space<vmem>>, vector<1x128xf32>
    %c1_121 = arith.constant 1 : index
    %c512_122 = arith.constant 512 : index
    %120 = vector.load %arg20[%c1_121, %c512_122] : memref<2x2048xf32, #tpu.memory_space<vmem>>, vector<1x128xf32>
    tpu.vector_store %arg20[%c1_121, %c512_122], %119 {strides = array<i32>} : memref<2x2048xf32, #tpu.memory_space<vmem>>, vector<1x128xf32>,
    %c57 = arith.constant 57 : index
    %c0_123 = arith.constant 0 : index
    %121 = vector.load %arg19[%c57, %c0_123] : memref<112x128xf32, #tpu.memory_space<vmem>>, vector<1x128xf32>
    %c1_124 = arith.constant 1 : index
    %c640_125 = arith.constant 640 : index
    %122 = vector.load %arg20[%c1_124, %c640_125] : memref<2x2048xf32, #tpu.memory_space<vmem>>, vector<1x128xf32>
    tpu.vector_store %arg20[%c1_124, %c640_125], %121 {strides = array<i32>} : memref<2x2048xf32, #tpu.memory_space<vmem>>, vector<1x128xf32>,
    %c58 = arith.constant 58 : index
    %c0_126 = arith.constant 0 : index
    %123 = vector.load %arg19[%c58, %c0_126] : memref<112x128xf32, #tpu.memory_space<vmem>>, vector<1x128xf32>
    %c1_127 = arith.constant 1 : index
    %c768_128 = arith.constant 768 : index
    %124 = vector.load %arg20[%c1_127, %c768_128] : memref<2x2048xf32, #tpu.memory_space<vmem>>, vector<1x128xf32>
    tpu.vector_store %arg20[%c1_127, %c768_128], %123 {strides = array<i32>} : memref<2x2048xf32, #tpu.memory_space<vmem>>, vector<1x128xf32>,
    %c59 = arith.constant 59 : index
    %c0_129 = arith.constant 0 : index
    %125 = vector.load %arg19[%c59, %c0_129] : memref<112x128xf32, #tpu.memory_space<vmem>>, vector<1x128xf32>
    %c1_130 = arith.constant 1 : index
    %c896_131 = arith.constant 896 : index
    %126 = vector.load %arg20[%c1_130, %c896_131] : memref<2x2048xf32, #tpu.memory_space<vmem>>, vector<1x128xf32>
    tpu.vector_store %arg20[%c1_130, %c896_131], %125 {strides = array<i32>} : memref<2x2048xf32, #tpu.memory_space<vmem>>, vector<1x128xf32>,
    %c63 = arith.constant 63 : index
    %c0_132 = arith.constant 0 : index
    %127 = vector.load %arg19[%c63, %c0_132] : memref<112x128xf32, #tpu.memory_space<vmem>>, vector<1x128xf32>
    %c1_133 = arith.constant 1 : index
    %c1024_134 = arith.constant 1024 : index
    %128 = vector.load %arg20[%c1_133, %c1024_134] : memref<2x2048xf32, #tpu.memory_space<vmem>>, vector<1x128xf32>
    tpu.vector_store %arg20[%c1_133, %c1024_134], %127 {strides = array<i32>} : memref<2x2048xf32, #tpu.memory_space<vmem>>, vector<1x128xf32>,
    %c64 = arith.constant 64 : index
    %c0_135 = arith.constant 0 : index
    %129 = vector.load %arg19[%c64, %c0_135] : memref<112x128xf32, #tpu.memory_space<vmem>>, vector<1x128xf32>
    %c1_136 = arith.constant 1 : index
    %c1152_137 = arith.constant 1152 : index
    %130 = vector.load %arg20[%c1_136, %c1152_137] : memref<2x2048xf32, #tpu.memory_space<vmem>>, vector<1x128xf32>
    tpu.vector_store %arg20[%c1_136, %c1152_137], %129 {strides = array<i32>} : memref<2x2048xf32, #tpu.memory_space<vmem>>, vector<1x128xf32>,
    %c65 = arith.constant 65 : index
    %c0_138 = arith.constant 0 : index
    %131 = vector.load %arg19[%c65, %c0_138] : memref<112x128xf32, #tpu.memory_space<vmem>>, vector<1x128xf32>
    %c1_139 = arith.constant 1 : index
    %c1280_140 = arith.constant 1280 : index
    %132 = vector.load %arg20[%c1_139, %c1280_140] : memref<2x2048xf32, #tpu.memory_space<vmem>>, vector<1x128xf32>
    tpu.vector_store %arg20[%c1_139, %c1280_140], %131 {strides = array<i32>} : memref<2x2048xf32, #tpu.memory_space<vmem>>, vector<1x128xf32>,
    %c66 = arith.constant 66 : index
    %c0_141 = arith.constant 0 : index
    %133 = vector.load %arg19[%c66, %c0_141] : memref<112x128xf32, #tpu.memory_space<vmem>>, vector<1x128xf32>
    %c1_142 = arith.constant 1 : index
    %c1408_143 = arith.constant 1408 : index
    %134 = vector.load %arg20[%c1_142, %c1408_143] : memref<2x2048xf32, #tpu.memory_space<vmem>>, vector<1x128xf32>
    tpu.vector_store %arg20[%c1_142, %c1408_143], %133 {strides = array<i32>} : memref<2x2048xf32, #tpu.memory_space<vmem>>, vector<1x128xf32>,
    %c70 = arith.constant 70 : index
    %c0_144 = arith.constant 0 : index
    %135 = vector.load %arg19[%c70, %c0_144] : memref<112x128xf32, #tpu.memory_space<vmem>>, vector<1x128xf32>
    %c1_145 = arith.constant 1 : index
    %c1536_146 = arith.constant 1536 : index
    %136 = vector.load %arg20[%c1_145, %c1536_146] : memref<2x2048xf32, #tpu.memory_space<vmem>>, vector<1x128xf32>
    tpu.vector_store %arg20[%c1_145, %c1536_146], %135 {strides = array<i32>} : memref<2x2048xf32, #tpu.memory_space<vmem>>, vector<1x128xf32>,
    %c71 = arith.constant 71 : index
    %c0_147 = arith.constant 0 : index
    %137 = vector.load %arg19[%c71, %c0_147] : memref<112x128xf32, #tpu.memory_space<vmem>>, vector<1x128xf32>
    %c1_148 = arith.constant 1 : index
    %c1664_149 = arith.constant 1664 : index
    %138 = vector.load %arg20[%c1_148, %c1664_149] : memref<2x2048xf32, #tpu.memory_space<vmem>>, vector<1x128xf32>
    tpu.vector_store %arg20[%c1_148, %c1664_149], %137 {strides = array<i32>} : memref<2x2048xf32, #tpu.memory_space<vmem>>, vector<1x128xf32>,
    %c72 = arith.constant 72 : index
    %c0_150 = arith.constant 0 : index
    %139 = vector.load %arg19[%c72, %c0_150] : memref<112x128xf32, #tpu.memory_space<vmem>>, vector<1x128xf32>
    %c1_151 = arith.constant 1 : index
    %c1792_152 = arith.constant 1792 : index
    %140 = vector.load %arg20[%c1_151, %c1792_152] : memref<2x2048xf32, #tpu.memory_space<vmem>>, vector<1x128xf32>
    tpu.vector_store %arg20[%c1_151, %c1792_152], %139 {strides = array<i32>} : memref<2x2048xf32, #tpu.memory_space<vmem>>, vector<1x128xf32>,
    %c73 = arith.constant 73 : index
    %c0_153 = arith.constant 0 : index
    %141 = vector.load %arg19[%c73, %c0_153] : memref<112x128xf32, #tpu.memory_space<vmem>>, vector<1x128xf32>
    %c1_154 = arith.constant 1 : index
    %c1920_155 = arith.constant 1920 : index
    %142 = vector.load %arg20[%c1_154, %c1920_155] : memref<2x2048xf32, #tpu.memory_space<vmem>>, vector<1x128xf32>
    tpu.vector_store %arg20[%c1_154, %c1920_155], %141 {strides = array<i32>} : memref<2x2048xf32, #tpu.memory_space<vmem>>, vector<1x128xf32>,
    %c0_156 = arith.constant 0 : index
    %c0_157 = arith.constant 0 : index
    %143 = vector.load %arg20[%c0_156, %c0_157] : memref<2x2048xf32, #tpu.memory_space<vmem>>, vector<2x2048xf32>
    %144 = arith.truncf %143 : vector<2x2048xf32> to vector<2x2048xbf16>
    %c0_158 = arith.constant 0 : index
    %c0_159 = arith.constant 0 : index
    %145 = vector.load %arg8[%c0_158, %c0_159] : memref<2048x512xbf16, #tpu.memory_space<vmem>>, vector<2048x512xbf16>
    %cst_160 = arith.constant dense<0.000000e+00> : vector<2x512xf32>
    %146 = tpu.matmul %144, %145, %cst_160 {dimension_numbers = #tpu.dot_dimension_numbers<[1], [0], [0], [1], [0, 0, 1, 1], [], []>} : vector<2x2048xbf16>, vector<2048x512xbf16>, vector<2x512xf32> -> vector<2x512xf32>
    %c0_161 = arith.constant 0 : index
    %c0_162 = arith.constant 0 : index
    %147 = vector.load %arg9[%c0_161, %c0_162] : memref<1x512xf32, #tpu.memory_space<vmem>>, vector<1x512xf32>
    %148 = vector.broadcast %147 : vector<1x512xf32> to vector<2x512xf32>
    %149 = arith.addf %146, %148 : vector<2x512xf32>
    %cst_163 = arith.constant 0.00999999977 : f32
    %150 = vector.broadcast %cst_163 : f32 to vector<2x512xf32>
    %151 = arith.mulf %150, %149 : vector<2x512xf32>
    %152 = arith.maximumf %149, %151 : vector<2x512xf32>
    %153 = arith.truncf %152 : vector<2x512xf32> to vector<2x512xbf16>
    %c0_164 = arith.constant 0 : index
    %c0_165 = arith.constant 0 : index
    %154 = vector.load %arg10[%c0_164, %c0_165] : memref<512x256xbf16, #tpu.memory_space<vmem>>, vector<512x256xbf16>
    %cst_166 = arith.constant dense<0.000000e+00> : vector<2x256xf32>
    %155 = tpu.matmul %153, %154, %cst_166 {dimension_numbers = #tpu.dot_dimension_numbers<[1], [0], [0], [1], [0, 0, 1, 1], [], []>} : vector<2x512xbf16>, vector<512x256xbf16>, vector<2x256xf32> -> vector<2x256xf32>
    %c0_167 = arith.constant 0 : index
    %c0_168 = arith.constant 0 : index
    %156 = vector.load %arg11[%c0_167, %c0_168] : memref<1x256xf32, #tpu.memory_space<vmem>>, vector<1x256xf32>
    %157 = vector.broadcast %156 : vector<1x256xf32> to vector<2x256xf32>
    %158 = arith.addf %155, %157 : vector<2x256xf32>
    %cst_169 = arith.constant 0.00999999977 : f32
    %159 = vector.broadcast %cst_169 : f32 to vector<2x256xf32>
    %160 = arith.mulf %159, %158 : vector<2x256xf32>
    %161 = arith.maximumf %158, %160 : vector<2x256xf32>
    %162 = arith.truncf %161 : vector<2x256xf32> to vector<2x256xbf16>
    %c0_170 = arith.constant 0 : index
    %c0_171 = arith.constant 0 : index
    %163 = vector.load %arg12[%c0_170, %c0_171] : memref<256x128xbf16, #tpu.memory_space<vmem>>, vector<256x128xbf16>
    %cst_172 = arith.constant dense<0.000000e+00> : vector<2x128xf32>
    %164 = tpu.matmul %162, %163, %cst_172 {dimension_numbers = #tpu.dot_dimension_numbers<[1], [0], [0], [1], [0, 0, 1, 1], [], []>} : vector<2x256xbf16>, vector<256x128xbf16>, vector<2x128xf32> -> vector<2x128xf32>
    %c0_173 = arith.constant 0 : index
    %c0_174 = arith.constant 0 : index
    %165 = vector.load %arg13[%c0_173, %c0_174] : memref<1x128xf32, #tpu.memory_space<vmem>>, vector<1x128xf32>
    %166 = vector.broadcast %165 : vector<1x128xf32> to vector<2x128xf32>
    %167 = arith.addf %164, %166 : vector<2x128xf32>
    %cst_175 = arith.constant 0.00999999977 : f32
    %168 = vector.broadcast %cst_175 : f32 to vector<2x128xf32>
    %169 = arith.mulf %168, %167 : vector<2x128xf32>
    %170 = arith.maximumf %167, %169 : vector<2x128xf32>
    %171 = arith.truncf %170 : vector<2x128xf32> to vector<2x128xbf16>
    %c0_176 = arith.constant 0 : index
    %c0_177 = arith.constant 0 : index
    %172 = vector.load %arg14[%c0_176, %c0_177] : memref<128x32xbf16, #tpu.memory_space<vmem>>, vector<128x32xbf16>
    %cst_178 = arith.constant dense<0.000000e+00> : vector<2x32xf32>
    %173 = tpu.matmul %171, %172, %cst_178 {dimension_numbers = #tpu.dot_dimension_numbers<[1], [0], [0], [1], [0, 0, 1, 1], [], []>} : vector<2x128xbf16>, vector<128x32xbf16>, vector<2x32xf32> -> vector<2x32xf32>
    %c0_179 = arith.constant 0 : index
    %c0_180 = arith.constant 0 : index
    %174 = vector.load %arg15[%c0_179, %c0_180] : memref<1x32xf32, #tpu.memory_space<vmem>>, vector<1x32xf32>
    %175 = vector.broadcast %174 : vector<1x32xf32> to vector<2x32xf32>
    %176 = arith.addf %173, %175 : vector<2x32xf32>
    %c0_181 = arith.constant 0 : index
    %c0_182 = arith.constant 0 : index
    %177 = vector.load %arg16[%c0_181, %c0_182] : memref<2x32xf32, #tpu.memory_space<vmem>>, vector<2x32xf32>
    tpu.vector_store %arg16[%c0_181, %c0_182], %176 {strides = array<i32>} : memref<2x32xf32, #tpu.memory_space<vmem>>, vector<2x32xf32>,
    return
  }
  func.func @transform_0(%arg0: i32) -> (i32, i32) {
    %c0_i32 = arith.constant 0 : i32
    %c0_i32_0 = arith.constant 0 : i32
    %c0_i32_1 = arith.constant 0 : i32
    return %c0_i32, %c0_i32_0 : i32, i32
  }
  func.func @transform_1(%arg0: i32) -> (i32, i32) {
    %c0_i32 = arith.constant 0 : i32
    %c0_i32_0 = arith.constant 0 : i32
    %c0_i32_1 = arith.constant 0 : i32
    return %c0_i32, %c0_i32_0 : i32, i32
  }
  func.func @transform_2(%arg0: i32) -> (i32, i32) {
    %c0_i32 = arith.constant 0 : i32
    %c0_i32_0 = arith.constant 0 : i32
    %c0_i32_1 = arith.constant 0 : i32
    return %c0_i32, %c0_i32_0 : i32, i32
  }
  func.func @transform_3(%arg0: i32) -> (i32, i32, i32) {
    %c0_i32 = arith.constant 0 : i32
    %c0_i32_0 = arith.constant 0 : i32
    %c0_i32_1 = arith.constant 0 : i32
    %c0_i32_2 = arith.constant 0 : i32
    return %c0_i32, %c0_i32_0, %c0_i32_1 : i32, i32, i32
  }
  func.func @transform_4(%arg0: i32) -> (i32, i32) {
    %c0_i32 = arith.constant 0 : i32
    %c0_i32_0 = arith.constant 0 : i32
    %c0_i32_1 = arith.constant 0 : i32
    return %c0_i32, %c0_i32_0 : i32, i32
  }
  func.func @transform_5(%arg0: i32) -> (i32, i32, i32) {
    %c0_i32 = arith.constant 0 : i32
    %c0_i32_0 = arith.constant 0 : i32
    %c0_i32_1 = arith.constant 0 : i32
    %c0_i32_2 = arith.constant 0 : i32
    return %c0_i32, %c0_i32_0, %c0_i32_1 : i32, i32, i32
  }
  func.func @transform_6(%arg0: i32) -> (i32, i32) {
    %c0_i32 = arith.constant 0 : i32
    %c0_i32_0 = arith.constant 0 : i32
    %c0_i32_1 = arith.constant 0 : i32
    return %c0_i32, %c0_i32_0 : i32, i32
  }
  func.func @transform_7(%arg0: i32) -> (i32, i32) {
    %c0_i32 = arith.constant 0 : i32
    %c0_i32_0 = arith.constant 0 : i32
    %c0_i32_1 = arith.constant 0 : i32
    return %c0_i32, %c0_i32_0 : i32, i32
  }
  func.func @transform_8(%arg0: i32) -> (i32, i32) {
    %c0_i32 = arith.constant 0 : i32
    %c0_i32_0 = arith.constant 0 : i32
    %c0_i32_1 = arith.constant 0 : i32
    return %c0_i32, %c0_i32_0 : i32, i32
  }
  func.func @transform_9(%arg0: i32) -> (i32, i32) {
    %c0_i32 = arith.constant 0 : i32
    %c0_i32_0 = arith.constant 0 : i32
    %c0_i32_1 = arith.constant 0 : i32
    return %c0_i32, %c0_i32_0 : i32, i32
  }
  func.func @transform_10(%arg0: i32) -> (i32, i32) {
    %c0_i32 = arith.constant 0 : i32
    %c0_i32_0 = arith.constant 0 : i32
    %c0_i32_1 = arith.constant 0 : i32
    return %c0_i32, %c0_i32_0 : i32, i32
  }
  func.func @transform_11(%arg0: i32) -> (i32, i32) {
    %c0_i32 = arith.constant 0 : i32
    %c0_i32_0 = arith.constant 0 : i32
    %c0_i32_1 = arith.constant 0 : i32
    return %c0_i32, %c0_i32_0 : i32, i32
  }
  func.func @transform_12(%arg0: i32) -> (i32, i32) {
    %c0_i32 = arith.constant 0 : i32
    %c0_i32_0 = arith.constant 0 : i32
    %c0_i32_1 = arith.constant 0 : i32
    return %c0_i32, %c0_i32_0 : i32, i32
  }
  func.func @transform_13(%arg0: i32) -> (i32, i32) {
    %c0_i32 = arith.constant 0 : i32
    %c0_i32_0 = arith.constant 0 : i32
    %c0_i32_1 = arith.constant 0 : i32
    return %c0_i32, %c0_i32_0 : i32, i32
  }
  func.func @transform_14(%arg0: i32) -> (i32, i32) {
    %c0_i32 = arith.constant 0 : i32
    %c0_i32_0 = arith.constant 0 : i32
    %c0_i32_1 = arith.constant 0 : i32
    return %c0_i32, %c0_i32_0 : i32, i32
  }
  func.func @transform_15(%arg0: i32) -> (i32, i32) {
    %c0_i32 = arith.constant 0 : i32
    %c0_i32_0 = arith.constant 0 : i32
    %c0_i32_1 = arith.constant 0 : i32
    return %c0_i32, %c0_i32_0 : i32, i32
  }
}

</mosaic_0001>

<llo_original>
// kernel: network_forward.1
$region0: #{network_forward.1}
  #allocation0 [shape = 'u32[]', space=smem, size = 0x4, offset = 0x4, fixed_abs, tag = 'smem constant byte address 0x4 - core index']
  #allocation1 [shape = 'u32[144,128]{1,0:T(1,128)}', space=vmem, size = 0x12000, scoped, tag = 'internal scratch']
  #allocation2 [shape = 'f32[112,128]{1,0:T(8,128)}', space=vmem, size = 0xe000, scoped, tag = 'scratch operand']
  #allocation3 [shape = 'f32[112,128]{1,0:T(8,128)}', space=vmem, size = 0xe000, scoped, tag = 'scratch operand']
  #allocation4 [shape = 'f32[112,128]{1,0:T(8,128)}', space=vmem, size = 0xe000, scoped, tag = 'scratch operand']
  #allocation5 [shape = 'f32[2,2048]{1,0:T(2,128)}', space=vmem, size = 0x4000, scoped, tag = 'scratch operand']
  %s0 = inlined_call_operand.vmem [shape: f32[112,8], index: 0, kind: input, shape index: {}]
  %s1 = inlined_call_operand.hbm [shape: bf16[8,128], index: 1, kind: input, shape index: {}]
  %s2 = inlined_call_operand.hbm [shape: f32[1,128], index: 2, kind: input, shape index: {}]
  %s3 = inlined_call_operand.hbm [shape: bf16[4,128,128], index: 3, kind: input, shape index: {}]
  %s4 = inlined_call_operand.hbm [shape: f32[1,128], index: 4, kind: input, shape index: {}]
  %s5 = inlined_call_operand.hbm [shape: bf16[4,128,128], index: 5, kind: input, shape index: {}]
  %s6 = inlined_call_operand.hbm [shape: f32[1,128], index: 6, kind: input, shape index: {}]
  %s7 = inlined_call_operand.hbm [shape: bf16[2048,512], index: 7, kind: input, shape index: {}]
  %s8 = inlined_call_operand.hbm [shape: f32[1,512], index: 8, kind: input, shape index: {}]
  %s9 = inlined_call_operand.hbm [shape: bf16[512,256], index: 9, kind: input, shape index: {}]
  %s10 = inlined_call_operand.hbm [shape: f32[1,256], index: 10, kind: input, shape index: {}]
  %s11 = inlined_call_operand.hbm [shape: bf16[256,128], index: 11, kind: input, shape index: {}]
  %s12 = inlined_call_operand.hbm [shape: f32[1,128], index: 12, kind: input, shape index: {}]
  %s13 = inlined_call_operand.vmem [shape: bf16[128,32], index: 13, kind: input, shape index: {}]
  %s14 = inlined_call_operand.hbm [shape: f32[1,32], index: 14, kind: input, shape index: {}]
  %s15 = inlined_call_operand.hbm [shape: f32[2,32], index: 15, kind: output, shape index: {}]
  %s16 = sld [smem:[#allocation0]]
  $region122: #{network_forward.1} parent=0
    _
  %s18 = ssub.s32 1, %s16
  %s19 = scalar_select 0, %s18, %s16
  $region1: #{network_forward.1} parent=0
    #allocation6 [shape = 'u8[2048]{0}', space=vmem, size = 0x800, scoped, tag = 'input window, operand 1, single buffered']
    #allocation7 [shape = 's32[1]{0}', space=sflag, size = 0x4, scoped, tag = 'scoped memory for network_forward.1']
    #allocation8 [shape = 's32[1]{0}', space=sflag, size = 0x4, scoped, tag = 'scoped memory for network_forward.1']
    #allocation9 [shape = 'u8[512]{0}', space=vmem, size = 0x400, scoped, tag = 'input window, operand 2, single buffered']
    #allocation10 [shape = 's32[1]{0}', space=sflag, size = 0x4, scoped, tag = 'scoped memory for network_forward.1']
    #allocation11 [shape = 'u8[131072]{0}', space=vmem, size = 0x20000, scoped, tag = 'input window, operand 3, single buffered']
    #allocation12 [shape = 'u8[512]{0}', space=vmem, size = 0x400, scoped, tag = 'input window, operand 4, single buffered']
    #allocation13 [shape = 's32[1]{0}', space=sflag, size = 0x4, scoped, tag = 'scoped memory for network_forward.1']
    #allocation14 [shape = 'u8[131072]{0}', space=vmem, size = 0x20000, scoped, tag = 'input window, operand 5, single buffered']
    #allocation15 [shape = 'u8[512]{0}', space=vmem, size = 0x400, scoped, tag = 'input window, operand 6, single buffered']
    #allocation16 [shape = 's32[1]{0}', space=sflag, size = 0x4, scoped, tag = 'scoped memory for network_forward.1']
    #allocation17 [shape = 'u8[2097152]{0}', space=vmem, size = 0x200000, scoped, tag = 'input window, operand 7, single buffered']
    #allocation18 [shape = 'u8[2048]{0}', space=vmem, size = 0x800, scoped, tag = 'input window, operand 8, single buffered']
    #allocation19 [shape = 's32[1]{0}', space=sflag, size = 0x4, scoped, tag = 'scoped memory for network_forward.1']
    #allocation20 [shape = 'u8[262144]{0}', space=vmem, size = 0x40000, scoped, tag = 'input window, operand 9, single buffered']
    #allocation21 [shape = 'u8[1024]{0}', space=vmem, size = 0x400, scoped, tag = 'input window, operand 10, single buffered']
    #allocation22 [shape = 's32[1]{0}', space=sflag, size = 0x4, scoped, tag = 'scoped memory for network_forward.1']
    #allocation23 [shape = 'u8[65536]{0}', space=vmem, size = 0x10000, scoped, tag = 'input window, operand 11, single buffered']
    #allocation24 [shape = 'u8[512]{0}', space=vmem, size = 0x400, scoped, tag = 'input window, operand 12, single buffered']
    #allocation25 [shape = 's32[1]{0}', space=sflag, size = 0x4, scoped, tag = 'scoped memory for network_forward.1']
    #allocation26 [shape = 'u8[512]{0}', space=vmem, size = 0x400, scoped, tag = 'input window, operand 14, single buffered']
    #allocation27 [shape = 'u8[1024]{0}', space=vmem, size = 0x400, scoped, tag = 'output window, operand 0, single buffered']
    %20 = vsyncpa [#allocation7], 0
    %21 = vsyncpa [#allocation10], 0
    %22 = vsyncpa [#allocation13], 0
    %23 = vsyncpa [#allocation16], 0
    %24 = vsyncpa [#allocation19], 0
    %25 = vsyncpa [#allocation22], 0
    %26 = vsyncpa [#allocation25], 0
    %27 = vsyncpa [#allocation8], 0
    // Predicated region
    $region2: #{network_forward.1} parent=1 // pred_check
      _
    $region3: #{network_forward.1} parent=1 // pred_check_branch
      %29 = sbr.rel (0) target = $region5
    $region4: #{network_forward.1} parent=1 // pred_region
      _
    $region5: #{network_forward.1} parent=1 // pred_fallthru
      _
    // Predicated region
    $region6: #{network_forward.1} parent=1 // pred_check
      _
    $region7: #{network_forward.1} parent=1 // pred_check_branch
      %31 = sbr.rel (0) target = $region9
    $region8: #{network_forward.1} parent=1 // pred_region
      %s33 = ssub.s32 64, 64
      %34 = vsyncadd [#allocation7], %s33
      %s36 = sshll.u32 [#allocation6], 4
      %s37 = int_to_ptr.vmem [resolvable:$true] %s36
      %39 = dma.hbm_to_vmem [thread:$0]  %s1, 64, %s37, [#allocation7]
    $region9: #{network_forward.1} parent=1 // pred_fallthru
      _
    // Predicated region
    $region10: #{network_forward.1} parent=1 // pred_check
      _
    $region11: #{network_forward.1} parent=1 // pred_check_branch
      %41 = sbr.rel (0) target = $region13
    $region12: #{network_forward.1} parent=1 // pred_region
      %s43 = ssub.s32 16, 16
      %44 = vsyncadd [#allocation10], %s43
      %s46 = sshll.u32 [#allocation9], 4
      %s47 = int_to_ptr.vmem [resolvable:$true] %s46
      %49 = dma.hbm_to_vmem [thread:$0]  %s2, 16, %s47, [#allocation10]
    $region13: #{network_forward.1} parent=1 // pred_fallthru
      _
    // Predicated region
    $region14: #{network_forward.1} parent=1 // pred_check
      _
    $region15: #{network_forward.1} parent=1 // pred_check_branch
      %51 = sbr.rel (0) target = $region17
    $region16: #{network_forward.1} parent=1 // pred_region
      %s53 = ssub.s32 4096, 4096
      %54 = vsyncadd [#allocation10], %s53
      %s55 = sshll.u32 [#allocation11], 4
      %s56 = int_to_ptr.vmem [resolvable:$true] %s55
      %61 = dma.hbm_to_vmem [thread:$0]  %s3, 4096, %s56, [#allocation10], 64, 64, 4
    $region17: #{network_forward.1} parent=1 // pred_fallthru
      _
    // Predicated region
    $region18: #{network_forward.1} parent=1 // pred_check
      _
    $region19: #{network_forward.1} parent=1 // pred_check_branch
      %63 = sbr.rel (0) target = $region21
    $region20: #{network_forward.1} parent=1 // pred_region
      %s65 = ssub.s32 16, 16
      %66 = vsyncadd [#allocation13], %s65
      %s68 = sshll.u32 [#allocation12], 4
      %s69 = int_to_ptr.vmem [resolvable:$true] %s68
      %71 = dma.hbm_to_vmem [thread:$0]  %s4, 16, %s69, [#allocation13]
    $region21: #{network_forward.1} parent=1 // pred_fallthru
      _
    // Predicated region
    $region22: #{network_forward.1} parent=1 // pred_check
      _
    $region23: #{network_forward.1} parent=1 // pred_check_branch
      %73 = sbr.rel (0) target = $region25
    $region24: #{network_forward.1} parent=1 // pred_region
      %s75 = ssub.s32 4096, 4096
      %76 = vsyncadd [#allocation13], %s75
      %s77 = sshll.u32 [#allocation14], 4
      %s78 = int_to_ptr.vmem [resolvable:$true] %s77
      %83 = dma.hbm_to_vmem [thread:$0]  %s5, 4096, %s78, [#allocation13], 64, 64, 4
    $region25: #{network_forward.1} parent=1 // pred_fallthru
      _
    // Predicated region
    $region26: #{network_forward.1} parent=1 // pred_check
      _
    $region27: #{network_forward.1} parent=1 // pred_check_branch
      %85 = sbr.rel (0) target = $region29
    $region28: #{network_forward.1} parent=1 // pred_region
      %s87 = ssub.s32 16, 16
      %88 = vsyncadd [#allocation16], %s87
      %s90 = sshll.u32 [#allocation15], 4
      %s91 = int_to_ptr.vmem [resolvable:$true] %s90
      %93 = dma.hbm_to_vmem [thread:$0]  %s6, 16, %s91, [#allocation16]
    $region29: #{network_forward.1} parent=1 // pred_fallthru
      _
    // Predicated region
    $region30: #{network_forward.1} parent=1 // pred_check
      _
    $region31: #{network_forward.1} parent=1 // pred_check_branch
      %95 = sbr.rel (0) target = $region33
    $region32: #{network_forward.1} parent=1 // pred_region
      %s97 = ssub.s32 65536, 65536
      %98 = vsyncadd [#allocation16], %s97
      %s99 = sshll.u32 [#allocation17], 4
      %s100 = int_to_ptr.vmem [resolvable:$true] %s99
      %105 = dma.hbm_to_vmem [thread:$0]  %s7, 65536, %s100, [#allocation16], 256, 256, 16
    $region33: #{network_forward.1} parent=1 // pred_fallthru
      _
    // Predicated region
    $region34: #{network_forward.1} parent=1 // pred_check
      _
    $region35: #{network_forward.1} parent=1 // pred_check_branch
      %107 = sbr.rel (0) target = $region37
    $region36: #{network_forward.1} parent=1 // pred_region
      %s109 = ssub.s32 64, 64
      %110 = vsyncadd [#allocation19], %s109
      %s112 = sshll.u32 [#allocation18], 4
      %s113 = int_to_ptr.vmem [resolvable:$true] %s112
      %115 = dma.hbm_to_vmem [thread:$0]  %s8, 64, %s113, [#allocation19]
    $region37: #{network_forward.1} parent=1 // pred_fallthru
      _
    // Predicated region
    $region38: #{network_forward.1} parent=1 // pred_check
      _
    $region39: #{network_forward.1} parent=1 // pred_check_branch
      %117 = sbr.rel (0) target = $region41
    $region40: #{network_forward.1} parent=1 // pred_region
      %s119 = ssub.s32 8192, 8192
      %120 = vsyncadd [#allocation19], %s119
      %s121 = sshll.u32 [#allocation20], 4
      %s122 = int_to_ptr.vmem [resolvable:$true] %s121
      %127 = dma.hbm_to_vmem [thread:$0]  %s9, 8192, %s122, [#allocation19], 128, 128, 8
    $region41: #{network_forward.1} parent=1 // pred_fallthru
      _
    // Predicated region
    $region42: #{network_forward.1} parent=1 // pred_check
      _
    $region43: #{network_forward.1} parent=1 // pred_check_branch
      %129 = sbr.rel (0) target = $region45
    $region44: #{network_forward.1} parent=1 // pred_region
      %s131 = ssub.s32 32, 32
      %132 = vsyncadd [#allocation22], %s131
      %s134 = sshll.u32 [#allocation21], 4
      %s135 = int_to_ptr.vmem [resolvable:$true] %s134
      %137 = dma.hbm_to_vmem [thread:$0]  %s10, 32, %s135, [#allocation22]
    $region45: #{network_forward.1} parent=1 // pred_fallthru
      _
    // Predicated region
    $region46: #{network_forward.1} parent=1 // pred_check
      _
    $region47: #{network_forward.1} parent=1 // pred_check_branch
      %139 = sbr.rel (0) target = $region49
    $region48: #{network_forward.1} parent=1 // pred_region
      %s141 = ssub.s32 2048, 2048
      %142 = vsyncadd [#allocation22], %s141
      %s143 = sshll.u32 [#allocation23], 4
      %s144 = int_to_ptr.vmem [resolvable:$true] %s143
      %149 = dma.hbm_to_vmem [thread:$0]  %s11, 2048, %s144, [#allocation22], 64, 64, 4
    $region49: #{network_forward.1} parent=1 // pred_fallthru
      _
    // Predicated region
    $region50: #{network_forward.1} parent=1 // pred_check
      _
    $region51: #{network_forward.1} parent=1 // pred_check_branch
      %151 = sbr.rel (0) target = $region53
    $region52: #{network_forward.1} parent=1 // pred_region
      %s153 = ssub.s32 16, 16
      %154 = vsyncadd [#allocation25], %s153
      %s156 = sshll.u32 [#allocation24], 4
      %s157 = int_to_ptr.vmem [resolvable:$true] %s156
      %159 = dma.hbm_to_vmem [thread:$0]  %s12, 16, %s157, [#allocation25]
    $region53: #{network_forward.1} parent=1 // pred_fallthru
      _
    // Predicated region
    $region54: #{network_forward.1} parent=1 // pred_check
      _
    $region55: #{network_forward.1} parent=1 // pred_check_branch
      %161 = sbr.rel (0) target = $region57
    $region56: #{network_forward.1} parent=1 // pred_region
      _
    $region57: #{network_forward.1} parent=1 // pred_fallthru
      _
    // Predicated region
    $region58: #{network_forward.1} parent=1 // pred_check
      _
    $region59: #{network_forward.1} parent=1 // pred_check_branch
      %163 = sbr.rel (0) target = $region61
    $region60: #{network_forward.1} parent=1 // pred_region
      %s165 = ssub.s32 16, 16
      %166 = vsyncadd [#allocation25], %s165
      %s168 = sshll.u32 [#allocation26], 4
      %s169 = int_to_ptr.vmem [resolvable:$true] %s168
      %171 = dma.hbm_to_vmem [thread:$0]  %s14, 16, %s169, [#allocation25]
    $region61: #{network_forward.1} parent=1 // pred_fallthru
      _
    // Predicated region
    $region62: #{network_forward.1} parent=1 // pred_check
      _
    $region63: #{network_forward.1} parent=1 // pred_check_branch
      %173 = sbr.rel (0) target = $region65
    $region64: #{network_forward.1} parent=1 // pred_region
      %174 = dma.done [#allocation7], 64
    $region65: #{network_forward.1} parent=1 // pred_fallthru
      _
    // Predicated region
    $region66: #{network_forward.1} parent=1 // pred_check
      _
    $region67: #{network_forward.1} parent=1 // pred_check_branch
      %176 = sbr.rel (0) target = $region69
    $region68: #{network_forward.1} parent=1 // pred_region
      %177 = dma.done [#allocation10], 16
    $region69: #{network_forward.1} parent=1 // pred_fallthru
      _
    // Predicated region
    $region70: #{network_forward.1} parent=1 // pred_check
      _
    $region71: #{network_forward.1} parent=1 // pred_check_branch
      %179 = sbr.rel (0) target = $region73
    $region72: #{network_forward.1} parent=1 // pred_region
      %180 = dma.done [#allocation10], 4096
    $region73: #{network_forward.1} parent=1 // pred_fallthru
      _
    // Predicated region
    $region74: #{network_forward.1} parent=1 // pred_check
      _
    $region75: #{network_forward.1} parent=1 // pred_check_branch
      %182 = sbr.rel (0) target = $region77
    $region76: #{network_forward.1} parent=1 // pred_region
      %183 = dma.done [#allocation13], 16
    $region77: #{network_forward.1} parent=1 // pred_fallthru
      _
    // Predicated region
    $region78: #{network_forward.1} parent=1 // pred_check
      _
    $region79: #{network_forward.1} parent=1 // pred_check_branch
      %185 = sbr.rel (0) target = $region81
    $region80: #{network_forward.1} parent=1 // pred_region
      %186 = dma.done [#allocation13], 4096
    $region81: #{network_forward.1} parent=1 // pred_fallthru
      _
    // Predicated region
    $region82: #{network_forward.1} parent=1 // pred_check
      _
    $region83: #{network_forward.1} parent=1 // pred_check_branch
      %188 = sbr.rel (0) target = $region85
    $region84: #{network_forward.1} parent=1 // pred_region
      %189 = dma.done [#allocation16], 16
    $region85: #{network_forward.1} parent=1 // pred_fallthru
      _
    // Predicated region
    $region86: #{network_forward.1} parent=1 // pred_check
      _
    $region87: #{network_forward.1} parent=1 // pred_check_branch
      %191 = sbr.rel (0) target = $region89
    $region88: #{network_forward.1} parent=1 // pred_region
      %192 = dma.done [#allocation16], 65536
    $region89: #{network_forward.1} parent=1 // pred_fallthru
      _
    // Predicated region
    $region90: #{network_forward.1} parent=1 // pred_check
      _
    $region91: #{network_forward.1} parent=1 // pred_check_branch
      %194 = sbr.rel (0) target = $region93
    $region92: #{network_forward.1} parent=1 // pred_region
      %195 = dma.done [#allocation19], 64
    $region93: #{network_forward.1} parent=1 // pred_fallthru
      _
    // Predicated region
    $region94: #{network_forward.1} parent=1 // pred_check
      _
    $region95: #{network_forward.1} parent=1 // pred_check_branch
      %197 = sbr.rel (0) target = $region97
    $region96: #{network_forward.1} parent=1 // pred_region
      %198 = dma.done [#allocation19], 8192
    $region97: #{network_forward.1} parent=1 // pred_fallthru
      _
    // Predicated region
    $region98: #{network_forward.1} parent=1 // pred_check
      _
    $region99: #{network_forward.1} parent=1 // pred_check_branch
      %200 = sbr.rel (0) target = $region101
    $region100: #{network_forward.1} parent=1 // pred_region
      %201 = dma.done [#allocation22], 32
    $region101: #{network_forward.1} parent=1 // pred_fallthru
      _
    // Predicated region
    $region102: #{network_forward.1} parent=1 // pred_check
      _
    $region103: #{network_forward.1} parent=1 // pred_check_branch
      %203 = sbr.rel (0) target = $region105
    $region104: #{network_forward.1} parent=1 // pred_region
      %204 = dma.done [#allocation22], 2048
    $region105: #{network_forward.1} parent=1 // pred_fallthru
      _
    // Predicated region
    $region106: #{network_forward.1} parent=1 // pred_check
      _
    $region107: #{network_forward.1} parent=1 // pred_check_branch
      %206 = sbr.rel (0) target = $region109
    $region108: #{network_forward.1} parent=1 // pred_region
      %207 = dma.done [#allocation25], 16
    $region109: #{network_forward.1} parent=1 // pred_fallthru
      _
    // Predicated region
    $region110: #{network_forward.1} parent=1 // pred_check
      _
    $region111: #{network_forward.1} parent=1 // pred_check_branch
      %209 = sbr.rel (0) target = $region113
    $region112: #{network_forward.1} parent=1 // pred_region
      %210 = dma.done [#allocation25], 16
    $region113: #{network_forward.1} parent=1 // pred_fallthru
      _
    %212 = vst [vmem:[#allocation3] sm:$0xff] 0.0
    %213 = vst [vmem:[#allocation3 + $0x8] sm:$0xff] 0.0
    %214 = vst [vmem:[#allocation3 + $0x10] sm:$0xff] 0.0
    %215 = vst [vmem:[#allocation3 + $0x18] sm:$0xff] 0.0
    %216 = vst [vmem:[#allocation3 + $0x20] sm:$0xff] 0.0
    %217 = vst [vmem:[#allocation3 + $0x28] sm:$0xff] 0.0
    %218 = vst [vmem:[#allocation3 + $0x30] sm:$0xff] 0.0
    %219 = vst [vmem:[#allocation3 + $0x38] sm:$0xff] 0.0
    %220 = vst [vmem:[#allocation3 + $0x40] sm:$0xff] 0.0
    %221 = vst [vmem:[#allocation3 + $0x48] sm:$0xff] 0.0
    %222 = vst [vmem:[#allocation3 + $0x50] sm:$0xff] 0.0
    %223 = vst [vmem:[#allocation3 + $0x58] sm:$0xff] 0.0
    %224 = vst [vmem:[#allocation3 + $0x60] sm:$0xff] 0.0
    %225 = vst [vmem:[#allocation3 + $0x68] sm:$0xff] 0.0
    %226 = vst [vmem:[#allocation4] sm:$0xff] 0.0
    %227 = vst [vmem:[#allocation4 + $0x8] sm:$0xff] 0.0
    %228 = vst [vmem:[#allocation4 + $0x10] sm:$0xff] 0.0
    %229 = vst [vmem:[#allocation4 + $0x18] sm:$0xff] 0.0
    %230 = vst [vmem:[#allocation4 + $0x20] sm:$0xff] 0.0
    %231 = vst [vmem:[#allocation4 + $0x28] sm:$0xff] 0.0
    %232 = vst [vmem:[#allocation4 + $0x30] sm:$0xff] 0.0
    %233 = vst [vmem:[#allocation4 + $0x38] sm:$0xff] 0.0
    %234 = vst [vmem:[#allocation4 + $0x40] sm:$0xff] 0.0
    %235 = vst [vmem:[#allocation4 + $0x48] sm:$0xff] 0.0
    %236 = vst [vmem:[#allocation4 + $0x50] sm:$0xff] 0.0
    %237 = vst [vmem:[#allocation4 + $0x58] sm:$0xff] 0.0
    %238 = vst [vmem:[#allocation4 + $0x60] sm:$0xff] 0.0
    %239 = vst [vmem:[#allocation4 + $0x68] sm:$0xff] 0.0
    %v240 = vld [vmem:[%s0] sm:$0xff]
    %v241 = vld [vmem:[%s0 + $0x8] sm:$0xff]
    %v242 = vld [vmem:[%s0 + $0x10] sm:$0xff]
    %v243 = vld [vmem:[%s0 + $0x18] sm:$0xff]
    %v244 = vld [vmem:[%s0 + $0x20] sm:$0xff]
    %v245 = vld [vmem:[%s0 + $0x28] sm:$0xff]
    %v246 = vld [vmem:[%s0 + $0x30] sm:$0xff]
    %v247 = vld [vmem:[%s0 + $0x38] sm:$0xff]
    %v248 = vld [vmem:[%s0 + $0x40] sm:$0xff]
    %v249 = vld [vmem:[%s0 + $0x48] sm:$0xff]
    %v250 = vld [vmem:[%s0 + $0x50] sm:$0xff]
    %v251 = vld [vmem:[%s0 + $0x58] sm:$0xff]
    %v252 = vld [vmem:[%s0 + $0x60] sm:$0xff]
    %v253 = vld [vmem:[%s0 + $0x68] sm:$0xff]
    %v254 = vpack.c.bf16 %v241, %v240
    %v255 = vpack.c.bf16 %v243, %v242
    %v256 = vpack.c.bf16 %v245, %v244
    %v257 = vpack.c.bf16 %v247, %v246
    %v258 = vpack.c.bf16 %v249, %v248
    %v259 = vpack.c.bf16 %v251, %v250
    %v260 = vpack.c.bf16 %v253, %v252
    %v261 = vld [vmem:[#allocation6] sm:$0xf]
    %v262 = vld [vmem:[#allocation9] sm:$0x1]
    %v264 = vlaneseq
    %v265 = vshrl.u32 %v264, 7
    %v266 = vsub.s32 0, %v265
    %v267 = vrot.slane %v262, %v266
    %vm269 = vcmask 64512
    %v271 = vsel %vm269, %v254, 0
    %v274 = vsel %vm269, %v255, 0
    %v277 = vsel %vm269, %v256, 0
    %v280 = vsel %vm269, %v257, 0
    %v283 = vsel %vm269, %v258, 0
    %v286 = vsel %vm269, %v259, 0
    %v289 = vsel %vm269, %v260, 0
    %vm291 = vcmask 1043456
    %v293 = vsel %vm291, %v261, 0
    %295 = vmatprep.subr.bf16.mxu0 0
    %296 = vmatpush1.bf16.msra.mxu0 0
    %297 = vmatprep.subr.bf16.mxu0 0
    %298 = vmatpush1.bf16.msra.mxu0 0
    %299 = vmatprep.subr.bf16.mxu0 0
    %300 = vmatpush1.bf16.msra.mxu0 0
    %301 = vmatprep.subr.bf16.mxu0 0
    %302 = vmatpush1.bf16.msra.mxu0 0
    %303 = vmatprep.subr.bf16.mxu0 0
    %304 = vmatpush1.bf16.msra.mxu0 0
    %305 = vmatprep.subr.bf16.mxu0 0
    %306 = vmatpush1.bf16.msra.mxu0 0
    %307 = vmatprep.subr.bf16.mxu0 0
    %308 = vmatpush1.bf16.msra.mxu0 0
    %309 = vmatprep.subr.bf16.mxu0 0
    %310 = vmatpush1.bf16.msra.mxu0 %v293
    %311 = vmatprep.subr.bf16.mxu0 0
    %312 = vmatpush2.bf16.msra.mxu0 0
    %313 = vmatprep.subr.bf16.mxu0 0
    %314 = vmatpush2.bf16.msra.mxu0 0
    %315 = vmatprep.subr.bf16.mxu0 0
    %316 = vmatpush2.bf16.msra.mxu0 0
    %317 = vmatprep.subr.bf16.mxu0 0
    %318 = vmatpush2.bf16.msra.mxu0 0
    %319 = vmatprep.subr.bf16.mxu0 0
    %320 = vmatpush2.bf16.msra.mxu0 0
    %321 = vmatprep.subr.bf16.mxu0 0
    %322 = vmatpush2.bf16.msra.mxu0 0
    %323 = vmatprep.subr.bf16.mxu0 0
    %324 = vmatpush2.bf16.msra.mxu0 0
    %325 = vmatprep.subr.bf16.mxu0 0
    %326 = vmatpush2.bf16.msra.mxu0 0
    %327 = vmatprep.mubr.bf16.mxu0 0
    %328 = vmatmul.mubr.bf16.gmra.mxu0 %v271
    %v329 = vpop.f32.mrf.mxu0
    %v330 = vadd.f32 %v267, %v329
    %v331 = vpop.f32.mrf.mxu0
    %v332 = vpop.f32.mrf.mxu0
    %v333 = vadd.f32 %v267, %v332
    %v334 = vpop.f32.mrf.mxu0
    %335 = vmatprep.mubr.bf16.mxu0 0
    %336 = vmatmul.mubr.bf16.gmra.mxu0 %v274
    %v337 = vpop.f32.mrf.mxu0
    %v338 = vadd.f32 %v267, %v337
    %v339 = vpop.f32.mrf.mxu0
    %v340 = vpop.f32.mrf.mxu0
    %v341 = vadd.f32 %v267, %v340
    %v342 = vpop.f32.mrf.mxu0
    %343 = vmatprep.mubr.bf16.mxu0 0
    %344 = vmatmul.mubr.bf16.gmra.mxu0 %v277
    %v345 = vpop.f32.mrf.mxu0
    %v346 = vadd.f32 %v267, %v345
    %v347 = vpop.f32.mrf.mxu0
    %v348 = vpop.f32.mrf.mxu0
    %v349 = vadd.f32 %v267, %v348
    %v350 = vpop.f32.mrf.mxu0
    %351 = vmatprep.mubr.bf16.mxu0 0
    %352 = vmatmul.mubr.bf16.gmra.mxu0 %v280
    %v353 = vpop.f32.mrf.mxu0
    %v354 = vadd.f32 %v267, %v353
    %v355 = vpop.f32.mrf.mxu0
    %v356 = vpop.f32.mrf.mxu0
    %v357 = vadd.f32 %v267, %v356
    %v358 = vpop.f32.mrf.mxu0
    %359 = vmatprep.mubr.bf16.mxu0 0
    %360 = vmatmul.mubr.bf16.gmra.mxu0 %v283
    %v361 = vpop.f32.mrf.mxu0
    %v362 = vadd.f32 %v267, %v361
    %v363 = vpop.f32.mrf.mxu0
    %v364 = vpop.f32.mrf.mxu0
    %v365 = vadd.f32 %v267, %v364
    %v366 = vpop.f32.mrf.mxu0
    %367 = vmatprep.mubr.bf16.mxu0 0
    %368 = vmatmul.mubr.bf16.gmra.mxu0 %v286
    %v369 = vpop.f32.mrf.mxu0
    %v370 = vadd.f32 %v267, %v369
    %v371 = vpop.f32.mrf.mxu0
    %v372 = vpop.f32.mrf.mxu0
    %v373 = vadd.f32 %v267, %v372
    %v374 = vpop.f32.mrf.mxu0
    %375 = vmatprep.mubr.bf16.mxu0 0
    %376 = vmatmul.mubr.bf16.gmra.mxu0 %v289
    %v377 = vpop.f32.mrf.mxu0
    %v378 = vadd.f32 %v267, %v377
    %v379 = vpop.f32.mrf.mxu0
    %v380 = vpop.f32.mrf.mxu0
    %v381 = vadd.f32 %v267, %v380
    %v382 = vpop.f32.mrf.mxu0
    %383 = vdwg.mxu0
    %v384 = vmul.f32 %v330, 0.01
    %v385 = vmul.f32 %v333, 0.01
    %v386 = vmul.f32 %v338, 0.01
    %v387 = vmul.f32 %v341, 0.01
    %v388 = vmul.f32 %v346, 0.01
    %v389 = vmul.f32 %v349, 0.01
    %v390 = vmul.f32 %v354, 0.01
    %v391 = vmul.f32 %v357, 0.01
    %v392 = vmul.f32 %v362, 0.01
    %v393 = vmul.f32 %v365, 0.01
    %v394 = vmul.f32 %v370, 0.01
    %v395 = vmul.f32 %v373, 0.01
    %v396 = vmul.f32 %v378, 0.01
    %v397 = vmul.f32 %v381, 0.01
    %v398 = vmax.f32 %v330, %v384
    %v399 = vmax.f32 %v333, %v385
    %v400 = vmax.f32 %v338, %v386
    %v401 = vmax.f32 %v341, %v387
    %v402 = vmax.f32 %v346, %v388
    %v403 = vmax.f32 %v349, %v389
    %v404 = vmax.f32 %v354, %v390
    %v405 = vmax.f32 %v357, %v391
    %v406 = vmax.f32 %v362, %v392
    %v407 = vmax.f32 %v365, %v393
    %v408 = vmax.f32 %v370, %v394
    %v409 = vmax.f32 %v373, %v395
    %v410 = vmax.f32 %v378, %v396
    %v411 = vmax.f32 %v381, %v397
    %412 = vst [vmem:[#allocation2] sm:$0xff] %v398
    %413 = vst [vmem:[#allocation2 + $0x8] sm:$0xff] %v399
    %414 = vst [vmem:[#allocation2 + $0x10] sm:$0xff] %v400
    %415 = vst [vmem:[#allocation2 + $0x18] sm:$0xff] %v401
    %416 = vst [vmem:[#allocation2 + $0x20] sm:$0xff] %v402
    %417 = vst [vmem:[#allocation2 + $0x28] sm:$0xff] %v403
    %418 = vst [vmem:[#allocation2 + $0x30] sm:$0xff] %v404
    %419 = vst [vmem:[#allocation2 + $0x38] sm:$0xff] %v405
    %420 = vst [vmem:[#allocation2 + $0x40] sm:$0xff] %v406
    %421 = vst [vmem:[#allocation2 + $0x48] sm:$0xff] %v407
    %422 = vst [vmem:[#allocation2 + $0x50] sm:$0xff] %v408
    %423 = vst [vmem:[#allocation2 + $0x58] sm:$0xff] %v409
    %424 = vst [vmem:[#allocation2 + $0x60] sm:$0xff] %v410
    %425 = vst [vmem:[#allocation2 + $0x68] sm:$0xff] %v411
    %v426 = vld [vmem:[#allocation2] sm:$0xff]
    %v427 = vld [vmem:[#allocation2 + $0x8] sm:$0xff]
    %v428 = vld [vmem:[#allocation2 + $0x10] sm:$0xff]
    %v429 = vld [vmem:[#allocation2 + $0x18] sm:$0xff]
    %v430 = vld [vmem:[#allocation2 + $0x20] sm:$0xff]
    %v431 = vld [vmem:[#allocation2 + $0x28] sm:$0xff]
    %v432 = vld [vmem:[#allocation2 + $0x30] sm:$0xff]
    %v433 = vld [vmem:[#allocation2 + $0x38] sm:$0xff]
    %v434 = vld [vmem:[#allocation2 + $0x40] sm:$0xff]
    %v435 = vld [vmem:[#allocation2 + $0x48] sm:$0xff]
    %v436 = vld [vmem:[#allocation2 + $0x50] sm:$0xff]
    %v437 = vld [vmem:[#allocation2 + $0x58] sm:$0xff]
    %v438 = vld [vmem:[#allocation2 + $0x60] sm:$0xff]
    %v439 = vpack.c.bf16 %v427, %v426
    %v440 = vpack.c.bf16 %v429, %v428
    %v441 = vpack.c.bf16 %v431, %v430
    %v442 = vpack.c.bf16 %v433, %v432
    %v443 = vpack.c.bf16 %v435, %v434
    %v444 = vpack.c.bf16 %v437, %v436
    %v445 = vpack.c.bf16 %v438, %v438
    %v446 = vld [vmem:[#allocation11] sm:$0xf]
    %v447 = vld [vmem:[#allocation11 + $0x4] sm:$0xf]
    %v448 = vld [vmem:[#allocation11 + $0x8] sm:$0xf]
    %v449 = vld [vmem:[#allocation11 + $0xc] sm:$0xf]
    %v450 = vld [vmem:[#allocation11 + $0x10] sm:$0xf]
    %v451 = vld [vmem:[#allocation11 + $0x14] sm:$0xf]
    %v452 = vld [vmem:[#allocation11 + $0x18] sm:$0xf]
    %v453 = vld [vmem:[#allocation11 + $0x1c] sm:$0xf]
    %v454 = vld [vmem:[#allocation11 + $0x20] sm:$0xf]
    %v455 = vld [vmem:[#allocation11 + $0x24] sm:$0xf]
    %v456 = vld [vmem:[#allocation11 + $0x28] sm:$0xf]
    %v457 = vld [vmem:[#allocation11 + $0x2c] sm:$0xf]
    %v458 = vld [vmem:[#allocation11 + $0x30] sm:$0xf]
    %v459 = vld [vmem:[#allocation11 + $0x34] sm:$0xf]
    %v460 = vld [vmem:[#allocation11 + $0x38] sm:$0xf]
    %v461 = vld [vmem:[#allocation11 + $0x3c] sm:$0xf]
    %v462 = vld [vmem:[#allocation2 + $0x1] sm:$0xff]
    %v463 = vld [vmem:[#allocation2 + $0x9] sm:$0xff]
    %v464 = vld [vmem:[#allocation2 + $0x11] sm:$0xff]
    %v465 = vld [vmem:[#allocation2 + $0x19] sm:$0xff]
    %v466 = vld [vmem:[#allocation2 + $0x21] sm:$0xff]
    %v467 = vld [vmem:[#allocation2 + $0x29] sm:$0xff]
    %v468 = vld [vmem:[#allocation2 + $0x31] sm:$0xff]
    %v469 = vld [vmem:[#allocation2 + $0x39] sm:$0xff]
    %v470 = vld [vmem:[#allocation2 + $0x41] sm:$0xff]
    %v471 = vld [vmem:[#allocation2 + $0x49] sm:$0xff]
    %v472 = vld [vmem:[#allocation2 + $0x51] sm:$0xff]
    %v473 = vld [vmem:[#allocation2 + $0x59] sm:$0xff]
    %v474 = vld [vmem:[#allocation2 + $0x61] sm:$0xff]
    %v475 = vpack.c.bf16 %v463, %v462
    %v476 = vpack.c.bf16 %v465, %v464
    %v477 = vpack.c.bf16 %v467, %v466
    %v478 = vpack.c.bf16 %v469, %v468
    %v479 = vpack.c.bf16 %v471, %v470
    %v480 = vpack.c.bf16 %v473, %v472
    %v481 = vpack.c.bf16 %v474, %v474
    %s482 = scalar_lea.vmem [#allocation11], 64
    %v483 = vld [vmem:[%s482] sm:$0xf]
    %v484 = vld [vmem:[%s482 + $0x4] sm:$0xf]
    %v485 = vld [vmem:[%s482 + $0x8] sm:$0xf]
    %v486 = vld [vmem:[%s482 + $0xc] sm:$0xf]
    %v487 = vld [vmem:[%s482 + $0x10] sm:$0xf]
    %v488 = vld [vmem:[%s482 + $0x14] sm:$0xf]
    %v489 = vld [vmem:[%s482 + $0x18] sm:$0xf]
    %v490 = vld [vmem:[%s482 + $0x1c] sm:$0xf]
    %v491 = vld [vmem:[%s482 + $0x20] sm:$0xf]
    %v492 = vld [vmem:[%s482 + $0x24] sm:$0xf]
    %v493 = vld [vmem:[%s482 + $0x28] sm:$0xf]
    %v494 = vld [vmem:[%s482 + $0x2c] sm:$0xf]
    %v495 = vld [vmem:[%s482 + $0x30] sm:$0xf]
    %v496 = vld [vmem:[%s482 + $0x34] sm:$0xf]
    %v497 = vld [vmem:[%s482 + $0x38] sm:$0xf]
    %v498 = vld [vmem:[%s482 + $0x3c] sm:$0xf]
    %v515 = vunpack.c.l.b16 %v483
    %v516 = vunpack.c.l.b16 %v484
    %v517 = vunpack.c.l.b16 %v485
    %v518 = vunpack.c.l.b16 %v486
    %v519 = vunpack.c.l.b16 %v487
    %v520 = vunpack.c.l.b16 %v488
    %v521 = vunpack.c.l.b16 %v489
    %v522 = vunpack.c.l.b16 %v490
    %v523 = vunpack.c.l.b16 %v491
    %v524 = vunpack.c.l.b16 %v492
    %v525 = vunpack.c.l.b16 %v493
    %v526 = vunpack.c.l.b16 %v494
    %v527 = vunpack.c.l.b16 %v495
    %v528 = vunpack.c.l.b16 %v496
    %v529 = vunpack.c.l.b16 %v497
    %v530 = vunpack.c.l.b16 %v498
    %v531 = vpack.c.b16 %v516, %v515
    %v532 = vpack.c.b16 %v518, %v517
    %v533 = vpack.c.b16 %v520, %v519
    %v534 = vpack.c.b16 %v522, %v521
    %v535 = vpack.c.b16 %v524, %v523
    %v536 = vpack.c.b16 %v526, %v525
    %v537 = vpack.c.b16 %v528, %v527
    %v538 = vpack.c.b16 %v530, %v529
    %547 = vmatprep.subr.bf16.mxu0 0
    %548 = vmatpush1.bf16.msra.mxu0 %v538
    %549 = vmatprep.subr.bf16.mxu0 0
    %550 = vmatpush1.bf16.msra.mxu0 %v537
    %551 = vmatprep.subr.bf16.mxu0 0
    %552 = vmatpush1.bf16.msra.mxu0 %v536
    %553 = vmatprep.subr.bf16.mxu0 0
    %554 = vmatpush1.bf16.msra.mxu0 %v535
    %555 = vmatprep.subr.bf16.mxu0 0
    %556 = vmatpush1.bf16.msra.mxu0 %v534
    %557 = vmatprep.subr.bf16.mxu0 0
    %558 = vmatpush1.bf16.msra.mxu0 %v533
    %559 = vmatprep.subr.bf16.mxu0 0
    %560 = vmatpush1.bf16.msra.mxu0 %v532
    %561 = vmatprep.subr.bf16.mxu0 0
    %562 = vmatpush1.bf16.msra.mxu0 %v531
    %563 = vmatprep.subr.bf16.mxu0 0
    %564 = vmatpush2.bf16.msra.mxu0 0
    %565 = vmatprep.subr.bf16.mxu0 0
    %566 = vmatpush2.bf16.msra.mxu0 0
    %567 = vmatprep.subr.bf16.mxu0 0
    %568 = vmatpush2.bf16.msra.mxu0 0
    %569 = vmatprep.subr.bf16.mxu0 0
    %570 = vmatpush2.bf16.msra.mxu0 0
    %571 = vmatprep.subr.bf16.mxu0 0
    %572 = vmatpush2.bf16.msra.mxu0 0
    %573 = vmatprep.subr.bf16.mxu0 0
    %574 = vmatpush2.bf16.msra.mxu0 0
    %575 = vmatprep.subr.bf16.mxu0 0
    %576 = vmatpush2.bf16.msra.mxu0 0
    %577 = vmatprep.subr.bf16.mxu0 0
    %578 = vmatpush2.bf16.msra.mxu0 0
    %579 = vmatprep.mubr.bf16.mxu0 0
    %580 = vmatmul.mubr.bf16.gmra.mxu0 %v475
    %v581 = vpop.f32.mrf.mxu0
    %v582 = vadd.f32 0.0, %v581
    %v583 = vpop.f32.mrf.mxu0
    %v584 = vpop.f32.mrf.mxu0
    %v585 = vadd.f32 0.0, %v584
    %v586 = vpop.f32.mrf.mxu0
    %587 = vmatprep.mubr.bf16.mxu0 0
    %588 = vmatmul.mubr.bf16.gmra.mxu0 %v476
    %v589 = vpop.f32.mrf.mxu0
    %v590 = vadd.f32 0.0, %v589
    %v591 = vpop.f32.mrf.mxu0
    %v592 = vpop.f32.mrf.mxu0
    %v593 = vadd.f32 0.0, %v592
    %v594 = vpop.f32.mrf.mxu0
    %595 = vmatprep.mubr.bf16.mxu0 0
    %596 = vmatmul.mubr.bf16.gmra.mxu0 %v477
    %v597 = vpop.f32.mrf.mxu0
    %v598 = vadd.f32 0.0, %v597
    %v599 = vpop.f32.mrf.mxu0
    %v600 = vpop.f32.mrf.mxu0
    %v601 = vadd.f32 0.0, %v600
    %v602 = vpop.f32.mrf.mxu0
    %603 = vmatprep.mubr.bf16.mxu0 0
    %604 = vmatmul.mubr.bf16.gmra.mxu0 %v478
    %v605 = vpop.f32.mrf.mxu0
    %v606 = vadd.f32 0.0, %v605
    %v607 = vpop.f32.mrf.mxu0
    %v608 = vpop.f32.mrf.mxu0
    %v609 = vadd.f32 0.0, %v608
    %v610 = vpop.f32.mrf.mxu0
    %611 = vmatprep.mubr.bf16.mxu0 0
    %612 = vmatmul.mubr.bf16.gmra.mxu0 %v479
    %v613 = vpop.f32.mrf.mxu0
    %v614 = vadd.f32 0.0, %v613
    %v615 = vpop.f32.mrf.mxu0
    %v616 = vpop.f32.mrf.mxu0
    %v617 = vadd.f32 0.0, %v616
    %v618 = vpop.f32.mrf.mxu0
    %619 = vmatprep.mubr.bf16.mxu0 0
    %620 = vmatmul.mubr.bf16.gmra.mxu0 %v480
    %v621 = vpop.f32.mrf.mxu0
    %v622 = vadd.f32 0.0, %v621
    %v623 = vpop.f32.mrf.mxu0
    %v624 = vpop.f32.mrf.mxu0
    %v625 = vadd.f32 0.0, %v624
    %v626 = vpop.f32.mrf.mxu0
    %627 = vmatprep.mubr.bf16.mxu0 0
    %628 = vmatmul.mubr.bf16.gmra.mxu0 %v481
    %v629 = vpop.f32.mrf.mxu0
    %v630 = vadd.f32 0.0, %v629
    %v631 = vpop.f32.mrf.mxu0
    %v632 = vpop.f32.mrf.mxu0
    %v633 = vpop.f32.mrf.mxu0
    %634 = vdwg.mxu0
    %v651 = vunpack.c.l.b16 %v446
    %v652 = vunpack.c.l.b16 %v447
    %v653 = vunpack.c.l.b16 %v448
    %v654 = vunpack.c.l.b16 %v449
    %v655 = vunpack.c.l.b16 %v450
    %v656 = vunpack.c.l.b16 %v451
    %v657 = vunpack.c.l.b16 %v452
    %v658 = vunpack.c.l.b16 %v453
    %v659 = vunpack.c.l.b16 %v454
    %v660 = vunpack.c.l.b16 %v455
    %v661 = vunpack.c.l.b16 %v456
    %v662 = vunpack.c.l.b16 %v457
    %v663 = vunpack.c.l.b16 %v458
    %v664 = vunpack.c.l.b16 %v459
    %v665 = vunpack.c.l.b16 %v460
    %v666 = vunpack.c.l.b16 %v461
    %v667 = vpack.c.b16 %v652, %v651
    %v668 = vpack.c.b16 %v654, %v653
    %v669 = vpack.c.b16 %v656, %v655
    %v670 = vpack.c.b16 %v658, %v657
    %v671 = vpack.c.b16 %v660, %v659
    %v672 = vpack.c.b16 %v662, %v661
    %v673 = vpack.c.b16 %v664, %v663
    %v674 = vpack.c.b16 %v666, %v665
    %683 = vmatprep.subr.bf16.mxu0 0
    %684 = vmatpush1.bf16.msra.mxu0 %v674
    %685 = vmatprep.subr.bf16.mxu0 0
    %686 = vmatpush1.bf16.msra.mxu0 %v673
    %687 = vmatprep.subr.bf16.mxu0 0
    %688 = vmatpush1.bf16.msra.mxu0 %v672
    %689 = vmatprep.subr.bf16.mxu0 0
    %690 = vmatpush1.bf16.msra.mxu0 %v671
    %691 = vmatprep.subr.bf16.mxu0 0
    %692 = vmatpush1.bf16.msra.mxu0 %v670
    %693 = vmatprep.subr.bf16.mxu0 0
    %694 = vmatpush1.bf16.msra.mxu0 %v669
    %695 = vmatprep.subr.bf16.mxu0 0
    %696 = vmatpush1.bf16.msra.mxu0 %v668
    %697 = vmatprep.subr.bf16.mxu0 0
    %698 = vmatpush1.bf16.msra.mxu0 %v667
    %699 = vmatprep.subr.bf16.mxu0 0
    %700 = vmatpush2.bf16.msra.mxu0 0
    %701 = vmatprep.subr.bf16.mxu0 0
    %702 = vmatpush2.bf16.msra.mxu0 0
    %703 = vmatprep.subr.bf16.mxu0 0
    %704 = vmatpush2.bf16.msra.mxu0 0
    %705 = vmatprep.subr.bf16.mxu0 0
    %706 = vmatpush2.bf16.msra.mxu0 0
    %707 = vmatprep.subr.bf16.mxu0 0
    %708 = vmatpush2.bf16.msra.mxu0 0
    %709 = vmatprep.subr.bf16.mxu0 0
    %710 = vmatpush2.bf16.msra.mxu0 0
    %711 = vmatprep.subr.bf16.mxu0 0
    %712 = vmatpush2.bf16.msra.mxu0 0
    %713 = vmatprep.subr.bf16.mxu0 0
    %714 = vmatpush2.bf16.msra.mxu0 0
    %715 = vmatprep.mubr.bf16.mxu0 0
    %716 = vmatmul.mubr.bf16.gmra.mxu0 %v439
    %v717 = vpop.f32.mrf.mxu0
    %v718 = vadd.f32 %v582, %v717
    %v719 = vpop.f32.mrf.mxu0
    %v720 = vpop.f32.mrf.mxu0
    %v721 = vadd.f32 %v585, %v720
    %v722 = vpop.f32.mrf.mxu0
    %723 = vmatprep.mubr.bf16.mxu0 0
    %724 = vmatmul.mubr.bf16.gmra.mxu0 %v440
    %v725 = vpop.f32.mrf.mxu0
    %v726 = vadd.f32 %v590, %v725
    %v727 = vpop.f32.mrf.mxu0
    %v728 = vpop.f32.mrf.mxu0
    %v729 = vadd.f32 %v593, %v728
    %v730 = vpop.f32.mrf.mxu0
    %731 = vmatprep.mubr.bf16.mxu0 0
    %732 = vmatmul.mubr.bf16.gmra.mxu0 %v441
    %v733 = vpop.f32.mrf.mxu0
    %v734 = vadd.f32 %v598, %v733
    %v735 = vpop.f32.mrf.mxu0
    %v736 = vpop.f32.mrf.mxu0
    %v737 = vadd.f32 %v601, %v736
    %v738 = vpop.f32.mrf.mxu0
    %739 = vmatprep.mubr.bf16.mxu0 0
    %740 = vmatmul.mubr.bf16.gmra.mxu0 %v442
    %v741 = vpop.f32.mrf.mxu0
    %v742 = vadd.f32 %v606, %v741
    %v743 = vpop.f32.mrf.mxu0
    %v744 = vpop.f32.mrf.mxu0
    %v745 = vadd.f32 %v609, %v744
    %v746 = vpop.f32.mrf.mxu0
    %747 = vmatprep.mubr.bf16.mxu0 0
    %748 = vmatmul.mubr.bf16.gmra.mxu0 %v443
    %v749 = vpop.f32.mrf.mxu0
    %v750 = vadd.f32 %v614, %v749
    %v751 = vpop.f32.mrf.mxu0
    %v752 = vpop.f32.mrf.mxu0
    %v753 = vadd.f32 %v617, %v752
    %v754 = vpop.f32.mrf.mxu0
    %755 = vmatprep.mubr.bf16.mxu0 0
    %756 = vmatmul.mubr.bf16.gmra.mxu0 %v444
    %v757 = vpop.f32.mrf.mxu0
    %v758 = vadd.f32 %v622, %v757
    %v759 = vpop.f32.mrf.mxu0
    %v760 = vpop.f32.mrf.mxu0
    %v761 = vadd.f32 %v625, %v760
    %v762 = vpop.f32.mrf.mxu0
    %763 = vmatprep.mubr.bf16.mxu0 0
    %764 = vmatmul.mubr.bf16.gmra.mxu0 %v445
    %v765 = vpop.f32.mrf.mxu0
    %v766 = vadd.f32 %v630, %v765
    %v767 = vpop.f32.mrf.mxu0
    %v768 = vpop.f32.mrf.mxu0
    %v769 = vpop.f32.mrf.mxu0
    %770 = vdwg.mxu0
    %v771 = vld [vmem:[#allocation2 + $0x7] sm:$0xff]
    %v772 = vld [vmem:[#allocation2 + $0xf] sm:$0xff]
    %v773 = vld [vmem:[#allocation2 + $0x17] sm:$0xff]
    %v774 = vld [vmem:[#allocation2 + $0x1f] sm:$0xff]
    %v775 = vld [vmem:[#allocation2 + $0x27] sm:$0xff]
    %v776 = vld [vmem:[#allocation2 + $0x2f] sm:$0xff]
    %v777 = vld [vmem:[#allocation2 + $0x37] sm:$0xff]
    %v778 = vld [vmem:[#allocation2 + $0x3f] sm:$0xff]
    %v779 = vld [vmem:[#allocation2 + $0x47] sm:$0xff]
    %v780 = vld [vmem:[#allocation2 + $0x4f] sm:$0xff]
    %v781 = vld [vmem:[#allocation2 + $0x57] sm:$0xff]
    %v782 = vld [vmem:[#allocation2 + $0x5f] sm:$0xff]
    %v783 = vld [vmem:[#allocation2 + $0x67] sm:$0xff]
    %v784 = vpack.c.bf16 %v772, %v771
    %v785 = vpack.c.bf16 %v774, %v773
    %v786 = vpack.c.bf16 %v776, %v775
    %v787 = vpack.c.bf16 %v778, %v777
    %v788 = vpack.c.bf16 %v780, %v779
    %v789 = vpack.c.bf16 %v782, %v781
    %v790 = vpack.c.bf16 %v783, %v783
    %s791 = scalar_lea.vmem [#allocation11], 128
    %v792 = vld [vmem:[%s791] sm:$0xf]
    %v793 = vld [vmem:[%s791 + $0x4] sm:$0xf]
    %v794 = vld [vmem:[%s791 + $0x8] sm:$0xf]
    %v795 = vld [vmem:[%s791 + $0xc] sm:$0xf]
    %v796 = vld [vmem:[%s791 + $0x10] sm:$0xf]
    %v797 = vld [vmem:[%s791 + $0x14] sm:$0xf]
    %v798 = vld [vmem:[%s791 + $0x18] sm:$0xf]
    %v799 = vld [vmem:[%s791 + $0x1c] sm:$0xf]
    %v800 = vld [vmem:[%s791 + $0x20] sm:$0xf]
    %v801 = vld [vmem:[%s791 + $0x24] sm:$0xf]
    %v802 = vld [vmem:[%s791 + $0x28] sm:$0xf]
    %v803 = vld [vmem:[%s791 + $0x2c] sm:$0xf]
    %v804 = vld [vmem:[%s791 + $0x30] sm:$0xf]
    %v805 = vld [vmem:[%s791 + $0x34] sm:$0xf]
    %v806 = vld [vmem:[%s791 + $0x38] sm:$0xf]
    %v807 = vld [vmem:[%s791 + $0x3c] sm:$0xf]
    %v824 = vunpack.c.l.b16 %v792
    %v825 = vunpack.c.l.b16 %v793
    %v826 = vunpack.c.l.b16 %v794
    %v827 = vunpack.c.l.b16 %v795
    %v828 = vunpack.c.l.b16 %v796
    %v829 = vunpack.c.l.b16 %v797
    %v830 = vunpack.c.l.b16 %v798
    %v831 = vunpack.c.l.b16 %v799
    %v832 = vunpack.c.l.b16 %v800
    %v833 = vunpack.c.l.b16 %v801
    %v834 = vunpack.c.l.b16 %v802
    %v835 = vunpack.c.l.b16 %v803
    %v836 = vunpack.c.l.b16 %v804
    %v837 = vunpack.c.l.b16 %v805
    %v838 = vunpack.c.l.b16 %v806
    %v839 = vunpack.c.l.b16 %v807
    %v840 = vpack.c.b16 %v825, %v824
    %v841 = vpack.c.b16 %v827, %v826
    %v842 = vpack.c.b16 %v829, %v828
    %v843 = vpack.c.b16 %v831, %v830
    %v844 = vpack.c.b16 %v833, %v832
    %v845 = vpack.c.b16 %v835, %v834
    %v846 = vpack.c.b16 %v837, %v836
    %v847 = vpack.c.b16 %v839, %v838
    %856 = vmatprep.subr.bf16.mxu0 0
    %857 = vmatpush1.bf16.msra.mxu0 %v847
    %858 = vmatprep.subr.bf16.mxu0 0
    %859 = vmatpush1.bf16.msra.mxu0 %v846
    %860 = vmatprep.subr.bf16.mxu0 0
    %861 = vmatpush1.bf16.msra.mxu0 %v845
    %862 = vmatprep.subr.bf16.mxu0 0
    %863 = vmatpush1.bf16.msra.mxu0 %v844
    %864 = vmatprep.subr.bf16.mxu0 0
    %865 = vmatpush1.bf16.msra.mxu0 %v843
    %866 = vmatprep.subr.bf16.mxu0 0
    %867 = vmatpush1.bf16.msra.mxu0 %v842
    %868 = vmatprep.subr.bf16.mxu0 0
    %869 = vmatpush1.bf16.msra.mxu0 %v841
    %870 = vmatprep.subr.bf16.mxu0 0
    %871 = vmatpush1.bf16.msra.mxu0 %v840
    %872 = vmatprep.subr.bf16.mxu0 0
    %873 = vmatpush2.bf16.msra.mxu0 0
    %874 = vmatprep.subr.bf16.mxu0 0
    %875 = vmatpush2.bf16.msra.mxu0 0
    %876 = vmatprep.subr.bf16.mxu0 0
    %877 = vmatpush2.bf16.msra.mxu0 0
    %878 = vmatprep.subr.bf16.mxu0 0
    %879 = vmatpush2.bf16.msra.mxu0 0
    %880 = vmatprep.subr.bf16.mxu0 0
    %881 = vmatpush2.bf16.msra.mxu0 0
    %882 = vmatprep.subr.bf16.mxu0 0
    %883 = vmatpush2.bf16.msra.mxu0 0
    %884 = vmatprep.subr.bf16.mxu0 0
    %885 = vmatpush2.bf16.msra.mxu0 0
    %886 = vmatprep.subr.bf16.mxu0 0
    %887 = vmatpush2.bf16.msra.mxu0 0
    %888 = vmatprep.mubr.bf16.mxu0 0
    %889 = vmatmul.mubr.bf16.gmra.mxu0 %v784
    %v890 = vpop.f32.mrf.mxu0
    %v891 = vadd.f32 0.0, %v890
    %v892 = vpop.f32.mrf.mxu0
    %v893 = vpop.f32.mrf.mxu0
    %v894 = vadd.f32 0.0, %v893
    %v895 = vpop.f32.mrf.mxu0
    %896 = vmatprep.mubr.bf16.mxu0 0
    %897 = vmatmul.mubr.bf16.gmra.mxu0 %v785
    %v898 = vpop.f32.mrf.mxu0
    %v899 = vadd.f32 0.0, %v898
    %v900 = vpop.f32.mrf.mxu0
    %v901 = vpop.f32.mrf.mxu0
    %v902 = vadd.f32 0.0, %v901
    %v903 = vpop.f32.mrf.mxu0
    %904 = vmatprep.mubr.bf16.mxu0 0
    %905 = vmatmul.mubr.bf16.gmra.mxu0 %v786
    %v906 = vpop.f32.mrf.mxu0
    %v907 = vadd.f32 0.0, %v906
    %v908 = vpop.f32.mrf.mxu0
    %v909 = vpop.f32.mrf.mxu0
    %v910 = vadd.f32 0.0, %v909
    %v911 = vpop.f32.mrf.mxu0
    %912 = vmatprep.mubr.bf16.mxu0 0
    %913 = vmatmul.mubr.bf16.gmra.mxu0 %v787
    %v914 = vpop.f32.mrf.mxu0
    %v915 = vadd.f32 0.0, %v914
    %v916 = vpop.f32.mrf.mxu0
    %v917 = vpop.f32.mrf.mxu0
    %v918 = vadd.f32 0.0, %v917
    %v919 = vpop.f32.mrf.mxu0
    %920 = vmatprep.mubr.bf16.mxu0 0
    %921 = vmatmul.mubr.bf16.gmra.mxu0 %v788
    %v922 = vpop.f32.mrf.mxu0
    %v923 = vadd.f32 0.0, %v922
    %v924 = vpop.f32.mrf.mxu0
    %v925 = vpop.f32.mrf.mxu0
    %v926 = vadd.f32 0.0, %v925
    %v927 = vpop.f32.mrf.mxu0
    %928 = vmatprep.mubr.bf16.mxu0 0
    %929 = vmatmul.mubr.bf16.gmra.mxu0 %v789
    %v930 = vpop.f32.mrf.mxu0
    %v931 = vadd.f32 0.0, %v930
    %v932 = vpop.f32.mrf.mxu0
    %v933 = vpop.f32.mrf.mxu0
    %v934 = vadd.f32 0.0, %v933
    %v935 = vpop.f32.mrf.mxu0
    %936 = vmatprep.mubr.bf16.mxu0 0
    %937 = vmatmul.mubr.bf16.gmra.mxu0 %v790
    %v938 = vpop.f32.mrf.mxu0
    %v939 = vadd.f32 0.0, %v938
    %v940 = vpop.f32.mrf.mxu0
    %v941 = vpop.f32.mrf.mxu0
    %v942 = vpop.f32.mrf.mxu0
    %943 = vdwg.mxu0
    %v944 = vadd.f32 %v718, %v891
    %v945 = vadd.f32 %v721, %v894
    %v946 = vadd.f32 %v726, %v899
    %v947 = vadd.f32 %v729, %v902
    %v948 = vadd.f32 %v734, %v907
    %v949 = vadd.f32 %v737, %v910
    %v950 = vadd.f32 %v742, %v915
    %v951 = vadd.f32 %v745, %v918
    %v952 = vadd.f32 %v750, %v923
    %v953 = vadd.f32 %v753, %v926
    %v954 = vadd.f32 %v758, %v931
    %v955 = vadd.f32 %v761, %v934
    %v956 = vadd.f32 %v766, %v939
    %v957 = vld [vmem:[#allocation2 + $0x8] sm:$0xff]
    %v958 = vld [vmem:[#allocation2 + $0x10] sm:$0xff]
    %v959 = vld [vmem:[#allocation2 + $0x18] sm:$0xff]
    %v960 = vld [vmem:[#allocation2 + $0x20] sm:$0xff]
    %v961 = vld [vmem:[#allocation2 + $0x28] sm:$0xff]
    %v962 = vld [vmem:[#allocation2 + $0x30] sm:$0xff]
    %v963 = vld [vmem:[#allocation2 + $0x38] sm:$0xff]
    %v964 = vld [vmem:[#allocation2 + $0x40] sm:$0xff]
    %v965 = vld [vmem:[#allocation2 + $0x48] sm:$0xff]
    %v966 = vld [vmem:[#allocation2 + $0x50] sm:$0xff]
    %v967 = vld [vmem:[#allocation2 + $0x58] sm:$0xff]
    %v968 = vld [vmem:[#allocation2 + $0x60] sm:$0xff]
    %v969 = vld [vmem:[#allocation2 + $0x68] sm:$0xff]
    %v970 = vpack.c.bf16 %v958, %v957
    %v971 = vpack.c.bf16 %v960, %v959
    %v972 = vpack.c.bf16 %v962, %v961
    %v973 = vpack.c.bf16 %v964, %v963
    %v974 = vpack.c.bf16 %v966, %v965
    %v975 = vpack.c.bf16 %v968, %v967
    %v976 = vpack.c.bf16 %v969, %v969
    %s977 = scalar_lea.vmem [#allocation11], 192
    %v978 = vld [vmem:[%s977] sm:$0xf]
    %v979 = vld [vmem:[%s977 + $0x4] sm:$0xf]
    %v980 = vld [vmem:[%s977 + $0x8] sm:$0xf]
    %v981 = vld [vmem:[%s977 + $0xc] sm:$0xf]
    %v982 = vld [vmem:[%s977 + $0x10] sm:$0xf]
    %v983 = vld [vmem:[%s977 + $0x14] sm:$0xf]
    %v984 = vld [vmem:[%s977 + $0x18] sm:$0xf]
    %v985 = vld [vmem:[%s977 + $0x1c] sm:$0xf]
    %v986 = vld [vmem:[%s977 + $0x20] sm:$0xf]
    %v987 = vld [vmem:[%s977 + $0x24] sm:$0xf]
    %v988 = vld [vmem:[%s977 + $0x28] sm:$0xf]
    %v989 = vld [vmem:[%s977 + $0x2c] sm:$0xf]
    %v990 = vld [vmem:[%s977 + $0x30] sm:$0xf]
    %v991 = vld [vmem:[%s977 + $0x34] sm:$0xf]
    %v992 = vld [vmem:[%s977 + $0x38] sm:$0xf]
    %v993 = vld [vmem:[%s977 + $0x3c] sm:$0xf]
    %v1010 = vunpack.c.l.b16 %v978
    %v1011 = vunpack.c.l.b16 %v979
    %v1012 = vunpack.c.l.b16 %v980
    %v1013 = vunpack.c.l.b16 %v981
    %v1014 = vunpack.c.l.b16 %v982
    %v1015 = vunpack.c.l.b16 %v983
    %v1016 = vunpack.c.l.b16 %v984
    %v1017 = vunpack.c.l.b16 %v985
    %v1018 = vunpack.c.l.b16 %v986
    %v1019 = vunpack.c.l.b16 %v987
    %v1020 = vunpack.c.l.b16 %v988
    %v1021 = vunpack.c.l.b16 %v989
    %v1022 = vunpack.c.l.b16 %v990
    %v1023 = vunpack.c.l.b16 %v991
    %v1024 = vunpack.c.l.b16 %v992
    %v1025 = vunpack.c.l.b16 %v993
    %v1026 = vpack.c.b16 %v1011, %v1010
    %v1027 = vpack.c.b16 %v1013, %v1012
    %v1028 = vpack.c.b16 %v1015, %v1014
    %v1029 = vpack.c.b16 %v1017, %v1016
    %v1030 = vpack.c.b16 %v1019, %v1018
    %v1031 = vpack.c.b16 %v1021, %v1020
    %v1032 = vpack.c.b16 %v1023, %v1022
    %v1033 = vpack.c.b16 %v1025, %v1024
    %1042 = vmatprep.subr.bf16.mxu0 0
    %1043 = vmatpush1.bf16.msra.mxu0 %v1033
    %1044 = vmatprep.subr.bf16.mxu0 0
    %1045 = vmatpush1.bf16.msra.mxu0 %v1032
    %1046 = vmatprep.subr.bf16.mxu0 0
    %1047 = vmatpush1.bf16.msra.mxu0 %v1031
    %1048 = vmatprep.subr.bf16.mxu0 0
    %1049 = vmatpush1.bf16.msra.mxu0 %v1030
    %1050 = vmatprep.subr.bf16.mxu0 0
    %1051 = vmatpush1.bf16.msra.mxu0 %v1029
    %1052 = vmatprep.subr.bf16.mxu0 0
    %1053 = vmatpush1.bf16.msra.mxu0 %v1028
    %1054 = vmatprep.subr.bf16.mxu0 0
    %1055 = vmatpush1.bf16.msra.mxu0 %v1027
    %1056 = vmatprep.subr.bf16.mxu0 0
    %1057 = vmatpush1.bf16.msra.mxu0 %v1026
    %1058 = vmatprep.subr.bf16.mxu0 0
    %1059 = vmatpush2.bf16.msra.mxu0 0
    %1060 = vmatprep.subr.bf16.mxu0 0
    %1061 = vmatpush2.bf16.msra.mxu0 0
    %1062 = vmatprep.subr.bf16.mxu0 0
    %1063 = vmatpush2.bf16.msra.mxu0 0
    %1064 = vmatprep.subr.bf16.mxu0 0
    %1065 = vmatpush2.bf16.msra.mxu0 0
    %1066 = vmatprep.subr.bf16.mxu0 0
    %1067 = vmatpush2.bf16.msra.mxu0 0
    %1068 = vmatprep.subr.bf16.mxu0 0
    %1069 = vmatpush2.bf16.msra.mxu0 0
    %1070 = vmatprep.subr.bf16.mxu0 0
    %1071 = vmatpush2.bf16.msra.mxu0 0
    %1072 = vmatprep.subr.bf16.mxu0 0
    %1073 = vmatpush2.bf16.msra.mxu0 0
    %1074 = vmatprep.mubr.bf16.mxu0 0
    %1075 = vmatmul.mubr.bf16.gmra.mxu0 %v970
    %v1076 = vpop.f32.mrf.mxu0
    %v1077 = vadd.f32 0.0, %v1076
    %v1078 = vpop.f32.mrf.mxu0
    %v1079 = vpop.f32.mrf.mxu0
    %v1080 = vadd.f32 0.0, %v1079
    %v1081 = vpop.f32.mrf.mxu0
    %1082 = vmatprep.mubr.bf16.mxu0 0
    %1083 = vmatmul.mubr.bf16.gmra.mxu0 %v971
    %v1084 = vpop.f32.mrf.mxu0
    %v1085 = vadd.f32 0.0, %v1084
    %v1086 = vpop.f32.mrf.mxu0
    %v1087 = vpop.f32.mrf.mxu0
    %v1088 = vadd.f32 0.0, %v1087
    %v1089 = vpop.f32.mrf.mxu0
    %1090 = vmatprep.mubr.bf16.mxu0 0
    %1091 = vmatmul.mubr.bf16.gmra.mxu0 %v972
    %v1092 = vpop.f32.mrf.mxu0
    %v1093 = vadd.f32 0.0, %v1092
    %v1094 = vpop.f32.mrf.mxu0
    %v1095 = vpop.f32.mrf.mxu0
    %v1096 = vadd.f32 0.0, %v1095
    %v1097 = vpop.f32.mrf.mxu0
    %1098 = vmatprep.mubr.bf16.mxu0 0
    %1099 = vmatmul.mubr.bf16.gmra.mxu0 %v973
    %v1100 = vpop.f32.mrf.mxu0
    %v1101 = vadd.f32 0.0, %v1100
    %v1102 = vpop.f32.mrf.mxu0
    %v1103 = vpop.f32.mrf.mxu0
    %v1104 = vadd.f32 0.0, %v1103
    %v1105 = vpop.f32.mrf.mxu0
    %1106 = vmatprep.mubr.bf16.mxu0 0
    %1107 = vmatmul.mubr.bf16.gmra.mxu0 %v974
    %v1108 = vpop.f32.mrf.mxu0
    %v1109 = vadd.f32 0.0, %v1108
    %v1110 = vpop.f32.mrf.mxu0
    %v1111 = vpop.f32.mrf.mxu0
    %v1112 = vadd.f32 0.0, %v1111
    %v1113 = vpop.f32.mrf.mxu0
    %1114 = vmatprep.mubr.bf16.mxu0 0
    %1115 = vmatmul.mubr.bf16.gmra.mxu0 %v975
    %v1116 = vpop.f32.mrf.mxu0
    %v1117 = vadd.f32 0.0, %v1116
    %v1118 = vpop.f32.mrf.mxu0
    %v1119 = vpop.f32.mrf.mxu0
    %v1120 = vadd.f32 0.0, %v1119
    %v1121 = vpop.f32.mrf.mxu0
    %1122 = vmatprep.mubr.bf16.mxu0 0
    %1123 = vmatmul.mubr.bf16.gmra.mxu0 %v976
    %v1124 = vpop.f32.mrf.mxu0
    %v1125 = vadd.f32 0.0, %v1124
    %v1126 = vpop.f32.mrf.mxu0
    %v1127 = vpop.f32.mrf.mxu0
    %v1128 = vpop.f32.mrf.mxu0
    %1129 = vdwg.mxu0
    %v1130 = vadd.f32 %v944, %v1077
    %v1131 = vadd.f32 %v945, %v1080
    %v1132 = vadd.f32 %v946, %v1085
    %v1133 = vadd.f32 %v947, %v1088
    %v1134 = vadd.f32 %v948, %v1093
    %v1135 = vadd.f32 %v949, %v1096
    %v1136 = vadd.f32 %v950, %v1101
    %v1137 = vadd.f32 %v951, %v1104
    %v1138 = vadd.f32 %v952, %v1109
    %v1139 = vadd.f32 %v953, %v1112
    %v1140 = vadd.f32 %v954, %v1117
    %v1141 = vadd.f32 %v955, %v1120
    %v1142 = vadd.f32 %v956, %v1125
    %v1143 = vld [vmem:[#allocation12] sm:$0x1]
    %v1145 = vlaneseq
    %v1146 = vshrl.u32 %v1145, 7
    %v1147 = vsub.s32 0, %v1146
    %v1148 = vrot.slane %v1143, %v1147
    %v1150 = vadd.f32 %v1130, %v1148
    %v1151 = vadd.f32 %v1131, %v1148
    %v1152 = vadd.f32 %v1132, %v1148
    %v1153 = vadd.f32 %v1133, %v1148
    %v1154 = vadd.f32 %v1134, %v1148
    %v1155 = vadd.f32 %v1135, %v1148
    %v1156 = vadd.f32 %v1136, %v1148
    %v1157 = vadd.f32 %v1137, %v1148
    %v1158 = vadd.f32 %v1138, %v1148
    %v1159 = vadd.f32 %v1139, %v1148
    %v1160 = vadd.f32 %v1140, %v1148
    %v1161 = vadd.f32 %v1141, %v1148
    %v1162 = vadd.f32 %v1142, %v1148
    %v1163 = vmul.f32 %v1150, 0.01
    %v1164 = vmul.f32 %v1151, 0.01
    %v1165 = vmul.f32 %v1152, 0.01
    %v1166 = vmul.f32 %v1153, 0.01
    %v1167 = vmul.f32 %v1154, 0.01
    %v1168 = vmul.f32 %v1155, 0.01
    %v1169 = vmul.f32 %v1156, 0.01
    %v1170 = vmul.f32 %v1157, 0.01
    %v1171 = vmul.f32 %v1158, 0.01
    %v1172 = vmul.f32 %v1159, 0.01
    %v1173 = vmul.f32 %v1160, 0.01
    %v1174 = vmul.f32 %v1161, 0.01
    %v1175 = vmul.f32 %v1162, 0.01
    %v1176 = vmax.f32 %v1150, %v1163
    %v1177 = vmax.f32 %v1151, %v1164
    %v1178 = vmax.f32 %v1152, %v1165
    %v1179 = vmax.f32 %v1153, %v1166
    %v1180 = vmax.f32 %v1154, %v1167
    %v1181 = vmax.f32 %v1155, %v1168
    %v1182 = vmax.f32 %v1156, %v1169
    %v1183 = vmax.f32 %v1157, %v1170
    %v1184 = vmax.f32 %v1158, %v1171
    %v1185 = vmax.f32 %v1159, %v1172
    %v1186 = vmax.f32 %v1160, %v1173
    %v1187 = vmax.f32 %v1161, %v1174
    %v1188 = vmax.f32 %v1162, %v1175
    %1189 = vst [vmem:[#allocation3] sm:$0xff] %v1176
    %1190 = vst [vmem:[#allocation3 + $0x8] sm:$0xff] %v1177
    %1191 = vst [vmem:[#allocation3 + $0x10] sm:$0xff] %v1178
    %1192 = vst [vmem:[#allocation3 + $0x18] sm:$0xff] %v1179
    %1193 = vst [vmem:[#allocation3 + $0x20] sm:$0xff] %v1180
    %1194 = vst [vmem:[#allocation3 + $0x28] sm:$0xff] %v1181
    %1195 = vst [vmem:[#allocation3 + $0x30] sm:$0xff] %v1182
    %1196 = vst [vmem:[#allocation3 + $0x38] sm:$0xff] %v1183
    %1197 = vst [vmem:[#allocation3 + $0x40] sm:$0xff] %v1184
    %1198 = vst [vmem:[#allocation3 + $0x48] sm:$0xff] %v1185
    %1199 = vst [vmem:[#allocation3 + $0x50] sm:$0xff] %v1186
    %1200 = vst [vmem:[#allocation3 + $0x58] sm:$0xff] %v1187
    %1201 = vst [vmem:[#allocation3 + $0x60] sm:$0xff] %v1188
    %v1202 = vld [vmem:[#allocation3] sm:$0xff]
    %v1203 = vld [vmem:[#allocation3 + $0x8] sm:$0xff]
    %v1204 = vld [vmem:[#allocation3 + $0x10] sm:$0xff]
    %v1205 = vld [vmem:[#allocation3 + $0x18] sm:$0xff]
    %v1206 = vld [vmem:[#allocation3 + $0x20] sm:$0xff]
    %v1207 = vld [vmem:[#allocation3 + $0x28] sm:$0xff]
    %v1208 = vld [vmem:[#allocation3 + $0x30] sm:$0xff]
    %v1209 = vld [vmem:[#allocation3 + $0x38] sm:$0xff]
    %v1210 = vld [vmem:[#allocation3 + $0x40] sm:$0xff]
    %v1211 = vld [vmem:[#allocation3 + $0x48] sm:$0xff]
    %v1212 = vld [vmem:[#allocation3 + $0x50] sm:$0xff]
    %v1213 = vld [vmem:[#allocation3 + $0x58] sm:$0xff]
    %v1214 = vld [vmem:[#allocation3 + $0x60] sm:$0xff]
    %v1215 = vpack.c.bf16 %v1203, %v1202
    %v1216 = vpack.c.bf16 %v1205, %v1204
    %v1217 = vpack.c.bf16 %v1207, %v1206
    %v1218 = vpack.c.bf16 %v1209, %v1208
    %v1219 = vpack.c.bf16 %v1211, %v1210
    %v1220 = vpack.c.bf16 %v1213, %v1212
    %v1221 = vpack.c.bf16 %v1214, %v1214
    %v1222 = vld [vmem:[#allocation14] sm:$0xf]
    %v1223 = vld [vmem:[#allocation14 + $0x4] sm:$0xf]
    %v1224 = vld [vmem:[#allocation14 + $0x8] sm:$0xf]
    %v1225 = vld [vmem:[#allocation14 + $0xc] sm:$0xf]
    %v1226 = vld [vmem:[#allocation14 + $0x10] sm:$0xf]
    %v1227 = vld [vmem:[#allocation14 + $0x14] sm:$0xf]
    %v1228 = vld [vmem:[#allocation14 + $0x18] sm:$0xf]
    %v1229 = vld [vmem:[#allocation14 + $0x1c] sm:$0xf]
    %v1230 = vld [vmem:[#allocation14 + $0x20] sm:$0xf]
    %v1231 = vld [vmem:[#allocation14 + $0x24] sm:$0xf]
    %v1232 = vld [vmem:[#allocation14 + $0x28] sm:$0xf]
    %v1233 = vld [vmem:[#allocation14 + $0x2c] sm:$0xf]
    %v1234 = vld [vmem:[#allocation14 + $0x30] sm:$0xf]
    %v1235 = vld [vmem:[#allocation14 + $0x34] sm:$0xf]
    %v1236 = vld [vmem:[#allocation14 + $0x38] sm:$0xf]
    %v1237 = vld [vmem:[#allocation14 + $0x3c] sm:$0xf]
    %v1238 = vld [vmem:[#allocation3 + $0x1] sm:$0xff]
    %v1239 = vld [vmem:[#allocation3 + $0x9] sm:$0xff]
    %v1240 = vld [vmem:[#allocation3 + $0x11] sm:$0xff]
    %v1241 = vld [vmem:[#allocation3 + $0x19] sm:$0xff]
    %v1242 = vld [vmem:[#allocation3 + $0x21] sm:$0xff]
    %v1243 = vld [vmem:[#allocation3 + $0x29] sm:$0xff]
    %v1244 = vld [vmem:[#allocation3 + $0x31] sm:$0xff]
    %v1245 = vld [vmem:[#allocation3 + $0x39] sm:$0xff]
    %v1246 = vld [vmem:[#allocation3 + $0x41] sm:$0xff]
    %v1247 = vld [vmem:[#allocation3 + $0x49] sm:$0xff]
    %v1248 = vld [vmem:[#allocation3 + $0x51] sm:$0xff]
    %v1249 = vld [vmem:[#allocation3 + $0x59] sm:$0xff]
    %v1250 = vld [vmem:[#allocation3 + $0x61] sm:$0xff]
    %v1251 = vpack.c.bf16 %v1239, %v1238
    %v1252 = vpack.c.bf16 %v1241, %v1240
    %v1253 = vpack.c.bf16 %v1243, %v1242
    %v1254 = vpack.c.bf16 %v1245, %v1244
    %v1255 = vpack.c.bf16 %v1247, %v1246
    %v1256 = vpack.c.bf16 %v1249, %v1248
    %v1257 = vpack.c.bf16 %v1250, %v1250
    %s1258 = scalar_lea.vmem [#allocation14], 64
    %v1259 = vld [vmem:[%s1258] sm:$0xf]
    %v1260 = vld [vmem:[%s1258 + $0x4] sm:$0xf]
    %v1261 = vld [vmem:[%s1258 + $0x8] sm:$0xf]
    %v1262 = vld [vmem:[%s1258 + $0xc] sm:$0xf]
    %v1263 = vld [vmem:[%s1258 + $0x10] sm:$0xf]
    %v1264 = vld [vmem:[%s1258 + $0x14] sm:$0xf]
    %v1265 = vld [vmem:[%s1258 + $0x18] sm:$0xf]
    %v1266 = vld [vmem:[%s1258 + $0x1c] sm:$0xf]
    %v1267 = vld [vmem:[%s1258 + $0x20] sm:$0xf]
    %v1268 = vld [vmem:[%s1258 + $0x24] sm:$0xf]
    %v1269 = vld [vmem:[%s1258 + $0x28] sm:$0xf]
    %v1270 = vld [vmem:[%s1258 + $0x2c] sm:$0xf]
    %v1271 = vld [vmem:[%s1258 + $0x30] sm:$0xf]
    %v1272 = vld [vmem:[%s1258 + $0x34] sm:$0xf]
    %v1273 = vld [vmem:[%s1258 + $0x38] sm:$0xf]
    %v1274 = vld [vmem:[%s1258 + $0x3c] sm:$0xf]
    %v1291 = vunpack.c.l.b16 %v1259
    %v1292 = vunpack.c.l.b16 %v1260
    %v1293 = vunpack.c.l.b16 %v1261
    %v1294 = vunpack.c.l.b16 %v1262
    %v1295 = vunpack.c.l.b16 %v1263
    %v1296 = vunpack.c.l.b16 %v1264
    %v1297 = vunpack.c.l.b16 %v1265
    %v1298 = vunpack.c.l.b16 %v1266
    %v1299 = vunpack.c.l.b16 %v1267
    %v1300 = vunpack.c.l.b16 %v1268
    %v1301 = vunpack.c.l.b16 %v1269
    %v1302 = vunpack.c.l.b16 %v1270
    %v1303 = vunpack.c.l.b16 %v1271
    %v1304 = vunpack.c.l.b16 %v1272
    %v1305 = vunpack.c.l.b16 %v1273
    %v1306 = vunpack.c.l.b16 %v1274
    %v1307 = vpack.c.b16 %v1292, %v1291
    %v1308 = vpack.c.b16 %v1294, %v1293
    %v1309 = vpack.c.b16 %v1296, %v1295
    %v1310 = vpack.c.b16 %v1298, %v1297
    %v1311 = vpack.c.b16 %v1300, %v1299
    %v1312 = vpack.c.b16 %v1302, %v1301
    %v1313 = vpack.c.b16 %v1304, %v1303
    %v1314 = vpack.c.b16 %v1306, %v1305
    %1323 = vmatprep.subr.bf16.mxu0 0
    %1324 = vmatpush1.bf16.msra.mxu0 %v1314
    %1325 = vmatprep.subr.bf16.mxu0 0
    %1326 = vmatpush1.bf16.msra.mxu0 %v1313
    %1327 = vmatprep.subr.bf16.mxu0 0
    %1328 = vmatpush1.bf16.msra.mxu0 %v1312
    %1329 = vmatprep.subr.bf16.mxu0 0
    %1330 = vmatpush1.bf16.msra.mxu0 %v1311
    %1331 = vmatprep.subr.bf16.mxu0 0
    %1332 = vmatpush1.bf16.msra.mxu0 %v1310
    %1333 = vmatprep.subr.bf16.mxu0 0
    %1334 = vmatpush1.bf16.msra.mxu0 %v1309
    %1335 = vmatprep.subr.bf16.mxu0 0
    %1336 = vmatpush1.bf16.msra.mxu0 %v1308
    %1337 = vmatprep.subr.bf16.mxu0 0
    %1338 = vmatpush1.bf16.msra.mxu0 %v1307
    %1339 = vmatprep.subr.bf16.mxu0 0
    %1340 = vmatpush2.bf16.msra.mxu0 0
    %1341 = vmatprep.subr.bf16.mxu0 0
    %1342 = vmatpush2.bf16.msra.mxu0 0
    %1343 = vmatprep.subr.bf16.mxu0 0
    %1344 = vmatpush2.bf16.msra.mxu0 0
    %1345 = vmatprep.subr.bf16.mxu0 0
    %1346 = vmatpush2.bf16.msra.mxu0 0
    %1347 = vmatprep.subr.bf16.mxu0 0
    %1348 = vmatpush2.bf16.msra.mxu0 0
    %1349 = vmatprep.subr.bf16.mxu0 0
    %1350 = vmatpush2.bf16.msra.mxu0 0
    %1351 = vmatprep.subr.bf16.mxu0 0
    %1352 = vmatpush2.bf16.msra.mxu0 0
    %1353 = vmatprep.subr.bf16.mxu0 0
    %1354 = vmatpush2.bf16.msra.mxu0 0
    %1355 = vmatprep.mubr.bf16.mxu0 0
    %1356 = vmatmul.mubr.bf16.gmra.mxu0 %v1251
    %v1357 = vpop.f32.mrf.mxu0
    %v1358 = vadd.f32 0.0, %v1357
    %v1359 = vpop.f32.mrf.mxu0
    %v1360 = vpop.f32.mrf.mxu0
    %v1361 = vadd.f32 0.0, %v1360
    %v1362 = vpop.f32.mrf.mxu0
    %1363 = vmatprep.mubr.bf16.mxu0 0
    %1364 = vmatmul.mubr.bf16.gmra.mxu0 %v1252
    %v1365 = vpop.f32.mrf.mxu0
    %v1366 = vadd.f32 0.0, %v1365
    %v1367 = vpop.f32.mrf.mxu0
    %v1368 = vpop.f32.mrf.mxu0
    %v1369 = vadd.f32 0.0, %v1368
    %v1370 = vpop.f32.mrf.mxu0
    %1371 = vmatprep.mubr.bf16.mxu0 0
    %1372 = vmatmul.mubr.bf16.gmra.mxu0 %v1253
    %v1373 = vpop.f32.mrf.mxu0
    %v1374 = vadd.f32 0.0, %v1373
    %v1375 = vpop.f32.mrf.mxu0
    %v1376 = vpop.f32.mrf.mxu0
    %v1377 = vadd.f32 0.0, %v1376
    %v1378 = vpop.f32.mrf.mxu0
    %1379 = vmatprep.mubr.bf16.mxu0 0
    %1380 = vmatmul.mubr.bf16.gmra.mxu0 %v1254
    %v1381 = vpop.f32.mrf.mxu0
    %v1382 = vadd.f32 0.0, %v1381
    %v1383 = vpop.f32.mrf.mxu0
    %v1384 = vpop.f32.mrf.mxu0
    %v1385 = vadd.f32 0.0, %v1384
    %v1386 = vpop.f32.mrf.mxu0
    %1387 = vmatprep.mubr.bf16.mxu0 0
    %1388 = vmatmul.mubr.bf16.gmra.mxu0 %v1255
    %v1389 = vpop.f32.mrf.mxu0
    %v1390 = vadd.f32 0.0, %v1389
    %v1391 = vpop.f32.mrf.mxu0
    %v1392 = vpop.f32.mrf.mxu0
    %v1393 = vadd.f32 0.0, %v1392
    %v1394 = vpop.f32.mrf.mxu0
    %1395 = vmatprep.mubr.bf16.mxu0 0
    %1396 = vmatmul.mubr.bf16.gmra.mxu0 %v1256
    %v1397 = vpop.f32.mrf.mxu0
    %v1398 = vadd.f32 0.0, %v1397
    %v1399 = vpop.f32.mrf.mxu0
    %v1400 = vpop.f32.mrf.mxu0
    %v1401 = vadd.f32 0.0, %v1400
    %v1402 = vpop.f32.mrf.mxu0
    %1403 = vmatprep.mubr.bf16.mxu0 0
    %1404 = vmatmul.mubr.bf16.gmra.mxu0 %v1257
    %v1405 = vpop.f32.mrf.mxu0
    %v1406 = vadd.f32 0.0, %v1405
    %v1407 = vpop.f32.mrf.mxu0
    %v1408 = vpop.f32.mrf.mxu0
    %v1409 = vpop.f32.mrf.mxu0
    %1410 = vdwg.mxu0
    %v1427 = vunpack.c.l.b16 %v1222
    %v1428 = vunpack.c.l.b16 %v1223
    %v1429 = vunpack.c.l.b16 %v1224
    %v1430 = vunpack.c.l.b16 %v1225
    %v1431 = vunpack.c.l.b16 %v1226
    %v1432 = vunpack.c.l.b16 %v1227
    %v1433 = vunpack.c.l.b16 %v1228
    %v1434 = vunpack.c.l.b16 %v1229
    %v1435 = vunpack.c.l.b16 %v1230
    %v1436 = vunpack.c.l.b16 %v1231
    %v1437 = vunpack.c.l.b16 %v1232
    %v1438 = vunpack.c.l.b16 %v1233
    %v1439 = vunpack.c.l.b16 %v1234
    %v1440 = vunpack.c.l.b16 %v1235
    %v1441 = vunpack.c.l.b16 %v1236
    %v1442 = vunpack.c.l.b16 %v1237
    %v1443 = vpack.c.b16 %v1428, %v1427
    %v1444 = vpack.c.b16 %v1430, %v1429
    %v1445 = vpack.c.b16 %v1432, %v1431
    %v1446 = vpack.c.b16 %v1434, %v1433
    %v1447 = vpack.c.b16 %v1436, %v1435
    %v1448 = vpack.c.b16 %v1438, %v1437
    %v1449 = vpack.c.b16 %v1440, %v1439
    %v1450 = vpack.c.b16 %v1442, %v1441
    %1459 = vmatprep.subr.bf16.mxu0 0
    %1460 = vmatpush1.bf16.msra.mxu0 %v1450
    %1461 = vmatprep.subr.bf16.mxu0 0
    %1462 = vmatpush1.bf16.msra.mxu0 %v1449
    %1463 = vmatprep.subr.bf16.mxu0 0
    %1464 = vmatpush1.bf16.msra.mxu0 %v1448
    %1465 = vmatprep.subr.bf16.mxu0 0
    %1466 = vmatpush1.bf16.msra.mxu0 %v1447
    %1467 = vmatprep.subr.bf16.mxu0 0
    %1468 = vmatpush1.bf16.msra.mxu0 %v1446
    %1469 = vmatprep.subr.bf16.mxu0 0
    %1470 = vmatpush1.bf16.msra.mxu0 %v1445
    %1471 = vmatprep.subr.bf16.mxu0 0
    %1472 = vmatpush1.bf16.msra.mxu0 %v1444
    %1473 = vmatprep.subr.bf16.mxu0 0
    %1474 = vmatpush1.bf16.msra.mxu0 %v1443
    %1475 = vmatprep.subr.bf16.mxu0 0
    %1476 = vmatpush2.bf16.msra.mxu0 0
    %1477 = vmatprep.subr.bf16.mxu0 0
    %1478 = vmatpush2.bf16.msra.mxu0 0
    %1479 = vmatprep.subr.bf16.mxu0 0
    %1480 = vmatpush2.bf16.msra.mxu0 0
    %1481 = vmatprep.subr.bf16.mxu0 0
    %1482 = vmatpush2.bf16.msra.mxu0 0
    %1483 = vmatprep.subr.bf16.mxu0 0
    %1484 = vmatpush2.bf16.msra.mxu0 0
    %1485 = vmatprep.subr.bf16.mxu0 0
    %1486 = vmatpush2.bf16.msra.mxu0 0
    %1487 = vmatprep.subr.bf16.mxu0 0
    %1488 = vmatpush2.bf16.msra.mxu0 0
    %1489 = vmatprep.subr.bf16.mxu0 0
    %1490 = vmatpush2.bf16.msra.mxu0 0
    %1491 = vmatprep.mubr.bf16.mxu0 0
    %1492 = vmatmul.mubr.bf16.gmra.mxu0 %v1215
    %v1493 = vpop.f32.mrf.mxu0
    %v1494 = vadd.f32 %v1358, %v1493
    %v1495 = vpop.f32.mrf.mxu0
    %v1496 = vpop.f32.mrf.mxu0
    %v1497 = vadd.f32 %v1361, %v1496
    %v1498 = vpop.f32.mrf.mxu0
    %1499 = vmatprep.mubr.bf16.mxu0 0
    %1500 = vmatmul.mubr.bf16.gmra.mxu0 %v1216
    %v1501 = vpop.f32.mrf.mxu0
    %v1502 = vadd.f32 %v1366, %v1501
    %v1503 = vpop.f32.mrf.mxu0
    %v1504 = vpop.f32.mrf.mxu0
    %v1505 = vadd.f32 %v1369, %v1504
    %v1506 = vpop.f32.mrf.mxu0
    %1507 = vmatprep.mubr.bf16.mxu0 0
    %1508 = vmatmul.mubr.bf16.gmra.mxu0 %v1217
    %v1509 = vpop.f32.mrf.mxu0
    %v1510 = vadd.f32 %v1374, %v1509
    %v1511 = vpop.f32.mrf.mxu0
    %v1512 = vpop.f32.mrf.mxu0
    %v1513 = vadd.f32 %v1377, %v1512
    %v1514 = vpop.f32.mrf.mxu0
    %1515 = vmatprep.mubr.bf16.mxu0 0
    %1516 = vmatmul.mubr.bf16.gmra.mxu0 %v1218
    %v1517 = vpop.f32.mrf.mxu0
    %v1518 = vadd.f32 %v1382, %v1517
    %v1519 = vpop.f32.mrf.mxu0
    %v1520 = vpop.f32.mrf.mxu0
    %v1521 = vadd.f32 %v1385, %v1520
    %v1522 = vpop.f32.mrf.mxu0
    %1523 = vmatprep.mubr.bf16.mxu0 0
    %1524 = vmatmul.mubr.bf16.gmra.mxu0 %v1219
    %v1525 = vpop.f32.mrf.mxu0
    %v1526 = vadd.f32 %v1390, %v1525
    %v1527 = vpop.f32.mrf.mxu0
    %v1528 = vpop.f32.mrf.mxu0
    %v1529 = vadd.f32 %v1393, %v1528
    %v1530 = vpop.f32.mrf.mxu0
    %1531 = vmatprep.mubr.bf16.mxu0 0
    %1532 = vmatmul.mubr.bf16.gmra.mxu0 %v1220
    %v1533 = vpop.f32.mrf.mxu0
    %v1534 = vadd.f32 %v1398, %v1533
    %v1535 = vpop.f32.mrf.mxu0
    %v1536 = vpop.f32.mrf.mxu0
    %v1537 = vadd.f32 %v1401, %v1536
    %v1538 = vpop.f32.mrf.mxu0
    %1539 = vmatprep.mubr.bf16.mxu0 0
    %1540 = vmatmul.mubr.bf16.gmra.mxu0 %v1221
    %v1541 = vpop.f32.mrf.mxu0
    %v1542 = vadd.f32 %v1406, %v1541
    %v1543 = vpop.f32.mrf.mxu0
    %v1544 = vpop.f32.mrf.mxu0
    %v1545 = vpop.f32.mrf.mxu0
    %1546 = vdwg.mxu0
    %v1547 = vld [vmem:[#allocation3 + $0x7] sm:$0xff]
    %v1548 = vld [vmem:[#allocation3 + $0xf] sm:$0xff]
    %v1549 = vld [vmem:[#allocation3 + $0x17] sm:$0xff]
    %v1550 = vld [vmem:[#allocation3 + $0x1f] sm:$0xff]
    %v1551 = vld [vmem:[#allocation3 + $0x27] sm:$0xff]
    %v1552 = vld [vmem:[#allocation3 + $0x2f] sm:$0xff]
    %v1553 = vld [vmem:[#allocation3 + $0x37] sm:$0xff]
    %v1554 = vld [vmem:[#allocation3 + $0x3f] sm:$0xff]
    %v1555 = vld [vmem:[#allocation3 + $0x47] sm:$0xff]
    %v1556 = vld [vmem:[#allocation3 + $0x4f] sm:$0xff]
    %v1557 = vld [vmem:[#allocation3 + $0x57] sm:$0xff]
    %v1558 = vld [vmem:[#allocation3 + $0x5f] sm:$0xff]
    %v1559 = vld [vmem:[#allocation3 + $0x67] sm:$0xff]
    %v1560 = vpack.c.bf16 %v1548, %v1547
    %v1561 = vpack.c.bf16 %v1550, %v1549
    %v1562 = vpack.c.bf16 %v1552, %v1551
    %v1563 = vpack.c.bf16 %v1554, %v1553
    %v1564 = vpack.c.bf16 %v1556, %v1555
    %v1565 = vpack.c.bf16 %v1558, %v1557
    %v1566 = vpack.c.bf16 %v1559, %v1559
    %s1567 = scalar_lea.vmem [#allocation14], 128
    %v1568 = vld [vmem:[%s1567] sm:$0xf]
    %v1569 = vld [vmem:[%s1567 + $0x4] sm:$0xf]
    %v1570 = vld [vmem:[%s1567 + $0x8] sm:$0xf]
    %v1571 = vld [vmem:[%s1567 + $0xc] sm:$0xf]
    %v1572 = vld [vmem:[%s1567 + $0x10] sm:$0xf]
    %v1573 = vld [vmem:[%s1567 + $0x14] sm:$0xf]
    %v1574 = vld [vmem:[%s1567 + $0x18] sm:$0xf]
    %v1575 = vld [vmem:[%s1567 + $0x1c] sm:$0xf]
    %v1576 = vld [vmem:[%s1567 + $0x20] sm:$0xf]
    %v1577 = vld [vmem:[%s1567 + $0x24] sm:$0xf]
    %v1578 = vld [vmem:[%s1567 + $0x28] sm:$0xf]
    %v1579 = vld [vmem:[%s1567 + $0x2c] sm:$0xf]
    %v1580 = vld [vmem:[%s1567 + $0x30] sm:$0xf]
    %v1581 = vld [vmem:[%s1567 + $0x34] sm:$0xf]
    %v1582 = vld [vmem:[%s1567 + $0x38] sm:$0xf]
    %v1583 = vld [vmem:[%s1567 + $0x3c] sm:$0xf]
    %v1600 = vunpack.c.l.b16 %v1568
    %v1601 = vunpack.c.l.b16 %v1569
    %v1602 = vunpack.c.l.b16 %v1570
    %v1603 = vunpack.c.l.b16 %v1571
    %v1604 = vunpack.c.l.b16 %v1572
    %v1605 = vunpack.c.l.b16 %v1573
    %v1606 = vunpack.c.l.b16 %v1574
    %v1607 = vunpack.c.l.b16 %v1575
    %v1608 = vunpack.c.l.b16 %v1576
    %v1609 = vunpack.c.l.b16 %v1577
    %v1610 = vunpack.c.l.b16 %v1578
    %v1611 = vunpack.c.l.b16 %v1579
    %v1612 = vunpack.c.l.b16 %v1580
    %v1613 = vunpack.c.l.b16 %v1581
    %v1614 = vunpack.c.l.b16 %v1582
    %v1615 = vunpack.c.l.b16 %v1583
    %v1616 = vpack.c.b16 %v1601, %v1600
    %v1617 = vpack.c.b16 %v1603, %v1602
    %v1618 = vpack.c.b16 %v1605, %v1604
    %v1619 = vpack.c.b16 %v1607, %v1606
    %v1620 = vpack.c.b16 %v1609, %v1608
    %v1621 = vpack.c.b16 %v1611, %v1610
    %v1622 = vpack.c.b16 %v1613, %v1612
    %v1623 = vpack.c.b16 %v1615, %v1614
    %1632 = vmatprep.subr.bf16.mxu0 0
    %1633 = vmatpush1.bf16.msra.mxu0 %v1623
    %1634 = vmatprep.subr.bf16.mxu0 0
    %1635 = vmatpush1.bf16.msra.mxu0 %v1622
    %1636 = vmatprep.subr.bf16.mxu0 0
    %1637 = vmatpush1.bf16.msra.mxu0 %v1621
    %1638 = vmatprep.subr.bf16.mxu0 0
    %1639 = vmatpush1.bf16.msra.mxu0 %v1620
    %1640 = vmatprep.subr.bf16.mxu0 0
    %1641 = vmatpush1.bf16.msra.mxu0 %v1619
    %1642 = vmatprep.subr.bf16.mxu0 0
    %1643 = vmatpush1.bf16.msra.mxu0 %v1618
    %1644 = vmatprep.subr.bf16.mxu0 0
    %1645 = vmatpush1.bf16.msra.mxu0 %v1617
    %1646 = vmatprep.subr.bf16.mxu0 0
    %1647 = vmatpush1.bf16.msra.mxu0 %v1616
    %1648 = vmatprep.subr.bf16.mxu0 0
    %1649 = vmatpush2.bf16.msra.mxu0 0
    %1650 = vmatprep.subr.bf16.mxu0 0
    %1651 = vmatpush2.bf16.msra.mxu0 0
    %1652 = vmatprep.subr.bf16.mxu0 0
    %1653 = vmatpush2.bf16.msra.mxu0 0
    %1654 = vmatprep.subr.bf16.mxu0 0
    %1655 = vmatpush2.bf16.msra.mxu0 0
    %1656 = vmatprep.subr.bf16.mxu0 0
    %1657 = vmatpush2.bf16.msra.mxu0 0
    %1658 = vmatprep.subr.bf16.mxu0 0
    %1659 = vmatpush2.bf16.msra.mxu0 0
    %1660 = vmatprep.subr.bf16.mxu0 0
    %1661 = vmatpush2.bf16.msra.mxu0 0
    %1662 = vmatprep.subr.bf16.mxu0 0
    %1663 = vmatpush2.bf16.msra.mxu0 0
    %1664 = vmatprep.mubr.bf16.mxu0 0
    %1665 = vmatmul.mubr.bf16.gmra.mxu0 %v1560
    %v1666 = vpop.f32.mrf.mxu0
    %v1667 = vadd.f32 0.0, %v1666
    %v1668 = vpop.f32.mrf.mxu0
    %v1669 = vpop.f32.mrf.mxu0
    %v1670 = vadd.f32 0.0, %v1669
    %v1671 = vpop.f32.mrf.mxu0
    %1672 = vmatprep.mubr.bf16.mxu0 0
    %1673 = vmatmul.mubr.bf16.gmra.mxu0 %v1561
    %v1674 = vpop.f32.mrf.mxu0
    %v1675 = vadd.f32 0.0, %v1674
    %v1676 = vpop.f32.mrf.mxu0
    %v1677 = vpop.f32.mrf.mxu0
    %v1678 = vadd.f32 0.0, %v1677
    %v1679 = vpop.f32.mrf.mxu0
    %1680 = vmatprep.mubr.bf16.mxu0 0
    %1681 = vmatmul.mubr.bf16.gmra.mxu0 %v1562
    %v1682 = vpop.f32.mrf.mxu0
    %v1683 = vadd.f32 0.0, %v1682
    %v1684 = vpop.f32.mrf.mxu0
    %v1685 = vpop.f32.mrf.mxu0
    %v1686 = vadd.f32 0.0, %v1685
    %v1687 = vpop.f32.mrf.mxu0
    %1688 = vmatprep.mubr.bf16.mxu0 0
    %1689 = vmatmul.mubr.bf16.gmra.mxu0 %v1563
    %v1690 = vpop.f32.mrf.mxu0
    %v1691 = vadd.f32 0.0, %v1690
    %v1692 = vpop.f32.mrf.mxu0
    %v1693 = vpop.f32.mrf.mxu0
    %v1694 = vadd.f32 0.0, %v1693
    %v1695 = vpop.f32.mrf.mxu0
    %1696 = vmatprep.mubr.bf16.mxu0 0
    %1697 = vmatmul.mubr.bf16.gmra.mxu0 %v1564
    %v1698 = vpop.f32.mrf.mxu0
    %v1699 = vadd.f32 0.0, %v1698
    %v1700 = vpop.f32.mrf.mxu0
    %v1701 = vpop.f32.mrf.mxu0
    %v1702 = vadd.f32 0.0, %v1701
    %v1703 = vpop.f32.mrf.mxu0
    %1704 = vmatprep.mubr.bf16.mxu0 0
    %1705 = vmatmul.mubr.bf16.gmra.mxu0 %v1565
    %v1706 = vpop.f32.mrf.mxu0
    %v1707 = vadd.f32 0.0, %v1706
    %v1708 = vpop.f32.mrf.mxu0
    %v1709 = vpop.f32.mrf.mxu0
    %v1710 = vadd.f32 0.0, %v1709
    %v1711 = vpop.f32.mrf.mxu0
    %1712 = vmatprep.mubr.bf16.mxu0 0
    %1713 = vmatmul.mubr.bf16.gmra.mxu0 %v1566
    %v1714 = vpop.f32.mrf.mxu0
    %v1715 = vadd.f32 0.0, %v1714
    %v1716 = vpop.f32.mrf.mxu0
    %v1717 = vpop.f32.mrf.mxu0
    %v1718 = vpop.f32.mrf.mxu0
    %1719 = vdwg.mxu0
    %v1720 = vadd.f32 %v1494, %v1667
    %v1721 = vadd.f32 %v1497, %v1670
    %v1722 = vadd.f32 %v1502, %v1675
    %v1723 = vadd.f32 %v1505, %v1678
    %v1724 = vadd.f32 %v1510, %v1683
    %v1725 = vadd.f32 %v1513, %v1686
    %v1726 = vadd.f32 %v1518, %v1691
    %v1727 = vadd.f32 %v1521, %v1694
    %v1728 = vadd.f32 %v1526, %v1699
    %v1729 = vadd.f32 %v1529, %v1702
    %v1730 = vadd.f32 %v1534, %v1707
    %v1731 = vadd.f32 %v1537, %v1710
    %v1732 = vadd.f32 %v1542, %v1715
    %v1733 = vld [vmem:[#allocation3 + $0x8] sm:$0xff]
    %v1734 = vld [vmem:[#allocation3 + $0x10] sm:$0xff]
    %v1735 = vld [vmem:[#allocation3 + $0x18] sm:$0xff]
    %v1736 = vld [vmem:[#allocation3 + $0x20] sm:$0xff]
    %v1737 = vld [vmem:[#allocation3 + $0x28] sm:$0xff]
    %v1738 = vld [vmem:[#allocation3 + $0x30] sm:$0xff]
    %v1739 = vld [vmem:[#allocation3 + $0x38] sm:$0xff]
    %v1740 = vld [vmem:[#allocation3 + $0x40] sm:$0xff]
    %v1741 = vld [vmem:[#allocation3 + $0x48] sm:$0xff]
    %v1742 = vld [vmem:[#allocation3 + $0x50] sm:$0xff]
    %v1743 = vld [vmem:[#allocation3 + $0x58] sm:$0xff]
    %v1744 = vld [vmem:[#allocation3 + $0x60] sm:$0xff]
    %v1745 = vld [vmem:[#allocation3 + $0x68] sm:$0xff]
    %v1746 = vpack.c.bf16 %v1734, %v1733
    %v1747 = vpack.c.bf16 %v1736, %v1735
    %v1748 = vpack.c.bf16 %v1738, %v1737
    %v1749 = vpack.c.bf16 %v1740, %v1739
    %v1750 = vpack.c.bf16 %v1742, %v1741
    %v1751 = vpack.c.bf16 %v1744, %v1743
    %v1752 = vpack.c.bf16 %v1745, %v1745
    %s1753 = scalar_lea.vmem [#allocation14], 192
    %v1754 = vld [vmem:[%s1753] sm:$0xf]
    %v1755 = vld [vmem:[%s1753 + $0x4] sm:$0xf]
    %v1756 = vld [vmem:[%s1753 + $0x8] sm:$0xf]
    %v1757 = vld [vmem:[%s1753 + $0xc] sm:$0xf]
    %v1758 = vld [vmem:[%s1753 + $0x10] sm:$0xf]
    %v1759 = vld [vmem:[%s1753 + $0x14] sm:$0xf]
    %v1760 = vld [vmem:[%s1753 + $0x18] sm:$0xf]
    %v1761 = vld [vmem:[%s1753 + $0x1c] sm:$0xf]
    %v1762 = vld [vmem:[%s1753 + $0x20] sm:$0xf]
    %v1763 = vld [vmem:[%s1753 + $0x24] sm:$0xf]
    %v1764 = vld [vmem:[%s1753 + $0x28] sm:$0xf]
    %v1765 = vld [vmem:[%s1753 + $0x2c] sm:$0xf]
    %v1766 = vld [vmem:[%s1753 + $0x30] sm:$0xf]
    %v1767 = vld [vmem:[%s1753 + $0x34] sm:$0xf]
    %v1768 = vld [vmem:[%s1753 + $0x38] sm:$0xf]
    %v1769 = vld [vmem:[%s1753 + $0x3c] sm:$0xf]
    %v1786 = vunpack.c.l.b16 %v1754
    %v1787 = vunpack.c.l.b16 %v1755
    %v1788 = vunpack.c.l.b16 %v1756
    %v1789 = vunpack.c.l.b16 %v1757
    %v1790 = vunpack.c.l.b16 %v1758
    %v1791 = vunpack.c.l.b16 %v1759
    %v1792 = vunpack.c.l.b16 %v1760
    %v1793 = vunpack.c.l.b16 %v1761
    %v1794 = vunpack.c.l.b16 %v1762
    %v1795 = vunpack.c.l.b16 %v1763
    %v1796 = vunpack.c.l.b16 %v1764
    %v1797 = vunpack.c.l.b16 %v1765
    %v1798 = vunpack.c.l.b16 %v1766
    %v1799 = vunpack.c.l.b16 %v1767
    %v1800 = vunpack.c.l.b16 %v1768
    %v1801 = vunpack.c.l.b16 %v1769
    %v1802 = vpack.c.b16 %v1787, %v1786
    %v1803 = vpack.c.b16 %v1789, %v1788
    %v1804 = vpack.c.b16 %v1791, %v1790
    %v1805 = vpack.c.b16 %v1793, %v1792
    %v1806 = vpack.c.b16 %v1795, %v1794
    %v1807 = vpack.c.b16 %v1797, %v1796
    %v1808 = vpack.c.b16 %v1799, %v1798
    %v1809 = vpack.c.b16 %v1801, %v1800
    %1818 = vmatprep.subr.bf16.mxu0 0
    %1819 = vmatpush1.bf16.msra.mxu0 %v1809
    %1820 = vmatprep.subr.bf16.mxu0 0
    %1821 = vmatpush1.bf16.msra.mxu0 %v1808
    %1822 = vmatprep.subr.bf16.mxu0 0
    %1823 = vmatpush1.bf16.msra.mxu0 %v1807
    %1824 = vmatprep.subr.bf16.mxu0 0
    %1825 = vmatpush1.bf16.msra.mxu0 %v1806
    %1826 = vmatprep.subr.bf16.mxu0 0
    %1827 = vmatpush1.bf16.msra.mxu0 %v1805
    %1828 = vmatprep.subr.bf16.mxu0 0
    %1829 = vmatpush1.bf16.msra.mxu0 %v1804
    %1830 = vmatprep.subr.bf16.mxu0 0
    %1831 = vmatpush1.bf16.msra.mxu0 %v1803
    %1832 = vmatprep.subr.bf16.mxu0 0
    %1833 = vmatpush1.bf16.msra.mxu0 %v1802
    %1834 = vmatprep.subr.bf16.mxu0 0
    %1835 = vmatpush2.bf16.msra.mxu0 0
    %1836 = vmatprep.subr.bf16.mxu0 0
    %1837 = vmatpush2.bf16.msra.mxu0 0
    %1838 = vmatprep.subr.bf16.mxu0 0
    %1839 = vmatpush2.bf16.msra.mxu0 0
    %1840 = vmatprep.subr.bf16.mxu0 0
    %1841 = vmatpush2.bf16.msra.mxu0 0
    %1842 = vmatprep.subr.bf16.mxu0 0
    %1843 = vmatpush2.bf16.msra.mxu0 0
    %1844 = vmatprep.subr.bf16.mxu0 0
    %1845 = vmatpush2.bf16.msra.mxu0 0
    %1846 = vmatprep.subr.bf16.mxu0 0
    %1847 = vmatpush2.bf16.msra.mxu0 0
    %1848 = vmatprep.subr.bf16.mxu0 0
    %1849 = vmatpush2.bf16.msra.mxu0 0
    %1850 = vmatprep.mubr.bf16.mxu0 0
    %1851 = vmatmul.mubr.bf16.gmra.mxu0 %v1746
    %v1852 = vpop.f32.mrf.mxu0
    %v1853 = vadd.f32 0.0, %v1852
    %v1854 = vpop.f32.mrf.mxu0
    %v1855 = vpop.f32.mrf.mxu0
    %v1856 = vadd.f32 0.0, %v1855
    %v1857 = vpop.f32.mrf.mxu0
    %1858 = vmatprep.mubr.bf16.mxu0 0
    %1859 = vmatmul.mubr.bf16.gmra.mxu0 %v1747
    %v1860 = vpop.f32.mrf.mxu0
    %v1861 = vadd.f32 0.0, %v1860
    %v1862 = vpop.f32.mrf.mxu0
    %v1863 = vpop.f32.mrf.mxu0
    %v1864 = vadd.f32 0.0, %v1863
    %v1865 = vpop.f32.mrf.mxu0
    %1866 = vmatprep.mubr.bf16.mxu0 0
    %1867 = vmatmul.mubr.bf16.gmra.mxu0 %v1748
    %v1868 = vpop.f32.mrf.mxu0
    %v1869 = vadd.f32 0.0, %v1868
    %v1870 = vpop.f32.mrf.mxu0
    %v1871 = vpop.f32.mrf.mxu0
    %v1872 = vadd.f32 0.0, %v1871
    %v1873 = vpop.f32.mrf.mxu0
    %1874 = vmatprep.mubr.bf16.mxu0 0
    %1875 = vmatmul.mubr.bf16.gmra.mxu0 %v1749
    %v1876 = vpop.f32.mrf.mxu0
    %v1877 = vadd.f32 0.0, %v1876
    %v1878 = vpop.f32.mrf.mxu0
    %v1879 = vpop.f32.mrf.mxu0
    %v1880 = vadd.f32 0.0, %v1879
    %v1881 = vpop.f32.mrf.mxu0
    %1882 = vmatprep.mubr.bf16.mxu0 0
    %1883 = vmatmul.mubr.bf16.gmra.mxu0 %v1750
    %v1884 = vpop.f32.mrf.mxu0
    %v1885 = vadd.f32 0.0, %v1884
    %v1886 = vpop.f32.mrf.mxu0
    %v1887 = vpop.f32.mrf.mxu0
    %v1888 = vadd.f32 0.0, %v1887
    %v1889 = vpop.f32.mrf.mxu0
    %1890 = vmatprep.mubr.bf16.mxu0 0
    %1891 = vmatmul.mubr.bf16.gmra.mxu0 %v1751
    %v1892 = vpop.f32.mrf.mxu0
    %v1893 = vadd.f32 0.0, %v1892
    %v1894 = vpop.f32.mrf.mxu0
    %v1895 = vpop.f32.mrf.mxu0
    %v1896 = vadd.f32 0.0, %v1895
    %v1897 = vpop.f32.mrf.mxu0
    %1898 = vmatprep.mubr.bf16.mxu0 0
    %1899 = vmatmul.mubr.bf16.gmra.mxu0 %v1752
    %v1900 = vpop.f32.mrf.mxu0
    %v1901 = vadd.f32 0.0, %v1900
    %v1902 = vpop.f32.mrf.mxu0
    %v1903 = vpop.f32.mrf.mxu0
    %v1904 = vpop.f32.mrf.mxu0
    %1905 = vdwg.mxu0
    %v1906 = vadd.f32 %v1720, %v1853
    %v1907 = vadd.f32 %v1721, %v1856
    %v1908 = vadd.f32 %v1722, %v1861
    %v1909 = vadd.f32 %v1723, %v1864
    %v1910 = vadd.f32 %v1724, %v1869
    %v1911 = vadd.f32 %v1725, %v1872
    %v1912 = vadd.f32 %v1726, %v1877
    %v1913 = vadd.f32 %v1727, %v1880
    %v1914 = vadd.f32 %v1728, %v1885
    %v1915 = vadd.f32 %v1729, %v1888
    %v1916 = vadd.f32 %v1730, %v1893
    %v1917 = vadd.f32 %v1731, %v1896
    %v1918 = vadd.f32 %v1732, %v1901
    %v1919 = vld [vmem:[#allocation15] sm:$0x1]
    %v1921 = vlaneseq
    %v1922 = vshrl.u32 %v1921, 7
    %v1923 = vsub.s32 0, %v1922
    %v1924 = vrot.slane %v1919, %v1923
    %v1926 = vadd.f32 %v1906, %v1924
    %v1927 = vadd.f32 %v1907, %v1924
    %v1928 = vadd.f32 %v1908, %v1924
    %v1929 = vadd.f32 %v1909, %v1924
    %v1930 = vadd.f32 %v1910, %v1924
    %v1931 = vadd.f32 %v1911, %v1924
    %v1932 = vadd.f32 %v1912, %v1924
    %v1933 = vadd.f32 %v1913, %v1924
    %v1934 = vadd.f32 %v1914, %v1924
    %v1935 = vadd.f32 %v1915, %v1924
    %v1936 = vadd.f32 %v1916, %v1924
    %v1937 = vadd.f32 %v1917, %v1924
    %v1938 = vadd.f32 %v1918, %v1924
    %v1939 = vmul.f32 %v1926, 0.01
    %v1940 = vmul.f32 %v1927, 0.01
    %v1941 = vmul.f32 %v1928, 0.01
    %v1942 = vmul.f32 %v1929, 0.01
    %v1943 = vmul.f32 %v1930, 0.01
    %v1944 = vmul.f32 %v1931, 0.01
    %v1945 = vmul.f32 %v1932, 0.01
    %v1946 = vmul.f32 %v1933, 0.01
    %v1947 = vmul.f32 %v1934, 0.01
    %v1948 = vmul.f32 %v1935, 0.01
    %v1949 = vmul.f32 %v1936, 0.01
    %v1950 = vmul.f32 %v1937, 0.01
    %v1951 = vmul.f32 %v1938, 0.01
    %v1952 = vmax.f32 %v1926, %v1939
    %v1953 = vmax.f32 %v1927, %v1940
    %v1954 = vmax.f32 %v1928, %v1941
    %v1955 = vmax.f32 %v1929, %v1942
    %v1956 = vmax.f32 %v1930, %v1943
    %v1957 = vmax.f32 %v1931, %v1944
    %v1958 = vmax.f32 %v1932, %v1945
    %v1959 = vmax.f32 %v1933, %v1946
    %v1960 = vmax.f32 %v1934, %v1947
    %v1961 = vmax.f32 %v1935, %v1948
    %v1962 = vmax.f32 %v1936, %v1949
    %v1963 = vmax.f32 %v1937, %v1950
    %v1964 = vmax.f32 %v1938, %v1951
    %1965 = vst [vmem:[#allocation4] sm:$0xff] %v1952
    %1966 = vst [vmem:[#allocation4 + $0x8] sm:$0xff] %v1953
    %1967 = vst [vmem:[#allocation4 + $0x10] sm:$0xff] %v1954
    %1968 = vst [vmem:[#allocation4 + $0x18] sm:$0xff] %v1955
    %1969 = vst [vmem:[#allocation4 + $0x20] sm:$0xff] %v1956
    %1970 = vst [vmem:[#allocation4 + $0x28] sm:$0xff] %v1957
    %1971 = vst [vmem:[#allocation4 + $0x30] sm:$0xff] %v1958
    %1972 = vst [vmem:[#allocation4 + $0x38] sm:$0xff] %v1959
    %1973 = vst [vmem:[#allocation4 + $0x40] sm:$0xff] %v1960
    %1974 = vst [vmem:[#allocation4 + $0x48] sm:$0xff] %v1961
    %1975 = vst [vmem:[#allocation4 + $0x50] sm:$0xff] %v1962
    %1976 = vst [vmem:[#allocation4 + $0x58] sm:$0xff] %v1963
    %1977 = vst [vmem:[#allocation4 + $0x60] sm:$0xff] %v1964
    %v1978 = vld [vmem:[#allocation4] sm:$0x1]
    %1979 = vst [vmem:[#allocation5] sm:$0x1] %v1978
    %v1980 = vld [vmem:[#allocation4 + $0x1] sm:$0x1]
    %1981 = vst [vmem:[#allocation5 + $0x2] sm:$0x1] %v1980
    %v1982 = vld [vmem:[#allocation4 + $0x2] sm:$0x1]
    %1983 = vst [vmem:[#allocation5 + $0x4] sm:$0x1] %v1982
    %v1984 = vld [vmem:[#allocation4 + $0x3] sm:$0x1]
    %1985 = vst [vmem:[#allocation5 + $0x6] sm:$0x1] %v1984
    %v1986 = vld [vmem:[#allocation4 + $0x7] sm:$0x1]
    %1987 = vst [vmem:[#allocation5 + $0x8] sm:$0x1] %v1986
    %v1988 = vld [vmem:[#allocation4 + $0x8] sm:$0x1]
    %1989 = vst [vmem:[#allocation5 + $0xa] sm:$0x1] %v1988
    %v1990 = vld [vmem:[#allocation4 + $0x9] sm:$0x1]
    %1991 = vst [vmem:[#allocation5 + $0xc] sm:$0x1] %v1990
    %v1992 = vld [vmem:[#allocation4 + $0xa] sm:$0x1]
    %1993 = vst [vmem:[#allocation5 + $0xe] sm:$0x1] %v1992
    %v1994 = vld [vmem:[#allocation4 + $0xe] sm:$0x1]
    %1995 = vst [vmem:[#allocation5 + $0x10] sm:$0x1] %v1994
    %v1996 = vld [vmem:[#allocation4 + $0xf] sm:$0x1]
    %1997 = vst [vmem:[#allocation5 + $0x12] sm:$0x1] %v1996
    %v1998 = vld [vmem:[#allocation4 + $0x10] sm:$0x1]
    %1999 = vst [vmem:[#allocation5 + $0x14] sm:$0x1] %v1998
    %v2000 = vld [vmem:[#allocation4 + $0x11] sm:$0x1]
    %2001 = vst [vmem:[#allocation5 + $0x16] sm:$0x1] %v2000
    %v2002 = vld [vmem:[#allocation4 + $0x15] sm:$0x1]
    %2003 = vst [vmem:[#allocation5 + $0x18] sm:$0x1] %v2002
    %v2004 = vld [vmem:[#allocation4 + $0x16] sm:$0x1]
    %2005 = vst [vmem:[#allocation5 + $0x1a] sm:$0x1] %v2004
    %v2006 = vld [vmem:[#allocation4 + $0x17] sm:$0x1]
    %2007 = vst [vmem:[#allocation5 + $0x1c] sm:$0x1] %v2006
    %v2008 = vld [vmem:[#allocation4 + $0x18] sm:$0x1]
    %2009 = vst [vmem:[#allocation5 + $0x1e] sm:$0x1] %v2008
    %v2010 = vld [vmem:[#allocation4 + $0x31] sm:$0x1]
    %2011 = vst [vmem:[#allocation5 + $0x1] sm:$0x1] %v2010
    %v2012 = vld [vmem:[#allocation4 + $0x32] sm:$0x1]
    %2013 = vst [vmem:[#allocation5 + $0x3] sm:$0x1] %v2012
    %v2014 = vld [vmem:[#allocation4 + $0x33] sm:$0x1]
    %2015 = vst [vmem:[#allocation5 + $0x5] sm:$0x1] %v2014
    %v2016 = vld [vmem:[#allocation4 + $0x34] sm:$0x1]
    %2017 = vst [vmem:[#allocation5 + $0x7] sm:$0x1] %v2016
    %v2018 = vld [vmem:[#allocation4 + $0x38] sm:$0x1]
    %2019 = vst [vmem:[#allocation5 + $0x9] sm:$0x1] %v2018
    %v2020 = vld [vmem:[#allocation4 + $0x39] sm:$0x1]
    %2021 = vst [vmem:[#allocation5 + $0xb] sm:$0x1] %v2020
    %v2022 = vld [vmem:[#allocation4 + $0x3a] sm:$0x1]
    %2023 = vst [vmem:[#allocation5 + $0xd] sm:$0x1] %v2022
    %v2024 = vld [vmem:[#allocation4 + $0x3b] sm:$0x1]
    %2025 = vst [vmem:[#allocation5 + $0xf] sm:$0x1] %v2024
    %v2026 = vld [vmem:[#allocation4 + $0x3f] sm:$0x1]
    %2027 = vst [vmem:[#allocation5 + $0x11] sm:$0x1] %v2026
    %v2028 = vld [vmem:[#allocation4 + $0x40] sm:$0x1]
    %2029 = vst [vmem:[#allocation5 + $0x13] sm:$0x1] %v2028
    %v2030 = vld [vmem:[#allocation4 + $0x41] sm:$0x1]
    %2031 = vst [vmem:[#allocation5 + $0x15] sm:$0x1] %v2030
    %v2032 = vld [vmem:[#allocation4 + $0x42] sm:$0x1]
    %2033 = vst [vmem:[#allocation5 + $0x17] sm:$0x1] %v2032
    %v2034 = vld [vmem:[#allocation4 + $0x46] sm:$0x1]
    %2035 = vst [vmem:[#allocation5 + $0x19] sm:$0x1] %v2034
    %v2036 = vld [vmem:[#allocation4 + $0x47] sm:$0x1]
    %2037 = vst [vmem:[#allocation5 + $0x1b] sm:$0x1] %v2036
    %v2038 = vld [vmem:[#allocation4 + $0x48] sm:$0x1]
    %2039 = vst [vmem:[#allocation5 + $0x1d] sm:$0x1] %v2038
    %v2040 = vld [vmem:[#allocation4 + $0x49] sm:$0x1]
    %2041 = vst [vmem:[#allocation5 + $0x1f] sm:$0x1] %v2040
    %v2042 = vld [vmem:[#allocation5] sm:$0xff]
    %v2043 = vld [vmem:[#allocation5 + $0x8] sm:$0xff]
    %v2044 = vld [vmem:[#allocation5 + $0x10] sm:$0xff]
    %v2045 = vld [vmem:[#allocation5 + $0x18] sm:$0xff]
    %v2050 = vcombine.high %v2042, %v2042
    %v2052 = vunpack.c.l.s4 1983009808
    %v2053 = vunpack.c.0.s8 %v2052
    %v2054 = vlaneseq
    %v2055 = vshrl.u32 %v2054, 7
    %v2056 = vsub.s32 %v2053, %v2055
    %v2057 = vrot.slane %v2042, %v2056
    %v2059 = vunpack.c.l.s4 1983009808
    %v2060 = vunpack.c.0.s8 %v2059
    %v2061 = vlaneseq
    %v2062 = vshrl.u32 %v2061, 7
    %v2063 = vsub.s32 %v2060, %v2062
    %v2064 = vrot.slane %v2050, %v2063
    %v2065 = vcombine.high %v2057, %v2057
    %v2066 = vcombine.high %v2064, %v2064
    %v2067 = vcombine.high %v2043, %v2043
    %v2069 = vunpack.c.l.s4 1983009808
    %v2070 = vunpack.c.0.s8 %v2069
    %v2071 = vlaneseq
    %v2072 = vshrl.u32 %v2071, 7
    %v2073 = vsub.s32 %v2070, %v2072
    %v2074 = vrot.slane %v2043, %v2073
    %v2076 = vunpack.c.l.s4 1983009808
    %v2077 = vunpack.c.0.s8 %v2076
    %v2078 = vlaneseq
    %v2079 = vshrl.u32 %v2078, 7
    %v2080 = vsub.s32 %v2077, %v2079
    %v2081 = vrot.slane %v2067, %v2080
    %v2082 = vcombine.high %v2074, %v2074
    %v2083 = vcombine.high %v2081, %v2081
    %v2084 = vcombine.high %v2044, %v2044
    %v2086 = vunpack.c.l.s4 1983009808
    %v2087 = vunpack.c.0.s8 %v2086
    %v2088 = vlaneseq
    %v2089 = vshrl.u32 %v2088, 7
    %v2090 = vsub.s32 %v2087, %v2089
    %v2091 = vrot.slane %v2044, %v2090
    %v2093 = vunpack.c.l.s4 1983009808
    %v2094 = vunpack.c.0.s8 %v2093
    %v2095 = vlaneseq
    %v2096 = vshrl.u32 %v2095, 7
    %v2097 = vsub.s32 %v2094, %v2096
    %v2098 = vrot.slane %v2084, %v2097
    %v2099 = vcombine.high %v2091, %v2091
    %v2100 = vcombine.high %v2098, %v2098
    %v2101 = vcombine.high %v2045, %v2045
    %v2103 = vunpack.c.l.s4 1983009808
    %v2104 = vunpack.c.0.s8 %v2103
    %v2105 = vlaneseq
    %v2106 = vshrl.u32 %v2105, 7
    %v2107 = vsub.s32 %v2104, %v2106
    %v2108 = vrot.slane %v2045, %v2107
    %v2110 = vunpack.c.l.s4 1983009808
    %v2111 = vunpack.c.0.s8 %v2110
    %v2112 = vlaneseq
    %v2113 = vshrl.u32 %v2112, 7
    %v2114 = vsub.s32 %v2111, %v2113
    %v2115 = vrot.slane %v2101, %v2114
    %v2116 = vcombine.high %v2108, %v2108
    %v2117 = vcombine.high %v2115, %v2115
    %v2134 = vpack.c.bf16 %v2057, %v2057
    %v2135 = vpack.c.bf16 %v2065, %v2065
    %v2136 = vpack.c.bf16 %v2064, %v2064
    %v2137 = vpack.c.bf16 %v2066, %v2066
    %v2138 = vpack.c.bf16 %v2074, %v2074
    %v2139 = vpack.c.bf16 %v2082, %v2082
    %v2140 = vpack.c.bf16 %v2081, %v2081
    %v2141 = vpack.c.bf16 %v2083, %v2083
    %v2142 = vpack.c.bf16 %v2091, %v2091
    %v2143 = vpack.c.bf16 %v2099, %v2099
    %v2144 = vpack.c.bf16 %v2098, %v2098
    %v2145 = vpack.c.bf16 %v2100, %v2100
    %v2146 = vpack.c.bf16 %v2108, %v2108
    %v2147 = vpack.c.bf16 %v2116, %v2116
    %v2148 = vpack.c.bf16 %v2115, %v2115
    %v2149 = vpack.c.bf16 %v2117, %v2117
    %v2150 = vld [vmem:[#allocation17] sm:$0xff]
    %v2151 = vld [vmem:[#allocation17 + $0x8] sm:$0xff]
    %v2152 = vld [vmem:[#allocation17 + $0x10] sm:$0xff]
    %v2153 = vld [vmem:[#allocation17 + $0x18] sm:$0xff]
    %v2154 = vld [vmem:[#allocation17 + $0x20] sm:$0xff]
    %v2155 = vld [vmem:[#allocation17 + $0x28] sm:$0xff]
    %v2156 = vld [vmem:[#allocation17 + $0x30] sm:$0xff]
    %v2157 = vld [vmem:[#allocation17 + $0x38] sm:$0xff]
    %v2158 = vld [vmem:[#allocation17 + $0x40] sm:$0xff]
    %v2159 = vld [vmem:[#allocation17 + $0x48] sm:$0xff]
    %v2160 = vld [vmem:[#allocation17 + $0x50] sm:$0xff]
    %v2161 = vld [vmem:[#allocation17 + $0x58] sm:$0xff]
    %v2162 = vld [vmem:[#allocation17 + $0x60] sm:$0xff]
    %v2163 = vld [vmem:[#allocation17 + $0x68] sm:$0xff]
    %v2164 = vld [vmem:[#allocation17 + $0x70] sm:$0xff]
    %v2165 = vld [vmem:[#allocation17 + $0x78] sm:$0xff]
    %v2166 = vld [vmem:[#allocation17 + $0x80] sm:$0xff]
    %v2167 = vld [vmem:[#allocation17 + $0x88] sm:$0xff]
    %v2168 = vld [vmem:[#allocation17 + $0x90] sm:$0xff]
    %v2169 = vld [vmem:[#allocation17 + $0x98] sm:$0xff]
    %v2170 = vld [vmem:[#allocation17 + $0xa0] sm:$0xff]
    %v2171 = vld [vmem:[#allocation17 + $0xa8] sm:$0xff]
    %v2172 = vld [vmem:[#allocation17 + $0xb0] sm:$0xff]
    %v2173 = vld [vmem:[#allocation17 + $0xb8] sm:$0xff]
    %v2174 = vld [vmem:[#allocation17 + $0xc0] sm:$0xff]
    %v2175 = vld [vmem:[#allocation17 + $0xc8] sm:$0xff]
    %v2176 = vld [vmem:[#allocation17 + $0xd0] sm:$0xff]
    %v2177 = vld [vmem:[#allocation17 + $0xd8] sm:$0xff]
    %v2178 = vld [vmem:[#allocation17 + $0xe0] sm:$0xff]
    %v2179 = vld [vmem:[#allocation17 + $0xe8] sm:$0xff]
    %v2180 = vld [vmem:[#allocation17 + $0xf0] sm:$0xff]
    %v2181 = vld [vmem:[#allocation17 + $0xf8] sm:$0xff]
    %v2182 = vld [vmem:[#allocation17 + $0x100] sm:$0xff]
    %v2183 = vld [vmem:[#allocation17 + $0x108] sm:$0xff]
    %v2184 = vld [vmem:[#allocation17 + $0x110] sm:$0xff]
    %v2185 = vld [vmem:[#allocation17 + $0x118] sm:$0xff]
    %v2186 = vld [vmem:[#allocation17 + $0x120] sm:$0xff]
    %v2187 = vld [vmem:[#allocation17 + $0x128] sm:$0xff]
    %v2188 = vld [vmem:[#allocation17 + $0x130] sm:$0xff]
    %v2189 = vld [vmem:[#allocation17 + $0x138] sm:$0xff]
    %v2190 = vld [vmem:[#allocation17 + $0x140] sm:$0xff]
    %v2191 = vld [vmem:[#allocation17 + $0x148] sm:$0xff]
    %v2192 = vld [vmem:[#allocation17 + $0x150] sm:$0xff]
    %v2193 = vld [vmem:[#allocation17 + $0x158] sm:$0xff]
    %v2194 = vld [vmem:[#allocation17 + $0x160] sm:$0xff]
    %v2195 = vld [vmem:[#allocation17 + $0x168] sm:$0xff]
    %v2196 = vld [vmem:[#allocation17 + $0x170] sm:$0xff]
    %v2197 = vld [vmem:[#allocation17 + $0x178] sm:$0xff]
    %v2198 = vld [vmem:[#allocation17 + $0x180] sm:$0xff]
    %v2199 = vld [vmem:[#allocation17 + $0x188] sm:$0xff]
    %v2200 = vld [vmem:[#allocation17 + $0x190] sm:$0xff]
    %v2201 = vld [vmem:[#allocation17 + $0x198] sm:$0xff]
    %v2202 = vld [vmem:[#allocation17 + $0x1a0] sm:$0xff]
    %v2203 = vld [vmem:[#allocation17 + $0x1a8] sm:$0xff]
    %v2204 = vld [vmem:[#allocation17 + $0x1b0] sm:$0xff]
    %v2205 = vld [vmem:[#allocation17 + $0x1b8] sm:$0xff]
    %v2206 = vld [vmem:[#allocation17 + $0x1c0] sm:$0xff]
    %v2207 = vld [vmem:[#allocation17 + $0x1c8] sm:$0xff]
    %v2208 = vld [vmem:[#allocation17 + $0x1d0] sm:$0xff]
    %v2209 = vld [vmem:[#allocation17 + $0x1d8] sm:$0xff]
    %v2210 = vld [vmem:[#allocation17 + $0x1e0] sm:$0xff]
    %v2211 = vld [vmem:[#allocation17 + $0x1e8] sm:$0xff]
    %v2212 = vld [vmem:[#allocation17 + $0x1f0] sm:$0xff]
    %v2213 = vld [vmem:[#allocation17 + $0x1f8] sm:$0xff]
    %v2214 = vld [vmem:[#allocation17 + $0x200] sm:$0xff]
    %v2215 = vld [vmem:[#allocation17 + $0x208] sm:$0xff]
    %v2216 = vld [vmem:[#allocation17 + $0x210] sm:$0xff]
    %v2217 = vld [vmem:[#allocation17 + $0x218] sm:$0xff]
    %v2218 = vld [vmem:[#allocation17 + $0x220] sm:$0xff]
    %v2219 = vld [vmem:[#allocation17 + $0x228] sm:$0xff]
    %v2220 = vld [vmem:[#allocation17 + $0x230] sm:$0xff]
    %v2221 = vld [vmem:[#allocation17 + $0x238] sm:$0xff]
    %v2222 = vld [vmem:[#allocation17 + $0x240] sm:$0xff]
    %v2223 = vld [vmem:[#allocation17 + $0x248] sm:$0xff]
    %v2224 = vld [vmem:[#allocation17 + $0x250] sm:$0xff]
    %v2225 = vld [vmem:[#allocation17 + $0x258] sm:$0xff]
    %v2226 = vld [vmem:[#allocation17 + $0x260] sm:$0xff]
    %v2227 = vld [vmem:[#allocation17 + $0x268] sm:$0xff]
    %v2228 = vld [vmem:[#allocation17 + $0x270] sm:$0xff]
    %v2229 = vld [vmem:[#allocation17 + $0x278] sm:$0xff]
    %v2230 = vld [vmem:[#allocation17 + $0x280] sm:$0xff]
    %v2231 = vld [vmem:[#allocation17 + $0x288] sm:$0xff]
    %v2232 = vld [vmem:[#allocation17 + $0x290] sm:$0xff]
    %v2233 = vld [vmem:[#allocation17 + $0x298] sm:$0xff]
    %v2234 = vld [vmem:[#allocation17 + $0x2a0] sm:$0xff]
    %v2235 = vld [vmem:[#allocation17 + $0x2a8] sm:$0xff]
    %v2236 = vld [vmem:[#allocation17 + $0x2b0] sm:$0xff]
    %v2237 = vld [vmem:[#allocation17 + $0x2b8] sm:$0xff]
    %v2238 = vld [vmem:[#allocation17 + $0x2c0] sm:$0xff]
    %v2239 = vld [vmem:[#allocation17 + $0x2c8] sm:$0xff]
    %v2240 = vld [vmem:[#allocation17 + $0x2d0] sm:$0xff]
    %v2241 = vld [vmem:[#allocation17 + $0x2d8] sm:$0xff]
    %v2242 = vld [vmem:[#allocation17 + $0x2e0] sm:$0xff]
    %v2243 = vld [vmem:[#allocation17 + $0x2e8] sm:$0xff]
    %v2244 = vld [vmem:[#allocation17 + $0x2f0] sm:$0xff]
    %v2245 = vld [vmem:[#allocation17 + $0x2f8] sm:$0xff]
    %v2246 = vld [vmem:[#allocation17 + $0x300] sm:$0xff]
    %v2247 = vld [vmem:[#allocation17 + $0x308] sm:$0xff]
    %v2248 = vld [vmem:[#allocation17 + $0x310] sm:$0xff]
    %v2249 = vld [vmem:[#allocation17 + $0x318] sm:$0xff]
    %v2250 = vld [vmem:[#allocation17 + $0x320] sm:$0xff]
    %v2251 = vld [vmem:[#allocation17 + $0x328] sm:$0xff]
    %v2252 = vld [vmem:[#allocation17 + $0x330] sm:$0xff]
    %v2253 = vld [vmem:[#allocation17 + $0x338] sm:$0xff]
    %v2254 = vld [vmem:[#allocation17 + $0x340] sm:$0xff]
    %v2255 = vld [vmem:[#allocation17 + $0x348] sm:$0xff]
    %v2256 = vld [vmem:[#allocation17 + $0x350] sm:$0xff]
    %v2257 = vld [vmem:[#allocation17 + $0x358] sm:$0xff]
    %v2258 = vld [vmem:[#allocation17 + $0x360] sm:$0xff]
    %v2259 = vld [vmem:[#allocation17 + $0x368] sm:$0xff]
    %v2260 = vld [vmem:[#allocation17 + $0x370] sm:$0xff]
    %v2261 = vld [vmem:[#allocation17 + $0x378] sm:$0xff]
    %v2262 = vld [vmem:[#allocation17 + $0x380] sm:$0xff]
    %v2263 = vld [vmem:[#allocation17 + $0x388] sm:$0xff]
    %v2264 = vld [vmem:[#allocation17 + $0x390] sm:$0xff]
    %v2265 = vld [vmem:[#allocation17 + $0x398] sm:$0xff]
    %v2266 = vld [vmem:[#allocation17 + $0x3a0] sm:$0xff]
    %v2267 = vld [vmem:[#allocation17 + $0x3a8] sm:$0xff]
    %v2268 = vld [vmem:[#allocation17 + $0x3b0] sm:$0xff]
    %v2269 = vld [vmem:[#allocation17 + $0x3b8] sm:$0xff]
    %v2270 = vld [vmem:[#allocation17 + $0x3c0] sm:$0xff]
    %v2271 = vld [vmem:[#allocation17 + $0x3c8] sm:$0xff]
    %v2272 = vld [vmem:[#allocation17 + $0x3d0] sm:$0xff]
    %v2273 = vld [vmem:[#allocation17 + $0x3d8] sm:$0xff]
    %v2274 = vld [vmem:[#allocation17 + $0x3e0] sm:$0xff]
    %v2275 = vld [vmem:[#allocation17 + $0x3e8] sm:$0xff]
    %v2276 = vld [vmem:[#allocation17 + $0x3f0] sm:$0xff]
    %v2277 = vld [vmem:[#allocation17 + $0x3f8] sm:$0xff]
    %v2278 = vld [vmem:[#allocation17 + $0x400] sm:$0xff]
    %v2279 = vld [vmem:[#allocation17 + $0x408] sm:$0xff]
    %v2280 = vld [vmem:[#allocation17 + $0x410] sm:$0xff]
    %v2281 = vld [vmem:[#allocation17 + $0x418] sm:$0xff]
    %v2282 = vld [vmem:[#allocation17 + $0x420] sm:$0xff]
    %v2283 = vld [vmem:[#allocation17 + $0x428] sm:$0xff]
    %v2284 = vld [vmem:[#allocation17 + $0x430] sm:$0xff]
    %v2285 = vld [vmem:[#allocation17 + $0x438] sm:$0xff]
    %v2286 = vld [vmem:[#allocation17 + $0x440] sm:$0xff]
    %v2287 = vld [vmem:[#allocation17 + $0x448] sm:$0xff]
    %v2288 = vld [vmem:[#allocation17 + $0x450] sm:$0xff]
    %v2289 = vld [vmem:[#allocation17 + $0x458] sm:$0xff]
    %v2290 = vld [vmem:[#allocation17 + $0x460] sm:$0xff]
    %v2291 = vld [vmem:[#allocation17 + $0x468] sm:$0xff]
    %v2292 = vld [vmem:[#allocation17 + $0x470] sm:$0xff]
    %v2293 = vld [vmem:[#allocation17 + $0x478] sm:$0xff]
    %v2294 = vld [vmem:[#allocation17 + $0x480] sm:$0xff]
    %v2295 = vld [vmem:[#allocation17 + $0x488] sm:$0xff]
    %v2296 = vld [vmem:[#allocation17 + $0x490] sm:$0xff]
    %v2297 = vld [vmem:[#allocation17 + $0x498] sm:$0xff]
    %v2298 = vld [vmem:[#allocation17 + $0x4a0] sm:$0xff]
    %v2299 = vld [vmem:[#allocation17 + $0x4a8] sm:$0xff]
    %v2300 = vld [vmem:[#allocation17 + $0x4b0] sm:$0xff]
    %v2301 = vld [vmem:[#allocation17 + $0x4b8] sm:$0xff]
    %v2302 = vld [vmem:[#allocation17 + $0x4c0] sm:$0xff]
    %v2303 = vld [vmem:[#allocation17 + $0x4c8] sm:$0xff]
    %v2304 = vld [vmem:[#allocation17 + $0x4d0] sm:$0xff]
    %v2305 = vld [vmem:[#allocation17 + $0x4d8] sm:$0xff]
    %v2306 = vld [vmem:[#allocation17 + $0x4e0] sm:$0xff]
    %v2307 = vld [vmem:[#allocation17 + $0x4e8] sm:$0xff]
    %v2308 = vld [vmem:[#allocation17 + $0x4f0] sm:$0xff]
    %v2309 = vld [vmem:[#allocation17 + $0x4f8] sm:$0xff]
    %v2310 = vld [vmem:[#allocation17 + $0x500] sm:$0xff]
    %v2311 = vld [vmem:[#allocation17 + $0x508] sm:$0xff]
    %v2312 = vld [vmem:[#allocation17 + $0x510] sm:$0xff]
    %v2313 = vld [vmem:[#allocation17 + $0x518] sm:$0xff]
    %v2314 = vld [vmem:[#allocation17 + $0x520] sm:$0xff]
    %v2315 = vld [vmem:[#allocation17 + $0x528] sm:$0xff]
    %v2316 = vld [vmem:[#allocation17 + $0x530] sm:$0xff]
    %v2317 = vld [vmem:[#allocation17 + $0x538] sm:$0xff]
    %v2318 = vld [vmem:[#allocation17 + $0x540] sm:$0xff]
    %v2319 = vld [vmem:[#allocation17 + $0x548] sm:$0xff]
    %v2320 = vld [vmem:[#allocation17 + $0x550] sm:$0xff]
    %v2321 = vld [vmem:[#allocation17 + $0x558] sm:$0xff]
    %v2322 = vld [vmem:[#allocation17 + $0x560] sm:$0xff]
    %v2323 = vld [vmem:[#allocation17 + $0x568] sm:$0xff]
    %v2324 = vld [vmem:[#allocation17 + $0x570] sm:$0xff]
    %v2325 = vld [vmem:[#allocation17 + $0x578] sm:$0xff]
    %v2326 = vld [vmem:[#allocation17 + $0x580] sm:$0xff]
    %v2327 = vld [vmem:[#allocation17 + $0x588] sm:$0xff]
    %v2328 = vld [vmem:[#allocation17 + $0x590] sm:$0xff]
    %v2329 = vld [vmem:[#allocation17 + $0x598] sm:$0xff]
    %v2330 = vld [vmem:[#allocation17 + $0x5a0] sm:$0xff]
    %v2331 = vld [vmem:[#allocation17 + $0x5a8] sm:$0xff]
    %v2332 = vld [vmem:[#allocation17 + $0x5b0] sm:$0xff]
    %v2333 = vld [vmem:[#allocation17 + $0x5b8] sm:$0xff]
    %v2334 = vld [vmem:[#allocation17 + $0x5c0] sm:$0xff]
    %v2335 = vld [vmem:[#allocation17 + $0x5c8] sm:$0xff]
    %v2336 = vld [vmem:[#allocation17 + $0x5d0] sm:$0xff]
    %v2337 = vld [vmem:[#allocation17 + $0x5d8] sm:$0xff]
    %v2338 = vld [vmem:[#allocation17 + $0x5e0] sm:$0xff]
    %v2339 = vld [vmem:[#allocation17 + $0x5e8] sm:$0xff]
    %v2340 = vld [vmem:[#allocation17 + $0x5f0] sm:$0xff]
    %v2341 = vld [vmem:[#allocation17 + $0x5f8] sm:$0xff]
    %v2342 = vld [vmem:[#allocation17 + $0x600] sm:$0xff]
    %v2343 = vld [vmem:[#allocation17 + $0x608] sm:$0xff]
    %v2344 = vld [vmem:[#allocation17 + $0x610] sm:$0xff]
    %v2345 = vld [vmem:[#allocation17 + $0x618] sm:$0xff]
    %v2346 = vld [vmem:[#allocation17 + $0x620] sm:$0xff]
    %v2347 = vld [vmem:[#allocation17 + $0x628] sm:$0xff]
    %v2348 = vld [vmem:[#allocation17 + $0x630] sm:$0xff]
    %v2349 = vld [vmem:[#allocation17 + $0x638] sm:$0xff]
    %v2350 = vld [vmem:[#allocation17 + $0x640] sm:$0xff]
    %v2351 = vld [vmem:[#allocation17 + $0x648] sm:$0xff]
    %v2352 = vld [vmem:[#allocation17 + $0x650] sm:$0xff]
    %v2353 = vld [vmem:[#allocation17 + $0x658] sm:$0xff]
    %v2354 = vld [vmem:[#allocation17 + $0x660] sm:$0xff]
    %v2355 = vld [vmem:[#allocation17 + $0x668] sm:$0xff]
    %v2356 = vld [vmem:[#allocation17 + $0x670] sm:$0xff]
    %v2357 = vld [vmem:[#allocation17 + $0x678] sm:$0xff]
    %v2358 = vld [vmem:[#allocation17 + $0x680] sm:$0xff]
    %v2359 = vld [vmem:[#allocation17 + $0x688] sm:$0xff]
    %v2360 = vld [vmem:[#allocation17 + $0x690] sm:$0xff]
    %v2361 = vld [vmem:[#allocation17 + $0x698] sm:$0xff]
    %v2362 = vld [vmem:[#allocation17 + $0x6a0] sm:$0xff]
    %v2363 = vld [vmem:[#allocation17 + $0x6a8] sm:$0xff]
    %v2364 = vld [vmem:[#allocation17 + $0x6b0] sm:$0xff]
    %v2365 = vld [vmem:[#allocation17 + $0x6b8] sm:$0xff]
    %v2366 = vld [vmem:[#allocation17 + $0x6c0] sm:$0xff]
    %v2367 = vld [vmem:[#allocation17 + $0x6c8] sm:$0xff]
    %v2368 = vld [vmem:[#allocation17 + $0x6d0] sm:$0xff]
    %v2369 = vld [vmem:[#allocation17 + $0x6d8] sm:$0xff]
    %v2370 = vld [vmem:[#allocation17 + $0x6e0] sm:$0xff]
    %v2371 = vld [vmem:[#allocation17 + $0x6e8] sm:$0xff]
    %v2372 = vld [vmem:[#allocation17 + $0x6f0] sm:$0xff]
    %v2373 = vld [vmem:[#allocation17 + $0x6f8] sm:$0xff]
    %v2374 = vld [vmem:[#allocation17 + $0x700] sm:$0xff]
    %v2375 = vld [vmem:[#allocation17 + $0x708] sm:$0xff]
    %v2376 = vld [vmem:[#allocation17 + $0x710] sm:$0xff]
    %v2377 = vld [vmem:[#allocation17 + $0x718] sm:$0xff]
    %v2378 = vld [vmem:[#allocation17 + $0x720] sm:$0xff]
    %v2379 = vld [vmem:[#allocation17 + $0x728] sm:$0xff]
    %v2380 = vld [vmem:[#allocation17 + $0x730] sm:$0xff]
    %v2381 = vld [vmem:[#allocation17 + $0x738] sm:$0xff]
    %v2382 = vld [vmem:[#allocation17 + $0x740] sm:$0xff]
    %v2383 = vld [vmem:[#allocation17 + $0x748] sm:$0xff]
    %v2384 = vld [vmem:[#allocation17 + $0x750] sm:$0xff]
    %v2385 = vld [vmem:[#allocation17 + $0x758] sm:$0xff]
    %v2386 = vld [vmem:[#allocation17 + $0x760] sm:$0xff]
    %v2387 = vld [vmem:[#allocation17 + $0x768] sm:$0xff]
    %v2388 = vld [vmem:[#allocation17 + $0x770] sm:$0xff]
    %v2389 = vld [vmem:[#allocation17 + $0x778] sm:$0xff]
    %v2390 = vld [vmem:[#allocation17 + $0x780] sm:$0xff]
    %v2391 = vld [vmem:[#allocation17 + $0x788] sm:$0xff]
    %v2392 = vld [vmem:[#allocation17 + $0x790] sm:$0xff]
    %v2393 = vld [vmem:[#allocation17 + $0x798] sm:$0xff]
    %v2394 = vld [vmem:[#allocation17 + $0x7a0] sm:$0xff]
    %v2395 = vld [vmem:[#allocation17 + $0x7a8] sm:$0xff]
    %v2396 = vld [vmem:[#allocation17 + $0x7b0] sm:$0xff]
    %v2397 = vld [vmem:[#allocation17 + $0x7b8] sm:$0xff]
    %v2398 = vld [vmem:[#allocation17 + $0x7c0] sm:$0xff]
    %v2399 = vld [vmem:[#allocation17 + $0x7c8] sm:$0xff]
    %v2400 = vld [vmem:[#allocation17 + $0x7d0] sm:$0xff]
    %v2401 = vld [vmem:[#allocation17 + $0x7d8] sm:$0xff]
    %v2402 = vld [vmem:[#allocation17 + $0x7e0] sm:$0xff]
    %v2403 = vld [vmem:[#allocation17 + $0x7e8] sm:$0xff]
    %v2404 = vld [vmem:[#allocation17 + $0x7f0] sm:$0xff]
    %v2405 = vld [vmem:[#allocation17 + $0x7f8] sm:$0xff]
    %v2406 = vld [vmem:[#allocation17 + $0x800] sm:$0xff]
    %v2407 = vld [vmem:[#allocation17 + $0x808] sm:$0xff]
    %v2408 = vld [vmem:[#allocation17 + $0x810] sm:$0xff]
    %v2409 = vld [vmem:[#allocation17 + $0x818] sm:$0xff]
    %v2410 = vld [vmem:[#allocation17 + $0x820] sm:$0xff]
    %v2411 = vld [vmem:[#allocation17 + $0x828] sm:$0xff]
    %v2412 = vld [vmem:[#allocation17 + $0x830] sm:$0xff]
    %v2413 = vld [vmem:[#allocation17 + $0x838] sm:$0xff]
    %v2414 = vld [vmem:[#allocation17 + $0x840] sm:$0xff]
    %v2415 = vld [vmem:[#allocation17 + $0x848] sm:$0xff]
    %v2416 = vld [vmem:[#allocation17 + $0x850] sm:$0xff]
    %v2417 = vld [vmem:[#allocation17 + $0x858] sm:$0xff]
    %v2418 = vld [vmem:[#allocation17 + $0x860] sm:$0xff]
    %v2419 = vld [vmem:[#allocation17 + $0x868] sm:$0xff]
    %v2420 = vld [vmem:[#allocation17 + $0x870] sm:$0xff]
    %v2421 = vld [vmem:[#allocation17 + $0x878] sm:$0xff]
    %v2422 = vld [vmem:[#allocation17 + $0x880] sm:$0xff]
    %v2423 = vld [vmem:[#allocation17 + $0x888] sm:$0xff]
    %v2424 = vld [vmem:[#allocation17 + $0x890] sm:$0xff]
    %v2425 = vld [vmem:[#allocation17 + $0x898] sm:$0xff]
    %v2426 = vld [vmem:[#allocation17 + $0x8a0] sm:$0xff]
    %v2427 = vld [vmem:[#allocation17 + $0x8a8] sm:$0xff]
    %v2428 = vld [vmem:[#allocation17 + $0x8b0] sm:$0xff]
    %v2429 = vld [vmem:[#allocation17 + $0x8b8] sm:$0xff]
    %v2430 = vld [vmem:[#allocation17 + $0x8c0] sm:$0xff]
    %v2431 = vld [vmem:[#allocation17 + $0x8c8] sm:$0xff]
    %v2432 = vld [vmem:[#allocation17 + $0x8d0] sm:$0xff]
    %v2433 = vld [vmem:[#allocation17 + $0x8d8] sm:$0xff]
    %v2434 = vld [vmem:[#allocation17 + $0x8e0] sm:$0xff]
    %v2435 = vld [vmem:[#allocation17 + $0x8e8] sm:$0xff]
    %v2436 = vld [vmem:[#allocation17 + $0x8f0] sm:$0xff]
    %v2437 = vld [vmem:[#allocation17 + $0x8f8] sm:$0xff]
    %v2438 = vld [vmem:[#allocation17 + $0x900] sm:$0xff]
    %v2439 = vld [vmem:[#allocation17 + $0x908] sm:$0xff]
    %v2440 = vld [vmem:[#allocation17 + $0x910] sm:$0xff]
    %v2441 = vld [vmem:[#allocation17 + $0x918] sm:$0xff]
    %v2442 = vld [vmem:[#allocation17 + $0x920] sm:$0xff]
    %v2443 = vld [vmem:[#allocation17 + $0x928] sm:$0xff]
    %v2444 = vld [vmem:[#allocation17 + $0x930] sm:$0xff]
    %v2445 = vld [vmem:[#allocation17 + $0x938] sm:$0xff]
    %v2446 = vld [vmem:[#allocation17 + $0x940] sm:$0xff]
    %v2447 = vld [vmem:[#allocation17 + $0x948] sm:$0xff]
    %v2448 = vld [vmem:[#allocation17 + $0x950] sm:$0xff]
    %v2449 = vld [vmem:[#allocation17 + $0x958] sm:$0xff]
    %v2450 = vld [vmem:[#allocation17 + $0x960] sm:$0xff]
    %v2451 = vld [vmem:[#allocation17 + $0x968] sm:$0xff]
    %v2452 = vld [vmem:[#allocation17 + $0x970] sm:$0xff]
    %v2453 = vld [vmem:[#allocation17 + $0x978] sm:$0xff]
    %v2454 = vld [vmem:[#allocation17 + $0x980] sm:$0xff]
    %v2455 = vld [vmem:[#allocation17 + $0x988] sm:$0xff]
    %v2456 = vld [vmem:[#allocation17 + $0x990] sm:$0xff]
    %v2457 = vld [vmem:[#allocation17 + $0x998] sm:$0xff]
    %v2458 = vld [vmem:[#allocation17 + $0x9a0] sm:$0xff]
    %v2459 = vld [vmem:[#allocation17 + $0x9a8] sm:$0xff]
    %v2460 = vld [vmem:[#allocation17 + $0x9b0] sm:$0xff]
    %v2461 = vld [vmem:[#allocation17 + $0x9b8] sm:$0xff]
    %v2462 = vld [vmem:[#allocation17 + $0x9c0] sm:$0xff]
    %v2463 = vld [vmem:[#allocation17 + $0x9c8] sm:$0xff]
    %v2464 = vld [vmem:[#allocation17 + $0x9d0] sm:$0xff]
    %v2465 = vld [vmem:[#allocation17 + $0x9d8] sm:$0xff]
    %v2466 = vld [vmem:[#allocation17 + $0x9e0] sm:$0xff]
    %v2467 = vld [vmem:[#allocation17 + $0x9e8] sm:$0xff]
    %v2468 = vld [vmem:[#allocation17 + $0x9f0] sm:$0xff]
    %v2469 = vld [vmem:[#allocation17 + $0x9f8] sm:$0xff]
    %v2470 = vld [vmem:[#allocation17 + $0xa00] sm:$0xff]
    %v2471 = vld [vmem:[#allocation17 + $0xa08] sm:$0xff]
    %v2472 = vld [vmem:[#allocation17 + $0xa10] sm:$0xff]
    %v2473 = vld [vmem:[#allocation17 + $0xa18] sm:$0xff]
    %v2474 = vld [vmem:[#allocation17 + $0xa20] sm:$0xff]
    %v2475 = vld [vmem:[#allocation17 + $0xa28] sm:$0xff]
    %v2476 = vld [vmem:[#allocation17 + $0xa30] sm:$0xff]
    %v2477 = vld [vmem:[#allocation17 + $0xa38] sm:$0xff]
    %v2478 = vld [vmem:[#allocation17 + $0xa40] sm:$0xff]
    %v2479 = vld [vmem:[#allocation17 + $0xa48] sm:$0xff]
    %v2480 = vld [vmem:[#allocation17 + $0xa50] sm:$0xff]
    %v2481 = vld [vmem:[#allocation17 + $0xa58] sm:$0xff]
    %v2482 = vld [vmem:[#allocation17 + $0xa60] sm:$0xff]
    %v2483 = vld [vmem:[#allocation17 + $0xa68] sm:$0xff]
    %v2484 = vld [vmem:[#allocation17 + $0xa70] sm:$0xff]
    %v2485 = vld [vmem:[#allocation17 + $0xa78] sm:$0xff]
    %v2486 = vld [vmem:[#allocation17 + $0xa80] sm:$0xff]
    %v2487 = vld [vmem:[#allocation17 + $0xa88] sm:$0xff]
    %v2488 = vld [vmem:[#allocation17 + $0xa90] sm:$0xff]
    %v2489 = vld [vmem:[#allocation17 + $0xa98] sm:$0xff]
    %v2490 = vld [vmem:[#allocation17 + $0xaa0] sm:$0xff]
    %v2491 = vld [vmem:[#allocation17 + $0xaa8] sm:$0xff]
    %v2492 = vld [vmem:[#allocation17 + $0xab0] sm:$0xff]
    %v2493 = vld [vmem:[#allocation17 + $0xab8] sm:$0xff]
    %v2494 = vld [vmem:[#allocation17 + $0xac0] sm:$0xff]
    %v2495 = vld [vmem:[#allocation17 + $0xac8] sm:$0xff]
    %v2496 = vld [vmem:[#allocation17 + $0xad0] sm:$0xff]
    %v2497 = vld [vmem:[#allocation17 + $0xad8] sm:$0xff]
    %v2498 = vld [vmem:[#allocation17 + $0xae0] sm:$0xff]
    %v2499 = vld [vmem:[#allocation17 + $0xae8] sm:$0xff]
    %v2500 = vld [vmem:[#allocation17 + $0xaf0] sm:$0xff]
    %v2501 = vld [vmem:[#allocation17 + $0xaf8] sm:$0xff]
    %v2502 = vld [vmem:[#allocation17 + $0xb00] sm:$0xff]
    %v2503 = vld [vmem:[#allocation17 + $0xb08] sm:$0xff]
    %v2504 = vld [vmem:[#allocation17 + $0xb10] sm:$0xff]
    %v2505 = vld [vmem:[#allocation17 + $0xb18] sm:$0xff]
    %v2506 = vld [vmem:[#allocation17 + $0xb20] sm:$0xff]
    %v2507 = vld [vmem:[#allocation17 + $0xb28] sm:$0xff]
    %v2508 = vld [vmem:[#allocation17 + $0xb30] sm:$0xff]
    %v2509 = vld [vmem:[#allocation17 + $0xb38] sm:$0xff]
    %v2510 = vld [vmem:[#allocation17 + $0xb40] sm:$0xff]
    %v2511 = vld [vmem:[#allocation17 + $0xb48] sm:$0xff]
    %v2512 = vld [vmem:[#allocation17 + $0xb50] sm:$0xff]
    %v2513 = vld [vmem:[#allocation17 + $0xb58] sm:$0xff]
    %v2514 = vld [vmem:[#allocation17 + $0xb60] sm:$0xff]
    %v2515 = vld [vmem:[#allocation17 + $0xb68] sm:$0xff]
    %v2516 = vld [vmem:[#allocation17 + $0xb70] sm:$0xff]
    %v2517 = vld [vmem:[#allocation17 + $0xb78] sm:$0xff]
    %v2518 = vld [vmem:[#allocation17 + $0xb80] sm:$0xff]
    %v2519 = vld [vmem:[#allocation17 + $0xb88] sm:$0xff]
    %v2520 = vld [vmem:[#allocation17 + $0xb90] sm:$0xff]
    %v2521 = vld [vmem:[#allocation17 + $0xb98] sm:$0xff]
    %v2522 = vld [vmem:[#allocation17 + $0xba0] sm:$0xff]
    %v2523 = vld [vmem:[#allocation17 + $0xba8] sm:$0xff]
    %v2524 = vld [vmem:[#allocation17 + $0xbb0] sm:$0xff]
    %v2525 = vld [vmem:[#allocation17 + $0xbb8] sm:$0xff]
    %v2526 = vld [vmem:[#allocation17 + $0xbc0] sm:$0xff]
    %v2527 = vld [vmem:[#allocation17 + $0xbc8] sm:$0xff]
    %v2528 = vld [vmem:[#allocation17 + $0xbd0] sm:$0xff]
    %v2529 = vld [vmem:[#allocation17 + $0xbd8] sm:$0xff]
    %v2530 = vld [vmem:[#allocation17 + $0xbe0] sm:$0xff]
    %v2531 = vld [vmem:[#allocation17 + $0xbe8] sm:$0xff]
    %v2532 = vld [vmem:[#allocation17 + $0xbf0] sm:$0xff]
    %v2533 = vld [vmem:[#allocation17 + $0xbf8] sm:$0xff]
    %v2534 = vld [vmem:[#allocation17 + $0xc00] sm:$0xff]
    %v2535 = vld [vmem:[#allocation17 + $0xc08] sm:$0xff]
    %v2536 = vld [vmem:[#allocation17 + $0xc10] sm:$0xff]
    %v2537 = vld [vmem:[#allocation17 + $0xc18] sm:$0xff]
    %v2538 = vld [vmem:[#allocation17 + $0xc20] sm:$0xff]
    %v2539 = vld [vmem:[#allocation17 + $0xc28] sm:$0xff]
    %v2540 = vld [vmem:[#allocation17 + $0xc30] sm:$0xff]
    %v2541 = vld [vmem:[#allocation17 + $0xc38] sm:$0xff]
    %v2542 = vld [vmem:[#allocation17 + $0xc40] sm:$0xff]
    %v2543 = vld [vmem:[#allocation17 + $0xc48] sm:$0xff]
    %v2544 = vld [vmem:[#allocation17 + $0xc50] sm:$0xff]
    %v2545 = vld [vmem:[#allocation17 + $0xc58] sm:$0xff]
    %v2546 = vld [vmem:[#allocation17 + $0xc60] sm:$0xff]
    %v2547 = vld [vmem:[#allocation17 + $0xc68] sm:$0xff]
    %v2548 = vld [vmem:[#allocation17 + $0xc70] sm:$0xff]
    %v2549 = vld [vmem:[#allocation17 + $0xc78] sm:$0xff]
    %v2550 = vld [vmem:[#allocation17 + $0xc80] sm:$0xff]
    %v2551 = vld [vmem:[#allocation17 + $0xc88] sm:$0xff]
    %v2552 = vld [vmem:[#allocation17 + $0xc90] sm:$0xff]
    %v2553 = vld [vmem:[#allocation17 + $0xc98] sm:$0xff]
    %v2554 = vld [vmem:[#allocation17 + $0xca0] sm:$0xff]
    %v2555 = vld [vmem:[#allocation17 + $0xca8] sm:$0xff]
    %v2556 = vld [vmem:[#allocation17 + $0xcb0] sm:$0xff]
    %v2557 = vld [vmem:[#allocation17 + $0xcb8] sm:$0xff]
    %v2558 = vld [vmem:[#allocation17 + $0xcc0] sm:$0xff]
    %v2559 = vld [vmem:[#allocation17 + $0xcc8] sm:$0xff]
    %v2560 = vld [vmem:[#allocation17 + $0xcd0] sm:$0xff]
    %v2561 = vld [vmem:[#allocation17 + $0xcd8] sm:$0xff]
    %v2562 = vld [vmem:[#allocation17 + $0xce0] sm:$0xff]
    %v2563 = vld [vmem:[#allocation17 + $0xce8] sm:$0xff]
    %v2564 = vld [vmem:[#allocation17 + $0xcf0] sm:$0xff]
    %v2565 = vld [vmem:[#allocation17 + $0xcf8] sm:$0xff]
    %v2566 = vld [vmem:[#allocation17 + $0xd00] sm:$0xff]
    %v2567 = vld [vmem:[#allocation17 + $0xd08] sm:$0xff]
    %v2568 = vld [vmem:[#allocation17 + $0xd10] sm:$0xff]
    %v2569 = vld [vmem:[#allocation17 + $0xd18] sm:$0xff]
    %v2570 = vld [vmem:[#allocation17 + $0xd20] sm:$0xff]
    %v2571 = vld [vmem:[#allocation17 + $0xd28] sm:$0xff]
    %v2572 = vld [vmem:[#allocation17 + $0xd30] sm:$0xff]
    %v2573 = vld [vmem:[#allocation17 + $0xd38] sm:$0xff]
    %v2574 = vld [vmem:[#allocation17 + $0xd40] sm:$0xff]
    %v2575 = vld [vmem:[#allocation17 + $0xd48] sm:$0xff]
    %v2576 = vld [vmem:[#allocation17 + $0xd50] sm:$0xff]
    %v2577 = vld [vmem:[#allocation17 + $0xd58] sm:$0xff]
    %v2578 = vld [vmem:[#allocation17 + $0xd60] sm:$0xff]
    %v2579 = vld [vmem:[#allocation17 + $0xd68] sm:$0xff]
    %v2580 = vld [vmem:[#allocation17 + $0xd70] sm:$0xff]
    %v2581 = vld [vmem:[#allocation17 + $0xd78] sm:$0xff]
    %v2582 = vld [vmem:[#allocation17 + $0xd80] sm:$0xff]
    %v2583 = vld [vmem:[#allocation17 + $0xd88] sm:$0xff]
    %v2584 = vld [vmem:[#allocation17 + $0xd90] sm:$0xff]
    %v2585 = vld [vmem:[#allocation17 + $0xd98] sm:$0xff]
    %v2586 = vld [vmem:[#allocation17 + $0xda0] sm:$0xff]
    %v2587 = vld [vmem:[#allocation17 + $0xda8] sm:$0xff]
    %v2588 = vld [vmem:[#allocation17 + $0xdb0] sm:$0xff]
    %v2589 = vld [vmem:[#allocation17 + $0xdb8] sm:$0xff]
    %v2590 = vld [vmem:[#allocation17 + $0xdc0] sm:$0xff]
    %v2591 = vld [vmem:[#allocation17 + $0xdc8] sm:$0xff]
    %v2592 = vld [vmem:[#allocation17 + $0xdd0] sm:$0xff]
    %v2593 = vld [vmem:[#allocation17 + $0xdd8] sm:$0xff]
    %v2594 = vld [vmem:[#allocation17 + $0xde0] sm:$0xff]
    %v2595 = vld [vmem:[#allocation17 + $0xde8] sm:$0xff]
    %v2596 = vld [vmem:[#allocation17 + $0xdf0] sm:$0xff]
    %v2597 = vld [vmem:[#allocation17 + $0xdf8] sm:$0xff]
    %v2598 = vld [vmem:[#allocation17 + $0xe00] sm:$0xff]
    %v2599 = vld [vmem:[#allocation17 + $0xe08] sm:$0xff]
    %v2600 = vld [vmem:[#allocation17 + $0xe10] sm:$0xff]
    %v2601 = vld [vmem:[#allocation17 + $0xe18] sm:$0xff]
    %v2602 = vld [vmem:[#allocation17 + $0xe20] sm:$0xff]
    %v2603 = vld [vmem:[#allocation17 + $0xe28] sm:$0xff]
    %v2604 = vld [vmem:[#allocation17 + $0xe30] sm:$0xff]
    %v2605 = vld [vmem:[#allocation17 + $0xe38] sm:$0xff]
    %v2606 = vld [vmem:[#allocation17 + $0xe40] sm:$0xff]
    %v2607 = vld [vmem:[#allocation17 + $0xe48] sm:$0xff]
    %v2608 = vld [vmem:[#allocation17 + $0xe50] sm:$0xff]
    %v2609 = vld [vmem:[#allocation17 + $0xe58] sm:$0xff]
    %v2610 = vld [vmem:[#allocation17 + $0xe60] sm:$0xff]
    %v2611 = vld [vmem:[#allocation17 + $0xe68] sm:$0xff]
    %v2612 = vld [vmem:[#allocation17 + $0xe70] sm:$0xff]
    %v2613 = vld [vmem:[#allocation17 + $0xe78] sm:$0xff]
    %v2614 = vld [vmem:[#allocation17 + $0xe80] sm:$0xff]
    %v2615 = vld [vmem:[#allocation17 + $0xe88] sm:$0xff]
    %v2616 = vld [vmem:[#allocation17 + $0xe90] sm:$0xff]
    %v2617 = vld [vmem:[#allocation17 + $0xe98] sm:$0xff]
    %v2618 = vld [vmem:[#allocation17 + $0xea0] sm:$0xff]
    %v2619 = vld [vmem:[#allocation17 + $0xea8] sm:$0xff]
    %v2620 = vld [vmem:[#allocation17 + $0xeb0] sm:$0xff]
    %v2621 = vld [vmem:[#allocation17 + $0xeb8] sm:$0xff]
    %v2622 = vld [vmem:[#allocation17 + $0xec0] sm:$0xff]
    %v2623 = vld [vmem:[#allocation17 + $0xec8] sm:$0xff]
    %v2624 = vld [vmem:[#allocation17 + $0xed0] sm:$0xff]
    %v2625 = vld [vmem:[#allocation17 + $0xed8] sm:$0xff]
    %v2626 = vld [vmem:[#allocation17 + $0xee0] sm:$0xff]
    %v2627 = vld [vmem:[#allocation17 + $0xee8] sm:$0xff]
    %v2628 = vld [vmem:[#allocation17 + $0xef0] sm:$0xff]
    %v2629 = vld [vmem:[#allocation17 + $0xef8] sm:$0xff]
    %v2630 = vld [vmem:[#allocation17 + $0xf00] sm:$0xff]
    %v2631 = vld [vmem:[#allocation17 + $0xf08] sm:$0xff]
    %v2632 = vld [vmem:[#allocation17 + $0xf10] sm:$0xff]
    %v2633 = vld [vmem:[#allocation17 + $0xf18] sm:$0xff]
    %v2634 = vld [vmem:[#allocation17 + $0xf20] sm:$0xff]
    %v2635 = vld [vmem:[#allocation17 + $0xf28] sm:$0xff]
    %v2636 = vld [vmem:[#allocation17 + $0xf30] sm:$0xff]
    %v2637 = vld [vmem:[#allocation17 + $0xf38] sm:$0xff]
    %v2638 = vld [vmem:[#allocation17 + $0xf40] sm:$0xff]
    %v2639 = vld [vmem:[#allocation17 + $0xf48] sm:$0xff]
    %v2640 = vld [vmem:[#allocation17 + $0xf50] sm:$0xff]
    %v2641 = vld [vmem:[#allocation17 + $0xf58] sm:$0xff]
    %v2642 = vld [vmem:[#allocation17 + $0xf60] sm:$0xff]
    %v2643 = vld [vmem:[#allocation17 + $0xf68] sm:$0xff]
    %v2644 = vld [vmem:[#allocation17 + $0xf70] sm:$0xff]
    %v2645 = vld [vmem:[#allocation17 + $0xf78] sm:$0xff]
    %v2646 = vld [vmem:[#allocation17 + $0xf80] sm:$0xff]
    %v2647 = vld [vmem:[#allocation17 + $0xf88] sm:$0xff]
    %v2648 = vld [vmem:[#allocation17 + $0xf90] sm:$0xff]
    %v2649 = vld [vmem:[#allocation17 + $0xf98] sm:$0xff]
    %v2650 = vld [vmem:[#allocation17 + $0xfa0] sm:$0xff]
    %v2651 = vld [vmem:[#allocation17 + $0xfa8] sm:$0xff]
    %v2652 = vld [vmem:[#allocation17 + $0xfb0] sm:$0xff]
    %v2653 = vld [vmem:[#allocation17 + $0xfb8] sm:$0xff]
    %v2654 = vld [vmem:[#allocation17 + $0xfc0] sm:$0xff]
    %v2655 = vld [vmem:[#allocation17 + $0xfc8] sm:$0xff]
    %v2656 = vld [vmem:[#allocation17 + $0xfd0] sm:$0xff]
    %v2657 = vld [vmem:[#allocation17 + $0xfd8] sm:$0xff]
    %v2658 = vld [vmem:[#allocation17 + $0xfe0] sm:$0xff]
    %v2659 = vld [vmem:[#allocation17 + $0xfe8] sm:$0xff]
    %v2660 = vld [vmem:[#allocation17 + $0xff0] sm:$0xff]
    %v2661 = vld [vmem:[#allocation17 + $0xff8] sm:$0xff]
    %v2662 = vld [vmem:[#allocation18] sm:$0xf]
    %v2664 = vlaneseq
    %v2665 = vshrl.u32 %v2664, 7
    %v2666 = vsub.s32 0, %v2665
    %v2667 = vrot.slane %v2662, %v2666
    %v2668 = vlaneseq
    %v2669 = vshrl.u32 %v2668, 7
    %v2670 = vsub.s32 1, %v2669
    %v2671 = vrot.slane %v2662, %v2670
    %v2672 = vlaneseq
    %v2673 = vshrl.u32 %v2672, 7
    %v2674 = vsub.s32 2, %v2673
    %v2675 = vrot.slane %v2662, %v2674
    %v2676 = vlaneseq
    %v2677 = vshrl.u32 %v2676, 7
    %v2678 = vsub.s32 3, %v2677
    %v2679 = vrot.slane %v2662, %v2678
    %v3196 = vunpack.c.l.b16 %v2150
    %v3197 = vunpack.c.h.b16 %v2150
    %v3198 = vunpack.c.l.b16 %v2151
    %v3199 = vunpack.c.h.b16 %v2151
    %v3200 = vunpack.c.l.b16 %v2152
    %v3201 = vunpack.c.h.b16 %v2152
    %v3202 = vunpack.c.l.b16 %v2153
    %v3203 = vunpack.c.h.b16 %v2153
    %v3204 = vunpack.c.l.b16 %v2154
    %v3205 = vunpack.c.h.b16 %v2154
    %v3206 = vunpack.c.l.b16 %v2155
    %v3207 = vunpack.c.h.b16 %v2155
    %v3208 = vunpack.c.l.b16 %v2156
    %v3209 = vunpack.c.h.b16 %v2156
    %v3210 = vunpack.c.l.b16 %v2157
    %v3211 = vunpack.c.h.b16 %v2157
    %v3212 = vunpack.c.l.b16 %v2158
    %v3213 = vunpack.c.h.b16 %v2158
    %v3214 = vunpack.c.l.b16 %v2159
    %v3215 = vunpack.c.h.b16 %v2159
    %v3216 = vunpack.c.l.b16 %v2160
    %v3217 = vunpack.c.h.b16 %v2160
    %v3218 = vunpack.c.l.b16 %v2161
    %v3219 = vunpack.c.h.b16 %v2161
    %v3220 = vunpack.c.l.b16 %v2162
    %v3221 = vunpack.c.h.b16 %v2162
    %v3222 = vunpack.c.l.b16 %v2163
    %v3223 = vunpack.c.h.b16 %v2163
    %v3224 = vunpack.c.l.b16 %v2164
    %v3225 = vunpack.c.h.b16 %v2164
    %v3226 = vunpack.c.l.b16 %v2165
    %v3227 = vunpack.c.h.b16 %v2165
    %v3228 = vunpack.c.l.b16 %v2166
    %v3229 = vunpack.c.h.b16 %v2166
    %v3230 = vunpack.c.l.b16 %v2167
    %v3231 = vunpack.c.h.b16 %v2167
    %v3232 = vunpack.c.l.b16 %v2168
    %v3233 = vunpack.c.h.b16 %v2168
    %v3234 = vunpack.c.l.b16 %v2169
    %v3235 = vunpack.c.h.b16 %v2169
    %v3236 = vunpack.c.l.b16 %v2170
    %v3237 = vunpack.c.h.b16 %v2170
    %v3238 = vunpack.c.l.b16 %v2171
    %v3239 = vunpack.c.h.b16 %v2171
    %v3240 = vunpack.c.l.b16 %v2172
    %v3241 = vunpack.c.h.b16 %v2172
    %v3242 = vunpack.c.l.b16 %v2173
    %v3243 = vunpack.c.h.b16 %v2173
    %v3244 = vunpack.c.l.b16 %v2174
    %v3245 = vunpack.c.h.b16 %v2174
    %v3246 = vunpack.c.l.b16 %v2175
    %v3247 = vunpack.c.h.b16 %v2175
    %v3248 = vunpack.c.l.b16 %v2176
    %v3249 = vunpack.c.h.b16 %v2176
    %v3250 = vunpack.c.l.b16 %v2177
    %v3251 = vunpack.c.h.b16 %v2177
    %v3252 = vunpack.c.l.b16 %v2178
    %v3253 = vunpack.c.h.b16 %v2178
    %v3254 = vunpack.c.l.b16 %v2179
    %v3255 = vunpack.c.h.b16 %v2179
    %v3256 = vunpack.c.l.b16 %v2180
    %v3257 = vunpack.c.h.b16 %v2180
    %v3258 = vunpack.c.l.b16 %v2181
    %v3259 = vunpack.c.h.b16 %v2181
    %v3260 = vunpack.c.l.b16 %v2182
    %v3261 = vunpack.c.h.b16 %v2182
    %v3262 = vunpack.c.l.b16 %v2183
    %v3263 = vunpack.c.h.b16 %v2183
    %v3264 = vunpack.c.l.b16 %v2184
    %v3265 = vunpack.c.h.b16 %v2184
    %v3266 = vunpack.c.l.b16 %v2185
    %v3267 = vunpack.c.h.b16 %v2185
    %v3268 = vunpack.c.l.b16 %v2186
    %v3269 = vunpack.c.h.b16 %v2186
    %v3270 = vunpack.c.l.b16 %v2187
    %v3271 = vunpack.c.h.b16 %v2187
    %v3272 = vunpack.c.l.b16 %v2188
    %v3273 = vunpack.c.h.b16 %v2188
    %v3274 = vunpack.c.l.b16 %v2189
    %v3275 = vunpack.c.h.b16 %v2189
    %v3276 = vunpack.c.l.b16 %v2190
    %v3277 = vunpack.c.h.b16 %v2190
    %v3278 = vunpack.c.l.b16 %v2191
    %v3279 = vunpack.c.h.b16 %v2191
    %v3280 = vunpack.c.l.b16 %v2192
    %v3281 = vunpack.c.h.b16 %v2192
    %v3282 = vunpack.c.l.b16 %v2193
    %v3283 = vunpack.c.h.b16 %v2193
    %v3284 = vunpack.c.l.b16 %v2194
    %v3285 = vunpack.c.h.b16 %v2194
    %v3286 = vunpack.c.l.b16 %v2195
    %v3287 = vunpack.c.h.b16 %v2195
    %v3288 = vunpack.c.l.b16 %v2196
    %v3289 = vunpack.c.h.b16 %v2196
    %v3290 = vunpack.c.l.b16 %v2197
    %v3291 = vunpack.c.h.b16 %v2197
    %v3292 = vunpack.c.l.b16 %v2198
    %v3293 = vunpack.c.h.b16 %v2198
    %v3294 = vunpack.c.l.b16 %v2199
    %v3295 = vunpack.c.h.b16 %v2199
    %v3296 = vunpack.c.l.b16 %v2200
    %v3297 = vunpack.c.h.b16 %v2200
    %v3298 = vunpack.c.l.b16 %v2201
    %v3299 = vunpack.c.h.b16 %v2201
    %v3300 = vunpack.c.l.b16 %v2202
    %v3301 = vunpack.c.h.b16 %v2202
    %v3302 = vunpack.c.l.b16 %v2203
    %v3303 = vunpack.c.h.b16 %v2203
    %v3304 = vunpack.c.l.b16 %v2204
    %v3305 = vunpack.c.h.b16 %v2204
    %v3306 = vunpack.c.l.b16 %v2205
    %v3307 = vunpack.c.h.b16 %v2205
    %v3308 = vunpack.c.l.b16 %v2206
    %v3309 = vunpack.c.h.b16 %v2206
    %v3310 = vunpack.c.l.b16 %v2207
    %v3311 = vunpack.c.h.b16 %v2207
    %v3312 = vunpack.c.l.b16 %v2208
    %v3313 = vunpack.c.h.b16 %v2208
    %v3314 = vunpack.c.l.b16 %v2209
    %v3315 = vunpack.c.h.b16 %v2209
    %v3316 = vunpack.c.l.b16 %v2210
    %v3317 = vunpack.c.h.b16 %v2210
    %v3318 = vunpack.c.l.b16 %v2211
    %v3319 = vunpack.c.h.b16 %v2211
    %v3320 = vunpack.c.l.b16 %v2212
    %v3321 = vunpack.c.h.b16 %v2212
    %v3322 = vunpack.c.l.b16 %v2213
    %v3323 = vunpack.c.h.b16 %v2213
    %v3324 = vunpack.c.l.b16 %v2214
    %v3325 = vunpack.c.h.b16 %v2214
    %v3326 = vunpack.c.l.b16 %v2215
    %v3327 = vunpack.c.h.b16 %v2215
    %v3328 = vunpack.c.l.b16 %v2216
    %v3329 = vunpack.c.h.b16 %v2216
    %v3330 = vunpack.c.l.b16 %v2217
    %v3331 = vunpack.c.h.b16 %v2217
    %v3332 = vunpack.c.l.b16 %v2218
    %v3333 = vunpack.c.h.b16 %v2218
    %v3334 = vunpack.c.l.b16 %v2219
    %v3335 = vunpack.c.h.b16 %v2219
    %v3336 = vunpack.c.l.b16 %v2220
    %v3337 = vunpack.c.h.b16 %v2220
    %v3338 = vunpack.c.l.b16 %v2221
    %v3339 = vunpack.c.h.b16 %v2221
    %v3340 = vunpack.c.l.b16 %v2222
    %v3341 = vunpack.c.h.b16 %v2222
    %v3342 = vunpack.c.l.b16 %v2223
    %v3343 = vunpack.c.h.b16 %v2223
    %v3344 = vunpack.c.l.b16 %v2224
    %v3345 = vunpack.c.h.b16 %v2224
    %v3346 = vunpack.c.l.b16 %v2225
    %v3347 = vunpack.c.h.b16 %v2225
    %v3348 = vunpack.c.l.b16 %v2226
    %v3349 = vunpack.c.h.b16 %v2226
    %v3350 = vunpack.c.l.b16 %v2227
    %v3351 = vunpack.c.h.b16 %v2227
    %v3352 = vunpack.c.l.b16 %v2228
    %v3353 = vunpack.c.h.b16 %v2228
    %v3354 = vunpack.c.l.b16 %v2229
    %v3355 = vunpack.c.h.b16 %v2229
    %v3356 = vunpack.c.l.b16 %v2230
    %v3357 = vunpack.c.h.b16 %v2230
    %v3358 = vunpack.c.l.b16 %v2231
    %v3359 = vunpack.c.h.b16 %v2231
    %v3360 = vunpack.c.l.b16 %v2232
    %v3361 = vunpack.c.h.b16 %v2232
    %v3362 = vunpack.c.l.b16 %v2233
    %v3363 = vunpack.c.h.b16 %v2233
    %v3364 = vunpack.c.l.b16 %v2234
    %v3365 = vunpack.c.h.b16 %v2234
    %v3366 = vunpack.c.l.b16 %v2235
    %v3367 = vunpack.c.h.b16 %v2235
    %v3368 = vunpack.c.l.b16 %v2236
    %v3369 = vunpack.c.h.b16 %v2236
    %v3370 = vunpack.c.l.b16 %v2237
    %v3371 = vunpack.c.h.b16 %v2237
    %v3372 = vunpack.c.l.b16 %v2238
    %v3373 = vunpack.c.h.b16 %v2238
    %v3374 = vunpack.c.l.b16 %v2239
    %v3375 = vunpack.c.h.b16 %v2239
    %v3376 = vunpack.c.l.b16 %v2240
    %v3377 = vunpack.c.h.b16 %v2240
    %v3378 = vunpack.c.l.b16 %v2241
    %v3379 = vunpack.c.h.b16 %v2241
    %v3380 = vunpack.c.l.b16 %v2242
    %v3381 = vunpack.c.h.b16 %v2242
    %v3382 = vunpack.c.l.b16 %v2243
    %v3383 = vunpack.c.h.b16 %v2243
    %v3384 = vunpack.c.l.b16 %v2244
    %v3385 = vunpack.c.h.b16 %v2244
    %v3386 = vunpack.c.l.b16 %v2245
    %v3387 = vunpack.c.h.b16 %v2245
    %v3388 = vunpack.c.l.b16 %v2246
    %v3389 = vunpack.c.h.b16 %v2246
    %v3390 = vunpack.c.l.b16 %v2247
    %v3391 = vunpack.c.h.b16 %v2247
    %v3392 = vunpack.c.l.b16 %v2248
    %v3393 = vunpack.c.h.b16 %v2248
    %v3394 = vunpack.c.l.b16 %v2249
    %v3395 = vunpack.c.h.b16 %v2249
    %v3396 = vunpack.c.l.b16 %v2250
    %v3397 = vunpack.c.h.b16 %v2250
    %v3398 = vunpack.c.l.b16 %v2251
    %v3399 = vunpack.c.h.b16 %v2251
    %v3400 = vunpack.c.l.b16 %v2252
    %v3401 = vunpack.c.h.b16 %v2252
    %v3402 = vunpack.c.l.b16 %v2253
    %v3403 = vunpack.c.h.b16 %v2253
    %v3404 = vunpack.c.l.b16 %v2254
    %v3405 = vunpack.c.h.b16 %v2254
    %v3406 = vunpack.c.l.b16 %v2255
    %v3407 = vunpack.c.h.b16 %v2255
    %v3408 = vunpack.c.l.b16 %v2256
    %v3409 = vunpack.c.h.b16 %v2256
    %v3410 = vunpack.c.l.b16 %v2257
    %v3411 = vunpack.c.h.b16 %v2257
    %v3412 = vunpack.c.l.b16 %v2258
    %v3413 = vunpack.c.h.b16 %v2258
    %v3414 = vunpack.c.l.b16 %v2259
    %v3415 = vunpack.c.h.b16 %v2259
    %v3416 = vunpack.c.l.b16 %v2260
    %v3417 = vunpack.c.h.b16 %v2260
    %v3418 = vunpack.c.l.b16 %v2261
    %v3419 = vunpack.c.h.b16 %v2261
    %v3420 = vunpack.c.l.b16 %v2262
    %v3421 = vunpack.c.h.b16 %v2262
    %v3422 = vunpack.c.l.b16 %v2263
    %v3423 = vunpack.c.h.b16 %v2263
    %v3424 = vunpack.c.l.b16 %v2264
    %v3425 = vunpack.c.h.b16 %v2264
    %v3426 = vunpack.c.l.b16 %v2265
    %v3427 = vunpack.c.h.b16 %v2265
    %v3428 = vunpack.c.l.b16 %v2266
    %v3429 = vunpack.c.h.b16 %v2266
    %v3430 = vunpack.c.l.b16 %v2267
    %v3431 = vunpack.c.h.b16 %v2267
    %v3432 = vunpack.c.l.b16 %v2268
    %v3433 = vunpack.c.h.b16 %v2268
    %v3434 = vunpack.c.l.b16 %v2269
    %v3435 = vunpack.c.h.b16 %v2269
    %v3436 = vunpack.c.l.b16 %v2270
    %v3437 = vunpack.c.h.b16 %v2270
    %v3438 = vunpack.c.l.b16 %v2271
    %v3439 = vunpack.c.h.b16 %v2271
    %v3440 = vunpack.c.l.b16 %v2272
    %v3441 = vunpack.c.h.b16 %v2272
    %v3442 = vunpack.c.l.b16 %v2273
    %v3443 = vunpack.c.h.b16 %v2273
    %v3444 = vunpack.c.l.b16 %v2274
    %v3445 = vunpack.c.h.b16 %v2274
    %v3446 = vunpack.c.l.b16 %v2275
    %v3447 = vunpack.c.h.b16 %v2275
    %v3448 = vunpack.c.l.b16 %v2276
    %v3449 = vunpack.c.h.b16 %v2276
    %v3450 = vunpack.c.l.b16 %v2277
    %v3451 = vunpack.c.h.b16 %v2277
    %v3452 = vunpack.c.l.b16 %v2278
    %v3453 = vunpack.c.h.b16 %v2278
    %v3454 = vunpack.c.l.b16 %v2279
    %v3455 = vunpack.c.h.b16 %v2279
    %v3456 = vunpack.c.l.b16 %v2280
    %v3457 = vunpack.c.h.b16 %v2280
    %v3458 = vunpack.c.l.b16 %v2281
    %v3459 = vunpack.c.h.b16 %v2281
    %v3460 = vunpack.c.l.b16 %v2282
    %v3461 = vunpack.c.h.b16 %v2282
    %v3462 = vunpack.c.l.b16 %v2283
    %v3463 = vunpack.c.h.b16 %v2283
    %v3464 = vunpack.c.l.b16 %v2284
    %v3465 = vunpack.c.h.b16 %v2284
    %v3466 = vunpack.c.l.b16 %v2285
    %v3467 = vunpack.c.h.b16 %v2285
    %v3468 = vunpack.c.l.b16 %v2286
    %v3469 = vunpack.c.h.b16 %v2286
    %v3470 = vunpack.c.l.b16 %v2287
    %v3471 = vunpack.c.h.b16 %v2287
    %v3472 = vunpack.c.l.b16 %v2288
    %v3473 = vunpack.c.h.b16 %v2288
    %v3474 = vunpack.c.l.b16 %v2289
    %v3475 = vunpack.c.h.b16 %v2289
    %v3476 = vunpack.c.l.b16 %v2290
    %v3477 = vunpack.c.h.b16 %v2290
    %v3478 = vunpack.c.l.b16 %v2291
    %v3479 = vunpack.c.h.b16 %v2291
    %v3480 = vunpack.c.l.b16 %v2292
    %v3481 = vunpack.c.h.b16 %v2292
    %v3482 = vunpack.c.l.b16 %v2293
    %v3483 = vunpack.c.h.b16 %v2293
    %v3484 = vunpack.c.l.b16 %v2294
    %v3485 = vunpack.c.h.b16 %v2294
    %v3486 = vunpack.c.l.b16 %v2295
    %v3487 = vunpack.c.h.b16 %v2295
    %v3488 = vunpack.c.l.b16 %v2296
    %v3489 = vunpack.c.h.b16 %v2296
    %v3490 = vunpack.c.l.b16 %v2297
    %v3491 = vunpack.c.h.b16 %v2297
    %v3492 = vunpack.c.l.b16 %v2298
    %v3493 = vunpack.c.h.b16 %v2298
    %v3494 = vunpack.c.l.b16 %v2299
    %v3495 = vunpack.c.h.b16 %v2299
    %v3496 = vunpack.c.l.b16 %v2300
    %v3497 = vunpack.c.h.b16 %v2300
    %v3498 = vunpack.c.l.b16 %v2301
    %v3499 = vunpack.c.h.b16 %v2301
    %v3500 = vunpack.c.l.b16 %v2302
    %v3501 = vunpack.c.h.b16 %v2302
    %v3502 = vunpack.c.l.b16 %v2303
    %v3503 = vunpack.c.h.b16 %v2303
    %v3504 = vunpack.c.l.b16 %v2304
    %v3505 = vunpack.c.h.b16 %v2304
    %v3506 = vunpack.c.l.b16 %v2305
    %v3507 = vunpack.c.h.b16 %v2305
    %v3508 = vunpack.c.l.b16 %v2306
    %v3509 = vunpack.c.h.b16 %v2306
    %v3510 = vunpack.c.l.b16 %v2307
    %v3511 = vunpack.c.h.b16 %v2307
    %v3512 = vunpack.c.l.b16 %v2308
    %v3513 = vunpack.c.h.b16 %v2308
    %v3514 = vunpack.c.l.b16 %v2309
    %v3515 = vunpack.c.h.b16 %v2309
    %v3516 = vunpack.c.l.b16 %v2310
    %v3517 = vunpack.c.h.b16 %v2310
    %v3518 = vunpack.c.l.b16 %v2311
    %v3519 = vunpack.c.h.b16 %v2311
    %v3520 = vunpack.c.l.b16 %v2312
    %v3521 = vunpack.c.h.b16 %v2312
    %v3522 = vunpack.c.l.b16 %v2313
    %v3523 = vunpack.c.h.b16 %v2313
    %v3524 = vunpack.c.l.b16 %v2314
    %v3525 = vunpack.c.h.b16 %v2314
    %v3526 = vunpack.c.l.b16 %v2315
    %v3527 = vunpack.c.h.b16 %v2315
    %v3528 = vunpack.c.l.b16 %v2316
    %v3529 = vunpack.c.h.b16 %v2316
    %v3530 = vunpack.c.l.b16 %v2317
    %v3531 = vunpack.c.h.b16 %v2317
    %v3532 = vunpack.c.l.b16 %v2318
    %v3533 = vunpack.c.h.b16 %v2318
    %v3534 = vunpack.c.l.b16 %v2319
    %v3535 = vunpack.c.h.b16 %v2319
    %v3536 = vunpack.c.l.b16 %v2320
    %v3537 = vunpack.c.h.b16 %v2320
    %v3538 = vunpack.c.l.b16 %v2321
    %v3539 = vunpack.c.h.b16 %v2321
    %v3540 = vunpack.c.l.b16 %v2322
    %v3541 = vunpack.c.h.b16 %v2322
    %v3542 = vunpack.c.l.b16 %v2323
    %v3543 = vunpack.c.h.b16 %v2323
    %v3544 = vunpack.c.l.b16 %v2324
    %v3545 = vunpack.c.h.b16 %v2324
    %v3546 = vunpack.c.l.b16 %v2325
    %v3547 = vunpack.c.h.b16 %v2325
    %v3548 = vunpack.c.l.b16 %v2326
    %v3549 = vunpack.c.h.b16 %v2326
    %v3550 = vunpack.c.l.b16 %v2327
    %v3551 = vunpack.c.h.b16 %v2327
    %v3552 = vunpack.c.l.b16 %v2328
    %v3553 = vunpack.c.h.b16 %v2328
    %v3554 = vunpack.c.l.b16 %v2329
    %v3555 = vunpack.c.h.b16 %v2329
    %v3556 = vunpack.c.l.b16 %v2330
    %v3557 = vunpack.c.h.b16 %v2330
    %v3558 = vunpack.c.l.b16 %v2331
    %v3559 = vunpack.c.h.b16 %v2331
    %v3560 = vunpack.c.l.b16 %v2332
    %v3561 = vunpack.c.h.b16 %v2332
    %v3562 = vunpack.c.l.b16 %v2333
    %v3563 = vunpack.c.h.b16 %v2333
    %v3564 = vunpack.c.l.b16 %v2334
    %v3565 = vunpack.c.h.b16 %v2334
    %v3566 = vunpack.c.l.b16 %v2335
    %v3567 = vunpack.c.h.b16 %v2335
    %v3568 = vunpack.c.l.b16 %v2336
    %v3569 = vunpack.c.h.b16 %v2336
    %v3570 = vunpack.c.l.b16 %v2337
    %v3571 = vunpack.c.h.b16 %v2337
    %v3572 = vunpack.c.l.b16 %v2338
    %v3573 = vunpack.c.h.b16 %v2338
    %v3574 = vunpack.c.l.b16 %v2339
    %v3575 = vunpack.c.h.b16 %v2339
    %v3576 = vunpack.c.l.b16 %v2340
    %v3577 = vunpack.c.h.b16 %v2340
    %v3578 = vunpack.c.l.b16 %v2341
    %v3579 = vunpack.c.h.b16 %v2341
    %v3580 = vunpack.c.l.b16 %v2342
    %v3581 = vunpack.c.h.b16 %v2342
    %v3582 = vunpack.c.l.b16 %v2343
    %v3583 = vunpack.c.h.b16 %v2343
    %v3584 = vunpack.c.l.b16 %v2344
    %v3585 = vunpack.c.h.b16 %v2344
    %v3586 = vunpack.c.l.b16 %v2345
    %v3587 = vunpack.c.h.b16 %v2345
    %v3588 = vunpack.c.l.b16 %v2346
    %v3589 = vunpack.c.h.b16 %v2346
    %v3590 = vunpack.c.l.b16 %v2347
    %v3591 = vunpack.c.h.b16 %v2347
    %v3592 = vunpack.c.l.b16 %v2348
    %v3593 = vunpack.c.h.b16 %v2348
    %v3594 = vunpack.c.l.b16 %v2349
    %v3595 = vunpack.c.h.b16 %v2349
    %v3596 = vunpack.c.l.b16 %v2350
    %v3597 = vunpack.c.h.b16 %v2350
    %v3598 = vunpack.c.l.b16 %v2351
    %v3599 = vunpack.c.h.b16 %v2351
    %v3600 = vunpack.c.l.b16 %v2352
    %v3601 = vunpack.c.h.b16 %v2352
    %v3602 = vunpack.c.l.b16 %v2353
    %v3603 = vunpack.c.h.b16 %v2353
    %v3604 = vunpack.c.l.b16 %v2354
    %v3605 = vunpack.c.h.b16 %v2354
    %v3606 = vunpack.c.l.b16 %v2355
    %v3607 = vunpack.c.h.b16 %v2355
    %v3608 = vunpack.c.l.b16 %v2356
    %v3609 = vunpack.c.h.b16 %v2356
    %v3610 = vunpack.c.l.b16 %v2357
    %v3611 = vunpack.c.h.b16 %v2357
    %v3612 = vunpack.c.l.b16 %v2358
    %v3613 = vunpack.c.h.b16 %v2358
    %v3614 = vunpack.c.l.b16 %v2359
    %v3615 = vunpack.c.h.b16 %v2359
    %v3616 = vunpack.c.l.b16 %v2360
    %v3617 = vunpack.c.h.b16 %v2360
    %v3618 = vunpack.c.l.b16 %v2361
    %v3619 = vunpack.c.h.b16 %v2361
    %v3620 = vunpack.c.l.b16 %v2362
    %v3621 = vunpack.c.h.b16 %v2362
    %v3622 = vunpack.c.l.b16 %v2363
    %v3623 = vunpack.c.h.b16 %v2363
    %v3624 = vunpack.c.l.b16 %v2364
    %v3625 = vunpack.c.h.b16 %v2364
    %v3626 = vunpack.c.l.b16 %v2365
    %v3627 = vunpack.c.h.b16 %v2365
    %v3628 = vunpack.c.l.b16 %v2366
    %v3629 = vunpack.c.h.b16 %v2366
    %v3630 = vunpack.c.l.b16 %v2367
    %v3631 = vunpack.c.h.b16 %v2367
    %v3632 = vunpack.c.l.b16 %v2368
    %v3633 = vunpack.c.h.b16 %v2368
    %v3634 = vunpack.c.l.b16 %v2369
    %v3635 = vunpack.c.h.b16 %v2369
    %v3636 = vunpack.c.l.b16 %v2370
    %v3637 = vunpack.c.h.b16 %v2370
    %v3638 = vunpack.c.l.b16 %v2371
    %v3639 = vunpack.c.h.b16 %v2371
    %v3640 = vunpack.c.l.b16 %v2372
    %v3641 = vunpack.c.h.b16 %v2372
    %v3642 = vunpack.c.l.b16 %v2373
    %v3643 = vunpack.c.h.b16 %v2373
    %v3644 = vunpack.c.l.b16 %v2374
    %v3645 = vunpack.c.h.b16 %v2374
    %v3646 = vunpack.c.l.b16 %v2375
    %v3647 = vunpack.c.h.b16 %v2375
    %v3648 = vunpack.c.l.b16 %v2376
    %v3649 = vunpack.c.h.b16 %v2376
    %v3650 = vunpack.c.l.b16 %v2377
    %v3651 = vunpack.c.h.b16 %v2377
    %v3652 = vunpack.c.l.b16 %v2378
    %v3653 = vunpack.c.h.b16 %v2378
    %v3654 = vunpack.c.l.b16 %v2379
    %v3655 = vunpack.c.h.b16 %v2379
    %v3656 = vunpack.c.l.b16 %v2380
    %v3657 = vunpack.c.h.b16 %v2380
    %v3658 = vunpack.c.l.b16 %v2381
    %v3659 = vunpack.c.h.b16 %v2381
    %v3660 = vunpack.c.l.b16 %v2382
    %v3661 = vunpack.c.h.b16 %v2382
    %v3662 = vunpack.c.l.b16 %v2383
    %v3663 = vunpack.c.h.b16 %v2383
    %v3664 = vunpack.c.l.b16 %v2384
    %v3665 = vunpack.c.h.b16 %v2384
    %v3666 = vunpack.c.l.b16 %v2385
    %v3667 = vunpack.c.h.b16 %v2385
    %v3668 = vunpack.c.l.b16 %v2386
    %v3669 = vunpack.c.h.b16 %v2386
    %v3670 = vunpack.c.l.b16 %v2387
    %v3671 = vunpack.c.h.b16 %v2387
    %v3672 = vunpack.c.l.b16 %v2388
    %v3673 = vunpack.c.h.b16 %v2388
    %v3674 = vunpack.c.l.b16 %v2389
    %v3675 = vunpack.c.h.b16 %v2389
    %v3676 = vunpack.c.l.b16 %v2390
    %v3677 = vunpack.c.h.b16 %v2390
    %v3678 = vunpack.c.l.b16 %v2391
    %v3679 = vunpack.c.h.b16 %v2391
    %v3680 = vunpack.c.l.b16 %v2392
    %v3681 = vunpack.c.h.b16 %v2392
    %v3682 = vunpack.c.l.b16 %v2393
    %v3683 = vunpack.c.h.b16 %v2393
    %v3684 = vunpack.c.l.b16 %v2394
    %v3685 = vunpack.c.h.b16 %v2394
    %v3686 = vunpack.c.l.b16 %v2395
    %v3687 = vunpack.c.h.b16 %v2395
    %v3688 = vunpack.c.l.b16 %v2396
    %v3689 = vunpack.c.h.b16 %v2396
    %v3690 = vunpack.c.l.b16 %v2397
    %v3691 = vunpack.c.h.b16 %v2397
    %v3692 = vunpack.c.l.b16 %v2398
    %v3693 = vunpack.c.h.b16 %v2398
    %v3694 = vunpack.c.l.b16 %v2399
    %v3695 = vunpack.c.h.b16 %v2399
    %v3696 = vunpack.c.l.b16 %v2400
    %v3697 = vunpack.c.h.b16 %v2400
    %v3698 = vunpack.c.l.b16 %v2401
    %v3699 = vunpack.c.h.b16 %v2401
    %v3700 = vunpack.c.l.b16 %v2402
    %v3701 = vunpack.c.h.b16 %v2402
    %v3702 = vunpack.c.l.b16 %v2403
    %v3703 = vunpack.c.h.b16 %v2403
    %v3704 = vunpack.c.l.b16 %v2404
    %v3705 = vunpack.c.h.b16 %v2404
    %v3706 = vunpack.c.l.b16 %v2405
    %v3707 = vunpack.c.h.b16 %v2405
    %v3708 = vunpack.c.l.b16 %v2406
    %v3709 = vunpack.c.h.b16 %v2406
    %v3710 = vunpack.c.l.b16 %v2407
    %v3711 = vunpack.c.h.b16 %v2407
    %v3712 = vunpack.c.l.b16 %v2408
    %v3713 = vunpack.c.h.b16 %v2408
    %v3714 = vunpack.c.l.b16 %v2409
    %v3715 = vunpack.c.h.b16 %v2409
    %v3716 = vunpack.c.l.b16 %v2410
    %v3717 = vunpack.c.h.b16 %v2410
    %v3718 = vunpack.c.l.b16 %v2411
    %v3719 = vunpack.c.h.b16 %v2411
    %v3720 = vunpack.c.l.b16 %v2412
    %v3721 = vunpack.c.h.b16 %v2412
    %v3722 = vunpack.c.l.b16 %v2413
    %v3723 = vunpack.c.h.b16 %v2413
    %v3724 = vunpack.c.l.b16 %v2414
    %v3725 = vunpack.c.h.b16 %v2414
    %v3726 = vunpack.c.l.b16 %v2415
    %v3727 = vunpack.c.h.b16 %v2415
    %v3728 = vunpack.c.l.b16 %v2416
    %v3729 = vunpack.c.h.b16 %v2416
    %v3730 = vunpack.c.l.b16 %v2417
    %v3731 = vunpack.c.h.b16 %v2417
    %v3732 = vunpack.c.l.b16 %v2418
    %v3733 = vunpack.c.h.b16 %v2418
    %v3734 = vunpack.c.l.b16 %v2419
    %v3735 = vunpack.c.h.b16 %v2419
    %v3736 = vunpack.c.l.b16 %v2420
    %v3737 = vunpack.c.h.b16 %v2420
    %v3738 = vunpack.c.l.b16 %v2421
    %v3739 = vunpack.c.h.b16 %v2421
    %v3740 = vunpack.c.l.b16 %v2422
    %v3741 = vunpack.c.h.b16 %v2422
    %v3742 = vunpack.c.l.b16 %v2423
    %v3743 = vunpack.c.h.b16 %v2423
    %v3744 = vunpack.c.l.b16 %v2424
    %v3745 = vunpack.c.h.b16 %v2424
    %v3746 = vunpack.c.l.b16 %v2425
    %v3747 = vunpack.c.h.b16 %v2425
    %v3748 = vunpack.c.l.b16 %v2426
    %v3749 = vunpack.c.h.b16 %v2426
    %v3750 = vunpack.c.l.b16 %v2427
    %v3751 = vunpack.c.h.b16 %v2427
    %v3752 = vunpack.c.l.b16 %v2428
    %v3753 = vunpack.c.h.b16 %v2428
    %v3754 = vunpack.c.l.b16 %v2429
    %v3755 = vunpack.c.h.b16 %v2429
    %v3756 = vunpack.c.l.b16 %v2430
    %v3757 = vunpack.c.h.b16 %v2430
    %v3758 = vunpack.c.l.b16 %v2431
    %v3759 = vunpack.c.h.b16 %v2431
    %v3760 = vunpack.c.l.b16 %v2432
    %v3761 = vunpack.c.h.b16 %v2432
    %v3762 = vunpack.c.l.b16 %v2433
    %v3763 = vunpack.c.h.b16 %v2433
    %v3764 = vunpack.c.l.b16 %v2434
    %v3765 = vunpack.c.h.b16 %v2434
    %v3766 = vunpack.c.l.b16 %v2435
    %v3767 = vunpack.c.h.b16 %v2435
    %v3768 = vunpack.c.l.b16 %v2436
    %v3769 = vunpack.c.h.b16 %v2436
    %v3770 = vunpack.c.l.b16 %v2437
    %v3771 = vunpack.c.h.b16 %v2437
    %v3772 = vunpack.c.l.b16 %v2438
    %v3773 = vunpack.c.h.b16 %v2438
    %v3774 = vunpack.c.l.b16 %v2439
    %v3775 = vunpack.c.h.b16 %v2439
    %v3776 = vunpack.c.l.b16 %v2440
    %v3777 = vunpack.c.h.b16 %v2440
    %v3778 = vunpack.c.l.b16 %v2441
    %v3779 = vunpack.c.h.b16 %v2441
    %v3780 = vunpack.c.l.b16 %v2442
    %v3781 = vunpack.c.h.b16 %v2442
    %v3782 = vunpack.c.l.b16 %v2443
    %v3783 = vunpack.c.h.b16 %v2443
    %v3784 = vunpack.c.l.b16 %v2444
    %v3785 = vunpack.c.h.b16 %v2444
    %v3786 = vunpack.c.l.b16 %v2445
    %v3787 = vunpack.c.h.b16 %v2445
    %v3788 = vunpack.c.l.b16 %v2446
    %v3789 = vunpack.c.h.b16 %v2446
    %v3790 = vunpack.c.l.b16 %v2447
    %v3791 = vunpack.c.h.b16 %v2447
    %v3792 = vunpack.c.l.b16 %v2448
    %v3793 = vunpack.c.h.b16 %v2448
    %v3794 = vunpack.c.l.b16 %v2449
    %v3795 = vunpack.c.h.b16 %v2449
    %v3796 = vunpack.c.l.b16 %v2450
    %v3797 = vunpack.c.h.b16 %v2450
    %v3798 = vunpack.c.l.b16 %v2451
    %v3799 = vunpack.c.h.b16 %v2451
    %v3800 = vunpack.c.l.b16 %v2452
    %v3801 = vunpack.c.h.b16 %v2452
    %v3802 = vunpack.c.l.b16 %v2453
    %v3803 = vunpack.c.h.b16 %v2453
    %v3804 = vunpack.c.l.b16 %v2454
    %v3805 = vunpack.c.h.b16 %v2454
    %v3806 = vunpack.c.l.b16 %v2455
    %v3807 = vunpack.c.h.b16 %v2455
    %v3808 = vunpack.c.l.b16 %v2456
    %v3809 = vunpack.c.h.b16 %v2456
    %v3810 = vunpack.c.l.b16 %v2457
    %v3811 = vunpack.c.h.b16 %v2457
    %v3812 = vunpack.c.l.b16 %v2458
    %v3813 = vunpack.c.h.b16 %v2458
    %v3814 = vunpack.c.l.b16 %v2459
    %v3815 = vunpack.c.h.b16 %v2459
    %v3816 = vunpack.c.l.b16 %v2460
    %v3817 = vunpack.c.h.b16 %v2460
    %v3818 = vunpack.c.l.b16 %v2461
    %v3819 = vunpack.c.h.b16 %v2461
    %v3820 = vunpack.c.l.b16 %v2462
    %v3821 = vunpack.c.h.b16 %v2462
    %v3822 = vunpack.c.l.b16 %v2463
    %v3823 = vunpack.c.h.b16 %v2463
    %v3824 = vunpack.c.l.b16 %v2464
    %v3825 = vunpack.c.h.b16 %v2464
    %v3826 = vunpack.c.l.b16 %v2465
    %v3827 = vunpack.c.h.b16 %v2465
    %v3828 = vunpack.c.l.b16 %v2466
    %v3829 = vunpack.c.h.b16 %v2466
    %v3830 = vunpack.c.l.b16 %v2467
    %v3831 = vunpack.c.h.b16 %v2467
    %v3832 = vunpack.c.l.b16 %v2468
    %v3833 = vunpack.c.h.b16 %v2468
    %v3834 = vunpack.c.l.b16 %v2469
    %v3835 = vunpack.c.h.b16 %v2469
    %v3836 = vunpack.c.l.b16 %v2470
    %v3837 = vunpack.c.h.b16 %v2470
    %v3838 = vunpack.c.l.b16 %v2471
    %v3839 = vunpack.c.h.b16 %v2471
    %v3840 = vunpack.c.l.b16 %v2472
    %v3841 = vunpack.c.h.b16 %v2472
    %v3842 = vunpack.c.l.b16 %v2473
    %v3843 = vunpack.c.h.b16 %v2473
    %v3844 = vunpack.c.l.b16 %v2474
    %v3845 = vunpack.c.h.b16 %v2474
    %v3846 = vunpack.c.l.b16 %v2475
    %v3847 = vunpack.c.h.b16 %v2475
    %v3848 = vunpack.c.l.b16 %v2476
    %v3849 = vunpack.c.h.b16 %v2476
    %v3850 = vunpack.c.l.b16 %v2477
    %v3851 = vunpack.c.h.b16 %v2477
    %v3852 = vunpack.c.l.b16 %v2478
    %v3853 = vunpack.c.h.b16 %v2478
    %v3854 = vunpack.c.l.b16 %v2479
    %v3855 = vunpack.c.h.b16 %v2479
    %v3856 = vunpack.c.l.b16 %v2480
    %v3857 = vunpack.c.h.b16 %v2480
    %v3858 = vunpack.c.l.b16 %v2481
    %v3859 = vunpack.c.h.b16 %v2481
    %v3860 = vunpack.c.l.b16 %v2482
    %v3861 = vunpack.c.h.b16 %v2482
    %v3862 = vunpack.c.l.b16 %v2483
    %v3863 = vunpack.c.h.b16 %v2483
    %v3864 = vunpack.c.l.b16 %v2484
    %v3865 = vunpack.c.h.b16 %v2484
    %v3866 = vunpack.c.l.b16 %v2485
    %v3867 = vunpack.c.h.b16 %v2485
    %v3868 = vunpack.c.l.b16 %v2486
    %v3869 = vunpack.c.h.b16 %v2486
    %v3870 = vunpack.c.l.b16 %v2487
    %v3871 = vunpack.c.h.b16 %v2487
    %v3872 = vunpack.c.l.b16 %v2488
    %v3873 = vunpack.c.h.b16 %v2488
    %v3874 = vunpack.c.l.b16 %v2489
    %v3875 = vunpack.c.h.b16 %v2489
    %v3876 = vunpack.c.l.b16 %v2490
    %v3877 = vunpack.c.h.b16 %v2490
    %v3878 = vunpack.c.l.b16 %v2491
    %v3879 = vunpack.c.h.b16 %v2491
    %v3880 = vunpack.c.l.b16 %v2492
    %v3881 = vunpack.c.h.b16 %v2492
    %v3882 = vunpack.c.l.b16 %v2493
    %v3883 = vunpack.c.h.b16 %v2493
    %v3884 = vunpack.c.l.b16 %v2494
    %v3885 = vunpack.c.h.b16 %v2494
    %v3886 = vunpack.c.l.b16 %v2495
    %v3887 = vunpack.c.h.b16 %v2495
    %v3888 = vunpack.c.l.b16 %v2496
    %v3889 = vunpack.c.h.b16 %v2496
    %v3890 = vunpack.c.l.b16 %v2497
    %v3891 = vunpack.c.h.b16 %v2497
    %v3892 = vunpack.c.l.b16 %v2498
    %v3893 = vunpack.c.h.b16 %v2498
    %v3894 = vunpack.c.l.b16 %v2499
    %v3895 = vunpack.c.h.b16 %v2499
    %v3896 = vunpack.c.l.b16 %v2500
    %v3897 = vunpack.c.h.b16 %v2500
    %v3898 = vunpack.c.l.b16 %v2501
    %v3899 = vunpack.c.h.b16 %v2501
    %v3900 = vunpack.c.l.b16 %v2502
    %v3901 = vunpack.c.h.b16 %v2502
    %v3902 = vunpack.c.l.b16 %v2503
    %v3903 = vunpack.c.h.b16 %v2503
    %v3904 = vunpack.c.l.b16 %v2504
    %v3905 = vunpack.c.h.b16 %v2504
    %v3906 = vunpack.c.l.b16 %v2505
    %v3907 = vunpack.c.h.b16 %v2505
    %v3908 = vunpack.c.l.b16 %v2506
    %v3909 = vunpack.c.h.b16 %v2506
    %v3910 = vunpack.c.l.b16 %v2507
    %v3911 = vunpack.c.h.b16 %v2507
    %v3912 = vunpack.c.l.b16 %v2508
    %v3913 = vunpack.c.h.b16 %v2508
    %v3914 = vunpack.c.l.b16 %v2509
    %v3915 = vunpack.c.h.b16 %v2509
    %v3916 = vunpack.c.l.b16 %v2510
    %v3917 = vunpack.c.h.b16 %v2510
    %v3918 = vunpack.c.l.b16 %v2511
    %v3919 = vunpack.c.h.b16 %v2511
    %v3920 = vunpack.c.l.b16 %v2512
    %v3921 = vunpack.c.h.b16 %v2512
    %v3922 = vunpack.c.l.b16 %v2513
    %v3923 = vunpack.c.h.b16 %v2513
    %v3924 = vunpack.c.l.b16 %v2514
    %v3925 = vunpack.c.h.b16 %v2514
    %v3926 = vunpack.c.l.b16 %v2515
    %v3927 = vunpack.c.h.b16 %v2515
    %v3928 = vunpack.c.l.b16 %v2516
    %v3929 = vunpack.c.h.b16 %v2516
    %v3930 = vunpack.c.l.b16 %v2517
    %v3931 = vunpack.c.h.b16 %v2517
    %v3932 = vunpack.c.l.b16 %v2518
    %v3933 = vunpack.c.h.b16 %v2518
    %v3934 = vunpack.c.l.b16 %v2519
    %v3935 = vunpack.c.h.b16 %v2519
    %v3936 = vunpack.c.l.b16 %v2520
    %v3937 = vunpack.c.h.b16 %v2520
    %v3938 = vunpack.c.l.b16 %v2521
    %v3939 = vunpack.c.h.b16 %v2521
    %v3940 = vunpack.c.l.b16 %v2522
    %v3941 = vunpack.c.h.b16 %v2522
    %v3942 = vunpack.c.l.b16 %v2523
    %v3943 = vunpack.c.h.b16 %v2523
    %v3944 = vunpack.c.l.b16 %v2524
    %v3945 = vunpack.c.h.b16 %v2524
    %v3946 = vunpack.c.l.b16 %v2525
    %v3947 = vunpack.c.h.b16 %v2525
    %v3948 = vunpack.c.l.b16 %v2526
    %v3949 = vunpack.c.h.b16 %v2526
    %v3950 = vunpack.c.l.b16 %v2527
    %v3951 = vunpack.c.h.b16 %v2527
    %v3952 = vunpack.c.l.b16 %v2528
    %v3953 = vunpack.c.h.b16 %v2528
    %v3954 = vunpack.c.l.b16 %v2529
    %v3955 = vunpack.c.h.b16 %v2529
    %v3956 = vunpack.c.l.b16 %v2530
    %v3957 = vunpack.c.h.b16 %v2530
    %v3958 = vunpack.c.l.b16 %v2531
    %v3959 = vunpack.c.h.b16 %v2531
    %v3960 = vunpack.c.l.b16 %v2532
    %v3961 = vunpack.c.h.b16 %v2532
    %v3962 = vunpack.c.l.b16 %v2533
    %v3963 = vunpack.c.h.b16 %v2533
    %v3964 = vunpack.c.l.b16 %v2534
    %v3965 = vunpack.c.h.b16 %v2534
    %v3966 = vunpack.c.l.b16 %v2535
    %v3967 = vunpack.c.h.b16 %v2535
    %v3968 = vunpack.c.l.b16 %v2536
    %v3969 = vunpack.c.h.b16 %v2536
    %v3970 = vunpack.c.l.b16 %v2537
    %v3971 = vunpack.c.h.b16 %v2537
    %v3972 = vunpack.c.l.b16 %v2538
    %v3973 = vunpack.c.h.b16 %v2538
    %v3974 = vunpack.c.l.b16 %v2539
    %v3975 = vunpack.c.h.b16 %v2539
    %v3976 = vunpack.c.l.b16 %v2540
    %v3977 = vunpack.c.h.b16 %v2540
    %v3978 = vunpack.c.l.b16 %v2541
    %v3979 = vunpack.c.h.b16 %v2541
    %v3980 = vunpack.c.l.b16 %v2542
    %v3981 = vunpack.c.h.b16 %v2542
    %v3982 = vunpack.c.l.b16 %v2543
    %v3983 = vunpack.c.h.b16 %v2543
    %v3984 = vunpack.c.l.b16 %v2544
    %v3985 = vunpack.c.h.b16 %v2544
    %v3986 = vunpack.c.l.b16 %v2545
    %v3987 = vunpack.c.h.b16 %v2545
    %v3988 = vunpack.c.l.b16 %v2546
    %v3989 = vunpack.c.h.b16 %v2546
    %v3990 = vunpack.c.l.b16 %v2547
    %v3991 = vunpack.c.h.b16 %v2547
    %v3992 = vunpack.c.l.b16 %v2548
    %v3993 = vunpack.c.h.b16 %v2548
    %v3994 = vunpack.c.l.b16 %v2549
    %v3995 = vunpack.c.h.b16 %v2549
    %v3996 = vunpack.c.l.b16 %v2550
    %v3997 = vunpack.c.h.b16 %v2550
    %v3998 = vunpack.c.l.b16 %v2551
    %v3999 = vunpack.c.h.b16 %v2551
    %v4000 = vunpack.c.l.b16 %v2552
    %v4001 = vunpack.c.h.b16 %v2552
    %v4002 = vunpack.c.l.b16 %v2553
    %v4003 = vunpack.c.h.b16 %v2553
    %v4004 = vunpack.c.l.b16 %v2554
    %v4005 = vunpack.c.h.b16 %v2554
    %v4006 = vunpack.c.l.b16 %v2555
    %v4007 = vunpack.c.h.b16 %v2555
    %v4008 = vunpack.c.l.b16 %v2556
    %v4009 = vunpack.c.h.b16 %v2556
    %v4010 = vunpack.c.l.b16 %v2557
    %v4011 = vunpack.c.h.b16 %v2557
    %v4012 = vunpack.c.l.b16 %v2558
    %v4013 = vunpack.c.h.b16 %v2558
    %v4014 = vunpack.c.l.b16 %v2559
    %v4015 = vunpack.c.h.b16 %v2559
    %v4016 = vunpack.c.l.b16 %v2560
    %v4017 = vunpack.c.h.b16 %v2560
    %v4018 = vunpack.c.l.b16 %v2561
    %v4019 = vunpack.c.h.b16 %v2561
    %v4020 = vunpack.c.l.b16 %v2562
    %v4021 = vunpack.c.h.b16 %v2562
    %v4022 = vunpack.c.l.b16 %v2563
    %v4023 = vunpack.c.h.b16 %v2563
    %v4024 = vunpack.c.l.b16 %v2564
    %v4025 = vunpack.c.h.b16 %v2564
    %v4026 = vunpack.c.l.b16 %v2565
    %v4027 = vunpack.c.h.b16 %v2565
    %v4028 = vunpack.c.l.b16 %v2566
    %v4029 = vunpack.c.h.b16 %v2566
    %v4030 = vunpack.c.l.b16 %v2567
    %v4031 = vunpack.c.h.b16 %v2567
    %v4032 = vunpack.c.l.b16 %v2568
    %v4033 = vunpack.c.h.b16 %v2568
    %v4034 = vunpack.c.l.b16 %v2569
    %v4035 = vunpack.c.h.b16 %v2569
    %v4036 = vunpack.c.l.b16 %v2570
    %v4037 = vunpack.c.h.b16 %v2570
    %v4038 = vunpack.c.l.b16 %v2571
    %v4039 = vunpack.c.h.b16 %v2571
    %v4040 = vunpack.c.l.b16 %v2572
    %v4041 = vunpack.c.h.b16 %v2572
    %v4042 = vunpack.c.l.b16 %v2573
    %v4043 = vunpack.c.h.b16 %v2573
    %v4044 = vunpack.c.l.b16 %v2574
    %v4045 = vunpack.c.h.b16 %v2574
    %v4046 = vunpack.c.l.b16 %v2575
    %v4047 = vunpack.c.h.b16 %v2575
    %v4048 = vunpack.c.l.b16 %v2576
    %v4049 = vunpack.c.h.b16 %v2576
    %v4050 = vunpack.c.l.b16 %v2577
    %v4051 = vunpack.c.h.b16 %v2577
    %v4052 = vunpack.c.l.b16 %v2578
    %v4053 = vunpack.c.h.b16 %v2578
    %v4054 = vunpack.c.l.b16 %v2579
    %v4055 = vunpack.c.h.b16 %v2579
    %v4056 = vunpack.c.l.b16 %v2580
    %v4057 = vunpack.c.h.b16 %v2580
    %v4058 = vunpack.c.l.b16 %v2581
    %v4059 = vunpack.c.h.b16 %v2581
    %v4060 = vunpack.c.l.b16 %v2582
    %v4061 = vunpack.c.h.b16 %v2582
    %v4062 = vunpack.c.l.b16 %v2583
    %v4063 = vunpack.c.h.b16 %v2583
    %v4064 = vunpack.c.l.b16 %v2584
    %v4065 = vunpack.c.h.b16 %v2584
    %v4066 = vunpack.c.l.b16 %v2585
    %v4067 = vunpack.c.h.b16 %v2585
    %v4068 = vunpack.c.l.b16 %v2586
    %v4069 = vunpack.c.h.b16 %v2586
    %v4070 = vunpack.c.l.b16 %v2587
    %v4071 = vunpack.c.h.b16 %v2587
    %v4072 = vunpack.c.l.b16 %v2588
    %v4073 = vunpack.c.h.b16 %v2588
    %v4074 = vunpack.c.l.b16 %v2589
    %v4075 = vunpack.c.h.b16 %v2589
    %v4076 = vunpack.c.l.b16 %v2590
    %v4077 = vunpack.c.h.b16 %v2590
    %v4078 = vunpack.c.l.b16 %v2591
    %v4079 = vunpack.c.h.b16 %v2591
    %v4080 = vunpack.c.l.b16 %v2592
    %v4081 = vunpack.c.h.b16 %v2592
    %v4082 = vunpack.c.l.b16 %v2593
    %v4083 = vunpack.c.h.b16 %v2593
    %v4084 = vunpack.c.l.b16 %v2594
    %v4085 = vunpack.c.h.b16 %v2594
    %v4086 = vunpack.c.l.b16 %v2595
    %v4087 = vunpack.c.h.b16 %v2595
    %v4088 = vunpack.c.l.b16 %v2596
    %v4089 = vunpack.c.h.b16 %v2596
    %v4090 = vunpack.c.l.b16 %v2597
    %v4091 = vunpack.c.h.b16 %v2597
    %v4092 = vunpack.c.l.b16 %v2598
    %v4093 = vunpack.c.h.b16 %v2598
    %v4094 = vunpack.c.l.b16 %v2599
    %v4095 = vunpack.c.h.b16 %v2599
    %v4096 = vunpack.c.l.b16 %v2600
    %v4097 = vunpack.c.h.b16 %v2600
    %v4098 = vunpack.c.l.b16 %v2601
    %v4099 = vunpack.c.h.b16 %v2601
    %v4100 = vunpack.c.l.b16 %v2602
    %v4101 = vunpack.c.h.b16 %v2602
    %v4102 = vunpack.c.l.b16 %v2603
    %v4103 = vunpack.c.h.b16 %v2603
    %v4104 = vunpack.c.l.b16 %v2604
    %v4105 = vunpack.c.h.b16 %v2604
    %v4106 = vunpack.c.l.b16 %v2605
    %v4107 = vunpack.c.h.b16 %v2605
    %v4108 = vunpack.c.l.b16 %v2606
    %v4109 = vunpack.c.h.b16 %v2606
    %v4110 = vunpack.c.l.b16 %v2607
    %v4111 = vunpack.c.h.b16 %v2607
    %v4112 = vunpack.c.l.b16 %v2608
    %v4113 = vunpack.c.h.b16 %v2608
    %v4114 = vunpack.c.l.b16 %v2609
    %v4115 = vunpack.c.h.b16 %v2609
    %v4116 = vunpack.c.l.b16 %v2610
    %v4117 = vunpack.c.h.b16 %v2610
    %v4118 = vunpack.c.l.b16 %v2611
    %v4119 = vunpack.c.h.b16 %v2611
    %v4120 = vunpack.c.l.b16 %v2612
    %v4121 = vunpack.c.h.b16 %v2612
    %v4122 = vunpack.c.l.b16 %v2613
    %v4123 = vunpack.c.h.b16 %v2613
    %v4124 = vunpack.c.l.b16 %v2614
    %v4125 = vunpack.c.h.b16 %v2614
    %v4126 = vunpack.c.l.b16 %v2615
    %v4127 = vunpack.c.h.b16 %v2615
    %v4128 = vunpack.c.l.b16 %v2616
    %v4129 = vunpack.c.h.b16 %v2616
    %v4130 = vunpack.c.l.b16 %v2617
    %v4131 = vunpack.c.h.b16 %v2617
    %v4132 = vunpack.c.l.b16 %v2618
    %v4133 = vunpack.c.h.b16 %v2618
    %v4134 = vunpack.c.l.b16 %v2619
    %v4135 = vunpack.c.h.b16 %v2619
    %v4136 = vunpack.c.l.b16 %v2620
    %v4137 = vunpack.c.h.b16 %v2620
    %v4138 = vunpack.c.l.b16 %v2621
    %v4139 = vunpack.c.h.b16 %v2621
    %v4140 = vunpack.c.l.b16 %v2622
    %v4141 = vunpack.c.h.b16 %v2622
    %v4142 = vunpack.c.l.b16 %v2623
    %v4143 = vunpack.c.h.b16 %v2623
    %v4144 = vunpack.c.l.b16 %v2624
    %v4145 = vunpack.c.h.b16 %v2624
    %v4146 = vunpack.c.l.b16 %v2625
    %v4147 = vunpack.c.h.b16 %v2625
    %v4148 = vunpack.c.l.b16 %v2626
    %v4149 = vunpack.c.h.b16 %v2626
    %v4150 = vunpack.c.l.b16 %v2627
    %v4151 = vunpack.c.h.b16 %v2627
    %v4152 = vunpack.c.l.b16 %v2628
    %v4153 = vunpack.c.h.b16 %v2628
    %v4154 = vunpack.c.l.b16 %v2629
    %v4155 = vunpack.c.h.b16 %v2629
    %v4156 = vunpack.c.l.b16 %v2630
    %v4157 = vunpack.c.h.b16 %v2630
    %v4158 = vunpack.c.l.b16 %v2631
    %v4159 = vunpack.c.h.b16 %v2631
    %v4160 = vunpack.c.l.b16 %v2632
    %v4161 = vunpack.c.h.b16 %v2632
    %v4162 = vunpack.c.l.b16 %v2633
    %v4163 = vunpack.c.h.b16 %v2633
    %v4164 = vunpack.c.l.b16 %v2634
    %v4165 = vunpack.c.h.b16 %v2634
    %v4166 = vunpack.c.l.b16 %v2635
    %v4167 = vunpack.c.h.b16 %v2635
    %v4168 = vunpack.c.l.b16 %v2636
    %v4169 = vunpack.c.h.b16 %v2636
    %v4170 = vunpack.c.l.b16 %v2637
    %v4171 = vunpack.c.h.b16 %v2637
    %v4172 = vunpack.c.l.b16 %v2638
    %v4173 = vunpack.c.h.b16 %v2638
    %v4174 = vunpack.c.l.b16 %v2639
    %v4175 = vunpack.c.h.b16 %v2639
    %v4176 = vunpack.c.l.b16 %v2640
    %v4177 = vunpack.c.h.b16 %v2640
    %v4178 = vunpack.c.l.b16 %v2641
    %v4179 = vunpack.c.h.b16 %v2641
    %v4180 = vunpack.c.l.b16 %v2642
    %v4181 = vunpack.c.h.b16 %v2642
    %v4182 = vunpack.c.l.b16 %v2643
    %v4183 = vunpack.c.h.b16 %v2643
    %v4184 = vunpack.c.l.b16 %v2644
    %v4185 = vunpack.c.h.b16 %v2644
    %v4186 = vunpack.c.l.b16 %v2645
    %v4187 = vunpack.c.h.b16 %v2645
    %v4188 = vunpack.c.l.b16 %v2646
    %v4189 = vunpack.c.h.b16 %v2646
    %v4190 = vunpack.c.l.b16 %v2647
    %v4191 = vunpack.c.h.b16 %v2647
    %v4192 = vunpack.c.l.b16 %v2648
    %v4193 = vunpack.c.h.b16 %v2648
    %v4194 = vunpack.c.l.b16 %v2649
    %v4195 = vunpack.c.h.b16 %v2649
    %v4196 = vunpack.c.l.b16 %v2650
    %v4197 = vunpack.c.h.b16 %v2650
    %v4198 = vunpack.c.l.b16 %v2651
    %v4199 = vunpack.c.h.b16 %v2651
    %v4200 = vunpack.c.l.b16 %v2652
    %v4201 = vunpack.c.h.b16 %v2652
    %v4202 = vunpack.c.l.b16 %v2653
    %v4203 = vunpack.c.h.b16 %v2653
    %v4204 = vunpack.c.l.b16 %v2654
    %v4205 = vunpack.c.h.b16 %v2654
    %v4206 = vunpack.c.l.b16 %v2655
    %v4207 = vunpack.c.h.b16 %v2655
    %v4208 = vunpack.c.l.b16 %v2656
    %v4209 = vunpack.c.h.b16 %v2656
    %v4210 = vunpack.c.l.b16 %v2657
    %v4211 = vunpack.c.h.b16 %v2657
    %v4212 = vunpack.c.l.b16 %v2658
    %v4213 = vunpack.c.h.b16 %v2658
    %v4214 = vunpack.c.l.b16 %v2659
    %v4215 = vunpack.c.h.b16 %v2659
    %v4216 = vunpack.c.l.b16 %v2660
    %v4217 = vunpack.c.h.b16 %v2660
    %v4218 = vunpack.c.l.b16 %v2661
    %v4219 = vunpack.c.h.b16 %v2661
    %v4220 = vpack.c.b16 %v3200, %v3196
    %v4221 = vpack.c.b16 %v3201, %v3197
    %v4222 = vpack.c.b16 %v3202, %v3198
    %v4223 = vpack.c.b16 %v3203, %v3199
    %v4224 = vpack.c.b16 %v3208, %v3204
    %v4225 = vpack.c.b16 %v3209, %v3205
    %v4226 = vpack.c.b16 %v3210, %v3206
    %v4227 = vpack.c.b16 %v3211, %v3207
    %v4228 = vpack.c.b16 %v3216, %v3212
    %v4229 = vpack.c.b16 %v3217, %v3213
    %v4230 = vpack.c.b16 %v3218, %v3214
    %v4231 = vpack.c.b16 %v3219, %v3215
    %v4232 = vpack.c.b16 %v3224, %v3220
    %v4233 = vpack.c.b16 %v3225, %v3221
    %v4234 = vpack.c.b16 %v3226, %v3222
    %v4235 = vpack.c.b16 %v3227, %v3223
    %v4236 = vpack.c.b16 %v3232, %v3228
    %v4237 = vpack.c.b16 %v3233, %v3229
    %v4238 = vpack.c.b16 %v3234, %v3230
    %v4239 = vpack.c.b16 %v3235, %v3231
    %v4240 = vpack.c.b16 %v3240, %v3236
    %v4241 = vpack.c.b16 %v3241, %v3237
    %v4242 = vpack.c.b16 %v3242, %v3238
    %v4243 = vpack.c.b16 %v3243, %v3239
    %v4244 = vpack.c.b16 %v3248, %v3244
    %v4245 = vpack.c.b16 %v3249, %v3245
    %v4246 = vpack.c.b16 %v3250, %v3246
    %v4247 = vpack.c.b16 %v3251, %v3247
    %v4248 = vpack.c.b16 %v3256, %v3252
    %v4249 = vpack.c.b16 %v3257, %v3253
    %v4250 = vpack.c.b16 %v3258, %v3254
    %v4251 = vpack.c.b16 %v3259, %v3255
    %v4252 = vpack.c.b16 %v3264, %v3260
    %v4253 = vpack.c.b16 %v3265, %v3261
    %v4254 = vpack.c.b16 %v3266, %v3262
    %v4255 = vpack.c.b16 %v3267, %v3263
    %v4256 = vpack.c.b16 %v3272, %v3268
    %v4257 = vpack.c.b16 %v3273, %v3269
    %v4258 = vpack.c.b16 %v3274, %v3270
    %v4259 = vpack.c.b16 %v3275, %v3271
    %v4260 = vpack.c.b16 %v3280, %v3276
    %v4261 = vpack.c.b16 %v3281, %v3277
    %v4262 = vpack.c.b16 %v3282, %v3278
    %v4263 = vpack.c.b16 %v3283, %v3279
    %v4264 = vpack.c.b16 %v3288, %v3284
    %v4265 = vpack.c.b16 %v3289, %v3285
    %v4266 = vpack.c.b16 %v3290, %v3286
    %v4267 = vpack.c.b16 %v3291, %v3287
    %v4268 = vpack.c.b16 %v3296, %v3292
    %v4269 = vpack.c.b16 %v3297, %v3293
    %v4270 = vpack.c.b16 %v3298, %v3294
    %v4271 = vpack.c.b16 %v3299, %v3295
    %v4272 = vpack.c.b16 %v3304, %v3300
    %v4273 = vpack.c.b16 %v3305, %v3301
    %v4274 = vpack.c.b16 %v3306, %v3302
    %v4275 = vpack.c.b16 %v3307, %v3303
    %v4276 = vpack.c.b16 %v3312, %v3308
    %v4277 = vpack.c.b16 %v3313, %v3309
    %v4278 = vpack.c.b16 %v3314, %v3310
    %v4279 = vpack.c.b16 %v3315, %v3311
    %v4280 = vpack.c.b16 %v3320, %v3316
    %v4281 = vpack.c.b16 %v3321, %v3317
    %v4282 = vpack.c.b16 %v3322, %v3318
    %v4283 = vpack.c.b16 %v3323, %v3319
    %v4284 = vpack.c.b16 %v3328, %v3324
    %v4285 = vpack.c.b16 %v3329, %v3325
    %v4286 = vpack.c.b16 %v3330, %v3326
    %v4287 = vpack.c.b16 %v3331, %v3327
    %v4288 = vpack.c.b16 %v3336, %v3332
    %v4289 = vpack.c.b16 %v3337, %v3333
    %v4290 = vpack.c.b16 %v3338, %v3334
    %v4291 = vpack.c.b16 %v3339, %v3335
    %v4292 = vpack.c.b16 %v3344, %v3340
    %v4293 = vpack.c.b16 %v3345, %v3341
    %v4294 = vpack.c.b16 %v3346, %v3342
    %v4295 = vpack.c.b16 %v3347, %v3343
    %v4296 = vpack.c.b16 %v3352, %v3348
    %v4297 = vpack.c.b16 %v3353, %v3349
    %v4298 = vpack.c.b16 %v3354, %v3350
    %v4299 = vpack.c.b16 %v3355, %v3351
    %v4300 = vpack.c.b16 %v3360, %v3356
    %v4301 = vpack.c.b16 %v3361, %v3357
    %v4302 = vpack.c.b16 %v3362, %v3358
    %v4303 = vpack.c.b16 %v3363, %v3359
    %v4304 = vpack.c.b16 %v3368, %v3364
    %v4305 = vpack.c.b16 %v3369, %v3365
    %v4306 = vpack.c.b16 %v3370, %v3366
    %v4307 = vpack.c.b16 %v3371, %v3367
    %v4308 = vpack.c.b16 %v3376, %v3372
    %v4309 = vpack.c.b16 %v3377, %v3373
    %v4310 = vpack.c.b16 %v3378, %v3374
    %v4311 = vpack.c.b16 %v3379, %v3375
    %v4312 = vpack.c.b16 %v3384, %v3380
    %v4313 = vpack.c.b16 %v3385, %v3381
    %v4314 = vpack.c.b16 %v3386, %v3382
    %v4315 = vpack.c.b16 %v3387, %v3383
    %v4316 = vpack.c.b16 %v3392, %v3388
    %v4317 = vpack.c.b16 %v3393, %v3389
    %v4318 = vpack.c.b16 %v3394, %v3390
    %v4319 = vpack.c.b16 %v3395, %v3391
    %v4320 = vpack.c.b16 %v3400, %v3396
    %v4321 = vpack.c.b16 %v3401, %v3397
    %v4322 = vpack.c.b16 %v3402, %v3398
    %v4323 = vpack.c.b16 %v3403, %v3399
    %v4324 = vpack.c.b16 %v3408, %v3404
    %v4325 = vpack.c.b16 %v3409, %v3405
    %v4326 = vpack.c.b16 %v3410, %v3406
    %v4327 = vpack.c.b16 %v3411, %v3407
    %v4328 = vpack.c.b16 %v3416, %v3412
    %v4329 = vpack.c.b16 %v3417, %v3413
    %v4330 = vpack.c.b16 %v3418, %v3414
    %v4331 = vpack.c.b16 %v3419, %v3415
    %v4332 = vpack.c.b16 %v3424, %v3420
    %v4333 = vpack.c.b16 %v3425, %v3421
    %v4334 = vpack.c.b16 %v3426, %v3422
    %v4335 = vpack.c.b16 %v3427, %v3423
    %v4336 = vpack.c.b16 %v3432, %v3428
    %v4337 = vpack.c.b16 %v3433, %v3429
    %v4338 = vpack.c.b16 %v3434, %v3430
    %v4339 = vpack.c.b16 %v3435, %v3431
    %v4340 = vpack.c.b16 %v3440, %v3436
    %v4341 = vpack.c.b16 %v3441, %v3437
    %v4342 = vpack.c.b16 %v3442, %v3438
    %v4343 = vpack.c.b16 %v3443, %v3439
    %v4344 = vpack.c.b16 %v3448, %v3444
    %v4345 = vpack.c.b16 %v3449, %v3445
    %v4346 = vpack.c.b16 %v3450, %v3446
    %v4347 = vpack.c.b16 %v3451, %v3447
    %v4348 = vpack.c.b16 %v3456, %v3452
    %v4349 = vpack.c.b16 %v3457, %v3453
    %v4350 = vpack.c.b16 %v3458, %v3454
    %v4351 = vpack.c.b16 %v3459, %v3455
    %v4352 = vpack.c.b16 %v3464, %v3460
    %v4353 = vpack.c.b16 %v3465, %v3461
    %v4354 = vpack.c.b16 %v3466, %v3462
    %v4355 = vpack.c.b16 %v3467, %v3463
    %v4356 = vpack.c.b16 %v3472, %v3468
    %v4357 = vpack.c.b16 %v3473, %v3469
    %v4358 = vpack.c.b16 %v3474, %v3470
    %v4359 = vpack.c.b16 %v3475, %v3471
    %v4360 = vpack.c.b16 %v3480, %v3476
    %v4361 = vpack.c.b16 %v3481, %v3477
    %v4362 = vpack.c.b16 %v3482, %v3478
    %v4363 = vpack.c.b16 %v3483, %v3479
    %v4364 = vpack.c.b16 %v3488, %v3484
    %v4365 = vpack.c.b16 %v3489, %v3485
    %v4366 = vpack.c.b16 %v3490, %v3486
    %v4367 = vpack.c.b16 %v3491, %v3487
    %v4368 = vpack.c.b16 %v3496, %v3492
    %v4369 = vpack.c.b16 %v3497, %v3493
    %v4370 = vpack.c.b16 %v3498, %v3494
    %v4371 = vpack.c.b16 %v3499, %v3495
    %v4372 = vpack.c.b16 %v3504, %v3500
    %v4373 = vpack.c.b16 %v3505, %v3501
    %v4374 = vpack.c.b16 %v3506, %v3502
    %v4375 = vpack.c.b16 %v3507, %v3503
    %v4376 = vpack.c.b16 %v3512, %v3508
    %v4377 = vpack.c.b16 %v3513, %v3509
    %v4378 = vpack.c.b16 %v3514, %v3510
    %v4379 = vpack.c.b16 %v3515, %v3511
    %v4380 = vpack.c.b16 %v3520, %v3516
    %v4381 = vpack.c.b16 %v3521, %v3517
    %v4382 = vpack.c.b16 %v3522, %v3518
    %v4383 = vpack.c.b16 %v3523, %v3519
    %v4384 = vpack.c.b16 %v3528, %v3524
    %v4385 = vpack.c.b16 %v3529, %v3525
    %v4386 = vpack.c.b16 %v3530, %v3526
    %v4387 = vpack.c.b16 %v3531, %v3527
    %v4388 = vpack.c.b16 %v3536, %v3532
    %v4389 = vpack.c.b16 %v3537, %v3533
    %v4390 = vpack.c.b16 %v3538, %v3534
    %v4391 = vpack.c.b16 %v3539, %v3535
    %v4392 = vpack.c.b16 %v3544, %v3540
    %v4393 = vpack.c.b16 %v3545, %v3541
    %v4394 = vpack.c.b16 %v3546, %v3542
    %v4395 = vpack.c.b16 %v3547, %v3543
    %v4396 = vpack.c.b16 %v3552, %v3548
    %v4397 = vpack.c.b16 %v3553, %v3549
    %v4398 = vpack.c.b16 %v3554, %v3550
    %v4399 = vpack.c.b16 %v3555, %v3551
    %v4400 = vpack.c.b16 %v3560, %v3556
    %v4401 = vpack.c.b16 %v3561, %v3557
    %v4402 = vpack.c.b16 %v3562, %v3558
    %v4403 = vpack.c.b16 %v3563, %v3559
    %v4404 = vpack.c.b16 %v3568, %v3564
    %v4405 = vpack.c.b16 %v3569, %v3565
    %v4406 = vpack.c.b16 %v3570, %v3566
    %v4407 = vpack.c.b16 %v3571, %v3567
    %v4408 = vpack.c.b16 %v3576, %v3572
    %v4409 = vpack.c.b16 %v3577, %v3573
    %v4410 = vpack.c.b16 %v3578, %v3574
    %v4411 = vpack.c.b16 %v3579, %v3575
    %v4412 = vpack.c.b16 %v3584, %v3580
    %v4413 = vpack.c.b16 %v3585, %v3581
    %v4414 = vpack.c.b16 %v3586, %v3582
    %v4415 = vpack.c.b16 %v3587, %v3583
    %v4416 = vpack.c.b16 %v3592, %v3588
    %v4417 = vpack.c.b16 %v3593, %v3589
    %v4418 = vpack.c.b16 %v3594, %v3590
    %v4419 = vpack.c.b16 %v3595, %v3591
    %v4420 = vpack.c.b16 %v3600, %v3596
    %v4421 = vpack.c.b16 %v3601, %v3597
    %v4422 = vpack.c.b16 %v3602, %v3598
    %v4423 = vpack.c.b16 %v3603, %v3599
    %v4424 = vpack.c.b16 %v3608, %v3604
    %v4425 = vpack.c.b16 %v3609, %v3605
    %v4426 = vpack.c.b16 %v3610, %v3606
    %v4427 = vpack.c.b16 %v3611, %v3607
    %v4428 = vpack.c.b16 %v3616, %v3612
    %v4429 = vpack.c.b16 %v3617, %v3613
    %v4430 = vpack.c.b16 %v3618, %v3614
    %v4431 = vpack.c.b16 %v3619, %v3615
    %v4432 = vpack.c.b16 %v3624, %v3620
    %v4433 = vpack.c.b16 %v3625, %v3621
    %v4434 = vpack.c.b16 %v3626, %v3622
    %v4435 = vpack.c.b16 %v3627, %v3623
    %v4436 = vpack.c.b16 %v3632, %v3628
    %v4437 = vpack.c.b16 %v3633, %v3629
    %v4438 = vpack.c.b16 %v3634, %v3630
    %v4439 = vpack.c.b16 %v3635, %v3631
    %v4440 = vpack.c.b16 %v3640, %v3636
    %v4441 = vpack.c.b16 %v3641, %v3637
    %v4442 = vpack.c.b16 %v3642, %v3638
    %v4443 = vpack.c.b16 %v3643, %v3639
    %v4444 = vpack.c.b16 %v3648, %v3644
    %v4445 = vpack.c.b16 %v3649, %v3645
    %v4446 = vpack.c.b16 %v3650, %v3646
    %v4447 = vpack.c.b16 %v3651, %v3647
    %v4448 = vpack.c.b16 %v3656, %v3652
    %v4449 = vpack.c.b16 %v3657, %v3653
    %v4450 = vpack.c.b16 %v3658, %v3654
    %v4451 = vpack.c.b16 %v3659, %v3655
    %v4452 = vpack.c.b16 %v3664, %v3660
    %v4453 = vpack.c.b16 %v3665, %v3661
    %v4454 = vpack.c.b16 %v3666, %v3662
    %v4455 = vpack.c.b16 %v3667, %v3663
    %v4456 = vpack.c.b16 %v3672, %v3668
    %v4457 = vpack.c.b16 %v3673, %v3669
    %v4458 = vpack.c.b16 %v3674, %v3670
    %v4459 = vpack.c.b16 %v3675, %v3671
    %v4460 = vpack.c.b16 %v3680, %v3676
    %v4461 = vpack.c.b16 %v3681, %v3677
    %v4462 = vpack.c.b16 %v3682, %v3678
    %v4463 = vpack.c.b16 %v3683, %v3679
    %v4464 = vpack.c.b16 %v3688, %v3684
    %v4465 = vpack.c.b16 %v3689, %v3685
    %v4466 = vpack.c.b16 %v3690, %v3686
    %v4467 = vpack.c.b16 %v3691, %v3687
    %v4468 = vpack.c.b16 %v3696, %v3692
    %v4469 = vpack.c.b16 %v3697, %v3693
    %v4470 = vpack.c.b16 %v3698, %v3694
    %v4471 = vpack.c.b16 %v3699, %v3695
    %v4472 = vpack.c.b16 %v3704, %v3700
    %v4473 = vpack.c.b16 %v3705, %v3701
    %v4474 = vpack.c.b16 %v3706, %v3702
    %v4475 = vpack.c.b16 %v3707, %v3703
    %v4476 = vpack.c.b16 %v3712, %v3708
    %v4477 = vpack.c.b16 %v3713, %v3709
    %v4478 = vpack.c.b16 %v3714, %v3710
    %v4479 = vpack.c.b16 %v3715, %v3711
    %v4480 = vpack.c.b16 %v3720, %v3716
    %v4481 = vpack.c.b16 %v3721, %v3717
    %v4482 = vpack.c.b16 %v3722, %v3718
    %v4483 = vpack.c.b16 %v3723, %v3719
    %v4484 = vpack.c.b16 %v3728, %v3724
    %v4485 = vpack.c.b16 %v3729, %v3725
    %v4486 = vpack.c.b16 %v3730, %v3726
    %v4487 = vpack.c.b16 %v3731, %v3727
    %v4488 = vpack.c.b16 %v3736, %v3732
    %v4489 = vpack.c.b16 %v3737, %v3733
    %v4490 = vpack.c.b16 %v3738, %v3734
    %v4491 = vpack.c.b16 %v3739, %v3735
    %v4492 = vpack.c.b16 %v3744, %v3740
    %v4493 = vpack.c.b16 %v3745, %v3741
    %v4494 = vpack.c.b16 %v3746, %v3742
    %v4495 = vpack.c.b16 %v3747, %v3743
    %v4496 = vpack.c.b16 %v3752, %v3748
    %v4497 = vpack.c.b16 %v3753, %v3749
    %v4498 = vpack.c.b16 %v3754, %v3750
    %v4499 = vpack.c.b16 %v3755, %v3751
    %v4500 = vpack.c.b16 %v3760, %v3756
    %v4501 = vpack.c.b16 %v3761, %v3757
    %v4502 = vpack.c.b16 %v3762, %v3758
    %v4503 = vpack.c.b16 %v3763, %v3759
    %v4504 = vpack.c.b16 %v3768, %v3764
    %v4505 = vpack.c.b16 %v3769, %v3765
    %v4506 = vpack.c.b16 %v3770, %v3766
    %v4507 = vpack.c.b16 %v3771, %v3767
    %v4508 = vpack.c.b16 %v3776, %v3772
    %v4509 = vpack.c.b16 %v3777, %v3773
    %v4510 = vpack.c.b16 %v3778, %v3774
    %v4511 = vpack.c.b16 %v3779, %v3775
    %v4512 = vpack.c.b16 %v3784, %v3780
    %v4513 = vpack.c.b16 %v3785, %v3781
    %v4514 = vpack.c.b16 %v3786, %v3782
    %v4515 = vpack.c.b16 %v3787, %v3783
    %v4516 = vpack.c.b16 %v3792, %v3788
    %v4517 = vpack.c.b16 %v3793, %v3789
    %v4518 = vpack.c.b16 %v3794, %v3790
    %v4519 = vpack.c.b16 %v3795, %v3791
    %v4520 = vpack.c.b16 %v3800, %v3796
    %v4521 = vpack.c.b16 %v3801, %v3797
    %v4522 = vpack.c.b16 %v3802, %v3798
    %v4523 = vpack.c.b16 %v3803, %v3799
    %v4524 = vpack.c.b16 %v3808, %v3804
    %v4525 = vpack.c.b16 %v3809, %v3805
    %v4526 = vpack.c.b16 %v3810, %v3806
    %v4527 = vpack.c.b16 %v3811, %v3807
    %v4528 = vpack.c.b16 %v3816, %v3812
    %v4529 = vpack.c.b16 %v3817, %v3813
    %v4530 = vpack.c.b16 %v3818, %v3814
    %v4531 = vpack.c.b16 %v3819, %v3815
    %v4532 = vpack.c.b16 %v3824, %v3820
    %v4533 = vpack.c.b16 %v3825, %v3821
    %v4534 = vpack.c.b16 %v3826, %v3822
    %v4535 = vpack.c.b16 %v3827, %v3823
    %v4536 = vpack.c.b16 %v3832, %v3828
    %v4537 = vpack.c.b16 %v3833, %v3829
    %v4538 = vpack.c.b16 %v3834, %v3830
    %v4539 = vpack.c.b16 %v3835, %v3831
    %v4540 = vpack.c.b16 %v3840, %v3836
    %v4541 = vpack.c.b16 %v3841, %v3837
    %v4542 = vpack.c.b16 %v3842, %v3838
    %v4543 = vpack.c.b16 %v3843, %v3839
    %v4544 = vpack.c.b16 %v3848, %v3844
    %v4545 = vpack.c.b16 %v3849, %v3845
    %v4546 = vpack.c.b16 %v3850, %v3846
    %v4547 = vpack.c.b16 %v3851, %v3847
    %v4548 = vpack.c.b16 %v3856, %v3852
    %v4549 = vpack.c.b16 %v3857, %v3853
    %v4550 = vpack.c.b16 %v3858, %v3854
    %v4551 = vpack.c.b16 %v3859, %v3855
    %v4552 = vpack.c.b16 %v3864, %v3860
    %v4553 = vpack.c.b16 %v3865, %v3861
    %v4554 = vpack.c.b16 %v3866, %v3862
    %v4555 = vpack.c.b16 %v3867, %v3863
    %v4556 = vpack.c.b16 %v3872, %v3868
    %v4557 = vpack.c.b16 %v3873, %v3869
    %v4558 = vpack.c.b16 %v3874, %v3870
    %v4559 = vpack.c.b16 %v3875, %v3871
    %v4560 = vpack.c.b16 %v3880, %v3876
    %v4561 = vpack.c.b16 %v3881, %v3877
    %v4562 = vpack.c.b16 %v3882, %v3878
    %v4563 = vpack.c.b16 %v3883, %v3879
    %v4564 = vpack.c.b16 %v3888, %v3884
    %v4565 = vpack.c.b16 %v3889, %v3885
    %v4566 = vpack.c.b16 %v3890, %v3886
    %v4567 = vpack.c.b16 %v3891, %v3887
    %v4568 = vpack.c.b16 %v3896, %v3892
    %v4569 = vpack.c.b16 %v3897, %v3893
    %v4570 = vpack.c.b16 %v3898, %v3894
    %v4571 = vpack.c.b16 %v3899, %v3895
    %v4572 = vpack.c.b16 %v3904, %v3900
    %v4573 = vpack.c.b16 %v3905, %v3901
    %v4574 = vpack.c.b16 %v3906, %v3902
    %v4575 = vpack.c.b16 %v3907, %v3903
    %v4576 = vpack.c.b16 %v3912, %v3908
    %v4577 = vpack.c.b16 %v3913, %v3909
    %v4578 = vpack.c.b16 %v3914, %v3910
    %v4579 = vpack.c.b16 %v3915, %v3911
    %v4580 = vpack.c.b16 %v3920, %v3916
    %v4581 = vpack.c.b16 %v3921, %v3917
    %v4582 = vpack.c.b16 %v3922, %v3918
    %v4583 = vpack.c.b16 %v3923, %v3919
    %v4584 = vpack.c.b16 %v3928, %v3924
    %v4585 = vpack.c.b16 %v3929, %v3925
    %v4586 = vpack.c.b16 %v3930, %v3926
    %v4587 = vpack.c.b16 %v3931, %v3927
    %v4588 = vpack.c.b16 %v3936, %v3932
    %v4589 = vpack.c.b16 %v3937, %v3933
    %v4590 = vpack.c.b16 %v3938, %v3934
    %v4591 = vpack.c.b16 %v3939, %v3935
    %v4592 = vpack.c.b16 %v3944, %v3940
    %v4593 = vpack.c.b16 %v3945, %v3941
    %v4594 = vpack.c.b16 %v3946, %v3942
    %v4595 = vpack.c.b16 %v3947, %v3943
    %v4596 = vpack.c.b16 %v3952, %v3948
    %v4597 = vpack.c.b16 %v3953, %v3949
    %v4598 = vpack.c.b16 %v3954, %v3950
    %v4599 = vpack.c.b16 %v3955, %v3951
    %v4600 = vpack.c.b16 %v3960, %v3956
    %v4601 = vpack.c.b16 %v3961, %v3957
    %v4602 = vpack.c.b16 %v3962, %v3958
    %v4603 = vpack.c.b16 %v3963, %v3959
    %v4604 = vpack.c.b16 %v3968, %v3964
    %v4605 = vpack.c.b16 %v3969, %v3965
    %v4606 = vpack.c.b16 %v3970, %v3966
    %v4607 = vpack.c.b16 %v3971, %v3967
    %v4608 = vpack.c.b16 %v3976, %v3972
    %v4609 = vpack.c.b16 %v3977, %v3973
    %v4610 = vpack.c.b16 %v3978, %v3974
    %v4611 = vpack.c.b16 %v3979, %v3975
    %v4612 = vpack.c.b16 %v3984, %v3980
    %v4613 = vpack.c.b16 %v3985, %v3981
    %v4614 = vpack.c.b16 %v3986, %v3982
    %v4615 = vpack.c.b16 %v3987, %v3983
    %v4616 = vpack.c.b16 %v3992, %v3988
    %v4617 = vpack.c.b16 %v3993, %v3989
    %v4618 = vpack.c.b16 %v3994, %v3990
    %v4619 = vpack.c.b16 %v3995, %v3991
    %v4620 = vpack.c.b16 %v4000, %v3996
    %v4621 = vpack.c.b16 %v4001, %v3997
    %v4622 = vpack.c.b16 %v4002, %v3998
    %v4623 = vpack.c.b16 %v4003, %v3999
    %v4624 = vpack.c.b16 %v4008, %v4004
    %v4625 = vpack.c.b16 %v4009, %v4005
    %v4626 = vpack.c.b16 %v4010, %v4006
    %v4627 = vpack.c.b16 %v4011, %v4007
    %v4628 = vpack.c.b16 %v4016, %v4012
    %v4629 = vpack.c.b16 %v4017, %v4013
    %v4630 = vpack.c.b16 %v4018, %v4014
    %v4631 = vpack.c.b16 %v4019, %v4015
    %v4632 = vpack.c.b16 %v4024, %v4020
    %v4633 = vpack.c.b16 %v4025, %v4021
    %v4634 = vpack.c.b16 %v4026, %v4022
    %v4635 = vpack.c.b16 %v4027, %v4023
    %v4636 = vpack.c.b16 %v4032, %v4028
    %v4637 = vpack.c.b16 %v4033, %v4029
    %v4638 = vpack.c.b16 %v4034, %v4030
    %v4639 = vpack.c.b16 %v4035, %v4031
    %v4640 = vpack.c.b16 %v4040, %v4036
    %v4641 = vpack.c.b16 %v4041, %v4037
    %v4642 = vpack.c.b16 %v4042, %v4038
    %v4643 = vpack.c.b16 %v4043, %v4039
    %v4644 = vpack.c.b16 %v4048, %v4044
    %v4645 = vpack.c.b16 %v4049, %v4045
    %v4646 = vpack.c.b16 %v4050, %v4046
    %v4647 = vpack.c.b16 %v4051, %v4047
    %v4648 = vpack.c.b16 %v4056, %v4052
    %v4649 = vpack.c.b16 %v4057, %v4053
    %v4650 = vpack.c.b16 %v4058, %v4054
    %v4651 = vpack.c.b16 %v4059, %v4055
    %v4652 = vpack.c.b16 %v4064, %v4060
    %v4653 = vpack.c.b16 %v4065, %v4061
    %v4654 = vpack.c.b16 %v4066, %v4062
    %v4655 = vpack.c.b16 %v4067, %v4063
    %v4656 = vpack.c.b16 %v4072, %v4068
    %v4657 = vpack.c.b16 %v4073, %v4069
    %v4658 = vpack.c.b16 %v4074, %v4070
    %v4659 = vpack.c.b16 %v4075, %v4071
    %v4660 = vpack.c.b16 %v4080, %v4076
    %v4661 = vpack.c.b16 %v4081, %v4077
    %v4662 = vpack.c.b16 %v4082, %v4078
    %v4663 = vpack.c.b16 %v4083, %v4079
    %v4664 = vpack.c.b16 %v4088, %v4084
    %v4665 = vpack.c.b16 %v4089, %v4085
    %v4666 = vpack.c.b16 %v4090, %v4086
    %v4667 = vpack.c.b16 %v4091, %v4087
    %v4668 = vpack.c.b16 %v4096, %v4092
    %v4669 = vpack.c.b16 %v4097, %v4093
    %v4670 = vpack.c.b16 %v4098, %v4094
    %v4671 = vpack.c.b16 %v4099, %v4095
    %v4672 = vpack.c.b16 %v4104, %v4100
    %v4673 = vpack.c.b16 %v4105, %v4101
    %v4674 = vpack.c.b16 %v4106, %v4102
    %v4675 = vpack.c.b16 %v4107, %v4103
    %v4676 = vpack.c.b16 %v4112, %v4108
    %v4677 = vpack.c.b16 %v4113, %v4109
    %v4678 = vpack.c.b16 %v4114, %v4110
    %v4679 = vpack.c.b16 %v4115, %v4111
    %v4680 = vpack.c.b16 %v4120, %v4116
    %v4681 = vpack.c.b16 %v4121, %v4117
    %v4682 = vpack.c.b16 %v4122, %v4118
    %v4683 = vpack.c.b16 %v4123, %v4119
    %v4684 = vpack.c.b16 %v4128, %v4124
    %v4685 = vpack.c.b16 %v4129, %v4125
    %v4686 = vpack.c.b16 %v4130, %v4126
    %v4687 = vpack.c.b16 %v4131, %v4127
    %v4688 = vpack.c.b16 %v4136, %v4132
    %v4689 = vpack.c.b16 %v4137, %v4133
    %v4690 = vpack.c.b16 %v4138, %v4134
    %v4691 = vpack.c.b16 %v4139, %v4135
    %v4692 = vpack.c.b16 %v4144, %v4140
    %v4693 = vpack.c.b16 %v4145, %v4141
    %v4694 = vpack.c.b16 %v4146, %v4142
    %v4695 = vpack.c.b16 %v4147, %v4143
    %v4696 = vpack.c.b16 %v4152, %v4148
    %v4697 = vpack.c.b16 %v4153, %v4149
    %v4698 = vpack.c.b16 %v4154, %v4150
    %v4699 = vpack.c.b16 %v4155, %v4151
    %v4700 = vpack.c.b16 %v4160, %v4156
    %v4701 = vpack.c.b16 %v4161, %v4157
    %v4702 = vpack.c.b16 %v4162, %v4158
    %v4703 = vpack.c.b16 %v4163, %v4159
    %v4704 = vpack.c.b16 %v4168, %v4164
    %v4705 = vpack.c.b16 %v4169, %v4165
    %v4706 = vpack.c.b16 %v4170, %v4166
    %v4707 = vpack.c.b16 %v4171, %v4167
    %v4708 = vpack.c.b16 %v4176, %v4172
    %v4709 = vpack.c.b16 %v4177, %v4173
    %v4710 = vpack.c.b16 %v4178, %v4174
    %v4711 = vpack.c.b16 %v4179, %v4175
    %v4712 = vpack.c.b16 %v4184, %v4180
    %v4713 = vpack.c.b16 %v4185, %v4181
    %v4714 = vpack.c.b16 %v4186, %v4182
    %v4715 = vpack.c.b16 %v4187, %v4183
    %v4716 = vpack.c.b16 %v4192, %v4188
    %v4717 = vpack.c.b16 %v4193, %v4189
    %v4718 = vpack.c.b16 %v4194, %v4190
    %v4719 = vpack.c.b16 %v4195, %v4191
    %v4720 = vpack.c.b16 %v4200, %v4196
    %v4721 = vpack.c.b16 %v4201, %v4197
    %v4722 = vpack.c.b16 %v4202, %v4198
    %v4723 = vpack.c.b16 %v4203, %v4199
    %v4724 = vpack.c.b16 %v4208, %v4204
    %v4725 = vpack.c.b16 %v4209, %v4205
    %v4726 = vpack.c.b16 %v4210, %v4206
    %v4727 = vpack.c.b16 %v4211, %v4207
    %v4728 = vpack.c.b16 %v4216, %v4212
    %v4729 = vpack.c.b16 %v4217, %v4213
    %v4730 = vpack.c.b16 %v4218, %v4214
    %v4731 = vpack.c.b16 %v4219, %v4215
    %5244 = vmatprep.subr.bf16.mxu0 %v4249
    %5245 = vmatpush1.bf16.msra.mxu0 %v4248
    %5246 = vmatprep.subr.bf16.mxu0 %v4245
    %5247 = vmatpush1.bf16.msra.mxu0 %v4244
    %5248 = vmatprep.subr.bf16.mxu0 %v4241
    %5249 = vmatpush1.bf16.msra.mxu0 %v4240
    %5250 = vmatprep.subr.bf16.mxu0 %v4237
    %5251 = vmatpush1.bf16.msra.mxu0 %v4236
    %5252 = vmatprep.subr.bf16.mxu0 %v4233
    %5253 = vmatpush1.bf16.msra.mxu0 %v4232
    %5254 = vmatprep.subr.bf16.mxu0 %v4229
    %5255 = vmatpush1.bf16.msra.mxu0 %v4228
    %5256 = vmatprep.subr.bf16.mxu0 %v4225
    %5257 = vmatpush1.bf16.msra.mxu0 %v4224
    %5258 = vmatprep.subr.bf16.mxu0 %v4221
    %5259 = vmatpush1.bf16.msra.mxu0 %v4220
    %5260 = vmatprep.subr.bf16.mxu0 %v4281
    %5261 = vmatpush2.bf16.msra.mxu0 %v4280
    %5262 = vmatprep.subr.bf16.mxu0 %v4277
    %5263 = vmatpush2.bf16.msra.mxu0 %v4276
    %5264 = vmatprep.subr.bf16.mxu0 %v4273
    %5265 = vmatpush2.bf16.msra.mxu0 %v4272
    %5266 = vmatprep.subr.bf16.mxu0 %v4269
    %5267 = vmatpush2.bf16.msra.mxu0 %v4268
    %5268 = vmatprep.subr.bf16.mxu0 %v4265
    %5269 = vmatpush2.bf16.msra.mxu0 %v4264
    %5270 = vmatprep.subr.bf16.mxu0 %v4261
    %5271 = vmatpush2.bf16.msra.mxu0 %v4260
    %5272 = vmatprep.subr.bf16.mxu0 %v4257
    %5273 = vmatpush2.bf16.msra.mxu0 %v4256
    %5274 = vmatprep.subr.bf16.mxu0 %v4253
    %5275 = vmatpush2.bf16.msra.mxu0 %v4252
    %5276 = vmatprep.mubr.bf16.mxu0 %v2135
    %5277 = vmatmul.mubr.bf16.gmra.mxu0 %v2134
    %v5278 = vpop.f32.mrf.mxu0
    %v5279 = vadd.f32 %v2667, %v5278
    %v5280 = vpop.f32.mrf.mxu0
    %v5281 = vadd.f32 %v2671, %v5280
    %v5282 = vpop.f32.mrf.mxu0
    %v5283 = vpop.f32.mrf.mxu0
    %5284 = vdwg.mxu0
    %5285 = vmatprep.subr.bf16.mxu0 %v4313
    %5286 = vmatpush1.bf16.msra.mxu0 %v4312
    %5287 = vmatprep.subr.bf16.mxu0 %v4309
    %5288 = vmatpush1.bf16.msra.mxu0 %v4308
    %5289 = vmatprep.subr.bf16.mxu0 %v4305
    %5290 = vmatpush1.bf16.msra.mxu0 %v4304
    %5291 = vmatprep.subr.bf16.mxu0 %v4301
    %5292 = vmatpush1.bf16.msra.mxu0 %v4300
    %5293 = vmatprep.subr.bf16.mxu0 %v4297
    %5294 = vmatpush1.bf16.msra.mxu0 %v4296
    %5295 = vmatprep.subr.bf16.mxu0 %v4293
    %5296 = vmatpush1.bf16.msra.mxu0 %v4292
    %5297 = vmatprep.subr.bf16.mxu0 %v4289
    %5298 = vmatpush1.bf16.msra.mxu0 %v4288
    %5299 = vmatprep.subr.bf16.mxu0 %v4285
    %5300 = vmatpush1.bf16.msra.mxu0 %v4284
    %5301 = vmatprep.subr.bf16.mxu0 %v4345
    %5302 = vmatpush2.bf16.msra.mxu0 %v4344
    %5303 = vmatprep.subr.bf16.mxu0 %v4341
    %5304 = vmatpush2.bf16.msra.mxu0 %v4340
    %5305 = vmatprep.subr.bf16.mxu0 %v4337
    %5306 = vmatpush2.bf16.msra.mxu0 %v4336
    %5307 = vmatprep.subr.bf16.mxu0 %v4333
    %5308 = vmatpush2.bf16.msra.mxu0 %v4332
    %5309 = vmatprep.subr.bf16.mxu0 %v4329
    %5310 = vmatpush2.bf16.msra.mxu0 %v4328
    %5311 = vmatprep.subr.bf16.mxu0 %v4325
    %5312 = vmatpush2.bf16.msra.mxu0 %v4324
    %5313 = vmatprep.subr.bf16.mxu0 %v4321
    %5314 = vmatpush2.bf16.msra.mxu0 %v4320
    %5315 = vmatprep.subr.bf16.mxu0 %v4317
    %5316 = vmatpush2.bf16.msra.mxu0 %v4316
    %5317 = vmatprep.mubr.bf16.mxu0 %v2137
    %5318 = vmatmul.mubr.bf16.gmra.mxu0 %v2136
    %v5319 = vpop.f32.mrf.mxu0
    %v5320 = vadd.f32 %v5279, %v5319
    %v5321 = vpop.f32.mrf.mxu0
    %v5322 = vadd.f32 %v5281, %v5321
    %v5323 = vpop.f32.mrf.mxu0
    %v5324 = vpop.f32.mrf.mxu0
    %5325 = vdwg.mxu0
    %5326 = vmatprep.subr.bf16.mxu0 %v4377
    %5327 = vmatpush1.bf16.msra.mxu0 %v4376
    %5328 = vmatprep.subr.bf16.mxu0 %v4373
    %5329 = vmatpush1.bf16.msra.mxu0 %v4372
    %5330 = vmatprep.subr.bf16.mxu0 %v4369
    %5331 = vmatpush1.bf16.msra.mxu0 %v4368
    %5332 = vmatprep.subr.bf16.mxu0 %v4365
    %5333 = vmatpush1.bf16.msra.mxu0 %v4364
    %5334 = vmatprep.subr.bf16.mxu0 %v4361
    %5335 = vmatpush1.bf16.msra.mxu0 %v4360
    %5336 = vmatprep.subr.bf16.mxu0 %v4357
    %5337 = vmatpush1.bf16.msra.mxu0 %v4356
    %5338 = vmatprep.subr.bf16.mxu0 %v4353
    %5339 = vmatpush1.bf16.msra.mxu0 %v4352
    %5340 = vmatprep.subr.bf16.mxu0 %v4349
    %5341 = vmatpush1.bf16.msra.mxu0 %v4348
    %5342 = vmatprep.subr.bf16.mxu0 %v4409
    %5343 = vmatpush2.bf16.msra.mxu0 %v4408
    %5344 = vmatprep.subr.bf16.mxu0 %v4405
    %5345 = vmatpush2.bf16.msra.mxu0 %v4404
    %5346 = vmatprep.subr.bf16.mxu0 %v4401
    %5347 = vmatpush2.bf16.msra.mxu0 %v4400
    %5348 = vmatprep.subr.bf16.mxu0 %v4397
    %5349 = vmatpush2.bf16.msra.mxu0 %v4396
    %5350 = vmatprep.subr.bf16.mxu0 %v4393
    %5351 = vmatpush2.bf16.msra.mxu0 %v4392
    %5352 = vmatprep.subr.bf16.mxu0 %v4389
    %5353 = vmatpush2.bf16.msra.mxu0 %v4388
    %5354 = vmatprep.subr.bf16.mxu0 %v4385
    %5355 = vmatpush2.bf16.msra.mxu0 %v4384
    %5356 = vmatprep.subr.bf16.mxu0 %v4381
    %5357 = vmatpush2.bf16.msra.mxu0 %v4380
    %5358 = vmatprep.mubr.bf16.mxu0 %v2139
    %5359 = vmatmul.mubr.bf16.gmra.mxu0 %v2138
    %v5360 = vpop.f32.mrf.mxu0
    %v5361 = vadd.f32 %v5320, %v5360
    %v5362 = vpop.f32.mrf.mxu0
    %v5363 = vadd.f32 %v5322, %v5362
    %v5364 = vpop.f32.mrf.mxu0
    %v5365 = vpop.f32.mrf.mxu0
    %5366 = vdwg.mxu0
    %5367 = vmatprep.subr.bf16.mxu0 %v4441
    %5368 = vmatpush1.bf16.msra.mxu0 %v4440
    %5369 = vmatprep.subr.bf16.mxu0 %v4437
    %5370 = vmatpush1.bf16.msra.mxu0 %v4436
    %5371 = vmatprep.subr.bf16.mxu0 %v4433
    %5372 = vmatpush1.bf16.msra.mxu0 %v4432
    %5373 = vmatprep.subr.bf16.mxu0 %v4429
    %5374 = vmatpush1.bf16.msra.mxu0 %v4428
    %5375 = vmatprep.subr.bf16.mxu0 %v4425
    %5376 = vmatpush1.bf16.msra.mxu0 %v4424
    %5377 = vmatprep.subr.bf16.mxu0 %v4421
    %5378 = vmatpush1.bf16.msra.mxu0 %v4420
    %5379 = vmatprep.subr.bf16.mxu0 %v4417
    %5380 = vmatpush1.bf16.msra.mxu0 %v4416
    %5381 = vmatprep.subr.bf16.mxu0 %v4413
    %5382 = vmatpush1.bf16.msra.mxu0 %v4412
    %5383 = vmatprep.subr.bf16.mxu0 %v4473
    %5384 = vmatpush2.bf16.msra.mxu0 %v4472
    %5385 = vmatprep.subr.bf16.mxu0 %v4469
    %5386 = vmatpush2.bf16.msra.mxu0 %v4468
    %5387 = vmatprep.subr.bf16.mxu0 %v4465
    %5388 = vmatpush2.bf16.msra.mxu0 %v4464
    %5389 = vmatprep.subr.bf16.mxu0 %v4461
    %5390 = vmatpush2.bf16.msra.mxu0 %v4460
    %5391 = vmatprep.subr.bf16.mxu0 %v4457
    %5392 = vmatpush2.bf16.msra.mxu0 %v4456
    %5393 = vmatprep.subr.bf16.mxu0 %v4453
    %5394 = vmatpush2.bf16.msra.mxu0 %v4452
    %5395 = vmatprep.subr.bf16.mxu0 %v4449
    %5396 = vmatpush2.bf16.msra.mxu0 %v4448
    %5397 = vmatprep.subr.bf16.mxu0 %v4445
    %5398 = vmatpush2.bf16.msra.mxu0 %v4444
    %5399 = vmatprep.mubr.bf16.mxu0 %v2141
    %5400 = vmatmul.mubr.bf16.gmra.mxu0 %v2140
    %v5401 = vpop.f32.mrf.mxu0
    %v5402 = vadd.f32 %v5361, %v5401
    %v5403 = vpop.f32.mrf.mxu0
    %v5404 = vadd.f32 %v5363, %v5403
    %v5405 = vpop.f32.mrf.mxu0
    %v5406 = vpop.f32.mrf.mxu0
    %5407 = vdwg.mxu0
    %5408 = vmatprep.subr.bf16.mxu0 %v4505
    %5409 = vmatpush1.bf16.msra.mxu0 %v4504
    %5410 = vmatprep.subr.bf16.mxu0 %v4501
    %5411 = vmatpush1.bf16.msra.mxu0 %v4500
    %5412 = vmatprep.subr.bf16.mxu0 %v4497
    %5413 = vmatpush1.bf16.msra.mxu0 %v4496
    %5414 = vmatprep.subr.bf16.mxu0 %v4493
    %5415 = vmatpush1.bf16.msra.mxu0 %v4492
    %5416 = vmatprep.subr.bf16.mxu0 %v4489
    %5417 = vmatpush1.bf16.msra.mxu0 %v4488
    %5418 = vmatprep.subr.bf16.mxu0 %v4485
    %5419 = vmatpush1.bf16.msra.mxu0 %v4484
    %5420 = vmatprep.subr.bf16.mxu0 %v4481
    %5421 = vmatpush1.bf16.msra.mxu0 %v4480
    %5422 = vmatprep.subr.bf16.mxu0 %v4477
    %5423 = vmatpush1.bf16.msra.mxu0 %v4476
    %5424 = vmatprep.subr.bf16.mxu0 %v4537
    %5425 = vmatpush2.bf16.msra.mxu0 %v4536
    %5426 = vmatprep.subr.bf16.mxu0 %v4533
    %5427 = vmatpush2.bf16.msra.mxu0 %v4532
    %5428 = vmatprep.subr.bf16.mxu0 %v4529
    %5429 = vmatpush2.bf16.msra.mxu0 %v4528
    %5430 = vmatprep.subr.bf16.mxu0 %v4525
    %5431 = vmatpush2.bf16.msra.mxu0 %v4524
    %5432 = vmatprep.subr.bf16.mxu0 %v4521
    %5433 = vmatpush2.bf16.msra.mxu0 %v4520
    %5434 = vmatprep.subr.bf16.mxu0 %v4517
    %5435 = vmatpush2.bf16.msra.mxu0 %v4516
    %5436 = vmatprep.subr.bf16.mxu0 %v4513
    %5437 = vmatpush2.bf16.msra.mxu0 %v4512
    %5438 = vmatprep.subr.bf16.mxu0 %v4509
    %5439 = vmatpush2.bf16.msra.mxu0 %v4508
    %5440 = vmatprep.mubr.bf16.mxu0 %v2143
    %5441 = vmatmul.mubr.bf16.gmra.mxu0 %v2142
    %v5442 = vpop.f32.mrf.mxu0
    %v5443 = vadd.f32 %v5402, %v5442
    %v5444 = vpop.f32.mrf.mxu0
    %v5445 = vadd.f32 %v5404, %v5444
    %v5446 = vpop.f32.mrf.mxu0
    %v5447 = vpop.f32.mrf.mxu0
    %5448 = vdwg.mxu0
    %5449 = vmatprep.subr.bf16.mxu0 %v4569
    %5450 = vmatpush1.bf16.msra.mxu0 %v4568
    %5451 = vmatprep.subr.bf16.mxu0 %v4565
    %5452 = vmatpush1.bf16.msra.mxu0 %v4564
    %5453 = vmatprep.subr.bf16.mxu0 %v4561
    %5454 = vmatpush1.bf16.msra.mxu0 %v4560
    %5455 = vmatprep.subr.bf16.mxu0 %v4557
    %5456 = vmatpush1.bf16.msra.mxu0 %v4556
    %5457 = vmatprep.subr.bf16.mxu0 %v4553
    %5458 = vmatpush1.bf16.msra.mxu0 %v4552
    %5459 = vmatprep.subr.bf16.mxu0 %v4549
    %5460 = vmatpush1.bf16.msra.mxu0 %v4548
    %5461 = vmatprep.subr.bf16.mxu0 %v4545
    %5462 = vmatpush1.bf16.msra.mxu0 %v4544
    %5463 = vmatprep.subr.bf16.mxu0 %v4541
    %5464 = vmatpush1.bf16.msra.mxu0 %v4540
    %5465 = vmatprep.subr.bf16.mxu0 %v4601
    %5466 = vmatpush2.bf16.msra.mxu0 %v4600
    %5467 = vmatprep.subr.bf16.mxu0 %v4597
    %5468 = vmatpush2.bf16.msra.mxu0 %v4596
    %5469 = vmatprep.subr.bf16.mxu0 %v4593
    %5470 = vmatpush2.bf16.msra.mxu0 %v4592
    %5471 = vmatprep.subr.bf16.mxu0 %v4589
    %5472 = vmatpush2.bf16.msra.mxu0 %v4588
    %5473 = vmatprep.subr.bf16.mxu0 %v4585
    %5474 = vmatpush2.bf16.msra.mxu0 %v4584
    %5475 = vmatprep.subr.bf16.mxu0 %v4581
    %5476 = vmatpush2.bf16.msra.mxu0 %v4580
    %5477 = vmatprep.subr.bf16.mxu0 %v4577
    %5478 = vmatpush2.bf16.msra.mxu0 %v4576
    %5479 = vmatprep.subr.bf16.mxu0 %v4573
    %5480 = vmatpush2.bf16.msra.mxu0 %v4572
    %5481 = vmatprep.mubr.bf16.mxu0 %v2145
    %5482 = vmatmul.mubr.bf16.gmra.mxu0 %v2144
    %v5483 = vpop.f32.mrf.mxu0
    %v5484 = vadd.f32 %v5443, %v5483
    %v5485 = vpop.f32.mrf.mxu0
    %v5486 = vadd.f32 %v5445, %v5485
    %v5487 = vpop.f32.mrf.mxu0
    %v5488 = vpop.f32.mrf.mxu0
    %5489 = vdwg.mxu0
    %5490 = vmatprep.subr.bf16.mxu0 %v4633
    %5491 = vmatpush1.bf16.msra.mxu0 %v4632
    %5492 = vmatprep.subr.bf16.mxu0 %v4629
    %5493 = vmatpush1.bf16.msra.mxu0 %v4628
    %5494 = vmatprep.subr.bf16.mxu0 %v4625
    %5495 = vmatpush1.bf16.msra.mxu0 %v4624
    %5496 = vmatprep.subr.bf16.mxu0 %v4621
    %5497 = vmatpush1.bf16.msra.mxu0 %v4620
    %5498 = vmatprep.subr.bf16.mxu0 %v4617
    %5499 = vmatpush1.bf16.msra.mxu0 %v4616
    %5500 = vmatprep.subr.bf16.mxu0 %v4613
    %5501 = vmatpush1.bf16.msra.mxu0 %v4612
    %5502 = vmatprep.subr.bf16.mxu0 %v4609
    %5503 = vmatpush1.bf16.msra.mxu0 %v4608
    %5504 = vmatprep.subr.bf16.mxu0 %v4605
    %5505 = vmatpush1.bf16.msra.mxu0 %v4604
    %5506 = vmatprep.subr.bf16.mxu0 %v4665
    %5507 = vmatpush2.bf16.msra.mxu0 %v4664
    %5508 = vmatprep.subr.bf16.mxu0 %v4661
    %5509 = vmatpush2.bf16.msra.mxu0 %v4660
    %5510 = vmatprep.subr.bf16.mxu0 %v4657
    %5511 = vmatpush2.bf16.msra.mxu0 %v4656
    %5512 = vmatprep.subr.bf16.mxu0 %v4653
    %5513 = vmatpush2.bf16.msra.mxu0 %v4652
    %5514 = vmatprep.subr.bf16.mxu0 %v4649
    %5515 = vmatpush2.bf16.msra.mxu0 %v4648
    %5516 = vmatprep.subr.bf16.mxu0 %v4645
    %5517 = vmatpush2.bf16.msra.mxu0 %v4644
    %5518 = vmatprep.subr.bf16.mxu0 %v4641
    %5519 = vmatpush2.bf16.msra.mxu0 %v4640
    %5520 = vmatprep.subr.bf16.mxu0 %v4637
    %5521 = vmatpush2.bf16.msra.mxu0 %v4636
    %5522 = vmatprep.mubr.bf16.mxu0 %v2147
    %5523 = vmatmul.mubr.bf16.gmra.mxu0 %v2146
    %v5524 = vpop.f32.mrf.mxu0
    %v5525 = vadd.f32 %v5484, %v5524
    %v5526 = vpop.f32.mrf.mxu0
    %v5527 = vadd.f32 %v5486, %v5526
    %v5528 = vpop.f32.mrf.mxu0
    %v5529 = vpop.f32.mrf.mxu0
    %5530 = vdwg.mxu0
    %5531 = vmatprep.subr.bf16.mxu0 %v4697
    %5532 = vmatpush1.bf16.msra.mxu0 %v4696
    %5533 = vmatprep.subr.bf16.mxu0 %v4693
    %5534 = vmatpush1.bf16.msra.mxu0 %v4692
    %5535 = vmatprep.subr.bf16.mxu0 %v4689
    %5536 = vmatpush1.bf16.msra.mxu0 %v4688
    %5537 = vmatprep.subr.bf16.mxu0 %v4685
    %5538 = vmatpush1.bf16.msra.mxu0 %v4684
    %5539 = vmatprep.subr.bf16.mxu0 %v4681
    %5540 = vmatpush1.bf16.msra.mxu0 %v4680
    %5541 = vmatprep.subr.bf16.mxu0 %v4677
    %5542 = vmatpush1.bf16.msra.mxu0 %v4676
    %5543 = vmatprep.subr.bf16.mxu0 %v4673
    %5544 = vmatpush1.bf16.msra.mxu0 %v4672
    %5545 = vmatprep.subr.bf16.mxu0 %v4669
    %5546 = vmatpush1.bf16.msra.mxu0 %v4668
    %5547 = vmatprep.subr.bf16.mxu0 %v4729
    %5548 = vmatpush2.bf16.msra.mxu0 %v4728
    %5549 = vmatprep.subr.bf16.mxu0 %v4725
    %5550 = vmatpush2.bf16.msra.mxu0 %v4724
    %5551 = vmatprep.subr.bf16.mxu0 %v4721
    %5552 = vmatpush2.bf16.msra.mxu0 %v4720
    %5553 = vmatprep.subr.bf16.mxu0 %v4717
    %5554 = vmatpush2.bf16.msra.mxu0 %v4716
    %5555 = vmatprep.subr.bf16.mxu0 %v4713
    %5556 = vmatpush2.bf16.msra.mxu0 %v4712
    %5557 = vmatprep.subr.bf16.mxu0 %v4709
    %5558 = vmatpush2.bf16.msra.mxu0 %v4708
    %5559 = vmatprep.subr.bf16.mxu0 %v4705
    %5560 = vmatpush2.bf16.msra.mxu0 %v4704
    %5561 = vmatprep.subr.bf16.mxu0 %v4701
    %5562 = vmatpush2.bf16.msra.mxu0 %v4700
    %5563 = vmatprep.mubr.bf16.mxu0 %v2149
    %5564 = vmatmul.mubr.bf16.gmra.mxu0 %v2148
    %v5565 = vpop.f32.mrf.mxu0
    %v5566 = vadd.f32 %v5525, %v5565
    %v5567 = vpop.f32.mrf.mxu0
    %v5568 = vadd.f32 %v5527, %v5567
    %v5569 = vpop.f32.mrf.mxu0
    %v5570 = vpop.f32.mrf.mxu0
    %5571 = vdwg.mxu0
    %5572 = vmatprep.subr.bf16.mxu0 %v4251
    %5573 = vmatpush1.bf16.msra.mxu0 %v4250
    %5574 = vmatprep.subr.bf16.mxu0 %v4247
    %5575 = vmatpush1.bf16.msra.mxu0 %v4246
    %5576 = vmatprep.subr.bf16.mxu0 %v4243
    %5577 = vmatpush1.bf16.msra.mxu0 %v4242
    %5578 = vmatprep.subr.bf16.mxu0 %v4239
    %5579 = vmatpush1.bf16.msra.mxu0 %v4238
    %5580 = vmatprep.subr.bf16.mxu0 %v4235
    %5581 = vmatpush1.bf16.msra.mxu0 %v4234
    %5582 = vmatprep.subr.bf16.mxu0 %v4231
    %5583 = vmatpush1.bf16.msra.mxu0 %v4230
    %5584 = vmatprep.subr.bf16.mxu0 %v4227
    %5585 = vmatpush1.bf16.msra.mxu0 %v4226
    %5586 = vmatprep.subr.bf16.mxu0 %v4223
    %5587 = vmatpush1.bf16.msra.mxu0 %v4222
    %5588 = vmatprep.subr.bf16.mxu0 %v4283
    %5589 = vmatpush2.bf16.msra.mxu0 %v4282
    %5590 = vmatprep.subr.bf16.mxu0 %v4279
    %5591 = vmatpush2.bf16.msra.mxu0 %v4278
    %5592 = vmatprep.subr.bf16.mxu0 %v4275
    %5593 = vmatpush2.bf16.msra.mxu0 %v4274
    %5594 = vmatprep.subr.bf16.mxu0 %v4271
    %5595 = vmatpush2.bf16.msra.mxu0 %v4270
    %5596 = vmatprep.subr.bf16.mxu0 %v4267
    %5597 = vmatpush2.bf16.msra.mxu0 %v4266
    %5598 = vmatprep.subr.bf16.mxu0 %v4263
    %5599 = vmatpush2.bf16.msra.mxu0 %v4262
    %5600 = vmatprep.subr.bf16.mxu0 %v4259
    %5601 = vmatpush2.bf16.msra.mxu0 %v4258
    %5602 = vmatprep.subr.bf16.mxu0 %v4255
    %5603 = vmatpush2.bf16.msra.mxu0 %v4254
    %5604 = vmatprep.mubr.bf16.mxu0 %v2135
    %5605 = vmatmul.mubr.bf16.gmra.mxu0 %v2134
    %v5606 = vpop.f32.mrf.mxu0
    %v5607 = vadd.f32 %v2675, %v5606
    %v5608 = vpop.f32.mrf.mxu0
    %v5609 = vadd.f32 %v2679, %v5608
    %v5610 = vpop.f32.mrf.mxu0
    %v5611 = vpop.f32.mrf.mxu0
    %5612 = vdwg.mxu0
    %5613 = vmatprep.subr.bf16.mxu0 %v4315
    %5614 = vmatpush1.bf16.msra.mxu0 %v4314
    %5615 = vmatprep.subr.bf16.mxu0 %v4311
    %5616 = vmatpush1.bf16.msra.mxu0 %v4310
    %5617 = vmatprep.subr.bf16.mxu0 %v4307
    %5618 = vmatpush1.bf16.msra.mxu0 %v4306
    %5619 = vmatprep.subr.bf16.mxu0 %v4303
    %5620 = vmatpush1.bf16.msra.mxu0 %v4302
    %5621 = vmatprep.subr.bf16.mxu0 %v4299
    %5622 = vmatpush1.bf16.msra.mxu0 %v4298
    %5623 = vmatprep.subr.bf16.mxu0 %v4295
    %5624 = vmatpush1.bf16.msra.mxu0 %v4294
    %5625 = vmatprep.subr.bf16.mxu0 %v4291
    %5626 = vmatpush1.bf16.msra.mxu0 %v4290
    %5627 = vmatprep.subr.bf16.mxu0 %v4287
    %5628 = vmatpush1.bf16.msra.mxu0 %v4286
    %5629 = vmatprep.subr.bf16.mxu0 %v4347
    %5630 = vmatpush2.bf16.msra.mxu0 %v4346
    %5631 = vmatprep.subr.bf16.mxu0 %v4343
    %5632 = vmatpush2.bf16.msra.mxu0 %v4342
    %5633 = vmatprep.subr.bf16.mxu0 %v4339
    %5634 = vmatpush2.bf16.msra.mxu0 %v4338
    %5635 = vmatprep.subr.bf16.mxu0 %v4335
    %5636 = vmatpush2.bf16.msra.mxu0 %v4334
    %5637 = vmatprep.subr.bf16.mxu0 %v4331
    %5638 = vmatpush2.bf16.msra.mxu0 %v4330
    %5639 = vmatprep.subr.bf16.mxu0 %v4327
    %5640 = vmatpush2.bf16.msra.mxu0 %v4326
    %5641 = vmatprep.subr.bf16.mxu0 %v4323
    %5642 = vmatpush2.bf16.msra.mxu0 %v4322
    %5643 = vmatprep.subr.bf16.mxu0 %v4319
    %5644 = vmatpush2.bf16.msra.mxu0 %v4318
    %5645 = vmatprep.mubr.bf16.mxu0 %v2137
    %5646 = vmatmul.mubr.bf16.gmra.mxu0 %v2136
    %v5647 = vpop.f32.mrf.mxu0
    %v5648 = vadd.f32 %v5607, %v5647
    %v5649 = vpop.f32.mrf.mxu0
    %v5650 = vadd.f32 %v5609, %v5649
    %v5651 = vpop.f32.mrf.mxu0
    %v5652 = vpop.f32.mrf.mxu0
    %5653 = vdwg.mxu0
    %5654 = vmatprep.subr.bf16.mxu0 %v4379
    %5655 = vmatpush1.bf16.msra.mxu0 %v4378
    %5656 = vmatprep.subr.bf16.mxu0 %v4375
    %5657 = vmatpush1.bf16.msra.mxu0 %v4374
    %5658 = vmatprep.subr.bf16.mxu0 %v4371
    %5659 = vmatpush1.bf16.msra.mxu0 %v4370
    %5660 = vmatprep.subr.bf16.mxu0 %v4367
    %5661 = vmatpush1.bf16.msra.mxu0 %v4366
    %5662 = vmatprep.subr.bf16.mxu0 %v4363
    %5663 = vmatpush1.bf16.msra.mxu0 %v4362
    %5664 = vmatprep.subr.bf16.mxu0 %v4359
    %5665 = vmatpush1.bf16.msra.mxu0 %v4358
    %5666 = vmatprep.subr.bf16.mxu0 %v4355
    %5667 = vmatpush1.bf16.msra.mxu0 %v4354
    %5668 = vmatprep.subr.bf16.mxu0 %v4351
    %5669 = vmatpush1.bf16.msra.mxu0 %v4350
    %5670 = vmatprep.subr.bf16.mxu0 %v4411
    %5671 = vmatpush2.bf16.msra.mxu0 %v4410
    %5672 = vmatprep.subr.bf16.mxu0 %v4407
    %5673 = vmatpush2.bf16.msra.mxu0 %v4406
    %5674 = vmatprep.subr.bf16.mxu0 %v4403
    %5675 = vmatpush2.bf16.msra.mxu0 %v4402
    %5676 = vmatprep.subr.bf16.mxu0 %v4399
    %5677 = vmatpush2.bf16.msra.mxu0 %v4398
    %5678 = vmatprep.subr.bf16.mxu0 %v4395
    %5679 = vmatpush2.bf16.msra.mxu0 %v4394
    %5680 = vmatprep.subr.bf16.mxu0 %v4391
    %5681 = vmatpush2.bf16.msra.mxu0 %v4390
    %5682 = vmatprep.subr.bf16.mxu0 %v4387
    %5683 = vmatpush2.bf16.msra.mxu0 %v4386
    %5684 = vmatprep.subr.bf16.mxu0 %v4383
    %5685 = vmatpush2.bf16.msra.mxu0 %v4382
    %5686 = vmatprep.mubr.bf16.mxu0 %v2139
    %5687 = vmatmul.mubr.bf16.gmra.mxu0 %v2138
    %v5688 = vpop.f32.mrf.mxu0
    %v5689 = vadd.f32 %v5648, %v5688
    %v5690 = vpop.f32.mrf.mxu0
    %v5691 = vadd.f32 %v5650, %v5690
    %v5692 = vpop.f32.mrf.mxu0
    %v5693 = vpop.f32.mrf.mxu0
    %5694 = vdwg.mxu0
    %5695 = vmatprep.subr.bf16.mxu0 %v4443
    %5696 = vmatpush1.bf16.msra.mxu0 %v4442
    %5697 = vmatprep.subr.bf16.mxu0 %v4439
    %5698 = vmatpush1.bf16.msra.mxu0 %v4438
    %5699 = vmatprep.subr.bf16.mxu0 %v4435
    %5700 = vmatpush1.bf16.msra.mxu0 %v4434
    %5701 = vmatprep.subr.bf16.mxu0 %v4431
    %5702 = vmatpush1.bf16.msra.mxu0 %v4430
    %5703 = vmatprep.subr.bf16.mxu0 %v4427
    %5704 = vmatpush1.bf16.msra.mxu0 %v4426
    %5705 = vmatprep.subr.bf16.mxu0 %v4423
    %5706 = vmatpush1.bf16.msra.mxu0 %v4422
    %5707 = vmatprep.subr.bf16.mxu0 %v4419
    %5708 = vmatpush1.bf16.msra.mxu0 %v4418
    %5709 = vmatprep.subr.bf16.mxu0 %v4415
    %5710 = vmatpush1.bf16.msra.mxu0 %v4414
    %5711 = vmatprep.subr.bf16.mxu0 %v4475
    %5712 = vmatpush2.bf16.msra.mxu0 %v4474
    %5713 = vmatprep.subr.bf16.mxu0 %v4471
    %5714 = vmatpush2.bf16.msra.mxu0 %v4470
    %5715 = vmatprep.subr.bf16.mxu0 %v4467
    %5716 = vmatpush2.bf16.msra.mxu0 %v4466
    %5717 = vmatprep.subr.bf16.mxu0 %v4463
    %5718 = vmatpush2.bf16.msra.mxu0 %v4462
    %5719 = vmatprep.subr.bf16.mxu0 %v4459
    %5720 = vmatpush2.bf16.msra.mxu0 %v4458
    %5721 = vmatprep.subr.bf16.mxu0 %v4455
    %5722 = vmatpush2.bf16.msra.mxu0 %v4454
    %5723 = vmatprep.subr.bf16.mxu0 %v4451
    %5724 = vmatpush2.bf16.msra.mxu0 %v4450
    %5725 = vmatprep.subr.bf16.mxu0 %v4447
    %5726 = vmatpush2.bf16.msra.mxu0 %v4446
    %5727 = vmatprep.mubr.bf16.mxu0 %v2141
    %5728 = vmatmul.mubr.bf16.gmra.mxu0 %v2140
    %v5729 = vpop.f32.mrf.mxu0
    %v5730 = vadd.f32 %v5689, %v5729
    %v5731 = vpop.f32.mrf.mxu0
    %v5732 = vadd.f32 %v5691, %v5731
    %v5733 = vpop.f32.mrf.mxu0
    %v5734 = vpop.f32.mrf.mxu0
    %5735 = vdwg.mxu0
    %5736 = vmatprep.subr.bf16.mxu0 %v4507
    %5737 = vmatpush1.bf16.msra.mxu0 %v4506
    %5738 = vmatprep.subr.bf16.mxu0 %v4503
    %5739 = vmatpush1.bf16.msra.mxu0 %v4502
    %5740 = vmatprep.subr.bf16.mxu0 %v4499
    %5741 = vmatpush1.bf16.msra.mxu0 %v4498
    %5742 = vmatprep.subr.bf16.mxu0 %v4495
    %5743 = vmatpush1.bf16.msra.mxu0 %v4494
    %5744 = vmatprep.subr.bf16.mxu0 %v4491
    %5745 = vmatpush1.bf16.msra.mxu0 %v4490
    %5746 = vmatprep.subr.bf16.mxu0 %v4487
    %5747 = vmatpush1.bf16.msra.mxu0 %v4486
    %5748 = vmatprep.subr.bf16.mxu0 %v4483
    %5749 = vmatpush1.bf16.msra.mxu0 %v4482
    %5750 = vmatprep.subr.bf16.mxu0 %v4479
    %5751 = vmatpush1.bf16.msra.mxu0 %v4478
    %5752 = vmatprep.subr.bf16.mxu0 %v4539
    %5753 = vmatpush2.bf16.msra.mxu0 %v4538
    %5754 = vmatprep.subr.bf16.mxu0 %v4535
    %5755 = vmatpush2.bf16.msra.mxu0 %v4534
    %5756 = vmatprep.subr.bf16.mxu0 %v4531
    %5757 = vmatpush2.bf16.msra.mxu0 %v4530
    %5758 = vmatprep.subr.bf16.mxu0 %v4527
    %5759 = vmatpush2.bf16.msra.mxu0 %v4526
    %5760 = vmatprep.subr.bf16.mxu0 %v4523
    %5761 = vmatpush2.bf16.msra.mxu0 %v4522
    %5762 = vmatprep.subr.bf16.mxu0 %v4519
    %5763 = vmatpush2.bf16.msra.mxu0 %v4518
    %5764 = vmatprep.subr.bf16.mxu0 %v4515
    %5765 = vmatpush2.bf16.msra.mxu0 %v4514
    %5766 = vmatprep.subr.bf16.mxu0 %v4511
    %5767 = vmatpush2.bf16.msra.mxu0 %v4510
    %5768 = vmatprep.mubr.bf16.mxu0 %v2143
    %5769 = vmatmul.mubr.bf16.gmra.mxu0 %v2142
    %v5770 = vpop.f32.mrf.mxu0
    %v5771 = vadd.f32 %v5730, %v5770
    %v5772 = vpop.f32.mrf.mxu0
    %v5773 = vadd.f32 %v5732, %v5772
    %v5774 = vpop.f32.mrf.mxu0
    %v5775 = vpop.f32.mrf.mxu0
    %5776 = vdwg.mxu0
    %5777 = vmatprep.subr.bf16.mxu0 %v4571
    %5778 = vmatpush1.bf16.msra.mxu0 %v4570
    %5779 = vmatprep.subr.bf16.mxu0 %v4567
    %5780 = vmatpush1.bf16.msra.mxu0 %v4566
    %5781 = vmatprep.subr.bf16.mxu0 %v4563
    %5782 = vmatpush1.bf16.msra.mxu0 %v4562
    %5783 = vmatprep.subr.bf16.mxu0 %v4559
    %5784 = vmatpush1.bf16.msra.mxu0 %v4558
    %5785 = vmatprep.subr.bf16.mxu0 %v4555
    %5786 = vmatpush1.bf16.msra.mxu0 %v4554
    %5787 = vmatprep.subr.bf16.mxu0 %v4551
    %5788 = vmatpush1.bf16.msra.mxu0 %v4550
    %5789 = vmatprep.subr.bf16.mxu0 %v4547
    %5790 = vmatpush1.bf16.msra.mxu0 %v4546
    %5791 = vmatprep.subr.bf16.mxu0 %v4543
    %5792 = vmatpush1.bf16.msra.mxu0 %v4542
    %5793 = vmatprep.subr.bf16.mxu0 %v4603
    %5794 = vmatpush2.bf16.msra.mxu0 %v4602
    %5795 = vmatprep.subr.bf16.mxu0 %v4599
    %5796 = vmatpush2.bf16.msra.mxu0 %v4598
    %5797 = vmatprep.subr.bf16.mxu0 %v4595
    %5798 = vmatpush2.bf16.msra.mxu0 %v4594
    %5799 = vmatprep.subr.bf16.mxu0 %v4591
    %5800 = vmatpush2.bf16.msra.mxu0 %v4590
    %5801 = vmatprep.subr.bf16.mxu0 %v4587
    %5802 = vmatpush2.bf16.msra.mxu0 %v4586
    %5803 = vmatprep.subr.bf16.mxu0 %v4583
    %5804 = vmatpush2.bf16.msra.mxu0 %v4582
    %5805 = vmatprep.subr.bf16.mxu0 %v4579
    %5806 = vmatpush2.bf16.msra.mxu0 %v4578
    %5807 = vmatprep.subr.bf16.mxu0 %v4575
    %5808 = vmatpush2.bf16.msra.mxu0 %v4574
    %5809 = vmatprep.mubr.bf16.mxu0 %v2145
    %5810 = vmatmul.mubr.bf16.gmra.mxu0 %v2144
    %v5811 = vpop.f32.mrf.mxu0
    %v5812 = vadd.f32 %v5771, %v5811
    %v5813 = vpop.f32.mrf.mxu0
    %v5814 = vadd.f32 %v5773, %v5813
    %v5815 = vpop.f32.mrf.mxu0
    %v5816 = vpop.f32.mrf.mxu0
    %5817 = vdwg.mxu0
    %5818 = vmatprep.subr.bf16.mxu0 %v4635
    %5819 = vmatpush1.bf16.msra.mxu0 %v4634
    %5820 = vmatprep.subr.bf16.mxu0 %v4631
    %5821 = vmatpush1.bf16.msra.mxu0 %v4630
    %5822 = vmatprep.subr.bf16.mxu0 %v4627
    %5823 = vmatpush1.bf16.msra.mxu0 %v4626
    %5824 = vmatprep.subr.bf16.mxu0 %v4623
    %5825 = vmatpush1.bf16.msra.mxu0 %v4622
    %5826 = vmatprep.subr.bf16.mxu0 %v4619
    %5827 = vmatpush1.bf16.msra.mxu0 %v4618
    %5828 = vmatprep.subr.bf16.mxu0 %v4615
    %5829 = vmatpush1.bf16.msra.mxu0 %v4614
    %5830 = vmatprep.subr.bf16.mxu0 %v4611
    %5831 = vmatpush1.bf16.msra.mxu0 %v4610
    %5832 = vmatprep.subr.bf16.mxu0 %v4607
    %5833 = vmatpush1.bf16.msra.mxu0 %v4606
    %5834 = vmatprep.subr.bf16.mxu0 %v4667
    %5835 = vmatpush2.bf16.msra.mxu0 %v4666
    %5836 = vmatprep.subr.bf16.mxu0 %v4663
    %5837 = vmatpush2.bf16.msra.mxu0 %v4662
    %5838 = vmatprep.subr.bf16.mxu0 %v4659
    %5839 = vmatpush2.bf16.msra.mxu0 %v4658
    %5840 = vmatprep.subr.bf16.mxu0 %v4655
    %5841 = vmatpush2.bf16.msra.mxu0 %v4654
    %5842 = vmatprep.subr.bf16.mxu0 %v4651
    %5843 = vmatpush2.bf16.msra.mxu0 %v4650
    %5844 = vmatprep.subr.bf16.mxu0 %v4647
    %5845 = vmatpush2.bf16.msra.mxu0 %v4646
    %5846 = vmatprep.subr.bf16.mxu0 %v4643
    %5847 = vmatpush2.bf16.msra.mxu0 %v4642
    %5848 = vmatprep.subr.bf16.mxu0 %v4639
    %5849 = vmatpush2.bf16.msra.mxu0 %v4638
    %5850 = vmatprep.mubr.bf16.mxu0 %v2147
    %5851 = vmatmul.mubr.bf16.gmra.mxu0 %v2146
    %v5852 = vpop.f32.mrf.mxu0
    %v5853 = vadd.f32 %v5812, %v5852
    %v5854 = vpop.f32.mrf.mxu0
    %v5855 = vadd.f32 %v5814, %v5854
    %v5856 = vpop.f32.mrf.mxu0
    %v5857 = vpop.f32.mrf.mxu0
    %5858 = vdwg.mxu0
    %5859 = vmatprep.subr.bf16.mxu0 %v4699
    %5860 = vmatpush1.bf16.msra.mxu0 %v4698
    %5861 = vmatprep.subr.bf16.mxu0 %v4695
    %5862 = vmatpush1.bf16.msra.mxu0 %v4694
    %5863 = vmatprep.subr.bf16.mxu0 %v4691
    %5864 = vmatpush1.bf16.msra.mxu0 %v4690
    %5865 = vmatprep.subr.bf16.mxu0 %v4687
    %5866 = vmatpush1.bf16.msra.mxu0 %v4686
    %5867 = vmatprep.subr.bf16.mxu0 %v4683
    %5868 = vmatpush1.bf16.msra.mxu0 %v4682
    %5869 = vmatprep.subr.bf16.mxu0 %v4679
    %5870 = vmatpush1.bf16.msra.mxu0 %v4678
    %5871 = vmatprep.subr.bf16.mxu0 %v4675
    %5872 = vmatpush1.bf16.msra.mxu0 %v4674
    %5873 = vmatprep.subr.bf16.mxu0 %v4671
    %5874 = vmatpush1.bf16.msra.mxu0 %v4670
    %5875 = vmatprep.subr.bf16.mxu0 %v4731
    %5876 = vmatpush2.bf16.msra.mxu0 %v4730
    %5877 = vmatprep.subr.bf16.mxu0 %v4727
    %5878 = vmatpush2.bf16.msra.mxu0 %v4726
    %5879 = vmatprep.subr.bf16.mxu0 %v4723
    %5880 = vmatpush2.bf16.msra.mxu0 %v4722
    %5881 = vmatprep.subr.bf16.mxu0 %v4719
    %5882 = vmatpush2.bf16.msra.mxu0 %v4718
    %5883 = vmatprep.subr.bf16.mxu0 %v4715
    %5884 = vmatpush2.bf16.msra.mxu0 %v4714
    %5885 = vmatprep.subr.bf16.mxu0 %v4711
    %5886 = vmatpush2.bf16.msra.mxu0 %v4710
    %5887 = vmatprep.subr.bf16.mxu0 %v4707
    %5888 = vmatpush2.bf16.msra.mxu0 %v4706
    %5889 = vmatprep.subr.bf16.mxu0 %v4703
    %5890 = vmatpush2.bf16.msra.mxu0 %v4702
    %5891 = vmatprep.mubr.bf16.mxu0 %v2149
    %5892 = vmatmul.mubr.bf16.gmra.mxu0 %v2148
    %v5893 = vpop.f32.mrf.mxu0
    %v5894 = vadd.f32 %v5853, %v5893
    %v5895 = vpop.f32.mrf.mxu0
    %v5896 = vadd.f32 %v5855, %v5895
    %v5897 = vpop.f32.mrf.mxu0
    %v5898 = vpop.f32.mrf.mxu0
    %5899 = vdwg.mxu0
    %v5900 = vmul.f32 %v5566, 0.01
    %v5901 = vmul.f32 %v5568, 0.01
    %v5902 = vmul.f32 %v5894, 0.01
    %v5903 = vmul.f32 %v5896, 0.01
    %v5904 = vmax.f32 %v5566, %v5900
    %v5905 = vmax.f32 %v5568, %v5901
    %v5906 = vmax.f32 %v5894, %v5902
    %v5907 = vmax.f32 %v5896, %v5903
    %v5908 = vpack.c.bf16 %v5904, %v5904
    %v5909 = vpack.c.bf16 %v5905, %v5905
    %v5910 = vpack.c.bf16 %v5906, %v5906
    %v5911 = vpack.c.bf16 %v5907, %v5907
    %v5912 = vld [vmem:[#allocation20] sm:$0xff]
    %v5913 = vld [vmem:[#allocation20 + $0x8] sm:$0xff]
    %v5914 = vld [vmem:[#allocation20 + $0x10] sm:$0xff]
    %v5915 = vld [vmem:[#allocation20 + $0x18] sm:$0xff]
    %v5916 = vld [vmem:[#allocation20 + $0x20] sm:$0xff]
    %v5917 = vld [vmem:[#allocation20 + $0x28] sm:$0xff]
    %v5918 = vld [vmem:[#allocation20 + $0x30] sm:$0xff]
    %v5919 = vld [vmem:[#allocation20 + $0x38] sm:$0xff]
    %v5920 = vld [vmem:[#allocation20 + $0x40] sm:$0xff]
    %v5921 = vld [vmem:[#allocation20 + $0x48] sm:$0xff]
    %v5922 = vld [vmem:[#allocation20 + $0x50] sm:$0xff]
    %v5923 = vld [vmem:[#allocation20 + $0x58] sm:$0xff]
    %v5924 = vld [vmem:[#allocation20 + $0x60] sm:$0xff]
    %v5925 = vld [vmem:[#allocation20 + $0x68] sm:$0xff]
    %v5926 = vld [vmem:[#allocation20 + $0x70] sm:$0xff]
    %v5927 = vld [vmem:[#allocation20 + $0x78] sm:$0xff]
    %v5928 = vld [vmem:[#allocation20 + $0x80] sm:$0xff]
    %v5929 = vld [vmem:[#allocation20 + $0x88] sm:$0xff]
    %v5930 = vld [vmem:[#allocation20 + $0x90] sm:$0xff]
    %v5931 = vld [vmem:[#allocation20 + $0x98] sm:$0xff]
    %v5932 = vld [vmem:[#allocation20 + $0xa0] sm:$0xff]
    %v5933 = vld [vmem:[#allocation20 + $0xa8] sm:$0xff]
    %v5934 = vld [vmem:[#allocation20 + $0xb0] sm:$0xff]
    %v5935 = vld [vmem:[#allocation20 + $0xb8] sm:$0xff]
    %v5936 = vld [vmem:[#allocation20 + $0xc0] sm:$0xff]
    %v5937 = vld [vmem:[#allocation20 + $0xc8] sm:$0xff]
    %v5938 = vld [vmem:[#allocation20 + $0xd0] sm:$0xff]
    %v5939 = vld [vmem:[#allocation20 + $0xd8] sm:$0xff]
    %v5940 = vld [vmem:[#allocation20 + $0xe0] sm:$0xff]
    %v5941 = vld [vmem:[#allocation20 + $0xe8] sm:$0xff]
    %v5942 = vld [vmem:[#allocation20 + $0xf0] sm:$0xff]
    %v5943 = vld [vmem:[#allocation20 + $0xf8] sm:$0xff]
    %v5944 = vld [vmem:[#allocation20 + $0x100] sm:$0xff]
    %v5945 = vld [vmem:[#allocation20 + $0x108] sm:$0xff]
    %v5946 = vld [vmem:[#allocation20 + $0x110] sm:$0xff]
    %v5947 = vld [vmem:[#allocation20 + $0x118] sm:$0xff]
    %v5948 = vld [vmem:[#allocation20 + $0x120] sm:$0xff]
    %v5949 = vld [vmem:[#allocation20 + $0x128] sm:$0xff]
    %v5950 = vld [vmem:[#allocation20 + $0x130] sm:$0xff]
    %v5951 = vld [vmem:[#allocation20 + $0x138] sm:$0xff]
    %v5952 = vld [vmem:[#allocation20 + $0x140] sm:$0xff]
    %v5953 = vld [vmem:[#allocation20 + $0x148] sm:$0xff]
    %v5954 = vld [vmem:[#allocation20 + $0x150] sm:$0xff]
    %v5955 = vld [vmem:[#allocation20 + $0x158] sm:$0xff]
    %v5956 = vld [vmem:[#allocation20 + $0x160] sm:$0xff]
    %v5957 = vld [vmem:[#allocation20 + $0x168] sm:$0xff]
    %v5958 = vld [vmem:[#allocation20 + $0x170] sm:$0xff]
    %v5959 = vld [vmem:[#allocation20 + $0x178] sm:$0xff]
    %v5960 = vld [vmem:[#allocation20 + $0x180] sm:$0xff]
    %v5961 = vld [vmem:[#allocation20 + $0x188] sm:$0xff]
    %v5962 = vld [vmem:[#allocation20 + $0x190] sm:$0xff]
    %v5963 = vld [vmem:[#allocation20 + $0x198] sm:$0xff]
    %v5964 = vld [vmem:[#allocation20 + $0x1a0] sm:$0xff]
    %v5965 = vld [vmem:[#allocation20 + $0x1a8] sm:$0xff]
    %v5966 = vld [vmem:[#allocation20 + $0x1b0] sm:$0xff]
    %v5967 = vld [vmem:[#allocation20 + $0x1b8] sm:$0xff]
    %v5968 = vld [vmem:[#allocation20 + $0x1c0] sm:$0xff]
    %v5969 = vld [vmem:[#allocation20 + $0x1c8] sm:$0xff]
    %v5970 = vld [vmem:[#allocation20 + $0x1d0] sm:$0xff]
    %v5971 = vld [vmem:[#allocation20 + $0x1d8] sm:$0xff]
    %v5972 = vld [vmem:[#allocation20 + $0x1e0] sm:$0xff]
    %v5973 = vld [vmem:[#allocation20 + $0x1e8] sm:$0xff]
    %v5974 = vld [vmem:[#allocation20 + $0x1f0] sm:$0xff]
    %v5975 = vld [vmem:[#allocation20 + $0x1f8] sm:$0xff]
    %v5976 = vld [vmem:[#allocation21] sm:$0x3]
    %v5978 = vlaneseq
    %v5979 = vshrl.u32 %v5978, 7
    %v5980 = vsub.s32 0, %v5979
    %v5981 = vrot.slane %v5976, %v5980
    %v5982 = vlaneseq
    %v5983 = vshrl.u32 %v5982, 7
    %v5984 = vsub.s32 1, %v5983
    %v5985 = vrot.slane %v5976, %v5984
    %v6052 = vunpack.c.l.b16 %v5912
    %v6053 = vunpack.c.h.b16 %v5912
    %v6054 = vunpack.c.l.b16 %v5913
    %v6055 = vunpack.c.h.b16 %v5913
    %v6056 = vunpack.c.l.b16 %v5914
    %v6057 = vunpack.c.h.b16 %v5914
    %v6058 = vunpack.c.l.b16 %v5915
    %v6059 = vunpack.c.h.b16 %v5915
    %v6060 = vunpack.c.l.b16 %v5916
    %v6061 = vunpack.c.h.b16 %v5916
    %v6062 = vunpack.c.l.b16 %v5917
    %v6063 = vunpack.c.h.b16 %v5917
    %v6064 = vunpack.c.l.b16 %v5918
    %v6065 = vunpack.c.h.b16 %v5918
    %v6066 = vunpack.c.l.b16 %v5919
    %v6067 = vunpack.c.h.b16 %v5919
    %v6068 = vunpack.c.l.b16 %v5920
    %v6069 = vunpack.c.h.b16 %v5920
    %v6070 = vunpack.c.l.b16 %v5921
    %v6071 = vunpack.c.h.b16 %v5921
    %v6072 = vunpack.c.l.b16 %v5922
    %v6073 = vunpack.c.h.b16 %v5922
    %v6074 = vunpack.c.l.b16 %v5923
    %v6075 = vunpack.c.h.b16 %v5923
    %v6076 = vunpack.c.l.b16 %v5924
    %v6077 = vunpack.c.h.b16 %v5924
    %v6078 = vunpack.c.l.b16 %v5925
    %v6079 = vunpack.c.h.b16 %v5925
    %v6080 = vunpack.c.l.b16 %v5926
    %v6081 = vunpack.c.h.b16 %v5926
    %v6082 = vunpack.c.l.b16 %v5927
    %v6083 = vunpack.c.h.b16 %v5927
    %v6084 = vunpack.c.l.b16 %v5928
    %v6085 = vunpack.c.h.b16 %v5928
    %v6086 = vunpack.c.l.b16 %v5929
    %v6087 = vunpack.c.h.b16 %v5929
    %v6088 = vunpack.c.l.b16 %v5930
    %v6089 = vunpack.c.h.b16 %v5930
    %v6090 = vunpack.c.l.b16 %v5931
    %v6091 = vunpack.c.h.b16 %v5931
    %v6092 = vunpack.c.l.b16 %v5932
    %v6093 = vunpack.c.h.b16 %v5932
    %v6094 = vunpack.c.l.b16 %v5933
    %v6095 = vunpack.c.h.b16 %v5933
    %v6096 = vunpack.c.l.b16 %v5934
    %v6097 = vunpack.c.h.b16 %v5934
    %v6098 = vunpack.c.l.b16 %v5935
    %v6099 = vunpack.c.h.b16 %v5935
    %v6100 = vunpack.c.l.b16 %v5936
    %v6101 = vunpack.c.h.b16 %v5936
    %v6102 = vunpack.c.l.b16 %v5937
    %v6103 = vunpack.c.h.b16 %v5937
    %v6104 = vunpack.c.l.b16 %v5938
    %v6105 = vunpack.c.h.b16 %v5938
    %v6106 = vunpack.c.l.b16 %v5939
    %v6107 = vunpack.c.h.b16 %v5939
    %v6108 = vunpack.c.l.b16 %v5940
    %v6109 = vunpack.c.h.b16 %v5940
    %v6110 = vunpack.c.l.b16 %v5941
    %v6111 = vunpack.c.h.b16 %v5941
    %v6112 = vunpack.c.l.b16 %v5942
    %v6113 = vunpack.c.h.b16 %v5942
    %v6114 = vunpack.c.l.b16 %v5943
    %v6115 = vunpack.c.h.b16 %v5943
    %v6116 = vunpack.c.l.b16 %v5944
    %v6117 = vunpack.c.h.b16 %v5944
    %v6118 = vunpack.c.l.b16 %v5945
    %v6119 = vunpack.c.h.b16 %v5945
    %v6120 = vunpack.c.l.b16 %v5946
    %v6121 = vunpack.c.h.b16 %v5946
    %v6122 = vunpack.c.l.b16 %v5947
    %v6123 = vunpack.c.h.b16 %v5947
    %v6124 = vunpack.c.l.b16 %v5948
    %v6125 = vunpack.c.h.b16 %v5948
    %v6126 = vunpack.c.l.b16 %v5949
    %v6127 = vunpack.c.h.b16 %v5949
    %v6128 = vunpack.c.l.b16 %v5950
    %v6129 = vunpack.c.h.b16 %v5950
    %v6130 = vunpack.c.l.b16 %v5951
    %v6131 = vunpack.c.h.b16 %v5951
    %v6132 = vunpack.c.l.b16 %v5952
    %v6133 = vunpack.c.h.b16 %v5952
    %v6134 = vunpack.c.l.b16 %v5953
    %v6135 = vunpack.c.h.b16 %v5953
    %v6136 = vunpack.c.l.b16 %v5954
    %v6137 = vunpack.c.h.b16 %v5954
    %v6138 = vunpack.c.l.b16 %v5955
    %v6139 = vunpack.c.h.b16 %v5955
    %v6140 = vunpack.c.l.b16 %v5956
    %v6141 = vunpack.c.h.b16 %v5956
    %v6142 = vunpack.c.l.b16 %v5957
    %v6143 = vunpack.c.h.b16 %v5957
    %v6144 = vunpack.c.l.b16 %v5958
    %v6145 = vunpack.c.h.b16 %v5958
    %v6146 = vunpack.c.l.b16 %v5959
    %v6147 = vunpack.c.h.b16 %v5959
    %v6148 = vunpack.c.l.b16 %v5960
    %v6149 = vunpack.c.h.b16 %v5960
    %v6150 = vunpack.c.l.b16 %v5961
    %v6151 = vunpack.c.h.b16 %v5961
    %v6152 = vunpack.c.l.b16 %v5962
    %v6153 = vunpack.c.h.b16 %v5962
    %v6154 = vunpack.c.l.b16 %v5963
    %v6155 = vunpack.c.h.b16 %v5963
    %v6156 = vunpack.c.l.b16 %v5964
    %v6157 = vunpack.c.h.b16 %v5964
    %v6158 = vunpack.c.l.b16 %v5965
    %v6159 = vunpack.c.h.b16 %v5965
    %v6160 = vunpack.c.l.b16 %v5966
    %v6161 = vunpack.c.h.b16 %v5966
    %v6162 = vunpack.c.l.b16 %v5967
    %v6163 = vunpack.c.h.b16 %v5967
    %v6164 = vunpack.c.l.b16 %v5968
    %v6165 = vunpack.c.h.b16 %v5968
    %v6166 = vunpack.c.l.b16 %v5969
    %v6167 = vunpack.c.h.b16 %v5969
    %v6168 = vunpack.c.l.b16 %v5970
    %v6169 = vunpack.c.h.b16 %v5970
    %v6170 = vunpack.c.l.b16 %v5971
    %v6171 = vunpack.c.h.b16 %v5971
    %v6172 = vunpack.c.l.b16 %v5972
    %v6173 = vunpack.c.h.b16 %v5972
    %v6174 = vunpack.c.l.b16 %v5973
    %v6175 = vunpack.c.h.b16 %v5973
    %v6176 = vunpack.c.l.b16 %v5974
    %v6177 = vunpack.c.h.b16 %v5974
    %v6178 = vunpack.c.l.b16 %v5975
    %v6179 = vunpack.c.h.b16 %v5975
    %v6180 = vpack.c.b16 %v6054, %v6052
    %v6181 = vpack.c.b16 %v6055, %v6053
    %v6182 = vpack.c.b16 %v6058, %v6056
    %v6183 = vpack.c.b16 %v6059, %v6057
    %v6184 = vpack.c.b16 %v6062, %v6060
    %v6185 = vpack.c.b16 %v6063, %v6061
    %v6186 = vpack.c.b16 %v6066, %v6064
    %v6187 = vpack.c.b16 %v6067, %v6065
    %v6188 = vpack.c.b16 %v6070, %v6068
    %v6189 = vpack.c.b16 %v6071, %v6069
    %v6190 = vpack.c.b16 %v6074, %v6072
    %v6191 = vpack.c.b16 %v6075, %v6073
    %v6192 = vpack.c.b16 %v6078, %v6076
    %v6193 = vpack.c.b16 %v6079, %v6077
    %v6194 = vpack.c.b16 %v6082, %v6080
    %v6195 = vpack.c.b16 %v6083, %v6081
    %v6196 = vpack.c.b16 %v6086, %v6084
    %v6197 = vpack.c.b16 %v6087, %v6085
    %v6198 = vpack.c.b16 %v6090, %v6088
    %v6199 = vpack.c.b16 %v6091, %v6089
    %v6200 = vpack.c.b16 %v6094, %v6092
    %v6201 = vpack.c.b16 %v6095, %v6093
    %v6202 = vpack.c.b16 %v6098, %v6096
    %v6203 = vpack.c.b16 %v6099, %v6097
    %v6204 = vpack.c.b16 %v6102, %v6100
    %v6205 = vpack.c.b16 %v6103, %v6101
    %v6206 = vpack.c.b16 %v6106, %v6104
    %v6207 = vpack.c.b16 %v6107, %v6105
    %v6208 = vpack.c.b16 %v6110, %v6108
    %v6209 = vpack.c.b16 %v6111, %v6109
    %v6210 = vpack.c.b16 %v6114, %v6112
    %v6211 = vpack.c.b16 %v6115, %v6113
    %v6212 = vpack.c.b16 %v6118, %v6116
    %v6213 = vpack.c.b16 %v6119, %v6117
    %v6214 = vpack.c.b16 %v6122, %v6120
    %v6215 = vpack.c.b16 %v6123, %v6121
    %v6216 = vpack.c.b16 %v6126, %v6124
    %v6217 = vpack.c.b16 %v6127, %v6125
    %v6218 = vpack.c.b16 %v6130, %v6128
    %v6219 = vpack.c.b16 %v6131, %v6129
    %v6220 = vpack.c.b16 %v6134, %v6132
    %v6221 = vpack.c.b16 %v6135, %v6133
    %v6222 = vpack.c.b16 %v6138, %v6136
    %v6223 = vpack.c.b16 %v6139, %v6137
    %v6224 = vpack.c.b16 %v6142, %v6140
    %v6225 = vpack.c.b16 %v6143, %v6141
    %v6226 = vpack.c.b16 %v6146, %v6144
    %v6227 = vpack.c.b16 %v6147, %v6145
    %v6228 = vpack.c.b16 %v6150, %v6148
    %v6229 = vpack.c.b16 %v6151, %v6149
    %v6230 = vpack.c.b16 %v6154, %v6152
    %v6231 = vpack.c.b16 %v6155, %v6153
    %v6232 = vpack.c.b16 %v6158, %v6156
    %v6233 = vpack.c.b16 %v6159, %v6157
    %v6234 = vpack.c.b16 %v6162, %v6160
    %v6235 = vpack.c.b16 %v6163, %v6161
    %v6236 = vpack.c.b16 %v6166, %v6164
    %v6237 = vpack.c.b16 %v6167, %v6165
    %v6238 = vpack.c.b16 %v6170, %v6168
    %v6239 = vpack.c.b16 %v6171, %v6169
    %v6240 = vpack.c.b16 %v6174, %v6172
    %v6241 = vpack.c.b16 %v6175, %v6173
    %v6242 = vpack.c.b16 %v6178, %v6176
    %v6243 = vpack.c.b16 %v6179, %v6177
    %6308 = vmatprep.subr.bf16.mxu0 %v6195
    %6309 = vmatpush1.bf16.msra.mxu0 %v6194
    %6310 = vmatprep.subr.bf16.mxu0 %v6193
    %6311 = vmatpush1.bf16.msra.mxu0 %v6192
    %6312 = vmatprep.subr.bf16.mxu0 %v6191
    %6313 = vmatpush1.bf16.msra.mxu0 %v6190
    %6314 = vmatprep.subr.bf16.mxu0 %v6189
    %6315 = vmatpush1.bf16.msra.mxu0 %v6188
    %6316 = vmatprep.subr.bf16.mxu0 %v6187
    %6317 = vmatpush1.bf16.msra.mxu0 %v6186
    %6318 = vmatprep.subr.bf16.mxu0 %v6185
    %6319 = vmatpush1.bf16.msra.mxu0 %v6184
    %6320 = vmatprep.subr.bf16.mxu0 %v6183
    %6321 = vmatpush1.bf16.msra.mxu0 %v6182
    %6322 = vmatprep.subr.bf16.mxu0 %v6181
    %6323 = vmatpush1.bf16.msra.mxu0 %v6180
    %6324 = vmatprep.subr.bf16.mxu0 %v6211
    %6325 = vmatpush2.bf16.msra.mxu0 %v6210
    %6326 = vmatprep.subr.bf16.mxu0 %v6209
    %6327 = vmatpush2.bf16.msra.mxu0 %v6208
    %6328 = vmatprep.subr.bf16.mxu0 %v6207
    %6329 = vmatpush2.bf16.msra.mxu0 %v6206
    %6330 = vmatprep.subr.bf16.mxu0 %v6205
    %6331 = vmatpush2.bf16.msra.mxu0 %v6204
    %6332 = vmatprep.subr.bf16.mxu0 %v6203
    %6333 = vmatpush2.bf16.msra.mxu0 %v6202
    %6334 = vmatprep.subr.bf16.mxu0 %v6201
    %6335 = vmatpush2.bf16.msra.mxu0 %v6200
    %6336 = vmatprep.subr.bf16.mxu0 %v6199
    %6337 = vmatpush2.bf16.msra.mxu0 %v6198
    %6338 = vmatprep.subr.bf16.mxu0 %v6197
    %6339 = vmatpush2.bf16.msra.mxu0 %v6196
    %6340 = vmatprep.mubr.bf16.mxu0 %v5909
    %6341 = vmatmul.mubr.bf16.gmra.mxu0 %v5908
    %v6342 = vpop.f32.mrf.mxu0
    %v6343 = vadd.f32 %v5981, %v6342
    %v6344 = vpop.f32.mrf.mxu0
    %v6345 = vadd.f32 %v5985, %v6344
    %v6346 = vpop.f32.mrf.mxu0
    %v6347 = vpop.f32.mrf.mxu0
    %6348 = vdwg.mxu0
    %6349 = vmatprep.subr.bf16.mxu0 %v6227
    %6350 = vmatpush1.bf16.msra.mxu0 %v6226
    %6351 = vmatprep.subr.bf16.mxu0 %v6225
    %6352 = vmatpush1.bf16.msra.mxu0 %v6224
    %6353 = vmatprep.subr.bf16.mxu0 %v6223
    %6354 = vmatpush1.bf16.msra.mxu0 %v6222
    %6355 = vmatprep.subr.bf16.mxu0 %v6221
    %6356 = vmatpush1.bf16.msra.mxu0 %v6220
    %6357 = vmatprep.subr.bf16.mxu0 %v6219
    %6358 = vmatpush1.bf16.msra.mxu0 %v6218
    %6359 = vmatprep.subr.bf16.mxu0 %v6217
    %6360 = vmatpush1.bf16.msra.mxu0 %v6216
    %6361 = vmatprep.subr.bf16.mxu0 %v6215
    %6362 = vmatpush1.bf16.msra.mxu0 %v6214
    %6363 = vmatprep.subr.bf16.mxu0 %v6213
    %6364 = vmatpush1.bf16.msra.mxu0 %v6212
    %6365 = vmatprep.subr.bf16.mxu0 %v6243
    %6366 = vmatpush2.bf16.msra.mxu0 %v6242
    %6367 = vmatprep.subr.bf16.mxu0 %v6241
    %6368 = vmatpush2.bf16.msra.mxu0 %v6240
    %6369 = vmatprep.subr.bf16.mxu0 %v6239
    %6370 = vmatpush2.bf16.msra.mxu0 %v6238
    %6371 = vmatprep.subr.bf16.mxu0 %v6237
    %6372 = vmatpush2.bf16.msra.mxu0 %v6236
    %6373 = vmatprep.subr.bf16.mxu0 %v6235
    %6374 = vmatpush2.bf16.msra.mxu0 %v6234
    %6375 = vmatprep.subr.bf16.mxu0 %v6233
    %6376 = vmatpush2.bf16.msra.mxu0 %v6232
    %6377 = vmatprep.subr.bf16.mxu0 %v6231
    %6378 = vmatpush2.bf16.msra.mxu0 %v6230
    %6379 = vmatprep.subr.bf16.mxu0 %v6229
    %6380 = vmatpush2.bf16.msra.mxu0 %v6228
    %6381 = vmatprep.mubr.bf16.mxu0 %v5911
    %6382 = vmatmul.mubr.bf16.gmra.mxu0 %v5910
    %v6383 = vpop.f32.mrf.mxu0
    %v6384 = vadd.f32 %v6343, %v6383
    %v6385 = vpop.f32.mrf.mxu0
    %v6386 = vadd.f32 %v6345, %v6385
    %v6387 = vpop.f32.mrf.mxu0
    %v6388 = vpop.f32.mrf.mxu0
    %6389 = vdwg.mxu0
    %v6390 = vmul.f32 %v6384, 0.01
    %v6391 = vmul.f32 %v6386, 0.01
    %v6392 = vmax.f32 %v6384, %v6390
    %v6393 = vmax.f32 %v6386, %v6391
    %v6394 = vpack.c.bf16 %v6392, %v6392
    %v6395 = vpack.c.bf16 %v6393, %v6393
    %v6396 = vld [vmem:[#allocation23] sm:$0xf]
    %v6397 = vld [vmem:[#allocation23 + $0x4] sm:$0xf]
    %v6398 = vld [vmem:[#allocation23 + $0x8] sm:$0xf]
    %v6399 = vld [vmem:[#allocation23 + $0xc] sm:$0xf]
    %v6400 = vld [vmem:[#allocation23 + $0x10] sm:$0xf]
    %v6401 = vld [vmem:[#allocation23 + $0x14] sm:$0xf]
    %v6402 = vld [vmem:[#allocation23 + $0x18] sm:$0xf]
    %v6403 = vld [vmem:[#allocation23 + $0x1c] sm:$0xf]
    %v6404 = vld [vmem:[#allocation23 + $0x20] sm:$0xf]
    %v6405 = vld [vmem:[#allocation23 + $0x24] sm:$0xf]
    %v6406 = vld [vmem:[#allocation23 + $0x28] sm:$0xf]
    %v6407 = vld [vmem:[#allocation23 + $0x2c] sm:$0xf]
    %v6408 = vld [vmem:[#allocation23 + $0x30] sm:$0xf]
    %v6409 = vld [vmem:[#allocation23 + $0x34] sm:$0xf]
    %v6410 = vld [vmem:[#allocation23 + $0x38] sm:$0xf]
    %v6411 = vld [vmem:[#allocation23 + $0x3c] sm:$0xf]
    %v6412 = vld [vmem:[#allocation23 + $0x40] sm:$0xf]
    %v6413 = vld [vmem:[#allocation23 + $0x44] sm:$0xf]
    %v6414 = vld [vmem:[#allocation23 + $0x48] sm:$0xf]
    %v6415 = vld [vmem:[#allocation23 + $0x4c] sm:$0xf]
    %v6416 = vld [vmem:[#allocation23 + $0x50] sm:$0xf]
    %v6417 = vld [vmem:[#allocation23 + $0x54] sm:$0xf]
    %v6418 = vld [vmem:[#allocation23 + $0x58] sm:$0xf]
    %v6419 = vld [vmem:[#allocation23 + $0x5c] sm:$0xf]
    %v6420 = vld [vmem:[#allocation23 + $0x60] sm:$0xf]
    %v6421 = vld [vmem:[#allocation23 + $0x64] sm:$0xf]
    %v6422 = vld [vmem:[#allocation23 + $0x68] sm:$0xf]
    %v6423 = vld [vmem:[#allocation23 + $0x6c] sm:$0xf]
    %v6424 = vld [vmem:[#allocation23 + $0x70] sm:$0xf]
    %v6425 = vld [vmem:[#allocation23 + $0x74] sm:$0xf]
    %v6426 = vld [vmem:[#allocation23 + $0x78] sm:$0xf]
    %v6427 = vld [vmem:[#allocation23 + $0x7c] sm:$0xf]
    %v6428 = vld [vmem:[#allocation24] sm:$0x1]
    %v6430 = vlaneseq
    %v6431 = vshrl.u32 %v6430, 7
    %v6432 = vsub.s32 0, %v6431
    %v6433 = vrot.slane %v6428, %v6432
    %v6467 = vunpack.c.l.b16 %v6396
    %v6468 = vunpack.c.l.b16 %v6397
    %v6469 = vunpack.c.l.b16 %v6398
    %v6470 = vunpack.c.l.b16 %v6399
    %v6471 = vunpack.c.l.b16 %v6400
    %v6472 = vunpack.c.l.b16 %v6401
    %v6473 = vunpack.c.l.b16 %v6402
    %v6474 = vunpack.c.l.b16 %v6403
    %v6475 = vunpack.c.l.b16 %v6404
    %v6476 = vunpack.c.l.b16 %v6405
    %v6477 = vunpack.c.l.b16 %v6406
    %v6478 = vunpack.c.l.b16 %v6407
    %v6479 = vunpack.c.l.b16 %v6408
    %v6480 = vunpack.c.l.b16 %v6409
    %v6481 = vunpack.c.l.b16 %v6410
    %v6482 = vunpack.c.l.b16 %v6411
    %v6483 = vunpack.c.l.b16 %v6412
    %v6484 = vunpack.c.l.b16 %v6413
    %v6485 = vunpack.c.l.b16 %v6414
    %v6486 = vunpack.c.l.b16 %v6415
    %v6487 = vunpack.c.l.b16 %v6416
    %v6488 = vunpack.c.l.b16 %v6417
    %v6489 = vunpack.c.l.b16 %v6418
    %v6490 = vunpack.c.l.b16 %v6419
    %v6491 = vunpack.c.l.b16 %v6420
    %v6492 = vunpack.c.l.b16 %v6421
    %v6493 = vunpack.c.l.b16 %v6422
    %v6494 = vunpack.c.l.b16 %v6423
    %v6495 = vunpack.c.l.b16 %v6424
    %v6496 = vunpack.c.l.b16 %v6425
    %v6497 = vunpack.c.l.b16 %v6426
    %v6498 = vunpack.c.l.b16 %v6427
    %v6499 = vpack.c.b16 %v6468, %v6467
    %v6500 = vpack.c.b16 %v6470, %v6469
    %v6501 = vpack.c.b16 %v6472, %v6471
    %v6502 = vpack.c.b16 %v6474, %v6473
    %v6503 = vpack.c.b16 %v6476, %v6475
    %v6504 = vpack.c.b16 %v6478, %v6477
    %v6505 = vpack.c.b16 %v6480, %v6479
    %v6506 = vpack.c.b16 %v6482, %v6481
    %v6507 = vpack.c.b16 %v6484, %v6483
    %v6508 = vpack.c.b16 %v6486, %v6485
    %v6509 = vpack.c.b16 %v6488, %v6487
    %v6510 = vpack.c.b16 %v6490, %v6489
    %v6511 = vpack.c.b16 %v6492, %v6491
    %v6512 = vpack.c.b16 %v6494, %v6493
    %v6513 = vpack.c.b16 %v6496, %v6495
    %v6514 = vpack.c.b16 %v6498, %v6497
    %6531 = vmatprep.subr.bf16.mxu0 0
    %6532 = vmatpush1.bf16.msra.mxu0 %v6506
    %6533 = vmatprep.subr.bf16.mxu0 0
    %6534 = vmatpush1.bf16.msra.mxu0 %v6505
    %6535 = vmatprep.subr.bf16.mxu0 0
    %6536 = vmatpush1.bf16.msra.mxu0 %v6504
    %6537 = vmatprep.subr.bf16.mxu0 0
    %6538 = vmatpush1.bf16.msra.mxu0 %v6503
    %6539 = vmatprep.subr.bf16.mxu0 0
    %6540 = vmatpush1.bf16.msra.mxu0 %v6502
    %6541 = vmatprep.subr.bf16.mxu0 0
    %6542 = vmatpush1.bf16.msra.mxu0 %v6501
    %6543 = vmatprep.subr.bf16.mxu0 0
    %6544 = vmatpush1.bf16.msra.mxu0 %v6500
    %6545 = vmatprep.subr.bf16.mxu0 0
    %6546 = vmatpush1.bf16.msra.mxu0 %v6499
    %6547 = vmatprep.subr.bf16.mxu0 0
    %6548 = vmatpush2.bf16.msra.mxu0 %v6514
    %6549 = vmatprep.subr.bf16.mxu0 0
    %6550 = vmatpush2.bf16.msra.mxu0 %v6513
    %6551 = vmatprep.subr.bf16.mxu0 0
    %6552 = vmatpush2.bf16.msra.mxu0 %v6512
    %6553 = vmatprep.subr.bf16.mxu0 0
    %6554 = vmatpush2.bf16.msra.mxu0 %v6511
    %6555 = vmatprep.subr.bf16.mxu0 0
    %6556 = vmatpush2.bf16.msra.mxu0 %v6510
    %6557 = vmatprep.subr.bf16.mxu0 0
    %6558 = vmatpush2.bf16.msra.mxu0 %v6509
    %6559 = vmatprep.subr.bf16.mxu0 0
    %6560 = vmatpush2.bf16.msra.mxu0 %v6508
    %6561 = vmatprep.subr.bf16.mxu0 0
    %6562 = vmatpush2.bf16.msra.mxu0 %v6507
    %6563 = vmatprep.mubr.bf16.mxu0 %v6395
    %6564 = vmatmul.mubr.bf16.gmra.mxu0 %v6394
    %v6565 = vpop.f32.mrf.mxu0
    %v6566 = vadd.f32 %v6433, %v6565
    %v6567 = vpop.f32.mrf.mxu0
    %v6568 = vpop.f32.mrf.mxu0
    %v6569 = vpop.f32.mrf.mxu0
    %6570 = vdwg.mxu0
    %v6571 = vmul.f32 %v6566, 0.01
    %v6572 = vmax.f32 %v6566, %v6571
    %v6573 = vpack.c.bf16 %v6572, %v6572
    %v6574 = vld [vmem:[%s13] sm:$0xf]
    %v6575 = vld [vmem:[%s13 + $0x4] sm:$0xf]
    %v6576 = vld [vmem:[%s13 + $0x8] sm:$0xf]
    %v6577 = vld [vmem:[%s13 + $0xc] sm:$0xf]
    %v6578 = vld [vmem:[%s13 + $0x10] sm:$0xf]
    %v6579 = vld [vmem:[%s13 + $0x14] sm:$0xf]
    %v6580 = vld [vmem:[%s13 + $0x18] sm:$0xf]
    %v6581 = vld [vmem:[%s13 + $0x1c] sm:$0xf]
    %v6582 = vld [vmem:[%s13 + $0x20] sm:$0xf]
    %v6583 = vld [vmem:[%s13 + $0x24] sm:$0xf]
    %v6584 = vld [vmem:[%s13 + $0x28] sm:$0xf]
    %v6585 = vld [vmem:[%s13 + $0x2c] sm:$0xf]
    %v6586 = vld [vmem:[%s13 + $0x30] sm:$0xf]
    %v6587 = vld [vmem:[%s13 + $0x34] sm:$0xf]
    %v6588 = vld [vmem:[%s13 + $0x38] sm:$0xf]
    %v6589 = vld [vmem:[%s13 + $0x3c] sm:$0xf]
    %v6590 = vld [vmem:[#allocation26] sm:$0x1]
    %v6592 = vlaneseq
    %v6593 = vshrl.u32 %v6592, 7
    %v6594 = vsub.s32 0, %v6593
    %v6595 = vrot.slane %v6590, %v6594
    %v6613 = vunpack.c.l.b16 %v6574
    %v6614 = vunpack.c.l.b16 %v6575
    %v6615 = vunpack.c.l.b16 %v6576
    %v6616 = vunpack.c.l.b16 %v6577
    %v6617 = vunpack.c.l.b16 %v6578
    %v6618 = vunpack.c.l.b16 %v6579
    %v6619 = vunpack.c.l.b16 %v6580
    %v6620 = vunpack.c.l.b16 %v6581
    %v6621 = vunpack.c.l.b16 %v6582
    %v6622 = vunpack.c.l.b16 %v6583
    %v6623 = vunpack.c.l.b16 %v6584
    %v6624 = vunpack.c.l.b16 %v6585
    %v6625 = vunpack.c.l.b16 %v6586
    %v6626 = vunpack.c.l.b16 %v6587
    %v6627 = vunpack.c.l.b16 %v6588
    %v6628 = vunpack.c.l.b16 %v6589
    %v6629 = vpack.c.b16 %v6614, %v6613
    %v6630 = vpack.c.b16 %v6616, %v6615
    %v6631 = vpack.c.b16 %v6618, %v6617
    %v6632 = vpack.c.b16 %v6620, %v6619
    %v6633 = vpack.c.b16 %v6622, %v6621
    %v6634 = vpack.c.b16 %v6624, %v6623
    %v6635 = vpack.c.b16 %v6626, %v6625
    %v6636 = vpack.c.b16 %v6628, %v6627
    %6645 = vmatprep.subr.bf16.mxu0 0
    %6646 = vmatpush1.bf16.msra.mxu0 %v6636
    %6647 = vmatprep.subr.bf16.mxu0 0
    %6648 = vmatpush1.bf16.msra.mxu0 %v6635
    %6649 = vmatprep.subr.bf16.mxu0 0
    %6650 = vmatpush1.bf16.msra.mxu0 %v6634
    %6651 = vmatprep.subr.bf16.mxu0 0
    %6652 = vmatpush1.bf16.msra.mxu0 %v6633
    %6653 = vmatprep.subr.bf16.mxu0 0
    %6654 = vmatpush1.bf16.msra.mxu0 %v6632
    %6655 = vmatprep.subr.bf16.mxu0 0
    %6656 = vmatpush1.bf16.msra.mxu0 %v6631
    %6657 = vmatprep.subr.bf16.mxu0 0
    %6658 = vmatpush1.bf16.msra.mxu0 %v6630
    %6659 = vmatprep.subr.bf16.mxu0 0
    %6660 = vmatpush1.bf16.msra.mxu0 %v6629
    %6661 = vmatprep.subr.bf16.mxu0 0
    %6662 = vmatpush2.bf16.msra.mxu0 0
    %6663 = vmatprep.subr.bf16.mxu0 0
    %6664 = vmatpush2.bf16.msra.mxu0 0
    %6665 = vmatprep.subr.bf16.mxu0 0
    %6666 = vmatpush2.bf16.msra.mxu0 0
    %6667 = vmatprep.subr.bf16.mxu0 0
    %6668 = vmatpush2.bf16.msra.mxu0 0
    %6669 = vmatprep.subr.bf16.mxu0 0
    %6670 = vmatpush2.bf16.msra.mxu0 0
    %6671 = vmatprep.subr.bf16.mxu0 0
    %6672 = vmatpush2.bf16.msra.mxu0 0
    %6673 = vmatprep.subr.bf16.mxu0 0
    %6674 = vmatpush2.bf16.msra.mxu0 0
    %6675 = vmatprep.subr.bf16.mxu0 0
    %6676 = vmatpush2.bf16.msra.mxu0 0
    %6677 = vmatprep.mubr.bf16.mxu0 0
    %6678 = vmatmul.mubr.bf16.gmra.mxu0 %v6573
    %v6679 = vpop.f32.mrf.mxu0
    %v6680 = vadd.f32 %v6595, %v6679
    %v6681 = vpop.f32.mrf.mxu0
    %v6682 = vpop.f32.mrf.mxu0
    %v6683 = vpop.f32.mrf.mxu0
    %6684 = vdwg.mxu0
    %vm6685 = vcmask 254976
    %6686 = vst.msk [vmem:[#allocation27] sm:$0x3] %vm6685, %v6680
    // Predicated region
    $region114: #{network_forward.1} parent=1 // pred_check
      _
    $region115: #{network_forward.1} parent=1 // pred_check_branch
      %6688 = sbr.rel (0) target = $region117
    $region116: #{network_forward.1} parent=1 // pred_region
      %s6690 = ssub.s32 32, 32
      %6691 = vsyncadd [#allocation8], %s6690
      %s6693 = sshll.u32 [#allocation27], 4
      %s6694 = int_to_ptr.vmem [resolvable:$true] %s6693
      %6696 = dma.vmem_to_hbm [thread:$0]  %s6694, 32, %s15, [#allocation8]
    $region117: #{network_forward.1} parent=1 // pred_fallthru
      _
    // Predicated region
    $region118: #{network_forward.1} parent=1 // pred_check
      _
    $region119: #{network_forward.1} parent=1 // pred_check_branch
      %6698 = sbr.rel (0) target = $region121
    $region120: #{network_forward.1} parent=1 // pred_region
      %6699 = dma.done [#allocation8], 32
    $region121: #{network_forward.1} parent=1 // pred_fallthru
      _
    %6700 = vsyncpa [#allocation7], 1
    %6701 = vsyncpa [#allocation10], 1
    %6702 = vsyncpa [#allocation13], 1
    %6703 = vsyncpa [#allocation16], 1
    %6704 = vsyncpa [#allocation19], 1
    %6705 = vsyncpa [#allocation22], 1
    %6706 = vsyncpa [#allocation25], 1
    %6707 = vsyncpa [#allocation8], 1

</llo_original>
